<compile_context>
chip_gen: v6e
topology: v6e:2x2x1
jax: 0.10.0
libtpu: 0.0.40
codegen_flags: <defaults>
</compile_context>

<pallas_src>
import functools
import math

import jax
import jax.numpy as jnp
from jax.experimental import pallas as pl
from jax.experimental.pallas import tpu as pltpu

EPS = 1e-6


def _layer_norm(y, alpha, beta, d):
    """Matches the torch module: alpha*(y-mean)/(unbiased_std+eps)+beta."""
    mean = jnp.mean(y, axis=-1, keepdims=True)
    var = jnp.sum((y - mean) ** 2, axis=-1, keepdims=True) * (1.0 / (d - 1))  # unbiased
    inv = pl.reciprocal(jnp.sqrt(var) + EPS, approx=True)                      # EUP slot
    return alpha * (y - mean) * inv + beta


# ----------------------------------------------------------------------------
# Fused EncoderLayer kernel: fused-QKV MHA (+residual) + FFN (+residual) + LayerNorm,
# optionally also the Encoder's final LayerNorm (last layer only).
# Grid is (B,); each step sees one (S, D) row block and one (S, S) mask-bias block;
# all weights use constant index_maps so they remain VMEM-resident across steps.
# ----------------------------------------------------------------------------
def _encoder_layer_kernel(x_ref, bias_ref,
                          wqkv_ref, bqkv_ref, wo_ref, bo_ref,
                          w1_ref, b1_ref, w2_ref, b2_ref,
                          ln_a_ref, ln_b_ref, fin_a_ref, fin_b_ref,
                          out_ref, *, apply_final_norm):
    S, D = x_ref.shape
    H, d_k, _ = wo_ref.shape

    x = x_ref[...]                                    # (S, D) f32
    xb = x.astype(jnp.bfloat16)

    # Single fused QKV projection (Wq columns already hold 1/sqrt(d_k)).
    qkv = jnp.dot(xb, wqkv_ref[...], preferred_element_type=jnp.float32) + bqkv_ref[...]
    qkv_b = qkv.astype(jnp.bfloat16)                  # cast q/k/v to bf16 exactly once

    # Head split: (H, S, d_k) via lane slices stacked on a new major axis.
    q3 = jnp.stack([qkv_b[:, h * d_k:(h + 1) * d_k] for h in range(H)], axis=0)
    k3 = jnp.stack([qkv_b[:, D + h * d_k:D + (h + 1) * d_k] for h in range(H)], axis=0)
    v3 = jnp.stack([qkv_b[:, 2 * D + h * d_k:2 * D + (h + 1) * d_k] for h in range(H)], axis=0)

    # Batched attention over all heads at once (no per-head matmul unroll).
    s = jnp.einsum('hqe,hke->hqk', q3, k3, preferred_element_type=jnp.float32)  # (H,S,S)
    s = s + bias_ref[...][None, :, :]                 # additive mask bias (-1e9 / 0)
    m = jnp.max(s, axis=-1, keepdims=True)
    e = jnp.exp(s - m)
    p = e * pl.reciprocal(jnp.sum(e, axis=-1, keepdims=True), approx=True)

    ho = jnp.einsum('hqk,hke->hqe', p.astype(jnp.bfloat16), v3,
                    preferred_element_type=jnp.float32)                          # (H,S,d_k)

    # Output projection: batched per-head (d_k,D) matmul, then sum over heads
    # (equivalent to concat(heads) @ Wo, without a lane-dim concatenate).
    attn = jnp.sum(
        jnp.einsum('hqe,hed->hqd', ho.astype(jnp.bfloat16), wo_ref[...],
                   preferred_element_type=jnp.float32),
        axis=0)                                                                  # (S, D)

    # Residual 1 (out-projection bias added once per row).
    x1 = x + attn + bo_ref[...]

    # FeedForward (relu(x@W1+b1)@W2+b2) + residual 2.
    x1b = x1.astype(jnp.bfloat16)
    h1 = jnp.dot(x1b, w1_ref[...], preferred_element_type=jnp.float32) + b1_ref[...]
    h1 = jnp.maximum(h1, 0.0)
    f = jnp.dot(h1.astype(jnp.bfloat16), w2_ref[...],
                preferred_element_type=jnp.float32) + b2_ref[...]
    y = x1 + f

    # norm_2 epilogue; last layer also applies the Encoder's final LayerNorm here.
    y = _layer_norm(y, ln_a_ref[...], ln_b_ref[...], D)
    if apply_final_norm:
        y = _layer_norm(y, fin_a_ref[...], fin_b_ref[...], D)
    # TODO(synk): D=32 (<128 lanes) means masked stores; real d_model>=128 (or a
    # lane-dense wrapper reshape) would make the writeback unmasked on v5e.
    out_ref[...] = y


def _const_index_map(ndim):
    return lambda b: (0,) * ndim


def encoder_layer(x, mask_bias, layer_params, final_ln=None):
    B, S, D = x.shape
    apply_final = final_ln is not None
    if not apply_final:
        # Dummy refs (never read when apply_final is False); tiny (1, D) arrays.
        final_ln = (layer_params[-2], layer_params[-1])
    operands = (*layer_params, *final_ln)

    row_spec = pl.BlockSpec((None, S, D), lambda b: (b, 0, 0))
    bias_spec = pl.BlockSpec((None, S, S), lambda b: (b, 0, 0))
    weight_specs = [pl.BlockSpec(w.shape, _const_index_map(w.ndim)) for w in operands]

    kernel = functools.partial(_encoder_layer_kernel, apply_final_norm=apply_final)

    y = pl.pallas_call(
        kernel,
        grid=(B,),
        in_specs=[row_spec, bias_spec, *weight_specs],
        out_specs=pl.BlockSpec((None, S, D), lambda b: (b, 0, 0)),
        out_shape=jax.ShapeDtypeStruct((B, S, D), jnp.float32),
        compiler_params=pltpu.CompilerParams(
            dimension_semantics=("parallel",),
            vmem_limit_bytes=32 * 1024 * 1024,
        ),
    )(x, mask_bias, *operands)
    return y


# ----------------------------------------------------------------------------
# Full Encoder forward.
# ----------------------------------------------------------------------------
def encoder_forward(src, mask, params):
    # TODO(synk): the embedding gather + positional-encoding add are plain JAX
    # (a token gather has no efficient rectangular-block Pallas mapping at this scale).
    B, S = src.shape
    x = params["embed"][src] + params["pe"][None, :S, :]
    # Convert the 0/1 mask ONCE into an additive bias (matches masked_fill(mask==0, -1e9)).
    mask_bias = jnp.where(mask == 0, -1e9, 0.0).astype(jnp.float32)
    layers = params["layers"]
    final_ln = (params["norm_alpha"], params["norm_beta"])
    for i, layer in enumerate(layers):
        is_last = i == len(layers) - 1
        x = encoder_layer(x, mask_bias, layer, final_ln if is_last else None)
    return x


# ----------------------------------------------------------------------------
# Deterministic parameter construction (weights pre-laid-out for the kernel).
# ----------------------------------------------------------------------------
def make_positional_encoding(max_len, d_model):
    # TODO(synk): the reference PositonalEncoder has indexing bugs; this is its
    # sin/cos intent (base 1000 as written) in the standard even/odd layout.
    pos = jnp.arange(max_len, dtype=jnp.float32)[:, None]
    idx = jnp.arange(d_model)
    pair = 2.0 * (idx // 2).astype(jnp.float32)
    angle = pos / jnp.power(1000.0, pair[None, :] / d_model)
    pe = jnp.where((idx % 2)[None, :] == 0, jnp.sin(angle), jnp.cos(angle))
    return pe.astype(jnp.float32)


def init_layer_params(key, d_model, n_heads, d_ff):
    d_k = d_model // n_heads
    ks = jax.random.split(key, 12)
    s = 0.05

    def nrm(k, shape):
        return s * jax.random.normal(k, shape, jnp.float32)

    wq = nrm(ks[0], (d_model, d_model)); bq = nrm(ks[1], (1, d_model))
    wk = nrm(ks[2], (d_model, d_model)); bk = nrm(ks[3], (1, d_model))
    wv = nrm(ks[4], (d_model, d_model)); bv = nrm(ks[5], (1, d_model))
    wo = nrm(ks[6], (d_model, d_model)); bo = nrm(ks[7], (1, d_model))
    w1 = nrm(ks[8], (d_model, d_ff));    b1 = nrm(ks[9], (1, d_ff))
    w2 = nrm(ks[10], (d_ff, d_model));   b2 = nrm(ks[11], (1, d_model))
    ln_a = jnp.ones((1, d_model), jnp.float32)
    ln_b = jnp.zeros((1, d_model), jnp.float32)

    scale = 1.0 / math.sqrt(d_k)   # fold 1/sqrt(d_k) into the Q projection
    wqkv = jnp.concatenate([wq * scale, wk, wv], axis=1).astype(jnp.bfloat16)  # (D, 3D)
    bqkv = jnp.concatenate([bq * scale, bk, bv], axis=1)                        # (1, 3D) f32
    wo3 = wo.reshape(n_heads, d_k, d_model).astype(jnp.bfloat16)                # (H, d_k, D)

    return (
        wqkv, bqkv,
        wo3, bo,
        w1.astype(jnp.bfloat16), b1,
        w2.astype(jnp.bfloat16), b2,
        ln_a, ln_b,
    )


if __name__ == "__main__":
    B, S = 2, 8
    d_model, n_heads, n_layers, d_ff = 32, 4, 2, 2048
    vocab_size, max_len = 100, 80

    root = jax.random.PRNGKey(0)
    k_emb, k_src, k_layers = jax.random.split(root, 3)
    layer_keys = jax.random.split(k_layers, n_layers)

    params = {
        "embed": 0.1 * jax.random.normal(k_emb, (vocab_size, d_model), jnp.float32),
        "pe": make_positional_encoding(max_len, d_model),
        "layers": [init_layer_params(k, d_model, n_heads, d_ff) for k in layer_keys],
        "norm_alpha": jnp.ones((1, d_model), jnp.float32),
        "norm_beta": jnp.zeros((1, d_model), jnp.float32),
    }

    src = jax.random.randint(k_src, (B, S), 0, vocab_size, dtype=jnp.int32)
    # Source padding mask (1 = keep, 0 = masked): batch 1 has its last 2 keys padded out.
    mask = jnp.ones((B, S, S), jnp.float32)
    mask = mask.at[1, :, S - 2:].set(0.0)

    out = jax.jit(encoder_forward)(src, mask, params)
    out = jax.block_until_ready(out)
    assert out.shape == (B, S, d_model)
    assert bool(jnp.all(jnp.isfinite(out)))
    print("KERNEL_OK")
</pallas_src>

<mosaic_0001>
module attributes {stable_mosaic.version = 11 : i64} {
  func.func @_encoder_layer_kernel(%arg0: i32, %arg1: memref<1x8x32xf32, #tpu.memory_space<vmem>>, %arg2: memref<1x8x8xf32, #tpu.memory_space<vmem>>, %arg3: memref<32x96xbf16, #tpu.memory_space<vmem>>, %arg4: memref<1x96xf32, #tpu.memory_space<vmem>>, %arg5: memref<4x8x32xbf16, #tpu.memory_space<vmem>>, %arg6: memref<1x32xf32, #tpu.memory_space<vmem>>, %arg7: memref<32x2048xbf16, #tpu.memory_space<vmem>>, %arg8: memref<1x2048xf32, #tpu.memory_space<vmem>>, %arg9: memref<2048x32xbf16, #tpu.memory_space<vmem>>, %arg10: memref<1x32xf32, #tpu.memory_space<vmem>>, %arg11: memref<1x32xf32, #tpu.memory_space<vmem>>, %arg12: memref<1x32xf32, #tpu.memory_space<vmem>>, %arg13: memref<1x32xf32, #tpu.memory_space<vmem>>, %arg14: memref<1x32xf32, #tpu.memory_space<vmem>>, %arg15: memref<1x8x32xf32, #tpu.memory_space<vmem>>) attributes {dimension_semantics = [#tpu.dimension_semantics<parallel>], iteration_bounds = array<i64: 2>, scalar_prefetch = 0 : i64, scratch_operands = 0 : i64, tpu.core_type = #tpu.core_type<tc>, window_params = [{transform_indices = @transform_0, window_bounds = array<i64: 1, 8, 32>}, {transform_indices = @transform_1, window_bounds = array<i64: 1, 8, 8>}, {pipeline_mode = #tpu.pipeline_mode<synchronous>, transform_indices = @transform_2, window_bounds = array<i64: 32, 96>}, {pipeline_mode = #tpu.pipeline_mode<synchronous>, transform_indices = @transform_3, window_bounds = array<i64: 1, 96>}, {pipeline_mode = #tpu.pipeline_mode<synchronous>, transform_indices = @transform_4, window_bounds = array<i64: 4, 8, 32>}, {pipeline_mode = #tpu.pipeline_mode<synchronous>, transform_indices = @transform_5, window_bounds = array<i64: 1, 32>}, {pipeline_mode = #tpu.pipeline_mode<synchronous>, transform_indices = @transform_6, window_bounds = array<i64: 32, 2048>}, {pipeline_mode = #tpu.pipeline_mode<synchronous>, transform_indices = @transform_7, window_bounds = array<i64: 1, 2048>}, {pipeline_mode = #tpu.pipeline_mode<synchronous>, transform_indices = @transform_8, window_bounds = array<i64: 2048, 32>}, {pipeline_mode = #tpu.pipeline_mode<synchronous>, transform_indices = @transform_9, window_bounds = array<i64: 1, 32>}, {pipeline_mode = #tpu.pipeline_mode<synchronous>, transform_indices = @transform_10, window_bounds = array<i64: 1, 32>}, {pipeline_mode = #tpu.pipeline_mode<synchronous>, transform_indices = @transform_11, window_bounds = array<i64: 1, 32>}, {pipeline_mode = #tpu.pipeline_mode<synchronous>, transform_indices = @transform_12, window_bounds = array<i64: 1, 32>}, {pipeline_mode = #tpu.pipeline_mode<synchronous>, transform_indices = @transform_13, window_bounds = array<i64: 1, 32>}, {transform_indices = @transform_14, window_bounds = array<i64: 1, 8, 32>}]} {
    %c0 = arith.constant 0 : index
    %c0_0 = arith.constant 0 : index
    %c0_1 = arith.constant 0 : index
    %0 = vector.load %arg1[%c0, %c0_0, %c0_1] : memref<1x8x32xf32, #tpu.memory_space<vmem>>, vector<1x8x32xf32>
    %1 = vector.shape_cast %0 : vector<1x8x32xf32> to vector<8x32xf32>
    %2 = arith.truncf %1 : vector<8x32xf32> to vector<8x32xbf16>
    %c0_2 = arith.constant 0 : index
    %c0_3 = arith.constant 0 : index
    %3 = vector.load %arg3[%c0_2, %c0_3] : memref<32x96xbf16, #tpu.memory_space<vmem>>, vector<32x96xbf16>
    %cst = arith.constant dense<0.000000e+00> : vector<8x96xf32>
    %4 = tpu.matmul %2, %3, %cst {dimension_numbers = #tpu.dot_dimension_numbers<[1], [0], [0], [1], [0, 0, 1, 1], [], []>} : vector<8x32xbf16>, vector<32x96xbf16>, vector<8x96xf32> -> vector<8x96xf32>
    %c0_4 = arith.constant 0 : index
    %c0_5 = arith.constant 0 : index
    %5 = vector.load %arg4[%c0_4, %c0_5] : memref<1x96xf32, #tpu.memory_space<vmem>>, vector<1x96xf32>
    %6 = vector.broadcast %5 : vector<1x96xf32> to vector<8x96xf32>
    %7 = arith.addf %4, %6 : vector<8x96xf32>
    %8 = arith.truncf %7 : vector<8x96xf32> to vector<8x96xbf16>
    %9 = vector.extract_strided_slice %8 {offsets = [0, 0], sizes = [8, 8], strides = [1, 1]} : vector<8x96xbf16> to vector<8x8xbf16>
    %10 = vector.extract_strided_slice %8 {offsets = [0, 8], sizes = [8, 8], strides = [1, 1]} : vector<8x96xbf16> to vector<8x8xbf16>
    %11 = vector.extract_strided_slice %8 {offsets = [0, 16], sizes = [8, 8], strides = [1, 1]} : vector<8x96xbf16> to vector<8x8xbf16>
    %12 = vector.extract_strided_slice %8 {offsets = [0, 24], sizes = [8, 8], strides = [1, 1]} : vector<8x96xbf16> to vector<8x8xbf16>
    %13 = vector.shape_cast %9 : vector<8x8xbf16> to vector<1x8x8xbf16>
    %14 = vector.shape_cast %10 : vector<8x8xbf16> to vector<1x8x8xbf16>
    %15 = vector.shape_cast %11 : vector<8x8xbf16> to vector<1x8x8xbf16>
    %16 = vector.shape_cast %12 : vector<8x8xbf16> to vector<1x8x8xbf16>
    %17 = tpu.concatenate %13, %14, %15, %16 in 0 : vector<1x8x8xbf16>, vector<1x8x8xbf16>, vector<1x8x8xbf16>, vector<1x8x8xbf16> -> vector<4x8x8xbf16>
    %18 = vector.extract_strided_slice %8 {offsets = [0, 32], sizes = [8, 8], strides = [1, 1]} : vector<8x96xbf16> to vector<8x8xbf16>
    %19 = vector.extract_strided_slice %8 {offsets = [0, 40], sizes = [8, 8], strides = [1, 1]} : vector<8x96xbf16> to vector<8x8xbf16>
    %20 = vector.extract_strided_slice %8 {offsets = [0, 48], sizes = [8, 8], strides = [1, 1]} : vector<8x96xbf16> to vector<8x8xbf16>
    %21 = vector.extract_strided_slice %8 {offsets = [0, 56], sizes = [8, 8], strides = [1, 1]} : vector<8x96xbf16> to vector<8x8xbf16>
    %22 = vector.shape_cast %18 : vector<8x8xbf16> to vector<1x8x8xbf16>
    %23 = vector.shape_cast %19 : vector<8x8xbf16> to vector<1x8x8xbf16>
    %24 = vector.shape_cast %20 : vector<8x8xbf16> to vector<1x8x8xbf16>
    %25 = vector.shape_cast %21 : vector<8x8xbf16> to vector<1x8x8xbf16>
    %26 = tpu.concatenate %22, %23, %24, %25 in 0 : vector<1x8x8xbf16>, vector<1x8x8xbf16>, vector<1x8x8xbf16>, vector<1x8x8xbf16> -> vector<4x8x8xbf16>
    %27 = vector.extract_strided_slice %8 {offsets = [0, 64], sizes = [8, 8], strides = [1, 1]} : vector<8x96xbf16> to vector<8x8xbf16>
    %28 = vector.extract_strided_slice %8 {offsets = [0, 72], sizes = [8, 8], strides = [1, 1]} : vector<8x96xbf16> to vector<8x8xbf16>
    %29 = vector.extract_strided_slice %8 {offsets = [0, 80], sizes = [8, 8], strides = [1, 1]} : vector<8x96xbf16> to vector<8x8xbf16>
    %30 = vector.extract_strided_slice %8 {offsets = [0, 88], sizes = [8, 8], strides = [1, 1]} : vector<8x96xbf16> to vector<8x8xbf16>
    %31 = vector.shape_cast %27 : vector<8x8xbf16> to vector<1x8x8xbf16>
    %32 = vector.shape_cast %28 : vector<8x8xbf16> to vector<1x8x8xbf16>
    %33 = vector.shape_cast %29 : vector<8x8xbf16> to vector<1x8x8xbf16>
    %34 = vector.shape_cast %30 : vector<8x8xbf16> to vector<1x8x8xbf16>
    %35 = tpu.concatenate %31, %32, %33, %34 in 0 : vector<1x8x8xbf16>, vector<1x8x8xbf16>, vector<1x8x8xbf16>, vector<1x8x8xbf16> -> vector<4x8x8xbf16>
    "tpu.trace_start"() <{level = 10 : i32, message = "hqe,hke->hqk"}> : () -> ()
    %cst_6 = arith.constant dense<0.000000e+00> : vector<4x8x8xf32>
    %36 = tpu.matmul %17, %26, %cst_6 {dimension_numbers = #tpu.dot_dimension_numbers<[2], [2], [1], [1], [0, 0, 0, 1, 1, 1], [0], [0]>} : vector<4x8x8xbf16>, vector<4x8x8xbf16>, vector<4x8x8xf32> -> vector<4x8x8xf32>
    "tpu.trace_stop"() : () -> ()
    %c0_7 = arith.constant 0 : index
    %c0_8 = arith.constant 0 : index
    %c0_9 = arith.constant 0 : index
    %37 = vector.load %arg2[%c0_7, %c0_8, %c0_9] : memref<1x8x8xf32, #tpu.memory_space<vmem>>, vector<1x8x8xf32>
    %38 = vector.shape_cast %37 : vector<1x8x8xf32> to vector<8x8xf32>
    %39 = vector.shape_cast %38 : vector<8x8xf32> to vector<1x8x8xf32>
    %40 = vector.broadcast %39 : vector<1x8x8xf32> to vector<4x8x8xf32>
    %41 = arith.addf %36, %40 : vector<4x8x8xf32>
    %cst_10 = arith.constant dense<0xFF800000> : vector<4x8xf32>
    %42 = vector.multi_reduction <maximumf>, %41, %cst_10 [2] : vector<4x8x8xf32> to vector<4x8xf32>
    %43 = vector.shape_cast %42 : vector<4x8xf32> to vector<4x8x1xf32>
    %44 = vector.broadcast %43 : vector<4x8x1xf32> to vector<4x8x8xf32>
    %45 = arith.subf %41, %44 : vector<4x8x8xf32>
    %46 = math.exp %45 : vector<4x8x8xf32>
    %cst_11 = arith.constant dense<0.000000e+00> : vector<4x8xf32>
    %47 = vector.multi_reduction <add>, %46, %cst_11 [2] : vector<4x8x8xf32> to vector<4x8xf32>
    %48 = vector.shape_cast %47 : vector<4x8xf32> to vector<4x8x1xf32>
    %49 = tpu.reciprocal %48 {approx = true} : vector<4x8x1xf32> -> vector<4x8x1xf32>
    %50 = vector.broadcast %49 : vector<4x8x1xf32> to vector<4x8x8xf32>
    %51 = arith.mulf %46, %50 : vector<4x8x8xf32>
    %52 = arith.truncf %51 : vector<4x8x8xf32> to vector<4x8x8xbf16>
    "tpu.trace_start"() <{level = 10 : i32, message = "hqk,hke->hqe"}> : () -> ()
    %cst_12 = arith.constant dense<0.000000e+00> : vector<4x8x8xf32>
    %53 = tpu.matmul %52, %35, %cst_12 {dimension_numbers = #tpu.dot_dimension_numbers<[2], [1], [1], [2], [0, 0, 0, 1, 1, 2], [0], [0]>} : vector<4x8x8xbf16>, vector<4x8x8xbf16>, vector<4x8x8xf32> -> vector<4x8x8xf32>
    "tpu.trace_stop"() : () -> ()
    %54 = arith.truncf %53 : vector<4x8x8xf32> to vector<4x8x8xbf16>
    %c0_13 = arith.constant 0 : index
    %c0_14 = arith.constant 0 : index
    %c0_15 = arith.constant 0 : index
    %55 = vector.load %arg5[%c0_13, %c0_14, %c0_15] : memref<4x8x32xbf16, #tpu.memory_space<vmem>>, vector<4x8x32xbf16>
    "tpu.trace_start"() <{level = 10 : i32, message = "hqe,hed->hqd"}> : () -> ()
    %cst_16 = arith.constant dense<0.000000e+00> : vector<4x8x32xf32>
    %56 = tpu.matmul %54, %55, %cst_16 {dimension_numbers = #tpu.dot_dimension_numbers<[2], [1], [1], [2], [0, 0, 0, 1, 1, 2], [0], [0]>} : vector<4x8x8xbf16>, vector<4x8x32xbf16>, vector<4x8x32xf32> -> vector<4x8x32xf32>
    "tpu.trace_stop"() : () -> ()
    %cst_17 = arith.constant dense<0.000000e+00> : vector<8x32xf32>
    %57 = vector.multi_reduction <add>, %56, %cst_17 [0] : vector<4x8x32xf32> to vector<8x32xf32>
    %58 = arith.addf %1, %57 : vector<8x32xf32>
    %c0_18 = arith.constant 0 : index
    %c0_19 = arith.constant 0 : index
    %59 = vector.load %arg6[%c0_18, %c0_19] : memref<1x32xf32, #tpu.memory_space<vmem>>, vector<1x32xf32>
    %60 = vector.broadcast %59 : vector<1x32xf32> to vector<8x32xf32>
    %61 = arith.addf %58, %60 : vector<8x32xf32>
    %62 = arith.truncf %61 : vector<8x32xf32> to vector<8x32xbf16>
    %c0_20 = arith.constant 0 : index
    %c0_21 = arith.constant 0 : index
    %63 = vector.load %arg7[%c0_20, %c0_21] : memref<32x2048xbf16, #tpu.memory_space<vmem>>, vector<32x2048xbf16>
    %cst_22 = arith.constant dense<0.000000e+00> : vector<8x2048xf32>
    %64 = tpu.matmul %62, %63, %cst_22 {dimension_numbers = #tpu.dot_dimension_numbers<[1], [0], [0], [1], [0, 0, 1, 1], [], []>} : vector<8x32xbf16>, vector<32x2048xbf16>, vector<8x2048xf32> -> vector<8x2048xf32>
    %c0_23 = arith.constant 0 : index
    %c0_24 = arith.constant 0 : index
    %65 = vector.load %arg8[%c0_23, %c0_24] : memref<1x2048xf32, #tpu.memory_space<vmem>>, vector<1x2048xf32>
    %66 = vector.broadcast %65 : vector<1x2048xf32> to vector<8x2048xf32>
    %67 = arith.addf %64, %66 : vector<8x2048xf32>
    %cst_25 = arith.constant 0.000000e+00 : f32
    %68 = vector.broadcast %cst_25 : f32 to vector<8x2048xf32>
    %69 = arith.maximumf %67, %68 : vector<8x2048xf32>
    %70 = arith.truncf %69 : vector<8x2048xf32> to vector<8x2048xbf16>
    %c0_26 = arith.constant 0 : index
    %c0_27 = arith.constant 0 : index
    %71 = vector.load %arg9[%c0_26, %c0_27] : memref<2048x32xbf16, #tpu.memory_space<vmem>>, vector<2048x32xbf16>
    %cst_28 = arith.constant dense<0.000000e+00> : vector<8x32xf32>
    %72 = tpu.matmul %70, %71, %cst_28 {dimension_numbers = #tpu.dot_dimension_numbers<[1], [0], [0], [1], [0, 0, 1, 1], [], []>} : vector<8x2048xbf16>, vector<2048x32xbf16>, vector<8x32xf32> -> vector<8x32xf32>
    %c0_29 = arith.constant 0 : index
    %c0_30 = arith.constant 0 : index
    %73 = vector.load %arg10[%c0_29, %c0_30] : memref<1x32xf32, #tpu.memory_space<vmem>>, vector<1x32xf32>
    %74 = vector.broadcast %73 : vector<1x32xf32> to vector<8x32xf32>
    %75 = arith.addf %72, %74 : vector<8x32xf32>
    %76 = arith.addf %61, %75 : vector<8x32xf32>
    %c0_31 = arith.constant 0 : index
    %c0_32 = arith.constant 0 : index
    %77 = vector.load %arg11[%c0_31, %c0_32] : memref<1x32xf32, #tpu.memory_space<vmem>>, vector<1x32xf32>
    %c0_33 = arith.constant 0 : index
    %c0_34 = arith.constant 0 : index
    %78 = vector.load %arg12[%c0_33, %c0_34] : memref<1x32xf32, #tpu.memory_space<vmem>>, vector<1x32xf32>
    %cst_35 = arith.constant dense<0.000000e+00> : vector<8xf32>
    %79 = vector.multi_reduction <add>, %76, %cst_35 [1] : vector<8x32xf32> to vector<8xf32>
    %80 = vector.shape_cast %79 : vector<8xf32> to vector<8x1xf32>
    %cst_36 = arith.constant 3.200000e+01 : f32
    %81 = vector.broadcast %cst_36 : f32 to vector<8x1xf32>
    %82 = arith.divf %80, %81 : vector<8x1xf32>
    %83 = vector.broadcast %82 : vector<8x1xf32> to vector<8x32xf32>
    %84 = arith.subf %76, %83 : vector<8x32xf32>
    %85 = arith.mulf %84, %84 : vector<8x32xf32>
    %cst_37 = arith.constant dense<0.000000e+00> : vector<8xf32>
    %86 = vector.multi_reduction <add>, %85, %cst_37 [1] : vector<8x32xf32> to vector<8xf32>
    %87 = vector.shape_cast %86 : vector<8xf32> to vector<8x1xf32>
    %cst_38 = arith.constant 0.0322580636 : f32
    %88 = vector.broadcast %cst_38 : f32 to vector<8x1xf32>
    %89 = arith.mulf %87, %88 : vector<8x1xf32>
    %90 = math.sqrt %89 : vector<8x1xf32>
    %cst_39 = arith.constant 9.99999997E-7 : f32
    %91 = vector.broadcast %cst_39 : f32 to vector<8x1xf32>
    %92 = arith.addf %90, %91 : vector<8x1xf32>
    %93 = tpu.reciprocal %92 {approx = true} : vector<8x1xf32> -> vector<8x1xf32>
    %94 = vector.broadcast %82 : vector<8x1xf32> to vector<8x32xf32>
    %95 = arith.subf %76, %94 : vector<8x32xf32>
    %96 = vector.broadcast %77 : vector<1x32xf32> to vector<8x32xf32>
    %97 = arith.mulf %96, %95 : vector<8x32xf32>
    %98 = vector.broadcast %93 : vector<8x1xf32> to vector<8x32xf32>
    %99 = arith.mulf %97, %98 : vector<8x32xf32>
    %100 = vector.broadcast %78 : vector<1x32xf32> to vector<8x32xf32>
    %101 = arith.addf %99, %100 : vector<8x32xf32>
    %c0_40 = arith.constant 0 : index
    %c0_41 = arith.constant 0 : index
    %c0_42 = arith.constant 0 : index
    %102 = vector.load %arg15[%c0_40, %c0_41, %c0_42] : memref<1x8x32xf32, #tpu.memory_space<vmem>>, vector<1x8x32xf32>
    %103 = vector.shape_cast %102 : vector<1x8x32xf32> to vector<8x32xf32>
    %104 = vector.shape_cast %101 : vector<8x32xf32> to vector<1x8x32xf32>
    tpu.vector_store %arg15[%c0_40, %c0_41, %c0_42], %104 {strides = array<i32>} : memref<1x8x32xf32, #tpu.memory_space<vmem>>, vector<1x8x32xf32>,
    return
  }
  func.func @transform_0(%arg0: i32) -> (i32, i32, i32) {
    %c0_i32 = arith.constant 0 : i32
    %c0_i32_0 = arith.constant 0 : i32
    %c0_i32_1 = arith.constant 0 : i32
    return %arg0, %c0_i32, %c0_i32_0 : i32, i32, i32
  }
  func.func @transform_1(%arg0: i32) -> (i32, i32, i32) {
    %c0_i32 = arith.constant 0 : i32
    %c0_i32_0 = arith.constant 0 : i32
    %c0_i32_1 = arith.constant 0 : i32
    return %arg0, %c0_i32, %c0_i32_0 : i32, i32, i32
  }
  func.func @transform_2(%arg0: i32) -> (i32, i32) {
    %c0_i32 = arith.constant 0 : i32
    %c0_i32_0 = arith.constant 0 : i32
    %c0_i32_1 = arith.constant 0 : i32
    return %c0_i32, %c0_i32_0 : i32, i32
  }
  func.func @transform_3(%arg0: i32) -> (i32, i32) {
    %c0_i32 = arith.constant 0 : i32
    %c0_i32_0 = arith.constant 0 : i32
    %c0_i32_1 = arith.constant 0 : i32
    return %c0_i32, %c0_i32_0 : i32, i32
  }
  func.func @transform_4(%arg0: i32) -> (i32, i32, i32) {
    %c0_i32 = arith.constant 0 : i32
    %c0_i32_0 = arith.constant 0 : i32
    %c0_i32_1 = arith.constant 0 : i32
    %c0_i32_2 = arith.constant 0 : i32
    return %c0_i32, %c0_i32_0, %c0_i32_1 : i32, i32, i32
  }
  func.func @transform_5(%arg0: i32) -> (i32, i32) {
    %c0_i32 = arith.constant 0 : i32
    %c0_i32_0 = arith.constant 0 : i32
    %c0_i32_1 = arith.constant 0 : i32
    return %c0_i32, %c0_i32_0 : i32, i32
  }
  func.func @transform_6(%arg0: i32) -> (i32, i32) {
    %c0_i32 = arith.constant 0 : i32
    %c0_i32_0 = arith.constant 0 : i32
    %c0_i32_1 = arith.constant 0 : i32
    return %c0_i32, %c0_i32_0 : i32, i32
  }
  func.func @transform_7(%arg0: i32) -> (i32, i32) {
    %c0_i32 = arith.constant 0 : i32
    %c0_i32_0 = arith.constant 0 : i32
    %c0_i32_1 = arith.constant 0 : i32
    return %c0_i32, %c0_i32_0 : i32, i32
  }
  func.func @transform_8(%arg0: i32) -> (i32, i32) {
    %c0_i32 = arith.constant 0 : i32
    %c0_i32_0 = arith.constant 0 : i32
    %c0_i32_1 = arith.constant 0 : i32
    return %c0_i32, %c0_i32_0 : i32, i32
  }
  func.func @transform_9(%arg0: i32) -> (i32, i32) {
    %c0_i32 = arith.constant 0 : i32
    %c0_i32_0 = arith.constant 0 : i32
    %c0_i32_1 = arith.constant 0 : i32
    return %c0_i32, %c0_i32_0 : i32, i32
  }
  func.func @transform_10(%arg0: i32) -> (i32, i32) {
    %c0_i32 = arith.constant 0 : i32
    %c0_i32_0 = arith.constant 0 : i32
    %c0_i32_1 = arith.constant 0 : i32
    return %c0_i32, %c0_i32_0 : i32, i32
  }
  func.func @transform_11(%arg0: i32) -> (i32, i32) {
    %c0_i32 = arith.constant 0 : i32
    %c0_i32_0 = arith.constant 0 : i32
    %c0_i32_1 = arith.constant 0 : i32
    return %c0_i32, %c0_i32_0 : i32, i32
  }
  func.func @transform_12(%arg0: i32) -> (i32, i32) {
    %c0_i32 = arith.constant 0 : i32
    %c0_i32_0 = arith.constant 0 : i32
    %c0_i32_1 = arith.constant 0 : i32
    return %c0_i32, %c0_i32_0 : i32, i32
  }
  func.func @transform_13(%arg0: i32) -> (i32, i32) {
    %c0_i32 = arith.constant 0 : i32
    %c0_i32_0 = arith.constant 0 : i32
    %c0_i32_1 = arith.constant 0 : i32
    return %c0_i32, %c0_i32_0 : i32, i32
  }
  func.func @transform_14(%arg0: i32) -> (i32, i32, i32) {
    %c0_i32 = arith.constant 0 : i32
    %c0_i32_0 = arith.constant 0 : i32
    %c0_i32_1 = arith.constant 0 : i32
    return %arg0, %c0_i32, %c0_i32_0 : i32, i32, i32
  }
}

module attributes {stable_mosaic.version = 11 : i64} {
  func.func @_encoder_layer_kernel(%arg0: i32, %arg1: memref<1x8x32xf32, #tpu.memory_space<vmem>>, %arg2: memref<1x8x8xf32, #tpu.memory_space<vmem>>, %arg3: memref<32x96xbf16, #tpu.memory_space<vmem>>, %arg4: memref<1x96xf32, #tpu.memory_space<vmem>>, %arg5: memref<4x8x32xbf16, #tpu.memory_space<vmem>>, %arg6: memref<1x32xf32, #tpu.memory_space<vmem>>, %arg7: memref<32x2048xbf16, #tpu.memory_space<vmem>>, %arg8: memref<1x2048xf32, #tpu.memory_space<vmem>>, %arg9: memref<2048x32xbf16, #tpu.memory_space<vmem>>, %arg10: memref<1x32xf32, #tpu.memory_space<vmem>>, %arg11: memref<1x32xf32, #tpu.memory_space<vmem>>, %arg12: memref<1x32xf32, #tpu.memory_space<vmem>>, %arg13: memref<1x32xf32, #tpu.memory_space<vmem>>, %arg14: memref<1x32xf32, #tpu.memory_space<vmem>>, %arg15: memref<1x8x32xf32, #tpu.memory_space<vmem>>) attributes {dimension_semantics = [#tpu.dimension_semantics<parallel>], iteration_bounds = array<i64: 2>, scalar_prefetch = 0 : i64, scratch_operands = 0 : i64, tpu.core_type = #tpu.core_type<tc>, window_params = [{transform_indices = @transform_0, window_bounds = array<i64: 1, 8, 32>}, {transform_indices = @transform_1, window_bounds = array<i64: 1, 8, 8>}, {pipeline_mode = #tpu.pipeline_mode<synchronous>, transform_indices = @transform_2, window_bounds = array<i64: 32, 96>}, {pipeline_mode = #tpu.pipeline_mode<synchronous>, transform_indices = @transform_3, window_bounds = array<i64: 1, 96>}, {pipeline_mode = #tpu.pipeline_mode<synchronous>, transform_indices = @transform_4, window_bounds = array<i64: 4, 8, 32>}, {pipeline_mode = #tpu.pipeline_mode<synchronous>, transform_indices = @transform_5, window_bounds = array<i64: 1, 32>}, {pipeline_mode = #tpu.pipeline_mode<synchronous>, transform_indices = @transform_6, window_bounds = array<i64: 32, 2048>}, {pipeline_mode = #tpu.pipeline_mode<synchronous>, transform_indices = @transform_7, window_bounds = array<i64: 1, 2048>}, {pipeline_mode = #tpu.pipeline_mode<synchronous>, transform_indices = @transform_8, window_bounds = array<i64: 2048, 32>}, {pipeline_mode = #tpu.pipeline_mode<synchronous>, transform_indices = @transform_9, window_bounds = array<i64: 1, 32>}, {pipeline_mode = #tpu.pipeline_mode<synchronous>, transform_indices = @transform_10, window_bounds = array<i64: 1, 32>}, {pipeline_mode = #tpu.pipeline_mode<synchronous>, transform_indices = @transform_11, window_bounds = array<i64: 1, 32>}, {pipeline_mode = #tpu.pipeline_mode<synchronous>, transform_indices = @transform_12, window_bounds = array<i64: 1, 32>}, {pipeline_mode = #tpu.pipeline_mode<synchronous>, transform_indices = @transform_13, window_bounds = array<i64: 1, 32>}, {transform_indices = @transform_14, window_bounds = array<i64: 1, 8, 32>}]} {
    %c0 = arith.constant 0 : index
    %c0_0 = arith.constant 0 : index
    %c0_1 = arith.constant 0 : index
    %0 = vector.load %arg1[%c0, %c0_0, %c0_1] : memref<1x8x32xf32, #tpu.memory_space<vmem>>, vector<1x8x32xf32>
    %1 = vector.shape_cast %0 : vector<1x8x32xf32> to vector<8x32xf32>
    %2 = arith.truncf %1 : vector<8x32xf32> to vector<8x32xbf16>
    %c0_2 = arith.constant 0 : index
    %c0_3 = arith.constant 0 : index
    %3 = vector.load %arg3[%c0_2, %c0_3] : memref<32x96xbf16, #tpu.memory_space<vmem>>, vector<32x96xbf16>
    %cst = arith.constant dense<0.000000e+00> : vector<8x96xf32>
    %4 = tpu.matmul %2, %3, %cst {dimension_numbers = #tpu.dot_dimension_numbers<[1], [0], [0], [1], [0, 0, 1, 1], [], []>} : vector<8x32xbf16>, vector<32x96xbf16>, vector<8x96xf32> -> vector<8x96xf32>
    %c0_4 = arith.constant 0 : index
    %c0_5 = arith.constant 0 : index
    %5 = vector.load %arg4[%c0_4, %c0_5] : memref<1x96xf32, #tpu.memory_space<vmem>>, vector<1x96xf32>
    %6 = vector.broadcast %5 : vector<1x96xf32> to vector<8x96xf32>
    %7 = arith.addf %4, %6 : vector<8x96xf32>
    %8 = arith.truncf %7 : vector<8x96xf32> to vector<8x96xbf16>
    %9 = vector.extract_strided_slice %8 {offsets = [0, 0], sizes = [8, 8], strides = [1, 1]} : vector<8x96xbf16> to vector<8x8xbf16>
    %10 = vector.extract_strided_slice %8 {offsets = [0, 8], sizes = [8, 8], strides = [1, 1]} : vector<8x96xbf16> to vector<8x8xbf16>
    %11 = vector.extract_strided_slice %8 {offsets = [0, 16], sizes = [8, 8], strides = [1, 1]} : vector<8x96xbf16> to vector<8x8xbf16>
    %12 = vector.extract_strided_slice %8 {offsets = [0, 24], sizes = [8, 8], strides = [1, 1]} : vector<8x96xbf16> to vector<8x8xbf16>
    %13 = vector.shape_cast %9 : vector<8x8xbf16> to vector<1x8x8xbf16>
    %14 = vector.shape_cast %10 : vector<8x8xbf16> to vector<1x8x8xbf16>
    %15 = vector.shape_cast %11 : vector<8x8xbf16> to vector<1x8x8xbf16>
    %16 = vector.shape_cast %12 : vector<8x8xbf16> to vector<1x8x8xbf16>
    %17 = tpu.concatenate %13, %14, %15, %16 in 0 : vector<1x8x8xbf16>, vector<1x8x8xbf16>, vector<1x8x8xbf16>, vector<1x8x8xbf16> -> vector<4x8x8xbf16>
    %18 = vector.extract_strided_slice %8 {offsets = [0, 32], sizes = [8, 8], strides = [1, 1]} : vector<8x96xbf16> to vector<8x8xbf16>
    %19 = vector.extract_strided_slice %8 {offsets = [0, 40], sizes = [8, 8], strides = [1, 1]} : vector<8x96xbf16> to vector<8x8xbf16>
    %20 = vector.extract_strided_slice %8 {offsets = [0, 48], sizes = [8, 8], strides = [1, 1]} : vector<8x96xbf16> to vector<8x8xbf16>
    %21 = vector.extract_strided_slice %8 {offsets = [0, 56], sizes = [8, 8], strides = [1, 1]} : vector<8x96xbf16> to vector<8x8xbf16>
    %22 = vector.shape_cast %18 : vector<8x8xbf16> to vector<1x8x8xbf16>
    %23 = vector.shape_cast %19 : vector<8x8xbf16> to vector<1x8x8xbf16>
    %24 = vector.shape_cast %20 : vector<8x8xbf16> to vector<1x8x8xbf16>
    %25 = vector.shape_cast %21 : vector<8x8xbf16> to vector<1x8x8xbf16>
    %26 = tpu.concatenate %22, %23, %24, %25 in 0 : vector<1x8x8xbf16>, vector<1x8x8xbf16>, vector<1x8x8xbf16>, vector<1x8x8xbf16> -> vector<4x8x8xbf16>
    %27 = vector.extract_strided_slice %8 {offsets = [0, 64], sizes = [8, 8], strides = [1, 1]} : vector<8x96xbf16> to vector<8x8xbf16>
    %28 = vector.extract_strided_slice %8 {offsets = [0, 72], sizes = [8, 8], strides = [1, 1]} : vector<8x96xbf16> to vector<8x8xbf16>
    %29 = vector.extract_strided_slice %8 {offsets = [0, 80], sizes = [8, 8], strides = [1, 1]} : vector<8x96xbf16> to vector<8x8xbf16>
    %30 = vector.extract_strided_slice %8 {offsets = [0, 88], sizes = [8, 8], strides = [1, 1]} : vector<8x96xbf16> to vector<8x8xbf16>
    %31 = vector.shape_cast %27 : vector<8x8xbf16> to vector<1x8x8xbf16>
    %32 = vector.shape_cast %28 : vector<8x8xbf16> to vector<1x8x8xbf16>
    %33 = vector.shape_cast %29 : vector<8x8xbf16> to vector<1x8x8xbf16>
    %34 = vector.shape_cast %30 : vector<8x8xbf16> to vector<1x8x8xbf16>
    %35 = tpu.concatenate %31, %32, %33, %34 in 0 : vector<1x8x8xbf16>, vector<1x8x8xbf16>, vector<1x8x8xbf16>, vector<1x8x8xbf16> -> vector<4x8x8xbf16>
    "tpu.trace_start"() <{level = 10 : i32, message = "hqe,hke->hqk"}> : () -> ()
    %cst_6 = arith.constant dense<0.000000e+00> : vector<4x8x8xf32>
    %36 = tpu.matmul %17, %26, %cst_6 {dimension_numbers = #tpu.dot_dimension_numbers<[2], [2], [1], [1], [0, 0, 0, 1, 1, 1], [0], [0]>} : vector<4x8x8xbf16>, vector<4x8x8xbf16>, vector<4x8x8xf32> -> vector<4x8x8xf32>
    "tpu.trace_stop"() : () -> ()
    %c0_7 = arith.constant 0 : index
    %c0_8 = arith.constant 0 : index
    %c0_9 = arith.constant 0 : index
    %37 = vector.load %arg2[%c0_7, %c0_8, %c0_9] : memref<1x8x8xf32, #tpu.memory_space<vmem>>, vector<1x8x8xf32>
    %38 = vector.shape_cast %37 : vector<1x8x8xf32> to vector<8x8xf32>
    %39 = vector.shape_cast %38 : vector<8x8xf32> to vector<1x8x8xf32>
    %40 = vector.broadcast %39 : vector<1x8x8xf32> to vector<4x8x8xf32>
    %41 = arith.addf %36, %40 : vector<4x8x8xf32>
    %cst_10 = arith.constant dense<0xFF800000> : vector<4x8xf32>
    %42 = vector.multi_reduction <maximumf>, %41, %cst_10 [2] : vector<4x8x8xf32> to vector<4x8xf32>
    %43 = vector.shape_cast %42 : vector<4x8xf32> to vector<4x8x1xf32>
    %44 = vector.broadcast %43 : vector<4x8x1xf32> to vector<4x8x8xf32>
    %45 = arith.subf %41, %44 : vector<4x8x8xf32>
    %46 = math.exp %45 : vector<4x8x8xf32>
    %cst_11 = arith.constant dense<0.000000e+00> : vector<4x8xf32>
    %47 = vector.multi_reduction <add>, %46, %cst_11 [2] : vector<4x8x8xf32> to vector<4x8xf32>
    %48 = vector.shape_cast %47 : vector<4x8xf32> to vector<4x8x1xf32>
    %49 = tpu.reciprocal %48 {approx = true} : vector<4x8x1xf32> -> vector<4x8x1xf32>
    %50 = vector.broadcast %49 : vector<4x8x1xf32> to vector<4x8x8xf32>
    %51 = arith.mulf %46, %50 : vector<4x8x8xf32>
    %52 = arith.truncf %51 : vector<4x8x8xf32> to vector<4x8x8xbf16>
    "tpu.trace_start"() <{level = 10 : i32, message = "hqk,hke->hqe"}> : () -> ()
    %cst_12 = arith.constant dense<0.000000e+00> : vector<4x8x8xf32>
    %53 = tpu.matmul %52, %35, %cst_12 {dimension_numbers = #tpu.dot_dimension_numbers<[2], [1], [1], [2], [0, 0, 0, 1, 1, 2], [0], [0]>} : vector<4x8x8xbf16>, vector<4x8x8xbf16>, vector<4x8x8xf32> -> vector<4x8x8xf32>
    "tpu.trace_stop"() : () -> ()
    %54 = arith.truncf %53 : vector<4x8x8xf32> to vector<4x8x8xbf16>
    %c0_13 = arith.constant 0 : index
    %c0_14 = arith.constant 0 : index
    %c0_15 = arith.constant 0 : index
    %55 = vector.load %arg5[%c0_13, %c0_14, %c0_15] : memref<4x8x32xbf16, #tpu.memory_space<vmem>>, vector<4x8x32xbf16>
    "tpu.trace_start"() <{level = 10 : i32, message = "hqe,hed->hqd"}> : () -> ()
    %cst_16 = arith.constant dense<0.000000e+00> : vector<4x8x32xf32>
    %56 = tpu.matmul %54, %55, %cst_16 {dimension_numbers = #tpu.dot_dimension_numbers<[2], [1], [1], [2], [0, 0, 0, 1, 1, 2], [0], [0]>} : vector<4x8x8xbf16>, vector<4x8x32xbf16>, vector<4x8x32xf32> -> vector<4x8x32xf32>
    "tpu.trace_stop"() : () -> ()
    %cst_17 = arith.constant dense<0.000000e+00> : vector<8x32xf32>
    %57 = vector.multi_reduction <add>, %56, %cst_17 [0] : vector<4x8x32xf32> to vector<8x32xf32>
    %58 = arith.addf %1, %57 : vector<8x32xf32>
    %c0_18 = arith.constant 0 : index
    %c0_19 = arith.constant 0 : index
    %59 = vector.load %arg6[%c0_18, %c0_19] : memref<1x32xf32, #tpu.memory_space<vmem>>, vector<1x32xf32>
    %60 = vector.broadcast %59 : vector<1x32xf32> to vector<8x32xf32>
    %61 = arith.addf %58, %60 : vector<8x32xf32>
    %62 = arith.truncf %61 : vector<8x32xf32> to vector<8x32xbf16>
    %c0_20 = arith.constant 0 : index
    %c0_21 = arith.constant 0 : index
    %63 = vector.load %arg7[%c0_20, %c0_21] : memref<32x2048xbf16, #tpu.memory_space<vmem>>, vector<32x2048xbf16>
    %cst_22 = arith.constant dense<0.000000e+00> : vector<8x2048xf32>
    %64 = tpu.matmul %62, %63, %cst_22 {dimension_numbers = #tpu.dot_dimension_numbers<[1], [0], [0], [1], [0, 0, 1, 1], [], []>} : vector<8x32xbf16>, vector<32x2048xbf16>, vector<8x2048xf32> -> vector<8x2048xf32>
    %c0_23 = arith.constant 0 : index
    %c0_24 = arith.constant 0 : index
    %65 = vector.load %arg8[%c0_23, %c0_24] : memref<1x2048xf32, #tpu.memory_space<vmem>>, vector<1x2048xf32>
    %66 = vector.broadcast %65 : vector<1x2048xf32> to vector<8x2048xf32>
    %67 = arith.addf %64, %66 : vector<8x2048xf32>
    %cst_25 = arith.constant 0.000000e+00 : f32
    %68 = vector.broadcast %cst_25 : f32 to vector<8x2048xf32>
    %69 = arith.maximumf %67, %68 : vector<8x2048xf32>
    %70 = arith.truncf %69 : vector<8x2048xf32> to vector<8x2048xbf16>
    %c0_26 = arith.constant 0 : index
    %c0_27 = arith.constant 0 : index
    %71 = vector.load %arg9[%c0_26, %c0_27] : memref<2048x32xbf16, #tpu.memory_space<vmem>>, vector<2048x32xbf16>
    %cst_28 = arith.constant dense<0.000000e+00> : vector<8x32xf32>
    %72 = tpu.matmul %70, %71, %cst_28 {dimension_numbers = #tpu.dot_dimension_numbers<[1], [0], [0], [1], [0, 0, 1, 1], [], []>} : vector<8x2048xbf16>, vector<2048x32xbf16>, vector<8x32xf32> -> vector<8x32xf32>
    %c0_29 = arith.constant 0 : index
    %c0_30 = arith.constant 0 : index
    %73 = vector.load %arg10[%c0_29, %c0_30] : memref<1x32xf32, #tpu.memory_space<vmem>>, vector<1x32xf32>
    %74 = vector.broadcast %73 : vector<1x32xf32> to vector<8x32xf32>
    %75 = arith.addf %72, %74 : vector<8x32xf32>
    %76 = arith.addf %61, %75 : vector<8x32xf32>
    %c0_31 = arith.constant 0 : index
    %c0_32 = arith.constant 0 : index
    %77 = vector.load %arg11[%c0_31, %c0_32] : memref<1x32xf32, #tpu.memory_space<vmem>>, vector<1x32xf32>
    %c0_33 = arith.constant 0 : index
    %c0_34 = arith.constant 0 : index
    %78 = vector.load %arg12[%c0_33, %c0_34] : memref<1x32xf32, #tpu.memory_space<vmem>>, vector<1x32xf32>
    %cst_35 = arith.constant dense<0.000000e+00> : vector<8xf32>
    %79 = vector.multi_reduction <add>, %76, %cst_35 [1] : vector<8x32xf32> to vector<8xf32>
    %80 = vector.shape_cast %79 : vector<8xf32> to vector<8x1xf32>
    %cst_36 = arith.constant 3.200000e+01 : f32
    %81 = vector.broadcast %cst_36 : f32 to vector<8x1xf32>
    %82 = arith.divf %80, %81 : vector<8x1xf32>
    %83 = vector.broadcast %82 : vector<8x1xf32> to vector<8x32xf32>
    %84 = arith.subf %76, %83 : vector<8x32xf32>
    %85 = arith.mulf %84, %84 : vector<8x32xf32>
    %cst_37 = arith.constant dense<0.000000e+00> : vector<8xf32>
    %86 = vector.multi_reduction <add>, %85, %cst_37 [1] : vector<8x32xf32> to vector<8xf32>
    %87 = vector.shape_cast %86 : vector<8xf32> to vector<8x1xf32>
    %cst_38 = arith.constant 0.0322580636 : f32
    %88 = vector.broadcast %cst_38 : f32 to vector<8x1xf32>
    %89 = arith.mulf %87, %88 : vector<8x1xf32>
    %90 = math.sqrt %89 : vector<8x1xf32>
    %cst_39 = arith.constant 9.99999997E-7 : f32
    %91 = vector.broadcast %cst_39 : f32 to vector<8x1xf32>
    %92 = arith.addf %90, %91 : vector<8x1xf32>
    %93 = tpu.reciprocal %92 {approx = true} : vector<8x1xf32> -> vector<8x1xf32>
    %94 = vector.broadcast %82 : vector<8x1xf32> to vector<8x32xf32>
    %95 = arith.subf %76, %94 : vector<8x32xf32>
    %96 = vector.broadcast %77 : vector<1x32xf32> to vector<8x32xf32>
    %97 = arith.mulf %96, %95 : vector<8x32xf32>
    %98 = vector.broadcast %93 : vector<8x1xf32> to vector<8x32xf32>
    %99 = arith.mulf %97, %98 : vector<8x32xf32>
    %100 = vector.broadcast %78 : vector<1x32xf32> to vector<8x32xf32>
    %101 = arith.addf %99, %100 : vector<8x32xf32>
    %c0_40 = arith.constant 0 : index
    %c0_41 = arith.constant 0 : index
    %102 = vector.load %arg13[%c0_40, %c0_41] : memref<1x32xf32, #tpu.memory_space<vmem>>, vector<1x32xf32>
    %c0_42 = arith.constant 0 : index
    %c0_43 = arith.constant 0 : index
    %103 = vector.load %arg14[%c0_42, %c0_43] : memref<1x32xf32, #tpu.memory_space<vmem>>, vector<1x32xf32>
    %cst_44 = arith.constant dense<0.000000e+00> : vector<8xf32>
    %104 = vector.multi_reduction <add>, %101, %cst_44 [1] : vector<8x32xf32> to vector<8xf32>
    %105 = vector.shape_cast %104 : vector<8xf32> to vector<8x1xf32>
    %cst_45 = arith.constant 3.200000e+01 : f32
    %106 = vector.broadcast %cst_45 : f32 to vector<8x1xf32>
    %107 = arith.divf %105, %106 : vector<8x1xf32>
    %108 = vector.broadcast %107 : vector<8x1xf32> to vector<8x32xf32>
    %109 = arith.subf %101, %108 : vector<8x32xf32>
    %110 = arith.mulf %109, %109 : vector<8x32xf32>
    %cst_46 = arith.constant dense<0.000000e+00> : vector<8xf32>
    %111 = vector.multi_reduction <add>, %110, %cst_46 [1] : vector<8x32xf32> to vector<8xf32>
    %112 = vector.shape_cast %111 : vector<8xf32> to vector<8x1xf32>
    %cst_47 = arith.constant 0.0322580636 : f32
    %113 = vector.broadcast %cst_47 : f32 to vector<8x1xf32>
    %114 = arith.mulf %112, %113 : vector<8x1xf32>
    %115 = math.sqrt %114 : vector<8x1xf32>
    %cst_48 = arith.constant 9.99999997E-7 : f32
    %116 = vector.broadcast %cst_48 : f32 to vector<8x1xf32>
    %117 = arith.addf %115, %116 : vector<8x1xf32>
    %118 = tpu.reciprocal %117 {approx = true} : vector<8x1xf32> -> vector<8x1xf32>
    %119 = vector.broadcast %107 : vector<8x1xf32> to vector<8x32xf32>
    %120 = arith.subf %101, %119 : vector<8x32xf32>
    %121 = vector.broadcast %102 : vector<1x32xf32> to vector<8x32xf32>
    %122 = arith.mulf %121, %120 : vector<8x32xf32>
    %123 = vector.broadcast %118 : vector<8x1xf32> to vector<8x32xf32>
    %124 = arith.mulf %122, %123 : vector<8x32xf32>
    %125 = vector.broadcast %103 : vector<1x32xf32> to vector<8x32xf32>
    %126 = arith.addf %124, %125 : vector<8x32xf32>
    %c0_49 = arith.constant 0 : index
    %c0_50 = arith.constant 0 : index
    %c0_51 = arith.constant 0 : index
    %127 = vector.load %arg15[%c0_49, %c0_50, %c0_51] : memref<1x8x32xf32, #tpu.memory_space<vmem>>, vector<1x8x32xf32>
    %128 = vector.shape_cast %127 : vector<1x8x32xf32> to vector<8x32xf32>
    %129 = vector.shape_cast %126 : vector<8x32xf32> to vector<1x8x32xf32>
    tpu.vector_store %arg15[%c0_49, %c0_50, %c0_51], %129 {strides = array<i32>} : memref<1x8x32xf32, #tpu.memory_space<vmem>>, vector<1x8x32xf32>,
    return
  }
  func.func @transform_0(%arg0: i32) -> (i32, i32, i32) {
    %c0_i32 = arith.constant 0 : i32
    %c0_i32_0 = arith.constant 0 : i32
    %c0_i32_1 = arith.constant 0 : i32
    return %arg0, %c0_i32, %c0_i32_0 : i32, i32, i32
  }
  func.func @transform_1(%arg0: i32) -> (i32, i32, i32) {
    %c0_i32 = arith.constant 0 : i32
    %c0_i32_0 = arith.constant 0 : i32
    %c0_i32_1 = arith.constant 0 : i32
    return %arg0, %c0_i32, %c0_i32_0 : i32, i32, i32
  }
  func.func @transform_2(%arg0: i32) -> (i32, i32) {
    %c0_i32 = arith.constant 0 : i32
    %c0_i32_0 = arith.constant 0 : i32
    %c0_i32_1 = arith.constant 0 : i32
    return %c0_i32, %c0_i32_0 : i32, i32
  }
  func.func @transform_3(%arg0: i32) -> (i32, i32) {
    %c0_i32 = arith.constant 0 : i32
    %c0_i32_0 = arith.constant 0 : i32
    %c0_i32_1 = arith.constant 0 : i32
    return %c0_i32, %c0_i32_0 : i32, i32
  }
  func.func @transform_4(%arg0: i32) -> (i32, i32, i32) {
    %c0_i32 = arith.constant 0 : i32
    %c0_i32_0 = arith.constant 0 : i32
    %c0_i32_1 = arith.constant 0 : i32
    %c0_i32_2 = arith.constant 0 : i32
    return %c0_i32, %c0_i32_0, %c0_i32_1 : i32, i32, i32
  }
  func.func @transform_5(%arg0: i32) -> (i32, i32) {
    %c0_i32 = arith.constant 0 : i32
    %c0_i32_0 = arith.constant 0 : i32
    %c0_i32_1 = arith.constant 0 : i32
    return %c0_i32, %c0_i32_0 : i32, i32
  }
  func.func @transform_6(%arg0: i32) -> (i32, i32) {
    %c0_i32 = arith.constant 0 : i32
    %c0_i32_0 = arith.constant 0 : i32
    %c0_i32_1 = arith.constant 0 : i32
    return %c0_i32, %c0_i32_0 : i32, i32
  }
  func.func @transform_7(%arg0: i32) -> (i32, i32) {
    %c0_i32 = arith.constant 0 : i32
    %c0_i32_0 = arith.constant 0 : i32
    %c0_i32_1 = arith.constant 0 : i32
    return %c0_i32, %c0_i32_0 : i32, i32
  }
  func.func @transform_8(%arg0: i32) -> (i32, i32) {
    %c0_i32 = arith.constant 0 : i32
    %c0_i32_0 = arith.constant 0 : i32
    %c0_i32_1 = arith.constant 0 : i32
    return %c0_i32, %c0_i32_0 : i32, i32
  }
  func.func @transform_9(%arg0: i32) -> (i32, i32) {
    %c0_i32 = arith.constant 0 : i32
    %c0_i32_0 = arith.constant 0 : i32
    %c0_i32_1 = arith.constant 0 : i32
    return %c0_i32, %c0_i32_0 : i32, i32
  }
  func.func @transform_10(%arg0: i32) -> (i32, i32) {
    %c0_i32 = arith.constant 0 : i32
    %c0_i32_0 = arith.constant 0 : i32
    %c0_i32_1 = arith.constant 0 : i32
    return %c0_i32, %c0_i32_0 : i32, i32
  }
  func.func @transform_11(%arg0: i32) -> (i32, i32) {
    %c0_i32 = arith.constant 0 : i32
    %c0_i32_0 = arith.constant 0 : i32
    %c0_i32_1 = arith.constant 0 : i32
    return %c0_i32, %c0_i32_0 : i32, i32
  }
  func.func @transform_12(%arg0: i32) -> (i32, i32) {
    %c0_i32 = arith.constant 0 : i32
    %c0_i32_0 = arith.constant 0 : i32
    %c0_i32_1 = arith.constant 0 : i32
    return %c0_i32, %c0_i32_0 : i32, i32
  }
  func.func @transform_13(%arg0: i32) -> (i32, i32) {
    %c0_i32 = arith.constant 0 : i32
    %c0_i32_0 = arith.constant 0 : i32
    %c0_i32_1 = arith.constant 0 : i32
    return %c0_i32, %c0_i32_0 : i32, i32
  }
  func.func @transform_14(%arg0: i32) -> (i32, i32, i32) {
    %c0_i32 = arith.constant 0 : i32
    %c0_i32_0 = arith.constant 0 : i32
    %c0_i32_1 = arith.constant 0 : i32
    return %arg0, %c0_i32, %c0_i32_0 : i32, i32, i32
  }
}

</mosaic_0001>

<llo_original>
// kernel: encoder_forward.3
$region0: #{encoder_forward.3}
  #allocation0 [shape = 'u32[]', space=smem, size = 0x4, offset = 0x4, fixed_abs, tag = 'smem constant byte address 0x4 - core index']
  #allocation1 [shape = 'u32[144,128]{1,0:T(1,128)}', space=vmem, size = 0x12000, scoped, tag = 'internal scratch']
  %s0 = inlined_call_operand.vmem [shape: f32[2,8,32], index: 0, kind: input, shape index: {}]
  %s1 = inlined_call_operand.vmem [shape: f32[2,8,8], index: 1, kind: input, shape index: {}]
  %s2 = inlined_call_operand.vmem [shape: bf16[32,96], index: 2, kind: input, shape index: {}]
  %s3 = inlined_call_operand.vmem [shape: f32[1,96], index: 3, kind: input, shape index: {}]
  %s4 = inlined_call_operand.vmem [shape: bf16[4,8,32], index: 4, kind: input, shape index: {}]
  %s5 = inlined_call_operand.vmem [shape: f32[1,32], index: 5, kind: input, shape index: {}]
  %s6 = inlined_call_operand.vmem [shape: bf16[32,2048], index: 6, kind: input, shape index: {}]
  %s7 = inlined_call_operand.vmem [shape: f32[1,2048], index: 7, kind: input, shape index: {}]
  %s8 = inlined_call_operand.vmem [shape: bf16[2048,32], index: 8, kind: input, shape index: {}]
  %s9 = inlined_call_operand.vmem [shape: f32[1,32], index: 9, kind: input, shape index: {}]
  %s10 = inlined_call_operand.vmem [shape: f32[1,32], index: 10, kind: input, shape index: {}]
  %s11 = inlined_call_operand.vmem [shape: f32[1,32], index: 11, kind: input, shape index: {}]
  %s12 = inlined_call_operand.vmem [shape: f32[1,32], index: 12, kind: input, shape index: {}]
  %s13 = inlined_call_operand.vmem [shape: f32[1,32], index: 13, kind: input, shape index: {}]
  %s14 = inlined_call_operand.hbm [shape: f32[2,8,32], index: 14, kind: output, shape index: {}]
  %s15 = sld [smem:[#allocation0]]
  $region89: #{encoder_forward.3} parent=0
    _
  %s17 = ssub.s32 1, %s15
  %s18 = scalar_select 0, %s17, %s15
  $region1: #{encoder_forward.3} parent=0
    #allocation2 [shape = 'u8[8192]{0}', space=vmem, size = 0x2000, scoped, tag = 'output window, operand 0']
    #allocation3 [shape = 's32[2]{0}', space=sflag, size = 0x8, scoped, tag = 'scoped memory for encoder_forward.3']
    %19 = vsyncpa [#allocation3], 0
    %s20 = scalar_lea.sflag [#allocation3], 1
    %21 = vsyncpa %s20, 0
    loop: start=0, step=1, limit=4
    $region2: #{encoder_forward.3} parent=1 // loop_pre_header
      _
    $region3: #{encoder_forward.3} parent=1 // loop_header
      %s23 = sphi 0, %s27
      %p24 = scmp.ge.s32.totalorder %s23, 4
      %s33 = sphi 0, %s35
      %s36 = sphi 0, %s33
      %s37 = sphi 0, %s36
      %s53 = sphi 0, %s37
      %s59 = sphi 0, %s61
      %s62 = sphi 0, %s59
      %s63 = sphi 0, %s62
      %s79 = sphi 0, %s63
      %s83 = sphi 0, %s83
      %s85 = sphi 0, %s83
      %s86 = sphi 0, %s85
      %s100 = sphi 0, %s86
      %s104 = sphi 0, %s104
      %s106 = sphi 0, %s104
      %s107 = sphi 0, %s106
      %s121 = sphi 0, %s107
      %s125 = sphi 0, %s125
      %s127 = sphi 0, %s125
      %s128 = sphi 0, %s127
      %s142 = sphi 0, %s128
      %s146 = sphi 0, %s146
      %s148 = sphi 0, %s146
      %s149 = sphi 0, %s148
      %s163 = sphi 0, %s149
      %s167 = sphi 0, %s167
      %s169 = sphi 0, %s167
      %s170 = sphi 0, %s169
      %s184 = sphi 0, %s170
      %s188 = sphi 0, %s188
      %s190 = sphi 0, %s188
      %s191 = sphi 0, %s190
      %s205 = sphi 0, %s191
      %s209 = sphi 0, %s209
      %s211 = sphi 0, %s209
      %s212 = sphi 0, %s211
      %s226 = sphi 0, %s212
      %s230 = sphi 0, %s230
      %s232 = sphi 0, %s230
      %s233 = sphi 0, %s232
      %s247 = sphi 0, %s233
      %s251 = sphi 0, %s251
      %s253 = sphi 0, %s251
      %s254 = sphi 0, %s253
      %s268 = sphi 0, %s254
      %s272 = sphi 0, %s272
      %s274 = sphi 0, %s272
      %s275 = sphi 0, %s274
      %s289 = sphi 0, %s275
      %s293 = sphi 0, %s293
      %s295 = sphi 0, %s293
      %s296 = sphi 0, %s295
      %s310 = sphi 0, %s296
      %s314 = sphi 0, %s314
      %s316 = sphi 0, %s314
      %s317 = sphi 0, %s316
      %s331 = sphi 0, %s317
      %s337 = sphi 0, %s339
      %s340 = sphi 0, %s337
      %s341 = sphi 0, %s340
      %s357 = sphi 0, %s341
    $region4: #{encoder_forward.3} parent=1 // loop_header_branch
      %26 = sbr.rel (%p24) target = $region8
    $region5: #{encoder_forward.3} parent=1 // loop_body
      %s28 = ssub.s32 %s23, 1
      %s29 = ssub.s32 %s23, 2
      %s30 = sadd.s32 %s23, 1
      %s31 = ssub.s32 %s23, %s30
      %p32 = scmp.eq.s32.totalorder %s31, 0
      %s34 = sadd.s32 %s33, 1
      %s35 = scalar_select %p32, %s33, %s34
      %p38 = pneg %p32
      %p39 = scmp.eq.s32.totalorder %s23, 1
      %p40 = por %p38, %p39
      %p41 = scmp.ne.s32.totalorder %s33, %s36
      %p42 = scmp.eq.s32.totalorder %s23, 0
      %p43 = por %p41, %p42
      %p44 = scmp.ne.s32.totalorder %s33, %s36
      %p45 = scmp.eq.s32.totalorder %s28, 1
      %p46 = por %p44, %p45
      %p47 = scmp.ne.s32.totalorder %s36, %s37
      %p48 = scmp.eq.s32.totalorder %s28, 0
      %p49 = por %p47, %p48
      %p50 = scmp.ne.s32.totalorder %s36, %s37
      %p51 = scmp.eq.s32.totalorder %s29, 1
      %p52 = por %p50, %p51
      %p54 = scmp.ne.s32.totalorder %s37, %s53
      %p55 = scmp.eq.s32.totalorder %s29, 0
      %p56 = por %p54, %p55
      %s57 = ssub.s32 %s23, %s30
      %p58 = scmp.eq.s32.totalorder %s57, 0
      %s60 = sadd.s32 %s59, 1
      %s61 = scalar_select %p58, %s59, %s60
      %p64 = pneg %p58
      %p65 = scmp.eq.s32.totalorder %s23, 1
      %p66 = por %p64, %p65
      %p67 = scmp.ne.s32.totalorder %s59, %s62
      %p68 = scmp.eq.s32.totalorder %s23, 0
      %p69 = por %p67, %p68
      %p70 = scmp.ne.s32.totalorder %s59, %s62
      %p71 = scmp.eq.s32.totalorder %s28, 1
      %p72 = por %p70, %p71
      %p73 = scmp.ne.s32.totalorder %s62, %s63
      %p74 = scmp.eq.s32.totalorder %s28, 0
      %p75 = por %p73, %p74
      %p76 = scmp.ne.s32.totalorder %s62, %s63
      %p77 = scmp.eq.s32.totalorder %s29, 1
      %p78 = por %p76, %p77
      %p80 = scmp.ne.s32.totalorder %s63, %s79
      %p81 = scmp.eq.s32.totalorder %s29, 0
      %p82 = por %p80, %p81
      %s84 = sadd.s32 %s83, 1
      %p87 = scmp.eq.s32.totalorder %s23, 1
      %p88 = scmp.ne.s32.totalorder %s83, %s85
      %p89 = scmp.eq.s32.totalorder %s23, 0
      %p90 = por %p88, %p89
      %p91 = scmp.ne.s32.totalorder %s83, %s85
      %p92 = scmp.eq.s32.totalorder %s28, 1
      %p93 = por %p91, %p92
      %p94 = scmp.ne.s32.totalorder %s85, %s86
      %p95 = scmp.eq.s32.totalorder %s28, 0
      %p96 = por %p94, %p95
      %p97 = scmp.ne.s32.totalorder %s85, %s86
      %p98 = scmp.eq.s32.totalorder %s29, 1
      %p99 = por %p97, %p98
      %p101 = scmp.ne.s32.totalorder %s86, %s100
      %p102 = scmp.eq.s32.totalorder %s29, 0
      %p103 = por %p101, %p102
      %s105 = sadd.s32 %s104, 1
      %p108 = scmp.eq.s32.totalorder %s23, 1
      %p109 = scmp.ne.s32.totalorder %s104, %s106
      %p110 = scmp.eq.s32.totalorder %s23, 0
      %p111 = por %p109, %p110
      %p112 = scmp.ne.s32.totalorder %s104, %s106
      %p113 = scmp.eq.s32.totalorder %s28, 1
      %p114 = por %p112, %p113
      %p115 = scmp.ne.s32.totalorder %s106, %s107
      %p116 = scmp.eq.s32.totalorder %s28, 0
      %p117 = por %p115, %p116
      %p118 = scmp.ne.s32.totalorder %s106, %s107
      %p119 = scmp.eq.s32.totalorder %s29, 1
      %p120 = por %p118, %p119
      %p122 = scmp.ne.s32.totalorder %s107, %s121
      %p123 = scmp.eq.s32.totalorder %s29, 0
      %p124 = por %p122, %p123
      %s126 = sadd.s32 %s125, 1
      %p129 = scmp.eq.s32.totalorder %s23, 1
      %p130 = scmp.ne.s32.totalorder %s125, %s127
      %p131 = scmp.eq.s32.totalorder %s23, 0
      %p132 = por %p130, %p131
      %p133 = scmp.ne.s32.totalorder %s125, %s127
      %p134 = scmp.eq.s32.totalorder %s28, 1
      %p135 = por %p133, %p134
      %p136 = scmp.ne.s32.totalorder %s127, %s128
      %p137 = scmp.eq.s32.totalorder %s28, 0
      %p138 = por %p136, %p137
      %p139 = scmp.ne.s32.totalorder %s127, %s128
      %p140 = scmp.eq.s32.totalorder %s29, 1
      %p141 = por %p139, %p140
      %p143 = scmp.ne.s32.totalorder %s128, %s142
      %p144 = scmp.eq.s32.totalorder %s29, 0
      %p145 = por %p143, %p144
      %s147 = sadd.s32 %s146, 1
      %p150 = scmp.eq.s32.totalorder %s23, 1
      %p151 = scmp.ne.s32.totalorder %s146, %s148
      %p152 = scmp.eq.s32.totalorder %s23, 0
      %p153 = por %p151, %p152
      %p154 = scmp.ne.s32.totalorder %s146, %s148
      %p155 = scmp.eq.s32.totalorder %s28, 1
      %p156 = por %p154, %p155
      %p157 = scmp.ne.s32.totalorder %s148, %s149
      %p158 = scmp.eq.s32.totalorder %s28, 0
      %p159 = por %p157, %p158
      %p160 = scmp.ne.s32.totalorder %s148, %s149
      %p161 = scmp.eq.s32.totalorder %s29, 1
      %p162 = por %p160, %p161
      %p164 = scmp.ne.s32.totalorder %s149, %s163
      %p165 = scmp.eq.s32.totalorder %s29, 0
      %p166 = por %p164, %p165
      %s168 = sadd.s32 %s167, 1
      %p171 = scmp.eq.s32.totalorder %s23, 1
      %p172 = scmp.ne.s32.totalorder %s167, %s169
      %p173 = scmp.eq.s32.totalorder %s23, 0
      %p174 = por %p172, %p173
      %p175 = scmp.ne.s32.totalorder %s167, %s169
      %p176 = scmp.eq.s32.totalorder %s28, 1
      %p177 = por %p175, %p176
      %p178 = scmp.ne.s32.totalorder %s169, %s170
      %p179 = scmp.eq.s32.totalorder %s28, 0
      %p180 = por %p178, %p179
      %p181 = scmp.ne.s32.totalorder %s169, %s170
      %p182 = scmp.eq.s32.totalorder %s29, 1
      %p183 = por %p181, %p182
      %p185 = scmp.ne.s32.totalorder %s170, %s184
      %p186 = scmp.eq.s32.totalorder %s29, 0
      %p187 = por %p185, %p186
      %s189 = sadd.s32 %s188, 1
      %p192 = scmp.eq.s32.totalorder %s23, 1
      %p193 = scmp.ne.s32.totalorder %s188, %s190
      %p194 = scmp.eq.s32.totalorder %s23, 0
      %p195 = por %p193, %p194
      %p196 = scmp.ne.s32.totalorder %s188, %s190
      %p197 = scmp.eq.s32.totalorder %s28, 1
      %p198 = por %p196, %p197
      %p199 = scmp.ne.s32.totalorder %s190, %s191
      %p200 = scmp.eq.s32.totalorder %s28, 0
      %p201 = por %p199, %p200
      %p202 = scmp.ne.s32.totalorder %s190, %s191
      %p203 = scmp.eq.s32.totalorder %s29, 1
      %p204 = por %p202, %p203
      %p206 = scmp.ne.s32.totalorder %s191, %s205
      %p207 = scmp.eq.s32.totalorder %s29, 0
      %p208 = por %p206, %p207
      %s210 = sadd.s32 %s209, 1
      %p213 = scmp.eq.s32.totalorder %s23, 1
      %p214 = scmp.ne.s32.totalorder %s209, %s211
      %p215 = scmp.eq.s32.totalorder %s23, 0
      %p216 = por %p214, %p215
      %p217 = scmp.ne.s32.totalorder %s209, %s211
      %p218 = scmp.eq.s32.totalorder %s28, 1
      %p219 = por %p217, %p218
      %p220 = scmp.ne.s32.totalorder %s211, %s212
      %p221 = scmp.eq.s32.totalorder %s28, 0
      %p222 = por %p220, %p221
      %p223 = scmp.ne.s32.totalorder %s211, %s212
      %p224 = scmp.eq.s32.totalorder %s29, 1
      %p225 = por %p223, %p224
      %p227 = scmp.ne.s32.totalorder %s212, %s226
      %p228 = scmp.eq.s32.totalorder %s29, 0
      %p229 = por %p227, %p228
      %s231 = sadd.s32 %s230, 1
      %p234 = scmp.eq.s32.totalorder %s23, 1
      %p235 = scmp.ne.s32.totalorder %s230, %s232
      %p236 = scmp.eq.s32.totalorder %s23, 0
      %p237 = por %p235, %p236
      %p238 = scmp.ne.s32.totalorder %s230, %s232
      %p239 = scmp.eq.s32.totalorder %s28, 1
      %p240 = por %p238, %p239
      %p241 = scmp.ne.s32.totalorder %s232, %s233
      %p242 = scmp.eq.s32.totalorder %s28, 0
      %p243 = por %p241, %p242
      %p244 = scmp.ne.s32.totalorder %s232, %s233
      %p245 = scmp.eq.s32.totalorder %s29, 1
      %p246 = por %p244, %p245
      %p248 = scmp.ne.s32.totalorder %s233, %s247
      %p249 = scmp.eq.s32.totalorder %s29, 0
      %p250 = por %p248, %p249
      %s252 = sadd.s32 %s251, 1
      %p255 = scmp.eq.s32.totalorder %s23, 1
      %p256 = scmp.ne.s32.totalorder %s251, %s253
      %p257 = scmp.eq.s32.totalorder %s23, 0
      %p258 = por %p256, %p257
      %p259 = scmp.ne.s32.totalorder %s251, %s253
      %p260 = scmp.eq.s32.totalorder %s28, 1
      %p261 = por %p259, %p260
      %p262 = scmp.ne.s32.totalorder %s253, %s254
      %p263 = scmp.eq.s32.totalorder %s28, 0
      %p264 = por %p262, %p263
      %p265 = scmp.ne.s32.totalorder %s253, %s254
      %p266 = scmp.eq.s32.totalorder %s29, 1
      %p267 = por %p265, %p266
      %p269 = scmp.ne.s32.totalorder %s254, %s268
      %p270 = scmp.eq.s32.totalorder %s29, 0
      %p271 = por %p269, %p270
      %s273 = sadd.s32 %s272, 1
      %p276 = scmp.eq.s32.totalorder %s23, 1
      %p277 = scmp.ne.s32.totalorder %s272, %s274
      %p278 = scmp.eq.s32.totalorder %s23, 0
      %p279 = por %p277, %p278
      %p280 = scmp.ne.s32.totalorder %s272, %s274
      %p281 = scmp.eq.s32.totalorder %s28, 1
      %p282 = por %p280, %p281
      %p283 = scmp.ne.s32.totalorder %s274, %s275
      %p284 = scmp.eq.s32.totalorder %s28, 0
      %p285 = por %p283, %p284
      %p286 = scmp.ne.s32.totalorder %s274, %s275
      %p287 = scmp.eq.s32.totalorder %s29, 1
      %p288 = por %p286, %p287
      %p290 = scmp.ne.s32.totalorder %s275, %s289
      %p291 = scmp.eq.s32.totalorder %s29, 0
      %p292 = por %p290, %p291
      %s294 = sadd.s32 %s293, 1
      %p297 = scmp.eq.s32.totalorder %s23, 1
      %p298 = scmp.ne.s32.totalorder %s293, %s295
      %p299 = scmp.eq.s32.totalorder %s23, 0
      %p300 = por %p298, %p299
      %p301 = scmp.ne.s32.totalorder %s293, %s295
      %p302 = scmp.eq.s32.totalorder %s28, 1
      %p303 = por %p301, %p302
      %p304 = scmp.ne.s32.totalorder %s295, %s296
      %p305 = scmp.eq.s32.totalorder %s28, 0
      %p306 = por %p304, %p305
      %p307 = scmp.ne.s32.totalorder %s295, %s296
      %p308 = scmp.eq.s32.totalorder %s29, 1
      %p309 = por %p307, %p308
      %p311 = scmp.ne.s32.totalorder %s296, %s310
      %p312 = scmp.eq.s32.totalorder %s29, 0
      %p313 = por %p311, %p312
      %s315 = sadd.s32 %s314, 1
      %p318 = scmp.eq.s32.totalorder %s23, 1
      %p319 = scmp.ne.s32.totalorder %s314, %s316
      %p320 = scmp.eq.s32.totalorder %s23, 0
      %p321 = por %p319, %p320
      %p322 = scmp.ne.s32.totalorder %s314, %s316
      %p323 = scmp.eq.s32.totalorder %s28, 1
      %p324 = por %p322, %p323
      %p325 = scmp.ne.s32.totalorder %s316, %s317
      %p326 = scmp.eq.s32.totalorder %s28, 0
      %p327 = por %p325, %p326
      %p328 = scmp.ne.s32.totalorder %s316, %s317
      %p329 = scmp.eq.s32.totalorder %s29, 1
      %p330 = por %p328, %p329
      %p332 = scmp.ne.s32.totalorder %s317, %s331
      %p333 = scmp.eq.s32.totalorder %s29, 0
      %p334 = por %p332, %p333
      %s335 = ssub.s32 %s23, %s30
      %p336 = scmp.eq.s32.totalorder %s335, 0
      %s338 = sadd.s32 %s337, 1
      %s339 = scalar_select %p336, %s337, %s338
      %p342 = pneg %p336
      %p343 = scmp.eq.s32.totalorder %s23, 1
      %p344 = por %p342, %p343
      %p345 = scmp.ne.s32.totalorder %s337, %s340
      %p346 = scmp.eq.s32.totalorder %s23, 0
      %p347 = por %p345, %p346
      %p348 = scmp.ne.s32.totalorder %s337, %s340
      %p349 = scmp.eq.s32.totalorder %s28, 1
      %p350 = por %p348, %p349
      %p351 = scmp.ne.s32.totalorder %s340, %s341
      %p352 = scmp.eq.s32.totalorder %s28, 0
      %p353 = por %p351, %p352
      %p354 = scmp.ne.s32.totalorder %s340, %s341
      %p355 = scmp.eq.s32.totalorder %s29, 1
      %p356 = por %p354, %p355
      %p358 = scmp.ne.s32.totalorder %s341, %s357
      %p359 = scmp.eq.s32.totalorder %s29, 0
      %p360 = por %p358, %p359
      %p361 = scmp.le.s32.totalorder 1, %s23
      %p362 = scmp.lt.s32.totalorder %s23, 3
      %p363 = pnand %p361, %p362
      %p364 = pneg %p363
      // Predicated region
      $region9: #{encoder_forward.3} parent=5 // pred_check
        _
      $region10: #{encoder_forward.3} parent=5 // pred_check_branch
        %366 = sbr.rel (%p363) target = $region12
      $region11: #{encoder_forward.3} parent=5 // pred_region
        %s367 = ssub.s32 %s23, 1
        // Predicated region
        $region13: #{encoder_forward.3} parent=11 // pred_check
          %p368 = pneg %p96
        $region14: #{encoder_forward.3} parent=11 // pred_check_branch
          %370 = sbr.rel (%p368) target = $region16
        $region15: #{encoder_forward.3} parent=11 // pred_region
          _
        $region16: #{encoder_forward.3} parent=11 // pred_fallthru
          _
        // Predicated region
        $region17: #{encoder_forward.3} parent=11 // pred_check
          %p371 = pneg %p117
        $region18: #{encoder_forward.3} parent=11 // pred_check_branch
          %373 = sbr.rel (%p371) target = $region20
        $region19: #{encoder_forward.3} parent=11 // pred_region
          _
        $region20: #{encoder_forward.3} parent=11 // pred_fallthru
          _
        // Predicated region
        $region21: #{encoder_forward.3} parent=11 // pred_check
          %p374 = pneg %p138
        $region22: #{encoder_forward.3} parent=11 // pred_check_branch
          %376 = sbr.rel (%p374) target = $region24
        $region23: #{encoder_forward.3} parent=11 // pred_region
          _
        $region24: #{encoder_forward.3} parent=11 // pred_fallthru
          _
        // Predicated region
        $region25: #{encoder_forward.3} parent=11 // pred_check
          %p377 = pneg %p159
        $region26: #{encoder_forward.3} parent=11 // pred_check_branch
          %379 = sbr.rel (%p377) target = $region28
        $region27: #{encoder_forward.3} parent=11 // pred_region
          _
        $region28: #{encoder_forward.3} parent=11 // pred_fallthru
          _
        // Predicated region
        $region29: #{encoder_forward.3} parent=11 // pred_check
          %p380 = pneg %p180
        $region30: #{encoder_forward.3} parent=11 // pred_check_branch
          %382 = sbr.rel (%p380) target = $region32
        $region31: #{encoder_forward.3} parent=11 // pred_region
          _
        $region32: #{encoder_forward.3} parent=11 // pred_fallthru
          _
        // Predicated region
        $region33: #{encoder_forward.3} parent=11 // pred_check
          %p383 = pneg %p201
        $region34: #{encoder_forward.3} parent=11 // pred_check_branch
          %385 = sbr.rel (%p383) target = $region36
        $region35: #{encoder_forward.3} parent=11 // pred_region
          _
        $region36: #{encoder_forward.3} parent=11 // pred_fallthru
          _
        // Predicated region
        $region37: #{encoder_forward.3} parent=11 // pred_check
          %p386 = pneg %p222
        $region38: #{encoder_forward.3} parent=11 // pred_check_branch
          %388 = sbr.rel (%p386) target = $region40
        $region39: #{encoder_forward.3} parent=11 // pred_region
          _
        $region40: #{encoder_forward.3} parent=11 // pred_fallthru
          _
        // Predicated region
        $region41: #{encoder_forward.3} parent=11 // pred_check
          %p389 = pneg %p243
        $region42: #{encoder_forward.3} parent=11 // pred_check_branch
          %391 = sbr.rel (%p389) target = $region44
        $region43: #{encoder_forward.3} parent=11 // pred_region
          _
        $region44: #{encoder_forward.3} parent=11 // pred_fallthru
          _
        // Predicated region
        $region45: #{encoder_forward.3} parent=11 // pred_check
          %p392 = pneg %p264
        $region46: #{encoder_forward.3} parent=11 // pred_check_branch
          %394 = sbr.rel (%p392) target = $region48
        $region47: #{encoder_forward.3} parent=11 // pred_region
          _
        $region48: #{encoder_forward.3} parent=11 // pred_fallthru
          _
        // Predicated region
        $region49: #{encoder_forward.3} parent=11 // pred_check
          %p395 = pneg %p285
        $region50: #{encoder_forward.3} parent=11 // pred_check_branch
          %397 = sbr.rel (%p395) target = $region52
        $region51: #{encoder_forward.3} parent=11 // pred_region
          _
        $region52: #{encoder_forward.3} parent=11 // pred_fallthru
          _
        // Predicated region
        $region53: #{encoder_forward.3} parent=11 // pred_check
          %p398 = pneg %p306
        $region54: #{encoder_forward.3} parent=11 // pred_check_branch
          %400 = sbr.rel (%p398) target = $region56
        $region55: #{encoder_forward.3} parent=11 // pred_region
          _
        $region56: #{encoder_forward.3} parent=11 // pred_fallthru
          _
        // Predicated region
        $region57: #{encoder_forward.3} parent=11 // pred_check
          %p401 = pneg %p327
        $region58: #{encoder_forward.3} parent=11 // pred_check_branch
          %403 = sbr.rel (%p401) target = $region60
        $region59: #{encoder_forward.3} parent=11 // pred_region
          _
        $region60: #{encoder_forward.3} parent=11 // pred_fallthru
          _
      $region12: #{encoder_forward.3} parent=5 // pred_fallthru
        _
      %p404 = scmp.lt.s32.totalorder %s23, 2
      // Predicated region
      $region61: #{encoder_forward.3} parent=5 // pred_check
        %p405 = pneg %p404
      $region62: #{encoder_forward.3} parent=5 // pred_check_branch
        %407 = sbr.rel (%p405) target = $region64
      $region63: #{encoder_forward.3} parent=5 // pred_region
        // Predicated region
        $region65: #{encoder_forward.3} parent=63 // pred_check
          %p408 = pneg %p43
        $region66: #{encoder_forward.3} parent=63 // pred_check_branch
          %410 = sbr.rel (%p408) target = $region68
        $region67: #{encoder_forward.3} parent=63 // pred_region
          %p411 = scmp.lt.s32.totalorder %s23, 1
          %s412 = scalar_select %p411, %s23, 1
          %s413 = smul.addr %s412, 8
          %s414 = scalar_lea.vmem %s0, %s413
        $region68: #{encoder_forward.3} parent=63 // pred_fallthru
          _
        // Predicated region
        $region69: #{encoder_forward.3} parent=63 // pred_check
          %p415 = pneg %p69
        $region70: #{encoder_forward.3} parent=63 // pred_check_branch
          %417 = sbr.rel (%p415) target = $region72
        $region71: #{encoder_forward.3} parent=63 // pred_region
          %p418 = scmp.lt.s32.totalorder %s23, 1
          %s419 = scalar_select %p418, %s23, 1
          %s420 = smul.addr %s419, 8
          %s421 = scalar_lea.vmem %s1, %s420
        $region72: #{encoder_forward.3} parent=63 // pred_fallthru
          _
      $region64: #{encoder_forward.3} parent=5 // pred_fallthru
        _
      %p422 = scmp.le.s32.totalorder 1, %s23
      %p423 = scmp.lt.s32.totalorder %s23, 3
      %p424 = pnand %p422, %p423
      %p425 = pneg %p424
      // Predicated region
      $region73: #{encoder_forward.3} parent=5 // pred_check
        _
      $region74: #{encoder_forward.3} parent=5 // pred_check_branch
        %427 = sbr.rel (%p424) target = $region76
      $region75: #{encoder_forward.3} parent=5 // pred_region
        %s428 = ssub.s32 %s23, 1
        %p429 = scmp.lt.s32.totalorder %s28, 1
        %s430 = scalar_select %p429, %s28, 1
        %s431 = smul.addr %s430, 8
        %s432 = scalar_lea.vmem %s0, %s431
        %p433 = pneg %p49
        %p434 = pneg %p46
        %p435 = scmp.lt.s32.totalorder %s28, 1
        %s436 = scalar_select %p435, %s28, 1
        %s437 = smul.addr %s436, 8
        %s438 = scalar_lea.vmem %s1, %s437
        %p439 = pneg %p75
        %p440 = pneg %p72
        %p441 = pneg %p96
        %p442 = pneg %p93
        %p443 = pneg %p117
        %p444 = pneg %p114
        %p445 = pneg %p138
        %p446 = pneg %p135
        %p447 = pneg %p159
        %p448 = pneg %p156
        %p449 = pneg %p180
        %p450 = pneg %p177
        %p451 = pneg %p201
        %p452 = pneg %p198
        %p453 = pneg %p222
        %p454 = pneg %p219
        %p455 = pneg %p243
        %p456 = pneg %p240
        %p457 = pneg %p264
        %p458 = pneg %p261
        %p459 = pneg %p285
        %p460 = pneg %p282
        %p461 = pneg %p306
        %p462 = pneg %p303
        %p463 = pneg %p327
        %p464 = pneg %p324
        %p465 = pneg %p353
        %p466 = pneg %p350
        %s467 = sand.u32 %s340, 1
        %s468 = scalar_lea.sflag [#allocation3], %s467
        %s469 = sand.u32 %s340, 1
        %s470 = smul.addr %s469, 8
        %s471 = scalar_lea.vmem [#allocation2], %s470
        %p472 = scmp.lt.s32.totalorder %s28, 1
        %s473 = scalar_select %p472, %s28, 1
        %s474 = smul.addr %s473, 8
        %s475 = scalar_lea.vmem %s0, %s474
        %p476 = scmp.lt.s32.totalorder %s28, 1
        %s477 = scalar_select %p476, %s28, 1
        %s478 = smul.addr %s477, 8
        %s479 = scalar_lea.vmem %s1, %s478
        %v481 = vld [vmem:[%s475] sm:$0xff]
        %v482 = vpack.c.bf16 %v481, %v481
        %v483 = vld [vmem:[%s2] sm:$0xf]
        %v484 = vld [vmem:[%s2 + $0x4] sm:$0xf]
        %v485 = vld [vmem:[%s2 + $0x8] sm:$0xf]
        %v486 = vld [vmem:[%s2 + $0xc] sm:$0xf]
        %v487 = vld [vmem:[%s3] sm:$0x1]
        %v489 = vlaneseq
        %v490 = vshrl.u32 %v489, 7
        %v491 = vsub.s32 0, %v490
        %v492 = vrot.slane %v487, %v491
        %v498 = vunpack.c.l.b16 %v483
        %v499 = vunpack.c.l.b16 %v484
        %v500 = vunpack.c.l.b16 %v485
        %v501 = vunpack.c.l.b16 %v486
        %v502 = vpack.c.b16 %v499, %v498
        %v503 = vpack.c.b16 %v501, %v500
        %vm506 = vcmask 261120
        %v508 = vsel %vm506, %v482, 0
        %510 = vmatprep.subr.bf16.mxu0 0
        %511 = vmatpush1.bf16.msra.mxu0 0
        %512 = vmatprep.subr.bf16.mxu0 0
        %513 = vmatpush1.bf16.msra.mxu0 0
        %514 = vmatprep.subr.bf16.mxu0 0
        %515 = vmatpush1.bf16.msra.mxu0 0
        %516 = vmatprep.subr.bf16.mxu0 0
        %517 = vmatpush1.bf16.msra.mxu0 0
        %518 = vmatprep.subr.bf16.mxu0 0
        %519 = vmatpush1.bf16.msra.mxu0 0
        %520 = vmatprep.subr.bf16.mxu0 0
        %521 = vmatpush1.bf16.msra.mxu0 0
        %522 = vmatprep.subr.bf16.mxu0 0
        %523 = vmatpush1.bf16.msra.mxu0 %v503
        %524 = vmatprep.subr.bf16.mxu0 0
        %525 = vmatpush1.bf16.msra.mxu0 %v502
        %526 = vmatprep.subr.bf16.mxu0 0
        %527 = vmatpush2.bf16.msra.mxu0 0
        %528 = vmatprep.subr.bf16.mxu0 0
        %529 = vmatpush2.bf16.msra.mxu0 0
        %530 = vmatprep.subr.bf16.mxu0 0
        %531 = vmatpush2.bf16.msra.mxu0 0
        %532 = vmatprep.subr.bf16.mxu0 0
        %533 = vmatpush2.bf16.msra.mxu0 0
        %534 = vmatprep.subr.bf16.mxu0 0
        %535 = vmatpush2.bf16.msra.mxu0 0
        %536 = vmatprep.subr.bf16.mxu0 0
        %537 = vmatpush2.bf16.msra.mxu0 0
        %538 = vmatprep.subr.bf16.mxu0 0
        %539 = vmatpush2.bf16.msra.mxu0 0
        %540 = vmatprep.subr.bf16.mxu0 0
        %541 = vmatpush2.bf16.msra.mxu0 0
        %542 = vmatprep.mubr.bf16.mxu0 0
        %543 = vmatmul.mubr.bf16.gmra.mxu0 %v508
        %v544 = vpop.f32.mrf.mxu0
        %v545 = vadd.f32 %v492, %v544
        %v546 = vpop.f32.mrf.mxu0
        %v547 = vpop.f32.mrf.mxu0
        %v548 = vpop.f32.mrf.mxu0
        %549 = vdwg.mxu0
        %v550 = vpack.c.bf16 %v545, %v545
        %552 = vrot.lane.b32.xlu0 %v550, 120
        %v553 = vpop.permute.xlu0 %552
        %554 = vrot.lane.b32.xlu0 %v550, 112
        %v555 = vpop.permute.xlu0 %554
        %556 = vrot.lane.b32.xlu0 %v550, 104
        %v557 = vpop.permute.xlu0 %556
        %v558 = vld [vmem:[%s479] sm:$0xff]
        %559 = vrot.lane.b32.xlu0 %v550, 96
        %v560 = vpop.permute.xlu0 %559
        %vm561 = vcmask 64512
        %v563 = vsel %vm561, %v550, 0
        %v566 = vsel %vm561, %v560, 0
        %568 = vmatprep.subr.bf16.mxu0 0
        %569 = vmatpush1.bf16.xpose.msra.mxu0 0
        %570 = vmatprep.subr.bf16.mxu0 0
        %571 = vmatpush1.bf16.xpose.msra.mxu0 0
        %572 = vmatprep.subr.bf16.mxu0 0
        %573 = vmatpush1.bf16.xpose.msra.mxu0 0
        %574 = vmatprep.subr.bf16.mxu0 0
        %575 = vmatpush1.bf16.xpose.msra.mxu0 0
        %576 = vmatprep.subr.bf16.mxu0 0
        %577 = vmatpush1.bf16.xpose.msra.mxu0 0
        %578 = vmatprep.subr.bf16.mxu0 0
        %579 = vmatpush1.bf16.xpose.msra.mxu0 0
        %580 = vmatprep.subr.bf16.mxu0 0
        %581 = vmatpush1.bf16.xpose.msra.mxu0 0
        %582 = vmatprep.subr.bf16.mxu0 0
        %583 = vmatpush1.bf16.xpose.msra.mxu0 %v566
        %584 = vmatprep.subr.bf16.mxu0 0
        %585 = vmatpush2.bf16.xpose.msra.mxu0 0
        %586 = vmatprep.subr.bf16.mxu0 0
        %587 = vmatpush2.bf16.xpose.msra.mxu0 0
        %588 = vmatprep.subr.bf16.mxu0 0
        %589 = vmatpush2.bf16.xpose.msra.mxu0 0
        %590 = vmatprep.subr.bf16.mxu0 0
        %591 = vmatpush2.bf16.xpose.msra.mxu0 0
        %592 = vmatprep.subr.bf16.mxu0 0
        %593 = vmatpush2.bf16.xpose.msra.mxu0 0
        %594 = vmatprep.subr.bf16.mxu0 0
        %595 = vmatpush2.bf16.xpose.msra.mxu0 0
        %596 = vmatprep.subr.bf16.mxu0 0
        %597 = vmatpush2.bf16.xpose.msra.mxu0 0
        %598 = vmatprep.subr.bf16.mxu0 0
        %599 = vmatpush2.bf16.xpose.msra.mxu0 0
        %600 = vmatprep.mubr.bf16.mxu0 0
        %601 = vmatmul.mubr.bf16.gmra.mxu0 %v563
        %v602 = vpop.f32.mrf.mxu0
        %v603 = vadd.f32 %v558, %v602
        %v604 = vpop.f32.mrf.mxu0
        %v605 = vpop.f32.mrf.mxu0
        %v606 = vpop.f32.mrf.mxu0
        %607 = vdwg.mxu0
        %608 = vrot.lane.b32.xlu0 %v553, 96
        %v609 = vpop.permute.xlu0 %608
        %v611 = vsel %vm561, %v553, 0
        %v614 = vsel %vm561, %v609, 0
        %616 = vmatprep.subr.bf16.mxu0 0
        %617 = vmatpush1.bf16.xpose.msra.mxu0 0
        %618 = vmatprep.subr.bf16.mxu0 0
        %619 = vmatpush1.bf16.xpose.msra.mxu0 0
        %620 = vmatprep.subr.bf16.mxu0 0
        %621 = vmatpush1.bf16.xpose.msra.mxu0 0
        %622 = vmatprep.subr.bf16.mxu0 0
        %623 = vmatpush1.bf16.xpose.msra.mxu0 0
        %624 = vmatprep.subr.bf16.mxu0 0
        %625 = vmatpush1.bf16.xpose.msra.mxu0 0
        %626 = vmatprep.subr.bf16.mxu0 0
        %627 = vmatpush1.bf16.xpose.msra.mxu0 0
        %628 = vmatprep.subr.bf16.mxu0 0
        %629 = vmatpush1.bf16.xpose.msra.mxu0 0
        %630 = vmatprep.subr.bf16.mxu0 0
        %631 = vmatpush1.bf16.xpose.msra.mxu0 %v614
        %632 = vmatprep.subr.bf16.mxu0 0
        %633 = vmatpush2.bf16.xpose.msra.mxu0 0
        %634 = vmatprep.subr.bf16.mxu0 0
        %635 = vmatpush2.bf16.xpose.msra.mxu0 0
        %636 = vmatprep.subr.bf16.mxu0 0
        %637 = vmatpush2.bf16.xpose.msra.mxu0 0
        %638 = vmatprep.subr.bf16.mxu0 0
        %639 = vmatpush2.bf16.xpose.msra.mxu0 0
        %640 = vmatprep.subr.bf16.mxu0 0
        %641 = vmatpush2.bf16.xpose.msra.mxu0 0
        %642 = vmatprep.subr.bf16.mxu0 0
        %643 = vmatpush2.bf16.xpose.msra.mxu0 0
        %644 = vmatprep.subr.bf16.mxu0 0
        %645 = vmatpush2.bf16.xpose.msra.mxu0 0
        %646 = vmatprep.subr.bf16.mxu0 0
        %647 = vmatpush2.bf16.xpose.msra.mxu0 0
        %648 = vmatprep.mubr.bf16.mxu0 0
        %649 = vmatmul.mubr.bf16.gmra.mxu0 %v611
        %v650 = vpop.f32.mrf.mxu0
        %v651 = vadd.f32 %v558, %v650
        %v652 = vpop.f32.mrf.mxu0
        %v653 = vpop.f32.mrf.mxu0
        %v654 = vpop.f32.mrf.mxu0
        %655 = vdwg.mxu0
        %656 = vrot.lane.b32.xlu0 %v555, 96
        %v657 = vpop.permute.xlu0 %656
        %v659 = vsel %vm561, %v555, 0
        %v662 = vsel %vm561, %v657, 0
        %664 = vmatprep.subr.bf16.mxu0 0
        %665 = vmatpush1.bf16.xpose.msra.mxu0 0
        %666 = vmatprep.subr.bf16.mxu0 0
        %667 = vmatpush1.bf16.xpose.msra.mxu0 0
        %668 = vmatprep.subr.bf16.mxu0 0
        %669 = vmatpush1.bf16.xpose.msra.mxu0 0
        %670 = vmatprep.subr.bf16.mxu0 0
        %671 = vmatpush1.bf16.xpose.msra.mxu0 0
        %672 = vmatprep.subr.bf16.mxu0 0
        %673 = vmatpush1.bf16.xpose.msra.mxu0 0
        %674 = vmatprep.subr.bf16.mxu0 0
        %675 = vmatpush1.bf16.xpose.msra.mxu0 0
        %676 = vmatprep.subr.bf16.mxu0 0
        %677 = vmatpush1.bf16.xpose.msra.mxu0 0
        %678 = vmatprep.subr.bf16.mxu0 0
        %679 = vmatpush1.bf16.xpose.msra.mxu0 %v662
        %680 = vmatprep.subr.bf16.mxu0 0
        %681 = vmatpush2.bf16.xpose.msra.mxu0 0
        %682 = vmatprep.subr.bf16.mxu0 0
        %683 = vmatpush2.bf16.xpose.msra.mxu0 0
        %684 = vmatprep.subr.bf16.mxu0 0
        %685 = vmatpush2.bf16.xpose.msra.mxu0 0
        %686 = vmatprep.subr.bf16.mxu0 0
        %687 = vmatpush2.bf16.xpose.msra.mxu0 0
        %688 = vmatprep.subr.bf16.mxu0 0
        %689 = vmatpush2.bf16.xpose.msra.mxu0 0
        %690 = vmatprep.subr.bf16.mxu0 0
        %691 = vmatpush2.bf16.xpose.msra.mxu0 0
        %692 = vmatprep.subr.bf16.mxu0 0
        %693 = vmatpush2.bf16.xpose.msra.mxu0 0
        %694 = vmatprep.subr.bf16.mxu0 0
        %695 = vmatpush2.bf16.xpose.msra.mxu0 0
        %696 = vmatprep.mubr.bf16.mxu0 0
        %697 = vmatmul.mubr.bf16.gmra.mxu0 %v659
        %v698 = vpop.f32.mrf.mxu0
        %v699 = vadd.f32 %v558, %v698
        %v700 = vpop.f32.mrf.mxu0
        %v701 = vpop.f32.mrf.mxu0
        %v702 = vpop.f32.mrf.mxu0
        %703 = vdwg.mxu0
        %704 = vrot.lane.b32.xlu0 %v557, 96
        %v705 = vpop.permute.xlu0 %704
        %v707 = vsel %vm561, %v557, 0
        %v710 = vsel %vm561, %v705, 0
        %712 = vmatprep.subr.bf16.mxu0 0
        %713 = vmatpush1.bf16.xpose.msra.mxu0 0
        %714 = vmatprep.subr.bf16.mxu0 0
        %715 = vmatpush1.bf16.xpose.msra.mxu0 0
        %716 = vmatprep.subr.bf16.mxu0 0
        %717 = vmatpush1.bf16.xpose.msra.mxu0 0
        %718 = vmatprep.subr.bf16.mxu0 0
        %719 = vmatpush1.bf16.xpose.msra.mxu0 0
        %720 = vmatprep.subr.bf16.mxu0 0
        %721 = vmatpush1.bf16.xpose.msra.mxu0 0
        %722 = vmatprep.subr.bf16.mxu0 0
        %723 = vmatpush1.bf16.xpose.msra.mxu0 0
        %724 = vmatprep.subr.bf16.mxu0 0
        %725 = vmatpush1.bf16.xpose.msra.mxu0 0
        %726 = vmatprep.subr.bf16.mxu0 0
        %727 = vmatpush1.bf16.xpose.msra.mxu0 %v710
        %728 = vmatprep.subr.bf16.mxu0 0
        %729 = vmatpush2.bf16.xpose.msra.mxu0 0
        %730 = vmatprep.subr.bf16.mxu0 0
        %731 = vmatpush2.bf16.xpose.msra.mxu0 0
        %732 = vmatprep.subr.bf16.mxu0 0
        %733 = vmatpush2.bf16.xpose.msra.mxu0 0
        %734 = vmatprep.subr.bf16.mxu0 0
        %735 = vmatpush2.bf16.xpose.msra.mxu0 0
        %736 = vmatprep.subr.bf16.mxu0 0
        %737 = vmatpush2.bf16.xpose.msra.mxu0 0
        %738 = vmatprep.subr.bf16.mxu0 0
        %739 = vmatpush2.bf16.xpose.msra.mxu0 0
        %740 = vmatprep.subr.bf16.mxu0 0
        %741 = vmatpush2.bf16.xpose.msra.mxu0 0
        %742 = vmatprep.subr.bf16.mxu0 0
        %743 = vmatpush2.bf16.xpose.msra.mxu0 0
        %744 = vmatprep.mubr.bf16.mxu0 0
        %745 = vmatmul.mubr.bf16.gmra.mxu0 %v707
        %v746 = vpop.f32.mrf.mxu0
        %v747 = vadd.f32 %v558, %v746
        %v748 = vpop.f32.mrf.mxu0
        %v749 = vpop.f32.mrf.mxu0
        %v750 = vpop.f32.mrf.mxu0
        %751 = vdwg.mxu0
        %v752 = vsel %vm561, %v603, -inf
        %753 = vmax.xlane.f32.xlu0 %v752
        %v754 = vpop.xlane.xlu0 %753
        %v755 = vsel %vm561, %v651, -inf
        %756 = vmax.xlane.f32.xlu0 %v755
        %v757 = vpop.xlane.xlu0 %756
        %v758 = vsel %vm561, %v699, -inf
        %759 = vmax.xlane.f32.xlu0 %v758
        %v760 = vpop.xlane.xlu0 %759
        %v761 = vsel %vm561, %v747, -inf
        %762 = vmax.xlane.f32.xlu0 %v761
        %v763 = vpop.xlane.xlu0 %762
        %v764 = vsub.f32 %v603, %v754
        %v765 = vsub.f32 %v651, %v757
        %v766 = vsub.f32 %v699, %v760
        %v767 = vsub.f32 %v747, %v763
        %v768 = vmul.f32 %v764, 1.442695
        %v769 = vpow.pop %v768
        %v770 = vmul.f32 %v765, 1.442695
        %v771 = vpow.pop %v770
        %v772 = vmul.f32 %v766, 1.442695
        %v773 = vpow.pop %v772
        %v774 = vmul.f32 %v767, 1.442695
        %v775 = vpow.pop %v774
        %v776 = vsel %vm561, %v769, 0.0
        %777 = vadd.xlane.f32.xlu0 %v776
        %v778 = vpop.xlane.xlu0 %777
        %v779 = vsel %vm561, %v771, 0.0
        %780 = vadd.xlane.f32.xlu0 %v779
        %v781 = vpop.xlane.xlu0 %780
        %v782 = vsel %vm561, %v773, 0.0
        %783 = vadd.xlane.f32.xlu0 %v782
        %v784 = vpop.xlane.xlu0 %783
        %v785 = vsel %vm561, %v775, 0.0
        %786 = vadd.xlane.f32.xlu0 %v785
        %v787 = vpop.xlane.xlu0 %786
        %v788 = vrcp.pop %v778
        %v789 = vrcp.pop %v781
        %v790 = vrcp.pop %v784
        %v791 = vrcp.pop %v787
        %v792 = vmul.f32 %v769, %v788
        %v793 = vmul.f32 %v771, %v789
        %v794 = vmul.f32 %v773, %v790
        %v795 = vmul.f32 %v775, %v791
        %v796 = vpack.c.bf16 %v792, %v792
        %v797 = vpack.c.bf16 %v793, %v793
        %v798 = vpack.c.bf16 %v794, %v794
        %v799 = vpack.c.bf16 %v795, %v795
        %800 = vrot.lane.b32.xlu0 %v550, 64
        %v801 = vpop.permute.xlu0 %800
        %v803 = vsel %vm561, %v796, 0
        %vm805 = vcmask 1043456
        %v807 = vsel %vm805, %v801, 0
        %809 = vmatprep.subr.bf16.mxu0 0
        %810 = vmatpush1.bf16.msra.mxu0 0
        %811 = vmatprep.subr.bf16.mxu0 0
        %812 = vmatpush1.bf16.msra.mxu0 0
        %813 = vmatprep.subr.bf16.mxu0 0
        %814 = vmatpush1.bf16.msra.mxu0 0
        %815 = vmatprep.subr.bf16.mxu0 0
        %816 = vmatpush1.bf16.msra.mxu0 0
        %817 = vmatprep.subr.bf16.mxu0 0
        %818 = vmatpush1.bf16.msra.mxu0 0
        %819 = vmatprep.subr.bf16.mxu0 0
        %820 = vmatpush1.bf16.msra.mxu0 0
        %821 = vmatprep.subr.bf16.mxu0 0
        %822 = vmatpush1.bf16.msra.mxu0 0
        %823 = vmatprep.subr.bf16.mxu0 0
        %824 = vmatpush1.bf16.msra.mxu0 %v807
        %825 = vmatprep.subr.bf16.mxu0 0
        %826 = vmatpush2.bf16.msra.mxu0 0
        %827 = vmatprep.subr.bf16.mxu0 0
        %828 = vmatpush2.bf16.msra.mxu0 0
        %829 = vmatprep.subr.bf16.mxu0 0
        %830 = vmatpush2.bf16.msra.mxu0 0
        %831 = vmatprep.subr.bf16.mxu0 0
        %832 = vmatpush2.bf16.msra.mxu0 0
        %833 = vmatprep.subr.bf16.mxu0 0
        %834 = vmatpush2.bf16.msra.mxu0 0
        %835 = vmatprep.subr.bf16.mxu0 0
        %836 = vmatpush2.bf16.msra.mxu0 0
        %837 = vmatprep.subr.bf16.mxu0 0
        %838 = vmatpush2.bf16.msra.mxu0 0
        %839 = vmatprep.subr.bf16.mxu0 0
        %840 = vmatpush2.bf16.msra.mxu0 0
        %841 = vmatprep.mubr.bf16.mxu0 0
        %842 = vmatmul.mubr.bf16.gmra.mxu0 %v803
        %v843 = vpop.f32.mrf.mxu0
        %v844 = vadd.f32 0.0, %v843
        %v845 = vpop.f32.mrf.mxu0
        %v846 = vpop.f32.mrf.mxu0
        %v847 = vpop.f32.mrf.mxu0
        %848 = vdwg.mxu0
        %849 = vrot.lane.b32.xlu0 %v553, 64
        %v850 = vpop.permute.xlu0 %849
        %v852 = vsel %vm561, %v797, 0
        %v855 = vsel %vm805, %v850, 0
        %857 = vmatprep.subr.bf16.mxu0 0
        %858 = vmatpush1.bf16.msra.mxu0 0
        %859 = vmatprep.subr.bf16.mxu0 0
        %860 = vmatpush1.bf16.msra.mxu0 0
        %861 = vmatprep.subr.bf16.mxu0 0
        %862 = vmatpush1.bf16.msra.mxu0 0
        %863 = vmatprep.subr.bf16.mxu0 0
        %864 = vmatpush1.bf16.msra.mxu0 0
        %865 = vmatprep.subr.bf16.mxu0 0
        %866 = vmatpush1.bf16.msra.mxu0 0
        %867 = vmatprep.subr.bf16.mxu0 0
        %868 = vmatpush1.bf16.msra.mxu0 0
        %869 = vmatprep.subr.bf16.mxu0 0
        %870 = vmatpush1.bf16.msra.mxu0 0
        %871 = vmatprep.subr.bf16.mxu0 0
        %872 = vmatpush1.bf16.msra.mxu0 %v855
        %873 = vmatprep.subr.bf16.mxu0 0
        %874 = vmatpush2.bf16.msra.mxu0 0
        %875 = vmatprep.subr.bf16.mxu0 0
        %876 = vmatpush2.bf16.msra.mxu0 0
        %877 = vmatprep.subr.bf16.mxu0 0
        %878 = vmatpush2.bf16.msra.mxu0 0
        %879 = vmatprep.subr.bf16.mxu0 0
        %880 = vmatpush2.bf16.msra.mxu0 0
        %881 = vmatprep.subr.bf16.mxu0 0
        %882 = vmatpush2.bf16.msra.mxu0 0
        %883 = vmatprep.subr.bf16.mxu0 0
        %884 = vmatpush2.bf16.msra.mxu0 0
        %885 = vmatprep.subr.bf16.mxu0 0
        %886 = vmatpush2.bf16.msra.mxu0 0
        %887 = vmatprep.subr.bf16.mxu0 0
        %888 = vmatpush2.bf16.msra.mxu0 0
        %889 = vmatprep.mubr.bf16.mxu0 0
        %890 = vmatmul.mubr.bf16.gmra.mxu0 %v852
        %v891 = vpop.f32.mrf.mxu0
        %v892 = vadd.f32 0.0, %v891
        %v893 = vpop.f32.mrf.mxu0
        %v894 = vpop.f32.mrf.mxu0
        %v895 = vpop.f32.mrf.mxu0
        %896 = vdwg.mxu0
        %897 = vrot.lane.b32.xlu0 %v555, 64
        %v898 = vpop.permute.xlu0 %897
        %v900 = vsel %vm561, %v798, 0
        %v903 = vsel %vm805, %v898, 0
        %905 = vmatprep.subr.bf16.mxu0 0
        %906 = vmatpush1.bf16.msra.mxu0 0
        %907 = vmatprep.subr.bf16.mxu0 0
        %908 = vmatpush1.bf16.msra.mxu0 0
        %909 = vmatprep.subr.bf16.mxu0 0
        %910 = vmatpush1.bf16.msra.mxu0 0
        %911 = vmatprep.subr.bf16.mxu0 0
        %912 = vmatpush1.bf16.msra.mxu0 0
        %913 = vmatprep.subr.bf16.mxu0 0
        %914 = vmatpush1.bf16.msra.mxu0 0
        %915 = vmatprep.subr.bf16.mxu0 0
        %916 = vmatpush1.bf16.msra.mxu0 0
        %917 = vmatprep.subr.bf16.mxu0 0
        %918 = vmatpush1.bf16.msra.mxu0 0
        %919 = vmatprep.subr.bf16.mxu0 0
        %920 = vmatpush1.bf16.msra.mxu0 %v903
        %921 = vmatprep.subr.bf16.mxu0 0
        %922 = vmatpush2.bf16.msra.mxu0 0
        %923 = vmatprep.subr.bf16.mxu0 0
        %924 = vmatpush2.bf16.msra.mxu0 0
        %925 = vmatprep.subr.bf16.mxu0 0
        %926 = vmatpush2.bf16.msra.mxu0 0
        %927 = vmatprep.subr.bf16.mxu0 0
        %928 = vmatpush2.bf16.msra.mxu0 0
        %929 = vmatprep.subr.bf16.mxu0 0
        %930 = vmatpush2.bf16.msra.mxu0 0
        %931 = vmatprep.subr.bf16.mxu0 0
        %932 = vmatpush2.bf16.msra.mxu0 0
        %933 = vmatprep.subr.bf16.mxu0 0
        %934 = vmatpush2.bf16.msra.mxu0 0
        %935 = vmatprep.subr.bf16.mxu0 0
        %936 = vmatpush2.bf16.msra.mxu0 0
        %937 = vmatprep.mubr.bf16.mxu0 0
        %938 = vmatmul.mubr.bf16.gmra.mxu0 %v900
        %v939 = vpop.f32.mrf.mxu0
        %v940 = vadd.f32 0.0, %v939
        %v941 = vpop.f32.mrf.mxu0
        %v942 = vpop.f32.mrf.mxu0
        %v943 = vpop.f32.mrf.mxu0
        %944 = vdwg.mxu0
        %945 = vrot.lane.b32.xlu0 %v557, 64
        %v946 = vpop.permute.xlu0 %945
        %v948 = vsel %vm561, %v799, 0
        %v951 = vsel %vm805, %v946, 0
        %953 = vmatprep.subr.bf16.mxu0 0
        %954 = vmatpush1.bf16.msra.mxu0 0
        %955 = vmatprep.subr.bf16.mxu0 0
        %956 = vmatpush1.bf16.msra.mxu0 0
        %957 = vmatprep.subr.bf16.mxu0 0
        %958 = vmatpush1.bf16.msra.mxu0 0
        %959 = vmatprep.subr.bf16.mxu0 0
        %960 = vmatpush1.bf16.msra.mxu0 0
        %961 = vmatprep.subr.bf16.mxu0 0
        %962 = vmatpush1.bf16.msra.mxu0 0
        %963 = vmatprep.subr.bf16.mxu0 0
        %964 = vmatpush1.bf16.msra.mxu0 0
        %965 = vmatprep.subr.bf16.mxu0 0
        %966 = vmatpush1.bf16.msra.mxu0 0
        %967 = vmatprep.subr.bf16.mxu0 0
        %968 = vmatpush1.bf16.msra.mxu0 %v951
        %969 = vmatprep.subr.bf16.mxu0 0
        %970 = vmatpush2.bf16.msra.mxu0 0
        %971 = vmatprep.subr.bf16.mxu0 0
        %972 = vmatpush2.bf16.msra.mxu0 0
        %973 = vmatprep.subr.bf16.mxu0 0
        %974 = vmatpush2.bf16.msra.mxu0 0
        %975 = vmatprep.subr.bf16.mxu0 0
        %976 = vmatpush2.bf16.msra.mxu0 0
        %977 = vmatprep.subr.bf16.mxu0 0
        %978 = vmatpush2.bf16.msra.mxu0 0
        %979 = vmatprep.subr.bf16.mxu0 0
        %980 = vmatpush2.bf16.msra.mxu0 0
        %981 = vmatprep.subr.bf16.mxu0 0
        %982 = vmatpush2.bf16.msra.mxu0 0
        %983 = vmatprep.subr.bf16.mxu0 0
        %984 = vmatpush2.bf16.msra.mxu0 0
        %985 = vmatprep.mubr.bf16.mxu0 0
        %986 = vmatmul.mubr.bf16.gmra.mxu0 %v948
        %v987 = vpop.f32.mrf.mxu0
        %v988 = vadd.f32 0.0, %v987
        %v989 = vpop.f32.mrf.mxu0
        %v990 = vpop.f32.mrf.mxu0
        %v991 = vpop.f32.mrf.mxu0
        %992 = vdwg.mxu0
        %v993 = vpack.c.bf16 %v844, %v844
        %v994 = vpack.c.bf16 %v892, %v892
        %v995 = vpack.c.bf16 %v940, %v940
        %v996 = vpack.c.bf16 %v988, %v988
        %v997 = vld [vmem:[%s4] sm:$0xf]
        %v998 = vld [vmem:[%s4 + $0x4] sm:$0xf]
        %v999 = vld [vmem:[%s4 + $0x8] sm:$0xf]
        %v1000 = vld [vmem:[%s4 + $0xc] sm:$0xf]
        %v1002 = vsel %vm561, %v993, 0
        %v1005 = vsel %vm805, %v997, 0
        %1007 = vmatprep.subr.bf16.mxu0 0
        %1008 = vmatpush1.bf16.msra.mxu0 0
        %1009 = vmatprep.subr.bf16.mxu0 0
        %1010 = vmatpush1.bf16.msra.mxu0 0
        %1011 = vmatprep.subr.bf16.mxu0 0
        %1012 = vmatpush1.bf16.msra.mxu0 0
        %1013 = vmatprep.subr.bf16.mxu0 0
        %1014 = vmatpush1.bf16.msra.mxu0 0
        %1015 = vmatprep.subr.bf16.mxu0 0
        %1016 = vmatpush1.bf16.msra.mxu0 0
        %1017 = vmatprep.subr.bf16.mxu0 0
        %1018 = vmatpush1.bf16.msra.mxu0 0
        %1019 = vmatprep.subr.bf16.mxu0 0
        %1020 = vmatpush1.bf16.msra.mxu0 0
        %1021 = vmatprep.subr.bf16.mxu0 0
        %1022 = vmatpush1.bf16.msra.mxu0 %v1005
        %1023 = vmatprep.subr.bf16.mxu0 0
        %1024 = vmatpush2.bf16.msra.mxu0 0
        %1025 = vmatprep.subr.bf16.mxu0 0
        %1026 = vmatpush2.bf16.msra.mxu0 0
        %1027 = vmatprep.subr.bf16.mxu0 0
        %1028 = vmatpush2.bf16.msra.mxu0 0
        %1029 = vmatprep.subr.bf16.mxu0 0
        %1030 = vmatpush2.bf16.msra.mxu0 0
        %1031 = vmatprep.subr.bf16.mxu0 0
        %1032 = vmatpush2.bf16.msra.mxu0 0
        %1033 = vmatprep.subr.bf16.mxu0 0
        %1034 = vmatpush2.bf16.msra.mxu0 0
        %1035 = vmatprep.subr.bf16.mxu0 0
        %1036 = vmatpush2.bf16.msra.mxu0 0
        %1037 = vmatprep.subr.bf16.mxu0 0
        %1038 = vmatpush2.bf16.msra.mxu0 0
        %1039 = vmatprep.mubr.bf16.mxu0 0
        %1040 = vmatmul.mubr.bf16.gmra.mxu0 %v1002
        %v1041 = vpop.f32.mrf.mxu0
        %v1042 = vadd.f32 0.0, %v1041
        %v1043 = vpop.f32.mrf.mxu0
        %v1044 = vpop.f32.mrf.mxu0
        %v1045 = vpop.f32.mrf.mxu0
        %1046 = vdwg.mxu0
        %v1048 = vsel %vm561, %v994, 0
        %v1051 = vsel %vm805, %v998, 0
        %1053 = vmatprep.subr.bf16.mxu0 0
        %1054 = vmatpush1.bf16.msra.mxu0 0
        %1055 = vmatprep.subr.bf16.mxu0 0
        %1056 = vmatpush1.bf16.msra.mxu0 0
        %1057 = vmatprep.subr.bf16.mxu0 0
        %1058 = vmatpush1.bf16.msra.mxu0 0
        %1059 = vmatprep.subr.bf16.mxu0 0
        %1060 = vmatpush1.bf16.msra.mxu0 0
        %1061 = vmatprep.subr.bf16.mxu0 0
        %1062 = vmatpush1.bf16.msra.mxu0 0
        %1063 = vmatprep.subr.bf16.mxu0 0
        %1064 = vmatpush1.bf16.msra.mxu0 0
        %1065 = vmatprep.subr.bf16.mxu0 0
        %1066 = vmatpush1.bf16.msra.mxu0 0
        %1067 = vmatprep.subr.bf16.mxu0 0
        %1068 = vmatpush1.bf16.msra.mxu0 %v1051
        %1069 = vmatprep.subr.bf16.mxu0 0
        %1070 = vmatpush2.bf16.msra.mxu0 0
        %1071 = vmatprep.subr.bf16.mxu0 0
        %1072 = vmatpush2.bf16.msra.mxu0 0
        %1073 = vmatprep.subr.bf16.mxu0 0
        %1074 = vmatpush2.bf16.msra.mxu0 0
        %1075 = vmatprep.subr.bf16.mxu0 0
        %1076 = vmatpush2.bf16.msra.mxu0 0
        %1077 = vmatprep.subr.bf16.mxu0 0
        %1078 = vmatpush2.bf16.msra.mxu0 0
        %1079 = vmatprep.subr.bf16.mxu0 0
        %1080 = vmatpush2.bf16.msra.mxu0 0
        %1081 = vmatprep.subr.bf16.mxu0 0
        %1082 = vmatpush2.bf16.msra.mxu0 0
        %1083 = vmatprep.subr.bf16.mxu0 0
        %1084 = vmatpush2.bf16.msra.mxu0 0
        %1085 = vmatprep.mubr.bf16.mxu0 0
        %1086 = vmatmul.mubr.bf16.gmra.mxu0 %v1048
        %v1087 = vpop.f32.mrf.mxu0
        %v1088 = vadd.f32 0.0, %v1087
        %v1089 = vpop.f32.mrf.mxu0
        %v1090 = vpop.f32.mrf.mxu0
        %v1091 = vpop.f32.mrf.mxu0
        %1092 = vdwg.mxu0
        %v1094 = vsel %vm561, %v995, 0
        %v1097 = vsel %vm805, %v999, 0
        %1099 = vmatprep.subr.bf16.mxu0 0
        %1100 = vmatpush1.bf16.msra.mxu0 0
        %1101 = vmatprep.subr.bf16.mxu0 0
        %1102 = vmatpush1.bf16.msra.mxu0 0
        %1103 = vmatprep.subr.bf16.mxu0 0
        %1104 = vmatpush1.bf16.msra.mxu0 0
        %1105 = vmatprep.subr.bf16.mxu0 0
        %1106 = vmatpush1.bf16.msra.mxu0 0
        %1107 = vmatprep.subr.bf16.mxu0 0
        %1108 = vmatpush1.bf16.msra.mxu0 0
        %1109 = vmatprep.subr.bf16.mxu0 0
        %1110 = vmatpush1.bf16.msra.mxu0 0
        %1111 = vmatprep.subr.bf16.mxu0 0
        %1112 = vmatpush1.bf16.msra.mxu0 0
        %1113 = vmatprep.subr.bf16.mxu0 0
        %1114 = vmatpush1.bf16.msra.mxu0 %v1097
        %1115 = vmatprep.subr.bf16.mxu0 0
        %1116 = vmatpush2.bf16.msra.mxu0 0
        %1117 = vmatprep.subr.bf16.mxu0 0
        %1118 = vmatpush2.bf16.msra.mxu0 0
        %1119 = vmatprep.subr.bf16.mxu0 0
        %1120 = vmatpush2.bf16.msra.mxu0 0
        %1121 = vmatprep.subr.bf16.mxu0 0
        %1122 = vmatpush2.bf16.msra.mxu0 0
        %1123 = vmatprep.subr.bf16.mxu0 0
        %1124 = vmatpush2.bf16.msra.mxu0 0
        %1125 = vmatprep.subr.bf16.mxu0 0
        %1126 = vmatpush2.bf16.msra.mxu0 0
        %1127 = vmatprep.subr.bf16.mxu0 0
        %1128 = vmatpush2.bf16.msra.mxu0 0
        %1129 = vmatprep.subr.bf16.mxu0 0
        %1130 = vmatpush2.bf16.msra.mxu0 0
        %1131 = vmatprep.mubr.bf16.mxu0 0
        %1132 = vmatmul.mubr.bf16.gmra.mxu0 %v1094
        %v1133 = vpop.f32.mrf.mxu0
        %v1134 = vadd.f32 0.0, %v1133
        %v1135 = vpop.f32.mrf.mxu0
        %v1136 = vpop.f32.mrf.mxu0
        %v1137 = vpop.f32.mrf.mxu0
        %1138 = vdwg.mxu0
        %v1140 = vsel %vm561, %v996, 0
        %v1143 = vsel %vm805, %v1000, 0
        %1145 = vmatprep.subr.bf16.mxu0 0
        %1146 = vmatpush1.bf16.msra.mxu0 0
        %1147 = vmatprep.subr.bf16.mxu0 0
        %1148 = vmatpush1.bf16.msra.mxu0 0
        %1149 = vmatprep.subr.bf16.mxu0 0
        %1150 = vmatpush1.bf16.msra.mxu0 0
        %1151 = vmatprep.subr.bf16.mxu0 0
        %1152 = vmatpush1.bf16.msra.mxu0 0
        %1153 = vmatprep.subr.bf16.mxu0 0
        %1154 = vmatpush1.bf16.msra.mxu0 0
        %1155 = vmatprep.subr.bf16.mxu0 0
        %1156 = vmatpush1.bf16.msra.mxu0 0
        %1157 = vmatprep.subr.bf16.mxu0 0
        %1158 = vmatpush1.bf16.msra.mxu0 0
        %1159 = vmatprep.subr.bf16.mxu0 0
        %1160 = vmatpush1.bf16.msra.mxu0 %v1143
        %1161 = vmatprep.subr.bf16.mxu0 0
        %1162 = vmatpush2.bf16.msra.mxu0 0
        %1163 = vmatprep.subr.bf16.mxu0 0
        %1164 = vmatpush2.bf16.msra.mxu0 0
        %1165 = vmatprep.subr.bf16.mxu0 0
        %1166 = vmatpush2.bf16.msra.mxu0 0
        %1167 = vmatprep.subr.bf16.mxu0 0
        %1168 = vmatpush2.bf16.msra.mxu0 0
        %1169 = vmatprep.subr.bf16.mxu0 0
        %1170 = vmatpush2.bf16.msra.mxu0 0
        %1171 = vmatprep.subr.bf16.mxu0 0
        %1172 = vmatpush2.bf16.msra.mxu0 0
        %1173 = vmatprep.subr.bf16.mxu0 0
        %1174 = vmatpush2.bf16.msra.mxu0 0
        %1175 = vmatprep.subr.bf16.mxu0 0
        %1176 = vmatpush2.bf16.msra.mxu0 0
        %1177 = vmatprep.mubr.bf16.mxu0 0
        %1178 = vmatmul.mubr.bf16.gmra.mxu0 %v1140
        %v1179 = vpop.f32.mrf.mxu0
        %v1180 = vadd.f32 0.0, %v1179
        %v1181 = vpop.f32.mrf.mxu0
        %v1182 = vpop.f32.mrf.mxu0
        %v1183 = vpop.f32.mrf.mxu0
        %1184 = vdwg.mxu0
        %v1185 = vsel %vm506, %v1042, 0.0
        %v1186 = vsel %vm506, %v1088, 0.0
        %v1187 = vadd.f32 %v1185, %v1186
        %v1188 = vsel %vm506, %v1134, 0.0
        %v1189 = vadd.f32 %v1187, %v1188
        %v1190 = vsel %vm506, %v1180, 0.0
        %v1191 = vadd.f32 %v1189, %v1190
        %v1192 = vadd.f32 %v481, %v1191
        %v1193 = vld [vmem:[%s5] sm:$0x1]
        %v1195 = vlaneseq
        %v1196 = vshrl.u32 %v1195, 7
        %v1197 = vsub.s32 0, %v1196
        %v1198 = vrot.slane %v1193, %v1197
        %v1200 = vadd.f32 %v1192, %v1198
        %v1201 = vpack.c.bf16 %v1200, %v1200
        %v1202 = vld [vmem:[%s6] sm:$0xff]
        %v1203 = vld [vmem:[%s6 + $0x8] sm:$0xff]
        %v1204 = vld [vmem:[%s6 + $0x10] sm:$0xff]
        %v1205 = vld [vmem:[%s6 + $0x18] sm:$0xff]
        %v1206 = vld [vmem:[%s6 + $0x20] sm:$0xff]
        %v1207 = vld [vmem:[%s6 + $0x28] sm:$0xff]
        %v1208 = vld [vmem:[%s6 + $0x30] sm:$0xff]
        %v1209 = vld [vmem:[%s6 + $0x38] sm:$0xff]
        %v1210 = vld [vmem:[%s6 + $0x40] sm:$0xff]
        %v1211 = vld [vmem:[%s6 + $0x48] sm:$0xff]
        %v1212 = vld [vmem:[%s6 + $0x50] sm:$0xff]
        %v1213 = vld [vmem:[%s6 + $0x58] sm:$0xff]
        %v1214 = vld [vmem:[%s6 + $0x60] sm:$0xff]
        %v1215 = vld [vmem:[%s6 + $0x68] sm:$0xff]
        %v1216 = vld [vmem:[%s6 + $0x70] sm:$0xff]
        %v1217 = vld [vmem:[%s6 + $0x78] sm:$0xff]
        %v1218 = vld [vmem:[%s6 + $0x80] sm:$0xff]
        %v1219 = vld [vmem:[%s6 + $0x88] sm:$0xff]
        %v1220 = vld [vmem:[%s6 + $0x90] sm:$0xff]
        %v1221 = vld [vmem:[%s6 + $0x98] sm:$0xff]
        %v1222 = vld [vmem:[%s6 + $0xa0] sm:$0xff]
        %v1223 = vld [vmem:[%s6 + $0xa8] sm:$0xff]
        %v1224 = vld [vmem:[%s6 + $0xb0] sm:$0xff]
        %v1225 = vld [vmem:[%s6 + $0xb8] sm:$0xff]
        %v1226 = vld [vmem:[%s6 + $0xc0] sm:$0xff]
        %v1227 = vld [vmem:[%s6 + $0xc8] sm:$0xff]
        %v1228 = vld [vmem:[%s6 + $0xd0] sm:$0xff]
        %v1229 = vld [vmem:[%s6 + $0xd8] sm:$0xff]
        %v1230 = vld [vmem:[%s6 + $0xe0] sm:$0xff]
        %v1231 = vld [vmem:[%s6 + $0xe8] sm:$0xff]
        %v1232 = vld [vmem:[%s6 + $0xf0] sm:$0xff]
        %v1233 = vld [vmem:[%s6 + $0xf8] sm:$0xff]
        %v1234 = vld [vmem:[%s7] sm:$0xff]
        %v1235 = vld [vmem:[%s7 + $0x8] sm:$0xff]
        %v1238 = vlaneseq
        %v1239 = vshrl.u32 %v1238, 7
        %v1240 = vsub.s32 0, %v1239
        %v1241 = vrot.slane %v1234, %v1240
        %v1242 = vlaneseq
        %v1243 = vshrl.u32 %v1242, 7
        %v1244 = vsub.s32 1, %v1243
        %v1245 = vrot.slane %v1234, %v1244
        %v1246 = vlaneseq
        %v1247 = vshrl.u32 %v1246, 7
        %v1248 = vsub.s32 2, %v1247
        %v1249 = vrot.slane %v1234, %v1248
        %v1250 = vlaneseq
        %v1251 = vshrl.u32 %v1250, 7
        %v1252 = vsub.s32 3, %v1251
        %v1253 = vrot.slane %v1234, %v1252
        %v1254 = vlaneseq
        %v1255 = vshrl.u32 %v1254, 7
        %v1256 = vsub.s32 4, %v1255
        %v1257 = vrot.slane %v1234, %v1256
        %v1258 = vlaneseq
        %v1259 = vshrl.u32 %v1258, 7
        %v1260 = vsub.s32 5, %v1259
        %v1261 = vrot.slane %v1234, %v1260
        %v1262 = vlaneseq
        %v1263 = vshrl.u32 %v1262, 7
        %v1264 = vsub.s32 6, %v1263
        %v1265 = vrot.slane %v1234, %v1264
        %v1266 = vlaneseq
        %v1267 = vshrl.u32 %v1266, 7
        %v1268 = vsub.s32 7, %v1267
        %v1269 = vrot.slane %v1234, %v1268
        %v1270 = vlaneseq
        %v1271 = vshrl.u32 %v1270, 7
        %v1272 = vsub.s32 0, %v1271
        %v1273 = vrot.slane %v1235, %v1272
        %v1274 = vlaneseq
        %v1275 = vshrl.u32 %v1274, 7
        %v1276 = vsub.s32 1, %v1275
        %v1277 = vrot.slane %v1235, %v1276
        %v1278 = vlaneseq
        %v1279 = vshrl.u32 %v1278, 7
        %v1280 = vsub.s32 2, %v1279
        %v1281 = vrot.slane %v1235, %v1280
        %v1282 = vlaneseq
        %v1283 = vshrl.u32 %v1282, 7
        %v1284 = vsub.s32 3, %v1283
        %v1285 = vrot.slane %v1235, %v1284
        %v1286 = vlaneseq
        %v1287 = vshrl.u32 %v1286, 7
        %v1288 = vsub.s32 4, %v1287
        %v1289 = vrot.slane %v1235, %v1288
        %v1290 = vlaneseq
        %v1291 = vshrl.u32 %v1290, 7
        %v1292 = vsub.s32 5, %v1291
        %v1293 = vrot.slane %v1235, %v1292
        %v1294 = vlaneseq
        %v1295 = vshrl.u32 %v1294, 7
        %v1296 = vsub.s32 6, %v1295
        %v1297 = vrot.slane %v1235, %v1296
        %v1298 = vlaneseq
        %v1299 = vshrl.u32 %v1298, 7
        %v1300 = vsub.s32 7, %v1299
        %v1301 = vrot.slane %v1235, %v1300
        %v1350 = vunpack.c.l.b16 %v1202
        %v1351 = vunpack.c.h.b16 %v1202
        %v1352 = vunpack.c.l.b16 %v1203
        %v1353 = vunpack.c.h.b16 %v1203
        %v1354 = vunpack.c.l.b16 %v1204
        %v1355 = vunpack.c.h.b16 %v1204
        %v1356 = vunpack.c.l.b16 %v1205
        %v1357 = vunpack.c.h.b16 %v1205
        %v1358 = vunpack.c.l.b16 %v1206
        %v1359 = vunpack.c.h.b16 %v1206
        %v1360 = vunpack.c.l.b16 %v1207
        %v1361 = vunpack.c.h.b16 %v1207
        %v1362 = vunpack.c.l.b16 %v1208
        %v1363 = vunpack.c.h.b16 %v1208
        %v1364 = vunpack.c.l.b16 %v1209
        %v1365 = vunpack.c.h.b16 %v1209
        %v1366 = vunpack.c.l.b16 %v1210
        %v1367 = vunpack.c.h.b16 %v1210
        %v1368 = vunpack.c.l.b16 %v1211
        %v1369 = vunpack.c.h.b16 %v1211
        %v1370 = vunpack.c.l.b16 %v1212
        %v1371 = vunpack.c.h.b16 %v1212
        %v1372 = vunpack.c.l.b16 %v1213
        %v1373 = vunpack.c.h.b16 %v1213
        %v1374 = vunpack.c.l.b16 %v1214
        %v1375 = vunpack.c.h.b16 %v1214
        %v1376 = vunpack.c.l.b16 %v1215
        %v1377 = vunpack.c.h.b16 %v1215
        %v1378 = vunpack.c.l.b16 %v1216
        %v1379 = vunpack.c.h.b16 %v1216
        %v1380 = vunpack.c.l.b16 %v1217
        %v1381 = vunpack.c.h.b16 %v1217
        %v1382 = vunpack.c.l.b16 %v1218
        %v1383 = vunpack.c.h.b16 %v1218
        %v1384 = vunpack.c.l.b16 %v1219
        %v1385 = vunpack.c.h.b16 %v1219
        %v1386 = vunpack.c.l.b16 %v1220
        %v1387 = vunpack.c.h.b16 %v1220
        %v1388 = vunpack.c.l.b16 %v1221
        %v1389 = vunpack.c.h.b16 %v1221
        %v1390 = vunpack.c.l.b16 %v1222
        %v1391 = vunpack.c.h.b16 %v1222
        %v1392 = vunpack.c.l.b16 %v1223
        %v1393 = vunpack.c.h.b16 %v1223
        %v1394 = vunpack.c.l.b16 %v1224
        %v1395 = vunpack.c.h.b16 %v1224
        %v1396 = vunpack.c.l.b16 %v1225
        %v1397 = vunpack.c.h.b16 %v1225
        %v1398 = vunpack.c.l.b16 %v1226
        %v1399 = vunpack.c.h.b16 %v1226
        %v1400 = vunpack.c.l.b16 %v1227
        %v1401 = vunpack.c.h.b16 %v1227
        %v1402 = vunpack.c.l.b16 %v1228
        %v1403 = vunpack.c.h.b16 %v1228
        %v1404 = vunpack.c.l.b16 %v1229
        %v1405 = vunpack.c.h.b16 %v1229
        %v1406 = vunpack.c.l.b16 %v1230
        %v1407 = vunpack.c.h.b16 %v1230
        %v1408 = vunpack.c.l.b16 %v1231
        %v1409 = vunpack.c.h.b16 %v1231
        %v1410 = vunpack.c.l.b16 %v1232
        %v1411 = vunpack.c.h.b16 %v1232
        %v1412 = vunpack.c.l.b16 %v1233
        %v1413 = vunpack.c.h.b16 %v1233
        %v1414 = vpack.c.b16 %v1366, %v1350
        %v1415 = vpack.c.b16 %v1367, %v1351
        %v1416 = vpack.c.b16 %v1368, %v1352
        %v1417 = vpack.c.b16 %v1369, %v1353
        %v1418 = vpack.c.b16 %v1370, %v1354
        %v1419 = vpack.c.b16 %v1371, %v1355
        %v1420 = vpack.c.b16 %v1372, %v1356
        %v1421 = vpack.c.b16 %v1373, %v1357
        %v1422 = vpack.c.b16 %v1374, %v1358
        %v1423 = vpack.c.b16 %v1375, %v1359
        %v1424 = vpack.c.b16 %v1376, %v1360
        %v1425 = vpack.c.b16 %v1377, %v1361
        %v1426 = vpack.c.b16 %v1378, %v1362
        %v1427 = vpack.c.b16 %v1379, %v1363
        %v1428 = vpack.c.b16 %v1380, %v1364
        %v1429 = vpack.c.b16 %v1381, %v1365
        %v1430 = vpack.c.b16 %v1398, %v1382
        %v1431 = vpack.c.b16 %v1399, %v1383
        %v1432 = vpack.c.b16 %v1400, %v1384
        %v1433 = vpack.c.b16 %v1401, %v1385
        %v1434 = vpack.c.b16 %v1402, %v1386
        %v1435 = vpack.c.b16 %v1403, %v1387
        %v1436 = vpack.c.b16 %v1404, %v1388
        %v1437 = vpack.c.b16 %v1405, %v1389
        %v1438 = vpack.c.b16 %v1406, %v1390
        %v1439 = vpack.c.b16 %v1407, %v1391
        %v1440 = vpack.c.b16 %v1408, %v1392
        %v1441 = vpack.c.b16 %v1409, %v1393
        %v1442 = vpack.c.b16 %v1410, %v1394
        %v1443 = vpack.c.b16 %v1411, %v1395
        %v1444 = vpack.c.b16 %v1412, %v1396
        %v1445 = vpack.c.b16 %v1413, %v1397
        %v1479 = vsel %vm506, %v1201, 0
        %1481 = vmatprep.subr.bf16.mxu0 0
        %1482 = vmatpush1.bf16.msra.mxu0 0
        %1483 = vmatprep.subr.bf16.mxu0 0
        %1484 = vmatpush1.bf16.msra.mxu0 0
        %1485 = vmatprep.subr.bf16.mxu0 0
        %1486 = vmatpush1.bf16.msra.mxu0 0
        %1487 = vmatprep.subr.bf16.mxu0 0
        %1488 = vmatpush1.bf16.msra.mxu0 0
        %1489 = vmatprep.subr.bf16.mxu0 0
        %1490 = vmatpush1.bf16.msra.mxu0 0
        %1491 = vmatprep.subr.bf16.mxu0 0
        %1492 = vmatpush1.bf16.msra.mxu0 0
        %1493 = vmatprep.subr.bf16.mxu0 %v1431
        %1494 = vmatpush1.bf16.msra.mxu0 %v1430
        %1495 = vmatprep.subr.bf16.mxu0 %v1415
        %1496 = vmatpush1.bf16.msra.mxu0 %v1414
        %1497 = vmatprep.subr.bf16.mxu0 0
        %1498 = vmatpush2.bf16.msra.mxu0 0
        %1499 = vmatprep.subr.bf16.mxu0 0
        %1500 = vmatpush2.bf16.msra.mxu0 0
        %1501 = vmatprep.subr.bf16.mxu0 0
        %1502 = vmatpush2.bf16.msra.mxu0 0
        %1503 = vmatprep.subr.bf16.mxu0 0
        %1504 = vmatpush2.bf16.msra.mxu0 0
        %1505 = vmatprep.subr.bf16.mxu0 0
        %1506 = vmatpush2.bf16.msra.mxu0 0
        %1507 = vmatprep.subr.bf16.mxu0 0
        %1508 = vmatpush2.bf16.msra.mxu0 0
        %1509 = vmatprep.subr.bf16.mxu0 0
        %1510 = vmatpush2.bf16.msra.mxu0 0
        %1511 = vmatprep.subr.bf16.mxu0 0
        %1512 = vmatpush2.bf16.msra.mxu0 0
        %1513 = vmatprep.mubr.bf16.mxu0 0
        %1514 = vmatmul.mubr.bf16.gmra.mxu0 %v1479
        %v1515 = vpop.f32.mrf.mxu0
        %v1516 = vadd.f32 %v1241, %v1515
        %v1517 = vpop.f32.mrf.mxu0
        %v1518 = vadd.f32 %v1245, %v1517
        %v1519 = vpop.f32.mrf.mxu0
        %v1520 = vpop.f32.mrf.mxu0
        %1521 = vdwg.mxu0
        %1522 = vmatprep.subr.bf16.mxu0 0
        %1523 = vmatpush1.bf16.msra.mxu0 0
        %1524 = vmatprep.subr.bf16.mxu0 0
        %1525 = vmatpush1.bf16.msra.mxu0 0
        %1526 = vmatprep.subr.bf16.mxu0 0
        %1527 = vmatpush1.bf16.msra.mxu0 0
        %1528 = vmatprep.subr.bf16.mxu0 0
        %1529 = vmatpush1.bf16.msra.mxu0 0
        %1530 = vmatprep.subr.bf16.mxu0 0
        %1531 = vmatpush1.bf16.msra.mxu0 0
        %1532 = vmatprep.subr.bf16.mxu0 0
        %1533 = vmatpush1.bf16.msra.mxu0 0
        %1534 = vmatprep.subr.bf16.mxu0 %v1433
        %1535 = vmatpush1.bf16.msra.mxu0 %v1432
        %1536 = vmatprep.subr.bf16.mxu0 %v1417
        %1537 = vmatpush1.bf16.msra.mxu0 %v1416
        %1538 = vmatprep.subr.bf16.mxu0 0
        %1539 = vmatpush2.bf16.msra.mxu0 0
        %1540 = vmatprep.subr.bf16.mxu0 0
        %1541 = vmatpush2.bf16.msra.mxu0 0
        %1542 = vmatprep.subr.bf16.mxu0 0
        %1543 = vmatpush2.bf16.msra.mxu0 0
        %1544 = vmatprep.subr.bf16.mxu0 0
        %1545 = vmatpush2.bf16.msra.mxu0 0
        %1546 = vmatprep.subr.bf16.mxu0 0
        %1547 = vmatpush2.bf16.msra.mxu0 0
        %1548 = vmatprep.subr.bf16.mxu0 0
        %1549 = vmatpush2.bf16.msra.mxu0 0
        %1550 = vmatprep.subr.bf16.mxu0 0
        %1551 = vmatpush2.bf16.msra.mxu0 0
        %1552 = vmatprep.subr.bf16.mxu0 0
        %1553 = vmatpush2.bf16.msra.mxu0 0
        %1554 = vmatprep.mubr.bf16.mxu0 0
        %1555 = vmatmul.mubr.bf16.gmra.mxu0 %v1479
        %v1556 = vpop.f32.mrf.mxu0
        %v1557 = vadd.f32 %v1249, %v1556
        %v1558 = vpop.f32.mrf.mxu0
        %v1559 = vadd.f32 %v1253, %v1558
        %v1560 = vpop.f32.mrf.mxu0
        %v1561 = vpop.f32.mrf.mxu0
        %1562 = vdwg.mxu0
        %1563 = vmatprep.subr.bf16.mxu0 0
        %1564 = vmatpush1.bf16.msra.mxu0 0
        %1565 = vmatprep.subr.bf16.mxu0 0
        %1566 = vmatpush1.bf16.msra.mxu0 0
        %1567 = vmatprep.subr.bf16.mxu0 0
        %1568 = vmatpush1.bf16.msra.mxu0 0
        %1569 = vmatprep.subr.bf16.mxu0 0
        %1570 = vmatpush1.bf16.msra.mxu0 0
        %1571 = vmatprep.subr.bf16.mxu0 0
        %1572 = vmatpush1.bf16.msra.mxu0 0
        %1573 = vmatprep.subr.bf16.mxu0 0
        %1574 = vmatpush1.bf16.msra.mxu0 0
        %1575 = vmatprep.subr.bf16.mxu0 %v1435
        %1576 = vmatpush1.bf16.msra.mxu0 %v1434
        %1577 = vmatprep.subr.bf16.mxu0 %v1419
        %1578 = vmatpush1.bf16.msra.mxu0 %v1418
        %1579 = vmatprep.subr.bf16.mxu0 0
        %1580 = vmatpush2.bf16.msra.mxu0 0
        %1581 = vmatprep.subr.bf16.mxu0 0
        %1582 = vmatpush2.bf16.msra.mxu0 0
        %1583 = vmatprep.subr.bf16.mxu0 0
        %1584 = vmatpush2.bf16.msra.mxu0 0
        %1585 = vmatprep.subr.bf16.mxu0 0
        %1586 = vmatpush2.bf16.msra.mxu0 0
        %1587 = vmatprep.subr.bf16.mxu0 0
        %1588 = vmatpush2.bf16.msra.mxu0 0
        %1589 = vmatprep.subr.bf16.mxu0 0
        %1590 = vmatpush2.bf16.msra.mxu0 0
        %1591 = vmatprep.subr.bf16.mxu0 0
        %1592 = vmatpush2.bf16.msra.mxu0 0
        %1593 = vmatprep.subr.bf16.mxu0 0
        %1594 = vmatpush2.bf16.msra.mxu0 0
        %1595 = vmatprep.mubr.bf16.mxu0 0
        %1596 = vmatmul.mubr.bf16.gmra.mxu0 %v1479
        %v1597 = vpop.f32.mrf.mxu0
        %v1598 = vadd.f32 %v1257, %v1597
        %v1599 = vpop.f32.mrf.mxu0
        %v1600 = vadd.f32 %v1261, %v1599
        %v1601 = vpop.f32.mrf.mxu0
        %v1602 = vpop.f32.mrf.mxu0
        %1603 = vdwg.mxu0
        %1604 = vmatprep.subr.bf16.mxu0 0
        %1605 = vmatpush1.bf16.msra.mxu0 0
        %1606 = vmatprep.subr.bf16.mxu0 0
        %1607 = vmatpush1.bf16.msra.mxu0 0
        %1608 = vmatprep.subr.bf16.mxu0 0
        %1609 = vmatpush1.bf16.msra.mxu0 0
        %1610 = vmatprep.subr.bf16.mxu0 0
        %1611 = vmatpush1.bf16.msra.mxu0 0
        %1612 = vmatprep.subr.bf16.mxu0 0
        %1613 = vmatpush1.bf16.msra.mxu0 0
        %1614 = vmatprep.subr.bf16.mxu0 0
        %1615 = vmatpush1.bf16.msra.mxu0 0
        %1616 = vmatprep.subr.bf16.mxu0 %v1437
        %1617 = vmatpush1.bf16.msra.mxu0 %v1436
        %1618 = vmatprep.subr.bf16.mxu0 %v1421
        %1619 = vmatpush1.bf16.msra.mxu0 %v1420
        %1620 = vmatprep.subr.bf16.mxu0 0
        %1621 = vmatpush2.bf16.msra.mxu0 0
        %1622 = vmatprep.subr.bf16.mxu0 0
        %1623 = vmatpush2.bf16.msra.mxu0 0
        %1624 = vmatprep.subr.bf16.mxu0 0
        %1625 = vmatpush2.bf16.msra.mxu0 0
        %1626 = vmatprep.subr.bf16.mxu0 0
        %1627 = vmatpush2.bf16.msra.mxu0 0
        %1628 = vmatprep.subr.bf16.mxu0 0
        %1629 = vmatpush2.bf16.msra.mxu0 0
        %1630 = vmatprep.subr.bf16.mxu0 0
        %1631 = vmatpush2.bf16.msra.mxu0 0
        %1632 = vmatprep.subr.bf16.mxu0 0
        %1633 = vmatpush2.bf16.msra.mxu0 0
        %1634 = vmatprep.subr.bf16.mxu0 0
        %1635 = vmatpush2.bf16.msra.mxu0 0
        %1636 = vmatprep.mubr.bf16.mxu0 0
        %1637 = vmatmul.mubr.bf16.gmra.mxu0 %v1479
        %v1638 = vpop.f32.mrf.mxu0
        %v1639 = vadd.f32 %v1265, %v1638
        %v1640 = vpop.f32.mrf.mxu0
        %v1641 = vadd.f32 %v1269, %v1640
        %v1642 = vpop.f32.mrf.mxu0
        %v1643 = vpop.f32.mrf.mxu0
        %1644 = vdwg.mxu0
        %1645 = vmatprep.subr.bf16.mxu0 0
        %1646 = vmatpush1.bf16.msra.mxu0 0
        %1647 = vmatprep.subr.bf16.mxu0 0
        %1648 = vmatpush1.bf16.msra.mxu0 0
        %1649 = vmatprep.subr.bf16.mxu0 0
        %1650 = vmatpush1.bf16.msra.mxu0 0
        %1651 = vmatprep.subr.bf16.mxu0 0
        %1652 = vmatpush1.bf16.msra.mxu0 0
        %1653 = vmatprep.subr.bf16.mxu0 0
        %1654 = vmatpush1.bf16.msra.mxu0 0
        %1655 = vmatprep.subr.bf16.mxu0 0
        %1656 = vmatpush1.bf16.msra.mxu0 0
        %1657 = vmatprep.subr.bf16.mxu0 %v1439
        %1658 = vmatpush1.bf16.msra.mxu0 %v1438
        %1659 = vmatprep.subr.bf16.mxu0 %v1423
        %1660 = vmatpush1.bf16.msra.mxu0 %v1422
        %1661 = vmatprep.subr.bf16.mxu0 0
        %1662 = vmatpush2.bf16.msra.mxu0 0
        %1663 = vmatprep.subr.bf16.mxu0 0
        %1664 = vmatpush2.bf16.msra.mxu0 0
        %1665 = vmatprep.subr.bf16.mxu0 0
        %1666 = vmatpush2.bf16.msra.mxu0 0
        %1667 = vmatprep.subr.bf16.mxu0 0
        %1668 = vmatpush2.bf16.msra.mxu0 0
        %1669 = vmatprep.subr.bf16.mxu0 0
        %1670 = vmatpush2.bf16.msra.mxu0 0
        %1671 = vmatprep.subr.bf16.mxu0 0
        %1672 = vmatpush2.bf16.msra.mxu0 0
        %1673 = vmatprep.subr.bf16.mxu0 0
        %1674 = vmatpush2.bf16.msra.mxu0 0
        %1675 = vmatprep.subr.bf16.mxu0 0
        %1676 = vmatpush2.bf16.msra.mxu0 0
        %1677 = vmatprep.mubr.bf16.mxu0 0
        %1678 = vmatmul.mubr.bf16.gmra.mxu0 %v1479
        %v1679 = vpop.f32.mrf.mxu0
        %v1680 = vadd.f32 %v1273, %v1679
        %v1681 = vpop.f32.mrf.mxu0
        %v1682 = vadd.f32 %v1277, %v1681
        %v1683 = vpop.f32.mrf.mxu0
        %v1684 = vpop.f32.mrf.mxu0
        %1685 = vdwg.mxu0
        %1686 = vmatprep.subr.bf16.mxu0 0
        %1687 = vmatpush1.bf16.msra.mxu0 0
        %1688 = vmatprep.subr.bf16.mxu0 0
        %1689 = vmatpush1.bf16.msra.mxu0 0
        %1690 = vmatprep.subr.bf16.mxu0 0
        %1691 = vmatpush1.bf16.msra.mxu0 0
        %1692 = vmatprep.subr.bf16.mxu0 0
        %1693 = vmatpush1.bf16.msra.mxu0 0
        %1694 = vmatprep.subr.bf16.mxu0 0
        %1695 = vmatpush1.bf16.msra.mxu0 0
        %1696 = vmatprep.subr.bf16.mxu0 0
        %1697 = vmatpush1.bf16.msra.mxu0 0
        %1698 = vmatprep.subr.bf16.mxu0 %v1441
        %1699 = vmatpush1.bf16.msra.mxu0 %v1440
        %1700 = vmatprep.subr.bf16.mxu0 %v1425
        %1701 = vmatpush1.bf16.msra.mxu0 %v1424
        %1702 = vmatprep.subr.bf16.mxu0 0
        %1703 = vmatpush2.bf16.msra.mxu0 0
        %1704 = vmatprep.subr.bf16.mxu0 0
        %1705 = vmatpush2.bf16.msra.mxu0 0
        %1706 = vmatprep.subr.bf16.mxu0 0
        %1707 = vmatpush2.bf16.msra.mxu0 0
        %1708 = vmatprep.subr.bf16.mxu0 0
        %1709 = vmatpush2.bf16.msra.mxu0 0
        %1710 = vmatprep.subr.bf16.mxu0 0
        %1711 = vmatpush2.bf16.msra.mxu0 0
        %1712 = vmatprep.subr.bf16.mxu0 0
        %1713 = vmatpush2.bf16.msra.mxu0 0
        %1714 = vmatprep.subr.bf16.mxu0 0
        %1715 = vmatpush2.bf16.msra.mxu0 0
        %1716 = vmatprep.subr.bf16.mxu0 0
        %1717 = vmatpush2.bf16.msra.mxu0 0
        %1718 = vmatprep.mubr.bf16.mxu0 0
        %1719 = vmatmul.mubr.bf16.gmra.mxu0 %v1479
        %v1720 = vpop.f32.mrf.mxu0
        %v1721 = vadd.f32 %v1281, %v1720
        %v1722 = vpop.f32.mrf.mxu0
        %v1723 = vadd.f32 %v1285, %v1722
        %v1724 = vpop.f32.mrf.mxu0
        %v1725 = vpop.f32.mrf.mxu0
        %1726 = vdwg.mxu0
        %1727 = vmatprep.subr.bf16.mxu0 0
        %1728 = vmatpush1.bf16.msra.mxu0 0
        %1729 = vmatprep.subr.bf16.mxu0 0
        %1730 = vmatpush1.bf16.msra.mxu0 0
        %1731 = vmatprep.subr.bf16.mxu0 0
        %1732 = vmatpush1.bf16.msra.mxu0 0
        %1733 = vmatprep.subr.bf16.mxu0 0
        %1734 = vmatpush1.bf16.msra.mxu0 0
        %1735 = vmatprep.subr.bf16.mxu0 0
        %1736 = vmatpush1.bf16.msra.mxu0 0
        %1737 = vmatprep.subr.bf16.mxu0 0
        %1738 = vmatpush1.bf16.msra.mxu0 0
        %1739 = vmatprep.subr.bf16.mxu0 %v1443
        %1740 = vmatpush1.bf16.msra.mxu0 %v1442
        %1741 = vmatprep.subr.bf16.mxu0 %v1427
        %1742 = vmatpush1.bf16.msra.mxu0 %v1426
        %1743 = vmatprep.subr.bf16.mxu0 0
        %1744 = vmatpush2.bf16.msra.mxu0 0
        %1745 = vmatprep.subr.bf16.mxu0 0
        %1746 = vmatpush2.bf16.msra.mxu0 0
        %1747 = vmatprep.subr.bf16.mxu0 0
        %1748 = vmatpush2.bf16.msra.mxu0 0
        %1749 = vmatprep.subr.bf16.mxu0 0
        %1750 = vmatpush2.bf16.msra.mxu0 0
        %1751 = vmatprep.subr.bf16.mxu0 0
        %1752 = vmatpush2.bf16.msra.mxu0 0
        %1753 = vmatprep.subr.bf16.mxu0 0
        %1754 = vmatpush2.bf16.msra.mxu0 0
        %1755 = vmatprep.subr.bf16.mxu0 0
        %1756 = vmatpush2.bf16.msra.mxu0 0
        %1757 = vmatprep.subr.bf16.mxu0 0
        %1758 = vmatpush2.bf16.msra.mxu0 0
        %1759 = vmatprep.mubr.bf16.mxu0 0
        %1760 = vmatmul.mubr.bf16.gmra.mxu0 %v1479
        %v1761 = vpop.f32.mrf.mxu0
        %v1762 = vadd.f32 %v1289, %v1761
        %v1763 = vpop.f32.mrf.mxu0
        %v1764 = vadd.f32 %v1293, %v1763
        %v1765 = vpop.f32.mrf.mxu0
        %v1766 = vpop.f32.mrf.mxu0
        %1767 = vdwg.mxu0
        %1768 = vmatprep.subr.bf16.mxu0 0
        %1769 = vmatpush1.bf16.msra.mxu0 0
        %1770 = vmatprep.subr.bf16.mxu0 0
        %1771 = vmatpush1.bf16.msra.mxu0 0
        %1772 = vmatprep.subr.bf16.mxu0 0
        %1773 = vmatpush1.bf16.msra.mxu0 0
        %1774 = vmatprep.subr.bf16.mxu0 0
        %1775 = vmatpush1.bf16.msra.mxu0 0
        %1776 = vmatprep.subr.bf16.mxu0 0
        %1777 = vmatpush1.bf16.msra.mxu0 0
        %1778 = vmatprep.subr.bf16.mxu0 0
        %1779 = vmatpush1.bf16.msra.mxu0 0
        %1780 = vmatprep.subr.bf16.mxu0 %v1445
        %1781 = vmatpush1.bf16.msra.mxu0 %v1444
        %1782 = vmatprep.subr.bf16.mxu0 %v1429
        %1783 = vmatpush1.bf16.msra.mxu0 %v1428
        %1784 = vmatprep.subr.bf16.mxu0 0
        %1785 = vmatpush2.bf16.msra.mxu0 0
        %1786 = vmatprep.subr.bf16.mxu0 0
        %1787 = vmatpush2.bf16.msra.mxu0 0
        %1788 = vmatprep.subr.bf16.mxu0 0
        %1789 = vmatpush2.bf16.msra.mxu0 0
        %1790 = vmatprep.subr.bf16.mxu0 0
        %1791 = vmatpush2.bf16.msra.mxu0 0
        %1792 = vmatprep.subr.bf16.mxu0 0
        %1793 = vmatpush2.bf16.msra.mxu0 0
        %1794 = vmatprep.subr.bf16.mxu0 0
        %1795 = vmatpush2.bf16.msra.mxu0 0
        %1796 = vmatprep.subr.bf16.mxu0 0
        %1797 = vmatpush2.bf16.msra.mxu0 0
        %1798 = vmatprep.subr.bf16.mxu0 0
        %1799 = vmatpush2.bf16.msra.mxu0 0
        %1800 = vmatprep.mubr.bf16.mxu0 0
        %1801 = vmatmul.mubr.bf16.gmra.mxu0 %v1479
        %v1802 = vpop.f32.mrf.mxu0
        %v1803 = vadd.f32 %v1297, %v1802
        %v1804 = vpop.f32.mrf.mxu0
        %v1805 = vadd.f32 %v1301, %v1804
        %v1806 = vpop.f32.mrf.mxu0
        %v1807 = vpop.f32.mrf.mxu0
        %1808 = vdwg.mxu0
        %v1809 = vmax.f32 %v1516, 0.0
        %v1810 = vmax.f32 %v1518, 0.0
        %v1811 = vmax.f32 %v1557, 0.0
        %v1812 = vmax.f32 %v1559, 0.0
        %v1813 = vmax.f32 %v1598, 0.0
        %v1814 = vmax.f32 %v1600, 0.0
        %v1815 = vmax.f32 %v1639, 0.0
        %v1816 = vmax.f32 %v1641, 0.0
        %v1817 = vmax.f32 %v1680, 0.0
        %v1818 = vmax.f32 %v1682, 0.0
        %v1819 = vmax.f32 %v1721, 0.0
        %v1820 = vmax.f32 %v1723, 0.0
        %v1821 = vmax.f32 %v1762, 0.0
        %v1822 = vmax.f32 %v1764, 0.0
        %v1823 = vmax.f32 %v1803, 0.0
        %v1824 = vmax.f32 %v1805, 0.0
        %v1825 = vpack.c.bf16 %v1809, %v1809
        %v1826 = vpack.c.bf16 %v1810, %v1810
        %v1827 = vpack.c.bf16 %v1811, %v1811
        %v1828 = vpack.c.bf16 %v1812, %v1812
        %v1829 = vpack.c.bf16 %v1813, %v1813
        %v1830 = vpack.c.bf16 %v1814, %v1814
        %v1831 = vpack.c.bf16 %v1815, %v1815
        %v1832 = vpack.c.bf16 %v1816, %v1816
        %v1833 = vpack.c.bf16 %v1817, %v1817
        %v1834 = vpack.c.bf16 %v1818, %v1818
        %v1835 = vpack.c.bf16 %v1819, %v1819
        %v1836 = vpack.c.bf16 %v1820, %v1820
        %v1837 = vpack.c.bf16 %v1821, %v1821
        %v1838 = vpack.c.bf16 %v1822, %v1822
        %v1839 = vpack.c.bf16 %v1823, %v1823
        %v1840 = vpack.c.bf16 %v1824, %v1824
        %v1841 = vld [vmem:[%s8] sm:$0xf]
        %v1842 = vld [vmem:[%s8 + $0x4] sm:$0xf]
        %v1843 = vld [vmem:[%s8 + $0x8] sm:$0xf]
        %v1844 = vld [vmem:[%s8 + $0xc] sm:$0xf]
        %v1845 = vld [vmem:[%s8 + $0x10] sm:$0xf]
        %v1846 = vld [vmem:[%s8 + $0x14] sm:$0xf]
        %v1847 = vld [vmem:[%s8 + $0x18] sm:$0xf]
        %v1848 = vld [vmem:[%s8 + $0x1c] sm:$0xf]
        %v1849 = vld [vmem:[%s8 + $0x20] sm:$0xf]
        %v1850 = vld [vmem:[%s8 + $0x24] sm:$0xf]
        %v1851 = vld [vmem:[%s8 + $0x28] sm:$0xf]
        %v1852 = vld [vmem:[%s8 + $0x2c] sm:$0xf]
        %v1853 = vld [vmem:[%s8 + $0x30] sm:$0xf]
        %v1854 = vld [vmem:[%s8 + $0x34] sm:$0xf]
        %v1855 = vld [vmem:[%s8 + $0x38] sm:$0xf]
        %v1856 = vld [vmem:[%s8 + $0x3c] sm:$0xf]
        %v1857 = vld [vmem:[%s8 + $0x40] sm:$0xf]
        %v1858 = vld [vmem:[%s8 + $0x44] sm:$0xf]
        %v1859 = vld [vmem:[%s8 + $0x48] sm:$0xf]
        %v1860 = vld [vmem:[%s8 + $0x4c] sm:$0xf]
        %v1861 = vld [vmem:[%s8 + $0x50] sm:$0xf]
        %v1862 = vld [vmem:[%s8 + $0x54] sm:$0xf]
        %v1863 = vld [vmem:[%s8 + $0x58] sm:$0xf]
        %v1864 = vld [vmem:[%s8 + $0x5c] sm:$0xf]
        %v1865 = vld [vmem:[%s8 + $0x60] sm:$0xf]
        %v1866 = vld [vmem:[%s8 + $0x64] sm:$0xf]
        %v1867 = vld [vmem:[%s8 + $0x68] sm:$0xf]
        %v1868 = vld [vmem:[%s8 + $0x6c] sm:$0xf]
        %v1869 = vld [vmem:[%s8 + $0x70] sm:$0xf]
        %v1870 = vld [vmem:[%s8 + $0x74] sm:$0xf]
        %v1871 = vld [vmem:[%s8 + $0x78] sm:$0xf]
        %v1872 = vld [vmem:[%s8 + $0x7c] sm:$0xf]
        %v1873 = vld [vmem:[%s8 + $0x80] sm:$0xf]
        %v1874 = vld [vmem:[%s8 + $0x84] sm:$0xf]
        %v1875 = vld [vmem:[%s8 + $0x88] sm:$0xf]
        %v1876 = vld [vmem:[%s8 + $0x8c] sm:$0xf]
        %v1877 = vld [vmem:[%s8 + $0x90] sm:$0xf]
        %v1878 = vld [vmem:[%s8 + $0x94] sm:$0xf]
        %v1879 = vld [vmem:[%s8 + $0x98] sm:$0xf]
        %v1880 = vld [vmem:[%s8 + $0x9c] sm:$0xf]
        %v1881 = vld [vmem:[%s8 + $0xa0] sm:$0xf]
        %v1882 = vld [vmem:[%s8 + $0xa4] sm:$0xf]
        %v1883 = vld [vmem:[%s8 + $0xa8] sm:$0xf]
        %v1884 = vld [vmem:[%s8 + $0xac] sm:$0xf]
        %v1885 = vld [vmem:[%s8 + $0xb0] sm:$0xf]
        %v1886 = vld [vmem:[%s8 + $0xb4] sm:$0xf]
        %v1887 = vld [vmem:[%s8 + $0xb8] sm:$0xf]
        %v1888 = vld [vmem:[%s8 + $0xbc] sm:$0xf]
        %v1889 = vld [vmem:[%s8 + $0xc0] sm:$0xf]
        %v1890 = vld [vmem:[%s8 + $0xc4] sm:$0xf]
        %v1891 = vld [vmem:[%s8 + $0xc8] sm:$0xf]
        %v1892 = vld [vmem:[%s8 + $0xcc] sm:$0xf]
        %v1893 = vld [vmem:[%s8 + $0xd0] sm:$0xf]
        %v1894 = vld [vmem:[%s8 + $0xd4] sm:$0xf]
        %v1895 = vld [vmem:[%s8 + $0xd8] sm:$0xf]
        %v1896 = vld [vmem:[%s8 + $0xdc] sm:$0xf]
        %v1897 = vld [vmem:[%s8 + $0xe0] sm:$0xf]
        %v1898 = vld [vmem:[%s8 + $0xe4] sm:$0xf]
        %v1899 = vld [vmem:[%s8 + $0xe8] sm:$0xf]
        %v1900 = vld [vmem:[%s8 + $0xec] sm:$0xf]
        %v1901 = vld [vmem:[%s8 + $0xf0] sm:$0xf]
        %v1902 = vld [vmem:[%s8 + $0xf4] sm:$0xf]
        %v1903 = vld [vmem:[%s8 + $0xf8] sm:$0xf]
        %v1904 = vld [vmem:[%s8 + $0xfc] sm:$0xf]
        %v1905 = vld [vmem:[%s8 + $0x100] sm:$0xf]
        %v1906 = vld [vmem:[%s8 + $0x104] sm:$0xf]
        %v1907 = vld [vmem:[%s8 + $0x108] sm:$0xf]
        %v1908 = vld [vmem:[%s8 + $0x10c] sm:$0xf]
        %v1909 = vld [vmem:[%s8 + $0x110] sm:$0xf]
        %v1910 = vld [vmem:[%s8 + $0x114] sm:$0xf]
        %v1911 = vld [vmem:[%s8 + $0x118] sm:$0xf]
        %v1912 = vld [vmem:[%s8 + $0x11c] sm:$0xf]
        %v1913 = vld [vmem:[%s8 + $0x120] sm:$0xf]
        %v1914 = vld [vmem:[%s8 + $0x124] sm:$0xf]
        %v1915 = vld [vmem:[%s8 + $0x128] sm:$0xf]
        %v1916 = vld [vmem:[%s8 + $0x12c] sm:$0xf]
        %v1917 = vld [vmem:[%s8 + $0x130] sm:$0xf]
        %v1918 = vld [vmem:[%s8 + $0x134] sm:$0xf]
        %v1919 = vld [vmem:[%s8 + $0x138] sm:$0xf]
        %v1920 = vld [vmem:[%s8 + $0x13c] sm:$0xf]
        %v1921 = vld [vmem:[%s8 + $0x140] sm:$0xf]
        %v1922 = vld [vmem:[%s8 + $0x144] sm:$0xf]
        %v1923 = vld [vmem:[%s8 + $0x148] sm:$0xf]
        %v1924 = vld [vmem:[%s8 + $0x14c] sm:$0xf]
        %v1925 = vld [vmem:[%s8 + $0x150] sm:$0xf]
        %v1926 = vld [vmem:[%s8 + $0x154] sm:$0xf]
        %v1927 = vld [vmem:[%s8 + $0x158] sm:$0xf]
        %v1928 = vld [vmem:[%s8 + $0x15c] sm:$0xf]
        %v1929 = vld [vmem:[%s8 + $0x160] sm:$0xf]
        %v1930 = vld [vmem:[%s8 + $0x164] sm:$0xf]
        %v1931 = vld [vmem:[%s8 + $0x168] sm:$0xf]
        %v1932 = vld [vmem:[%s8 + $0x16c] sm:$0xf]
        %v1933 = vld [vmem:[%s8 + $0x170] sm:$0xf]
        %v1934 = vld [vmem:[%s8 + $0x174] sm:$0xf]
        %v1935 = vld [vmem:[%s8 + $0x178] sm:$0xf]
        %v1936 = vld [vmem:[%s8 + $0x17c] sm:$0xf]
        %v1937 = vld [vmem:[%s8 + $0x180] sm:$0xf]
        %v1938 = vld [vmem:[%s8 + $0x184] sm:$0xf]
        %v1939 = vld [vmem:[%s8 + $0x188] sm:$0xf]
        %v1940 = vld [vmem:[%s8 + $0x18c] sm:$0xf]
        %v1941 = vld [vmem:[%s8 + $0x190] sm:$0xf]
        %v1942 = vld [vmem:[%s8 + $0x194] sm:$0xf]
        %v1943 = vld [vmem:[%s8 + $0x198] sm:$0xf]
        %v1944 = vld [vmem:[%s8 + $0x19c] sm:$0xf]
        %v1945 = vld [vmem:[%s8 + $0x1a0] sm:$0xf]
        %v1946 = vld [vmem:[%s8 + $0x1a4] sm:$0xf]
        %v1947 = vld [vmem:[%s8 + $0x1a8] sm:$0xf]
        %v1948 = vld [vmem:[%s8 + $0x1ac] sm:$0xf]
        %v1949 = vld [vmem:[%s8 + $0x1b0] sm:$0xf]
        %v1950 = vld [vmem:[%s8 + $0x1b4] sm:$0xf]
        %v1951 = vld [vmem:[%s8 + $0x1b8] sm:$0xf]
        %v1952 = vld [vmem:[%s8 + $0x1bc] sm:$0xf]
        %v1953 = vld [vmem:[%s8 + $0x1c0] sm:$0xf]
        %v1954 = vld [vmem:[%s8 + $0x1c4] sm:$0xf]
        %v1955 = vld [vmem:[%s8 + $0x1c8] sm:$0xf]
        %v1956 = vld [vmem:[%s8 + $0x1cc] sm:$0xf]
        %v1957 = vld [vmem:[%s8 + $0x1d0] sm:$0xf]
        %v1958 = vld [vmem:[%s8 + $0x1d4] sm:$0xf]
        %v1959 = vld [vmem:[%s8 + $0x1d8] sm:$0xf]
        %v1960 = vld [vmem:[%s8 + $0x1dc] sm:$0xf]
        %v1961 = vld [vmem:[%s8 + $0x1e0] sm:$0xf]
        %v1962 = vld [vmem:[%s8 + $0x1e4] sm:$0xf]
        %v1963 = vld [vmem:[%s8 + $0x1e8] sm:$0xf]
        %v1964 = vld [vmem:[%s8 + $0x1ec] sm:$0xf]
        %v1965 = vld [vmem:[%s8 + $0x1f0] sm:$0xf]
        %v1966 = vld [vmem:[%s8 + $0x1f4] sm:$0xf]
        %v1967 = vld [vmem:[%s8 + $0x1f8] sm:$0xf]
        %v1968 = vld [vmem:[%s8 + $0x1fc] sm:$0xf]
        %v1969 = vld [vmem:[%s8 + $0x200] sm:$0xf]
        %v1970 = vld [vmem:[%s8 + $0x204] sm:$0xf]
        %v1971 = vld [vmem:[%s8 + $0x208] sm:$0xf]
        %v1972 = vld [vmem:[%s8 + $0x20c] sm:$0xf]
        %v1973 = vld [vmem:[%s8 + $0x210] sm:$0xf]
        %v1974 = vld [vmem:[%s8 + $0x214] sm:$0xf]
        %v1975 = vld [vmem:[%s8 + $0x218] sm:$0xf]
        %v1976 = vld [vmem:[%s8 + $0x21c] sm:$0xf]
        %v1977 = vld [vmem:[%s8 + $0x220] sm:$0xf]
        %v1978 = vld [vmem:[%s8 + $0x224] sm:$0xf]
        %v1979 = vld [vmem:[%s8 + $0x228] sm:$0xf]
        %v1980 = vld [vmem:[%s8 + $0x22c] sm:$0xf]
        %v1981 = vld [vmem:[%s8 + $0x230] sm:$0xf]
        %v1982 = vld [vmem:[%s8 + $0x234] sm:$0xf]
        %v1983 = vld [vmem:[%s8 + $0x238] sm:$0xf]
        %v1984 = vld [vmem:[%s8 + $0x23c] sm:$0xf]
        %v1985 = vld [vmem:[%s8 + $0x240] sm:$0xf]
        %v1986 = vld [vmem:[%s8 + $0x244] sm:$0xf]
        %v1987 = vld [vmem:[%s8 + $0x248] sm:$0xf]
        %v1988 = vld [vmem:[%s8 + $0x24c] sm:$0xf]
        %v1989 = vld [vmem:[%s8 + $0x250] sm:$0xf]
        %v1990 = vld [vmem:[%s8 + $0x254] sm:$0xf]
        %v1991 = vld [vmem:[%s8 + $0x258] sm:$0xf]
        %v1992 = vld [vmem:[%s8 + $0x25c] sm:$0xf]
        %v1993 = vld [vmem:[%s8 + $0x260] sm:$0xf]
        %v1994 = vld [vmem:[%s8 + $0x264] sm:$0xf]
        %v1995 = vld [vmem:[%s8 + $0x268] sm:$0xf]
        %v1996 = vld [vmem:[%s8 + $0x26c] sm:$0xf]
        %v1997 = vld [vmem:[%s8 + $0x270] sm:$0xf]
        %v1998 = vld [vmem:[%s8 + $0x274] sm:$0xf]
        %v1999 = vld [vmem:[%s8 + $0x278] sm:$0xf]
        %v2000 = vld [vmem:[%s8 + $0x27c] sm:$0xf]
        %v2001 = vld [vmem:[%s8 + $0x280] sm:$0xf]
        %v2002 = vld [vmem:[%s8 + $0x284] sm:$0xf]
        %v2003 = vld [vmem:[%s8 + $0x288] sm:$0xf]
        %v2004 = vld [vmem:[%s8 + $0x28c] sm:$0xf]
        %v2005 = vld [vmem:[%s8 + $0x290] sm:$0xf]
        %v2006 = vld [vmem:[%s8 + $0x294] sm:$0xf]
        %v2007 = vld [vmem:[%s8 + $0x298] sm:$0xf]
        %v2008 = vld [vmem:[%s8 + $0x29c] sm:$0xf]
        %v2009 = vld [vmem:[%s8 + $0x2a0] sm:$0xf]
        %v2010 = vld [vmem:[%s8 + $0x2a4] sm:$0xf]
        %v2011 = vld [vmem:[%s8 + $0x2a8] sm:$0xf]
        %v2012 = vld [vmem:[%s8 + $0x2ac] sm:$0xf]
        %v2013 = vld [vmem:[%s8 + $0x2b0] sm:$0xf]
        %v2014 = vld [vmem:[%s8 + $0x2b4] sm:$0xf]
        %v2015 = vld [vmem:[%s8 + $0x2b8] sm:$0xf]
        %v2016 = vld [vmem:[%s8 + $0x2bc] sm:$0xf]
        %v2017 = vld [vmem:[%s8 + $0x2c0] sm:$0xf]
        %v2018 = vld [vmem:[%s8 + $0x2c4] sm:$0xf]
        %v2019 = vld [vmem:[%s8 + $0x2c8] sm:$0xf]
        %v2020 = vld [vmem:[%s8 + $0x2cc] sm:$0xf]
        %v2021 = vld [vmem:[%s8 + $0x2d0] sm:$0xf]
        %v2022 = vld [vmem:[%s8 + $0x2d4] sm:$0xf]
        %v2023 = vld [vmem:[%s8 + $0x2d8] sm:$0xf]
        %v2024 = vld [vmem:[%s8 + $0x2dc] sm:$0xf]
        %v2025 = vld [vmem:[%s8 + $0x2e0] sm:$0xf]
        %v2026 = vld [vmem:[%s8 + $0x2e4] sm:$0xf]
        %v2027 = vld [vmem:[%s8 + $0x2e8] sm:$0xf]
        %v2028 = vld [vmem:[%s8 + $0x2ec] sm:$0xf]
        %v2029 = vld [vmem:[%s8 + $0x2f0] sm:$0xf]
        %v2030 = vld [vmem:[%s8 + $0x2f4] sm:$0xf]
        %v2031 = vld [vmem:[%s8 + $0x2f8] sm:$0xf]
        %v2032 = vld [vmem:[%s8 + $0x2fc] sm:$0xf]
        %v2033 = vld [vmem:[%s8 + $0x300] sm:$0xf]
        %v2034 = vld [vmem:[%s8 + $0x304] sm:$0xf]
        %v2035 = vld [vmem:[%s8 + $0x308] sm:$0xf]
        %v2036 = vld [vmem:[%s8 + $0x30c] sm:$0xf]
        %v2037 = vld [vmem:[%s8 + $0x310] sm:$0xf]
        %v2038 = vld [vmem:[%s8 + $0x314] sm:$0xf]
        %v2039 = vld [vmem:[%s8 + $0x318] sm:$0xf]
        %v2040 = vld [vmem:[%s8 + $0x31c] sm:$0xf]
        %v2041 = vld [vmem:[%s8 + $0x320] sm:$0xf]
        %v2042 = vld [vmem:[%s8 + $0x324] sm:$0xf]
        %v2043 = vld [vmem:[%s8 + $0x328] sm:$0xf]
        %v2044 = vld [vmem:[%s8 + $0x32c] sm:$0xf]
        %v2045 = vld [vmem:[%s8 + $0x330] sm:$0xf]
        %v2046 = vld [vmem:[%s8 + $0x334] sm:$0xf]
        %v2047 = vld [vmem:[%s8 + $0x338] sm:$0xf]
        %v2048 = vld [vmem:[%s8 + $0x33c] sm:$0xf]
        %v2049 = vld [vmem:[%s8 + $0x340] sm:$0xf]
        %v2050 = vld [vmem:[%s8 + $0x344] sm:$0xf]
        %v2051 = vld [vmem:[%s8 + $0x348] sm:$0xf]
        %v2052 = vld [vmem:[%s8 + $0x34c] sm:$0xf]
        %v2053 = vld [vmem:[%s8 + $0x350] sm:$0xf]
        %v2054 = vld [vmem:[%s8 + $0x354] sm:$0xf]
        %v2055 = vld [vmem:[%s8 + $0x358] sm:$0xf]
        %v2056 = vld [vmem:[%s8 + $0x35c] sm:$0xf]
        %v2057 = vld [vmem:[%s8 + $0x360] sm:$0xf]
        %v2058 = vld [vmem:[%s8 + $0x364] sm:$0xf]
        %v2059 = vld [vmem:[%s8 + $0x368] sm:$0xf]
        %v2060 = vld [vmem:[%s8 + $0x36c] sm:$0xf]
        %v2061 = vld [vmem:[%s8 + $0x370] sm:$0xf]
        %v2062 = vld [vmem:[%s8 + $0x374] sm:$0xf]
        %v2063 = vld [vmem:[%s8 + $0x378] sm:$0xf]
        %v2064 = vld [vmem:[%s8 + $0x37c] sm:$0xf]
        %v2065 = vld [vmem:[%s8 + $0x380] sm:$0xf]
        %v2066 = vld [vmem:[%s8 + $0x384] sm:$0xf]
        %v2067 = vld [vmem:[%s8 + $0x388] sm:$0xf]
        %v2068 = vld [vmem:[%s8 + $0x38c] sm:$0xf]
        %v2069 = vld [vmem:[%s8 + $0x390] sm:$0xf]
        %v2070 = vld [vmem:[%s8 + $0x394] sm:$0xf]
        %v2071 = vld [vmem:[%s8 + $0x398] sm:$0xf]
        %v2072 = vld [vmem:[%s8 + $0x39c] sm:$0xf]
        %v2073 = vld [vmem:[%s8 + $0x3a0] sm:$0xf]
        %v2074 = vld [vmem:[%s8 + $0x3a4] sm:$0xf]
        %v2075 = vld [vmem:[%s8 + $0x3a8] sm:$0xf]
        %v2076 = vld [vmem:[%s8 + $0x3ac] sm:$0xf]
        %v2077 = vld [vmem:[%s8 + $0x3b0] sm:$0xf]
        %v2078 = vld [vmem:[%s8 + $0x3b4] sm:$0xf]
        %v2079 = vld [vmem:[%s8 + $0x3b8] sm:$0xf]
        %v2080 = vld [vmem:[%s8 + $0x3bc] sm:$0xf]
        %v2081 = vld [vmem:[%s8 + $0x3c0] sm:$0xf]
        %v2082 = vld [vmem:[%s8 + $0x3c4] sm:$0xf]
        %v2083 = vld [vmem:[%s8 + $0x3c8] sm:$0xf]
        %v2084 = vld [vmem:[%s8 + $0x3cc] sm:$0xf]
        %v2085 = vld [vmem:[%s8 + $0x3d0] sm:$0xf]
        %v2086 = vld [vmem:[%s8 + $0x3d4] sm:$0xf]
        %v2087 = vld [vmem:[%s8 + $0x3d8] sm:$0xf]
        %v2088 = vld [vmem:[%s8 + $0x3dc] sm:$0xf]
        %v2089 = vld [vmem:[%s8 + $0x3e0] sm:$0xf]
        %v2090 = vld [vmem:[%s8 + $0x3e4] sm:$0xf]
        %v2091 = vld [vmem:[%s8 + $0x3e8] sm:$0xf]
        %v2092 = vld [vmem:[%s8 + $0x3ec] sm:$0xf]
        %v2093 = vld [vmem:[%s8 + $0x3f0] sm:$0xf]
        %v2094 = vld [vmem:[%s8 + $0x3f4] sm:$0xf]
        %v2095 = vld [vmem:[%s8 + $0x3f8] sm:$0xf]
        %v2096 = vld [vmem:[%s8 + $0x3fc] sm:$0xf]
        %v2097 = vld [vmem:[%s9] sm:$0x1]
        %v2099 = vlaneseq
        %v2100 = vshrl.u32 %v2099, 7
        %v2101 = vsub.s32 0, %v2100
        %v2102 = vrot.slane %v2097, %v2101
        %v2360 = vunpack.c.l.b16 %v1841
        %v2361 = vunpack.c.l.b16 %v1842
        %v2362 = vunpack.c.l.b16 %v1843
        %v2363 = vunpack.c.l.b16 %v1844
        %v2364 = vunpack.c.l.b16 %v1845
        %v2365 = vunpack.c.l.b16 %v1846
        %v2366 = vunpack.c.l.b16 %v1847
        %v2367 = vunpack.c.l.b16 %v1848
        %v2368 = vunpack.c.l.b16 %v1849
        %v2369 = vunpack.c.l.b16 %v1850
        %v2370 = vunpack.c.l.b16 %v1851
        %v2371 = vunpack.c.l.b16 %v1852
        %v2372 = vunpack.c.l.b16 %v1853
        %v2373 = vunpack.c.l.b16 %v1854
        %v2374 = vunpack.c.l.b16 %v1855
        %v2375 = vunpack.c.l.b16 %v1856
        %v2376 = vunpack.c.l.b16 %v1857
        %v2377 = vunpack.c.l.b16 %v1858
        %v2378 = vunpack.c.l.b16 %v1859
        %v2379 = vunpack.c.l.b16 %v1860
        %v2380 = vunpack.c.l.b16 %v1861
        %v2381 = vunpack.c.l.b16 %v1862
        %v2382 = vunpack.c.l.b16 %v1863
        %v2383 = vunpack.c.l.b16 %v1864
        %v2384 = vunpack.c.l.b16 %v1865
        %v2385 = vunpack.c.l.b16 %v1866
        %v2386 = vunpack.c.l.b16 %v1867
        %v2387 = vunpack.c.l.b16 %v1868
        %v2388 = vunpack.c.l.b16 %v1869
        %v2389 = vunpack.c.l.b16 %v1870
        %v2390 = vunpack.c.l.b16 %v1871
        %v2391 = vunpack.c.l.b16 %v1872
        %v2392 = vunpack.c.l.b16 %v1873
        %v2393 = vunpack.c.l.b16 %v1874
        %v2394 = vunpack.c.l.b16 %v1875
        %v2395 = vunpack.c.l.b16 %v1876
        %v2396 = vunpack.c.l.b16 %v1877
        %v2397 = vunpack.c.l.b16 %v1878
        %v2398 = vunpack.c.l.b16 %v1879
        %v2399 = vunpack.c.l.b16 %v1880
        %v2400 = vunpack.c.l.b16 %v1881
        %v2401 = vunpack.c.l.b16 %v1882
        %v2402 = vunpack.c.l.b16 %v1883
        %v2403 = vunpack.c.l.b16 %v1884
        %v2404 = vunpack.c.l.b16 %v1885
        %v2405 = vunpack.c.l.b16 %v1886
        %v2406 = vunpack.c.l.b16 %v1887
        %v2407 = vunpack.c.l.b16 %v1888
        %v2408 = vunpack.c.l.b16 %v1889
        %v2409 = vunpack.c.l.b16 %v1890
        %v2410 = vunpack.c.l.b16 %v1891
        %v2411 = vunpack.c.l.b16 %v1892
        %v2412 = vunpack.c.l.b16 %v1893
        %v2413 = vunpack.c.l.b16 %v1894
        %v2414 = vunpack.c.l.b16 %v1895
        %v2415 = vunpack.c.l.b16 %v1896
        %v2416 = vunpack.c.l.b16 %v1897
        %v2417 = vunpack.c.l.b16 %v1898
        %v2418 = vunpack.c.l.b16 %v1899
        %v2419 = vunpack.c.l.b16 %v1900
        %v2420 = vunpack.c.l.b16 %v1901
        %v2421 = vunpack.c.l.b16 %v1902
        %v2422 = vunpack.c.l.b16 %v1903
        %v2423 = vunpack.c.l.b16 %v1904
        %v2424 = vunpack.c.l.b16 %v1905
        %v2425 = vunpack.c.l.b16 %v1906
        %v2426 = vunpack.c.l.b16 %v1907
        %v2427 = vunpack.c.l.b16 %v1908
        %v2428 = vunpack.c.l.b16 %v1909
        %v2429 = vunpack.c.l.b16 %v1910
        %v2430 = vunpack.c.l.b16 %v1911
        %v2431 = vunpack.c.l.b16 %v1912
        %v2432 = vunpack.c.l.b16 %v1913
        %v2433 = vunpack.c.l.b16 %v1914
        %v2434 = vunpack.c.l.b16 %v1915
        %v2435 = vunpack.c.l.b16 %v1916
        %v2436 = vunpack.c.l.b16 %v1917
        %v2437 = vunpack.c.l.b16 %v1918
        %v2438 = vunpack.c.l.b16 %v1919
        %v2439 = vunpack.c.l.b16 %v1920
        %v2440 = vunpack.c.l.b16 %v1921
        %v2441 = vunpack.c.l.b16 %v1922
        %v2442 = vunpack.c.l.b16 %v1923
        %v2443 = vunpack.c.l.b16 %v1924
        %v2444 = vunpack.c.l.b16 %v1925
        %v2445 = vunpack.c.l.b16 %v1926
        %v2446 = vunpack.c.l.b16 %v1927
        %v2447 = vunpack.c.l.b16 %v1928
        %v2448 = vunpack.c.l.b16 %v1929
        %v2449 = vunpack.c.l.b16 %v1930
        %v2450 = vunpack.c.l.b16 %v1931
        %v2451 = vunpack.c.l.b16 %v1932
        %v2452 = vunpack.c.l.b16 %v1933
        %v2453 = vunpack.c.l.b16 %v1934
        %v2454 = vunpack.c.l.b16 %v1935
        %v2455 = vunpack.c.l.b16 %v1936
        %v2456 = vunpack.c.l.b16 %v1937
        %v2457 = vunpack.c.l.b16 %v1938
        %v2458 = vunpack.c.l.b16 %v1939
        %v2459 = vunpack.c.l.b16 %v1940
        %v2460 = vunpack.c.l.b16 %v1941
        %v2461 = vunpack.c.l.b16 %v1942
        %v2462 = vunpack.c.l.b16 %v1943
        %v2463 = vunpack.c.l.b16 %v1944
        %v2464 = vunpack.c.l.b16 %v1945
        %v2465 = vunpack.c.l.b16 %v1946
        %v2466 = vunpack.c.l.b16 %v1947
        %v2467 = vunpack.c.l.b16 %v1948
        %v2468 = vunpack.c.l.b16 %v1949
        %v2469 = vunpack.c.l.b16 %v1950
        %v2470 = vunpack.c.l.b16 %v1951
        %v2471 = vunpack.c.l.b16 %v1952
        %v2472 = vunpack.c.l.b16 %v1953
        %v2473 = vunpack.c.l.b16 %v1954
        %v2474 = vunpack.c.l.b16 %v1955
        %v2475 = vunpack.c.l.b16 %v1956
        %v2476 = vunpack.c.l.b16 %v1957
        %v2477 = vunpack.c.l.b16 %v1958
        %v2478 = vunpack.c.l.b16 %v1959
        %v2479 = vunpack.c.l.b16 %v1960
        %v2480 = vunpack.c.l.b16 %v1961
        %v2481 = vunpack.c.l.b16 %v1962
        %v2482 = vunpack.c.l.b16 %v1963
        %v2483 = vunpack.c.l.b16 %v1964
        %v2484 = vunpack.c.l.b16 %v1965
        %v2485 = vunpack.c.l.b16 %v1966
        %v2486 = vunpack.c.l.b16 %v1967
        %v2487 = vunpack.c.l.b16 %v1968
        %v2488 = vunpack.c.l.b16 %v1969
        %v2489 = vunpack.c.l.b16 %v1970
        %v2490 = vunpack.c.l.b16 %v1971
        %v2491 = vunpack.c.l.b16 %v1972
        %v2492 = vunpack.c.l.b16 %v1973
        %v2493 = vunpack.c.l.b16 %v1974
        %v2494 = vunpack.c.l.b16 %v1975
        %v2495 = vunpack.c.l.b16 %v1976
        %v2496 = vunpack.c.l.b16 %v1977
        %v2497 = vunpack.c.l.b16 %v1978
        %v2498 = vunpack.c.l.b16 %v1979
        %v2499 = vunpack.c.l.b16 %v1980
        %v2500 = vunpack.c.l.b16 %v1981
        %v2501 = vunpack.c.l.b16 %v1982
        %v2502 = vunpack.c.l.b16 %v1983
        %v2503 = vunpack.c.l.b16 %v1984
        %v2504 = vunpack.c.l.b16 %v1985
        %v2505 = vunpack.c.l.b16 %v1986
        %v2506 = vunpack.c.l.b16 %v1987
        %v2507 = vunpack.c.l.b16 %v1988
        %v2508 = vunpack.c.l.b16 %v1989
        %v2509 = vunpack.c.l.b16 %v1990
        %v2510 = vunpack.c.l.b16 %v1991
        %v2511 = vunpack.c.l.b16 %v1992
        %v2512 = vunpack.c.l.b16 %v1993
        %v2513 = vunpack.c.l.b16 %v1994
        %v2514 = vunpack.c.l.b16 %v1995
        %v2515 = vunpack.c.l.b16 %v1996
        %v2516 = vunpack.c.l.b16 %v1997
        %v2517 = vunpack.c.l.b16 %v1998
        %v2518 = vunpack.c.l.b16 %v1999
        %v2519 = vunpack.c.l.b16 %v2000
        %v2520 = vunpack.c.l.b16 %v2001
        %v2521 = vunpack.c.l.b16 %v2002
        %v2522 = vunpack.c.l.b16 %v2003
        %v2523 = vunpack.c.l.b16 %v2004
        %v2524 = vunpack.c.l.b16 %v2005
        %v2525 = vunpack.c.l.b16 %v2006
        %v2526 = vunpack.c.l.b16 %v2007
        %v2527 = vunpack.c.l.b16 %v2008
        %v2528 = vunpack.c.l.b16 %v2009
        %v2529 = vunpack.c.l.b16 %v2010
        %v2530 = vunpack.c.l.b16 %v2011
        %v2531 = vunpack.c.l.b16 %v2012
        %v2532 = vunpack.c.l.b16 %v2013
        %v2533 = vunpack.c.l.b16 %v2014
        %v2534 = vunpack.c.l.b16 %v2015
        %v2535 = vunpack.c.l.b16 %v2016
        %v2536 = vunpack.c.l.b16 %v2017
        %v2537 = vunpack.c.l.b16 %v2018
        %v2538 = vunpack.c.l.b16 %v2019
        %v2539 = vunpack.c.l.b16 %v2020
        %v2540 = vunpack.c.l.b16 %v2021
        %v2541 = vunpack.c.l.b16 %v2022
        %v2542 = vunpack.c.l.b16 %v2023
        %v2543 = vunpack.c.l.b16 %v2024
        %v2544 = vunpack.c.l.b16 %v2025
        %v2545 = vunpack.c.l.b16 %v2026
        %v2546 = vunpack.c.l.b16 %v2027
        %v2547 = vunpack.c.l.b16 %v2028
        %v2548 = vunpack.c.l.b16 %v2029
        %v2549 = vunpack.c.l.b16 %v2030
        %v2550 = vunpack.c.l.b16 %v2031
        %v2551 = vunpack.c.l.b16 %v2032
        %v2552 = vunpack.c.l.b16 %v2033
        %v2553 = vunpack.c.l.b16 %v2034
        %v2554 = vunpack.c.l.b16 %v2035
        %v2555 = vunpack.c.l.b16 %v2036
        %v2556 = vunpack.c.l.b16 %v2037
        %v2557 = vunpack.c.l.b16 %v2038
        %v2558 = vunpack.c.l.b16 %v2039
        %v2559 = vunpack.c.l.b16 %v2040
        %v2560 = vunpack.c.l.b16 %v2041
        %v2561 = vunpack.c.l.b16 %v2042
        %v2562 = vunpack.c.l.b16 %v2043
        %v2563 = vunpack.c.l.b16 %v2044
        %v2564 = vunpack.c.l.b16 %v2045
        %v2565 = vunpack.c.l.b16 %v2046
        %v2566 = vunpack.c.l.b16 %v2047
        %v2567 = vunpack.c.l.b16 %v2048
        %v2568 = vunpack.c.l.b16 %v2049
        %v2569 = vunpack.c.l.b16 %v2050
        %v2570 = vunpack.c.l.b16 %v2051
        %v2571 = vunpack.c.l.b16 %v2052
        %v2572 = vunpack.c.l.b16 %v2053
        %v2573 = vunpack.c.l.b16 %v2054
        %v2574 = vunpack.c.l.b16 %v2055
        %v2575 = vunpack.c.l.b16 %v2056
        %v2576 = vunpack.c.l.b16 %v2057
        %v2577 = vunpack.c.l.b16 %v2058
        %v2578 = vunpack.c.l.b16 %v2059
        %v2579 = vunpack.c.l.b16 %v2060
        %v2580 = vunpack.c.l.b16 %v2061
        %v2581 = vunpack.c.l.b16 %v2062
        %v2582 = vunpack.c.l.b16 %v2063
        %v2583 = vunpack.c.l.b16 %v2064
        %v2584 = vunpack.c.l.b16 %v2065
        %v2585 = vunpack.c.l.b16 %v2066
        %v2586 = vunpack.c.l.b16 %v2067
        %v2587 = vunpack.c.l.b16 %v2068
        %v2588 = vunpack.c.l.b16 %v2069
        %v2589 = vunpack.c.l.b16 %v2070
        %v2590 = vunpack.c.l.b16 %v2071
        %v2591 = vunpack.c.l.b16 %v2072
        %v2592 = vunpack.c.l.b16 %v2073
        %v2593 = vunpack.c.l.b16 %v2074
        %v2594 = vunpack.c.l.b16 %v2075
        %v2595 = vunpack.c.l.b16 %v2076
        %v2596 = vunpack.c.l.b16 %v2077
        %v2597 = vunpack.c.l.b16 %v2078
        %v2598 = vunpack.c.l.b16 %v2079
        %v2599 = vunpack.c.l.b16 %v2080
        %v2600 = vunpack.c.l.b16 %v2081
        %v2601 = vunpack.c.l.b16 %v2082
        %v2602 = vunpack.c.l.b16 %v2083
        %v2603 = vunpack.c.l.b16 %v2084
        %v2604 = vunpack.c.l.b16 %v2085
        %v2605 = vunpack.c.l.b16 %v2086
        %v2606 = vunpack.c.l.b16 %v2087
        %v2607 = vunpack.c.l.b16 %v2088
        %v2608 = vunpack.c.l.b16 %v2089
        %v2609 = vunpack.c.l.b16 %v2090
        %v2610 = vunpack.c.l.b16 %v2091
        %v2611 = vunpack.c.l.b16 %v2092
        %v2612 = vunpack.c.l.b16 %v2093
        %v2613 = vunpack.c.l.b16 %v2094
        %v2614 = vunpack.c.l.b16 %v2095
        %v2615 = vunpack.c.l.b16 %v2096
        %v2616 = vpack.c.b16 %v2361, %v2360
        %v2617 = vpack.c.b16 %v2363, %v2362
        %v2618 = vpack.c.b16 %v2365, %v2364
        %v2619 = vpack.c.b16 %v2367, %v2366
        %v2620 = vpack.c.b16 %v2369, %v2368
        %v2621 = vpack.c.b16 %v2371, %v2370
        %v2622 = vpack.c.b16 %v2373, %v2372
        %v2623 = vpack.c.b16 %v2375, %v2374
        %v2624 = vpack.c.b16 %v2377, %v2376
        %v2625 = vpack.c.b16 %v2379, %v2378
        %v2626 = vpack.c.b16 %v2381, %v2380
        %v2627 = vpack.c.b16 %v2383, %v2382
        %v2628 = vpack.c.b16 %v2385, %v2384
        %v2629 = vpack.c.b16 %v2387, %v2386
        %v2630 = vpack.c.b16 %v2389, %v2388
        %v2631 = vpack.c.b16 %v2391, %v2390
        %v2632 = vpack.c.b16 %v2393, %v2392
        %v2633 = vpack.c.b16 %v2395, %v2394
        %v2634 = vpack.c.b16 %v2397, %v2396
        %v2635 = vpack.c.b16 %v2399, %v2398
        %v2636 = vpack.c.b16 %v2401, %v2400
        %v2637 = vpack.c.b16 %v2403, %v2402
        %v2638 = vpack.c.b16 %v2405, %v2404
        %v2639 = vpack.c.b16 %v2407, %v2406
        %v2640 = vpack.c.b16 %v2409, %v2408
        %v2641 = vpack.c.b16 %v2411, %v2410
        %v2642 = vpack.c.b16 %v2413, %v2412
        %v2643 = vpack.c.b16 %v2415, %v2414
        %v2644 = vpack.c.b16 %v2417, %v2416
        %v2645 = vpack.c.b16 %v2419, %v2418
        %v2646 = vpack.c.b16 %v2421, %v2420
        %v2647 = vpack.c.b16 %v2423, %v2422
        %v2648 = vpack.c.b16 %v2425, %v2424
        %v2649 = vpack.c.b16 %v2427, %v2426
        %v2650 = vpack.c.b16 %v2429, %v2428
        %v2651 = vpack.c.b16 %v2431, %v2430
        %v2652 = vpack.c.b16 %v2433, %v2432
        %v2653 = vpack.c.b16 %v2435, %v2434
        %v2654 = vpack.c.b16 %v2437, %v2436
        %v2655 = vpack.c.b16 %v2439, %v2438
        %v2656 = vpack.c.b16 %v2441, %v2440
        %v2657 = vpack.c.b16 %v2443, %v2442
        %v2658 = vpack.c.b16 %v2445, %v2444
        %v2659 = vpack.c.b16 %v2447, %v2446
        %v2660 = vpack.c.b16 %v2449, %v2448
        %v2661 = vpack.c.b16 %v2451, %v2450
        %v2662 = vpack.c.b16 %v2453, %v2452
        %v2663 = vpack.c.b16 %v2455, %v2454
        %v2664 = vpack.c.b16 %v2457, %v2456
        %v2665 = vpack.c.b16 %v2459, %v2458
        %v2666 = vpack.c.b16 %v2461, %v2460
        %v2667 = vpack.c.b16 %v2463, %v2462
        %v2668 = vpack.c.b16 %v2465, %v2464
        %v2669 = vpack.c.b16 %v2467, %v2466
        %v2670 = vpack.c.b16 %v2469, %v2468
        %v2671 = vpack.c.b16 %v2471, %v2470
        %v2672 = vpack.c.b16 %v2473, %v2472
        %v2673 = vpack.c.b16 %v2475, %v2474
        %v2674 = vpack.c.b16 %v2477, %v2476
        %v2675 = vpack.c.b16 %v2479, %v2478
        %v2676 = vpack.c.b16 %v2481, %v2480
        %v2677 = vpack.c.b16 %v2483, %v2482
        %v2678 = vpack.c.b16 %v2485, %v2484
        %v2679 = vpack.c.b16 %v2487, %v2486
        %v2680 = vpack.c.b16 %v2489, %v2488
        %v2681 = vpack.c.b16 %v2491, %v2490
        %v2682 = vpack.c.b16 %v2493, %v2492
        %v2683 = vpack.c.b16 %v2495, %v2494
        %v2684 = vpack.c.b16 %v2497, %v2496
        %v2685 = vpack.c.b16 %v2499, %v2498
        %v2686 = vpack.c.b16 %v2501, %v2500
        %v2687 = vpack.c.b16 %v2503, %v2502
        %v2688 = vpack.c.b16 %v2505, %v2504
        %v2689 = vpack.c.b16 %v2507, %v2506
        %v2690 = vpack.c.b16 %v2509, %v2508
        %v2691 = vpack.c.b16 %v2511, %v2510
        %v2692 = vpack.c.b16 %v2513, %v2512
        %v2693 = vpack.c.b16 %v2515, %v2514
        %v2694 = vpack.c.b16 %v2517, %v2516
        %v2695 = vpack.c.b16 %v2519, %v2518
        %v2696 = vpack.c.b16 %v2521, %v2520
        %v2697 = vpack.c.b16 %v2523, %v2522
        %v2698 = vpack.c.b16 %v2525, %v2524
        %v2699 = vpack.c.b16 %v2527, %v2526
        %v2700 = vpack.c.b16 %v2529, %v2528
        %v2701 = vpack.c.b16 %v2531, %v2530
        %v2702 = vpack.c.b16 %v2533, %v2532
        %v2703 = vpack.c.b16 %v2535, %v2534
        %v2704 = vpack.c.b16 %v2537, %v2536
        %v2705 = vpack.c.b16 %v2539, %v2538
        %v2706 = vpack.c.b16 %v2541, %v2540
        %v2707 = vpack.c.b16 %v2543, %v2542
        %v2708 = vpack.c.b16 %v2545, %v2544
        %v2709 = vpack.c.b16 %v2547, %v2546
        %v2710 = vpack.c.b16 %v2549, %v2548
        %v2711 = vpack.c.b16 %v2551, %v2550
        %v2712 = vpack.c.b16 %v2553, %v2552
        %v2713 = vpack.c.b16 %v2555, %v2554
        %v2714 = vpack.c.b16 %v2557, %v2556
        %v2715 = vpack.c.b16 %v2559, %v2558
        %v2716 = vpack.c.b16 %v2561, %v2560
        %v2717 = vpack.c.b16 %v2563, %v2562
        %v2718 = vpack.c.b16 %v2565, %v2564
        %v2719 = vpack.c.b16 %v2567, %v2566
        %v2720 = vpack.c.b16 %v2569, %v2568
        %v2721 = vpack.c.b16 %v2571, %v2570
        %v2722 = vpack.c.b16 %v2573, %v2572
        %v2723 = vpack.c.b16 %v2575, %v2574
        %v2724 = vpack.c.b16 %v2577, %v2576
        %v2725 = vpack.c.b16 %v2579, %v2578
        %v2726 = vpack.c.b16 %v2581, %v2580
        %v2727 = vpack.c.b16 %v2583, %v2582
        %v2728 = vpack.c.b16 %v2585, %v2584
        %v2729 = vpack.c.b16 %v2587, %v2586
        %v2730 = vpack.c.b16 %v2589, %v2588
        %v2731 = vpack.c.b16 %v2591, %v2590
        %v2732 = vpack.c.b16 %v2593, %v2592
        %v2733 = vpack.c.b16 %v2595, %v2594
        %v2734 = vpack.c.b16 %v2597, %v2596
        %v2735 = vpack.c.b16 %v2599, %v2598
        %v2736 = vpack.c.b16 %v2601, %v2600
        %v2737 = vpack.c.b16 %v2603, %v2602
        %v2738 = vpack.c.b16 %v2605, %v2604
        %v2739 = vpack.c.b16 %v2607, %v2606
        %v2740 = vpack.c.b16 %v2609, %v2608
        %v2741 = vpack.c.b16 %v2611, %v2610
        %v2742 = vpack.c.b16 %v2613, %v2612
        %v2743 = vpack.c.b16 %v2615, %v2614
        %2872 = vmatprep.subr.bf16.mxu0 0
        %2873 = vmatpush1.bf16.msra.mxu0 %v2623
        %2874 = vmatprep.subr.bf16.mxu0 0
        %2875 = vmatpush1.bf16.msra.mxu0 %v2622
        %2876 = vmatprep.subr.bf16.mxu0 0
        %2877 = vmatpush1.bf16.msra.mxu0 %v2621
        %2878 = vmatprep.subr.bf16.mxu0 0
        %2879 = vmatpush1.bf16.msra.mxu0 %v2620
        %2880 = vmatprep.subr.bf16.mxu0 0
        %2881 = vmatpush1.bf16.msra.mxu0 %v2619
        %2882 = vmatprep.subr.bf16.mxu0 0
        %2883 = vmatpush1.bf16.msra.mxu0 %v2618
        %2884 = vmatprep.subr.bf16.mxu0 0
        %2885 = vmatpush1.bf16.msra.mxu0 %v2617
        %2886 = vmatprep.subr.bf16.mxu0 0
        %2887 = vmatpush1.bf16.msra.mxu0 %v2616
        %2888 = vmatprep.subr.bf16.mxu0 0
        %2889 = vmatpush2.bf16.msra.mxu0 %v2631
        %2890 = vmatprep.subr.bf16.mxu0 0
        %2891 = vmatpush2.bf16.msra.mxu0 %v2630
        %2892 = vmatprep.subr.bf16.mxu0 0
        %2893 = vmatpush2.bf16.msra.mxu0 %v2629
        %2894 = vmatprep.subr.bf16.mxu0 0
        %2895 = vmatpush2.bf16.msra.mxu0 %v2628
        %2896 = vmatprep.subr.bf16.mxu0 0
        %2897 = vmatpush2.bf16.msra.mxu0 %v2627
        %2898 = vmatprep.subr.bf16.mxu0 0
        %2899 = vmatpush2.bf16.msra.mxu0 %v2626
        %2900 = vmatprep.subr.bf16.mxu0 0
        %2901 = vmatpush2.bf16.msra.mxu0 %v2625
        %2902 = vmatprep.subr.bf16.mxu0 0
        %2903 = vmatpush2.bf16.msra.mxu0 %v2624
        %2904 = vmatprep.mubr.bf16.mxu0 %v1826
        %2905 = vmatmul.mubr.bf16.gmra.mxu0 %v1825
        %v2906 = vpop.f32.mrf.mxu0
        %v2907 = vadd.f32 %v2102, %v2906
        %v2908 = vpop.f32.mrf.mxu0
        %v2909 = vpop.f32.mrf.mxu0
        %v2910 = vpop.f32.mrf.mxu0
        %2911 = vdwg.mxu0
        %2912 = vmatprep.subr.bf16.mxu0 0
        %2913 = vmatpush1.bf16.msra.mxu0 %v2639
        %2914 = vmatprep.subr.bf16.mxu0 0
        %2915 = vmatpush1.bf16.msra.mxu0 %v2638
        %2916 = vmatprep.subr.bf16.mxu0 0
        %2917 = vmatpush1.bf16.msra.mxu0 %v2637
        %2918 = vmatprep.subr.bf16.mxu0 0
        %2919 = vmatpush1.bf16.msra.mxu0 %v2636
        %2920 = vmatprep.subr.bf16.mxu0 0
        %2921 = vmatpush1.bf16.msra.mxu0 %v2635
        %2922 = vmatprep.subr.bf16.mxu0 0
        %2923 = vmatpush1.bf16.msra.mxu0 %v2634
        %2924 = vmatprep.subr.bf16.mxu0 0
        %2925 = vmatpush1.bf16.msra.mxu0 %v2633
        %2926 = vmatprep.subr.bf16.mxu0 0
        %2927 = vmatpush1.bf16.msra.mxu0 %v2632
        %2928 = vmatprep.subr.bf16.mxu0 0
        %2929 = vmatpush2.bf16.msra.mxu0 %v2647
        %2930 = vmatprep.subr.bf16.mxu0 0
        %2931 = vmatpush2.bf16.msra.mxu0 %v2646
        %2932 = vmatprep.subr.bf16.mxu0 0
        %2933 = vmatpush2.bf16.msra.mxu0 %v2645
        %2934 = vmatprep.subr.bf16.mxu0 0
        %2935 = vmatpush2.bf16.msra.mxu0 %v2644
        %2936 = vmatprep.subr.bf16.mxu0 0
        %2937 = vmatpush2.bf16.msra.mxu0 %v2643
        %2938 = vmatprep.subr.bf16.mxu0 0
        %2939 = vmatpush2.bf16.msra.mxu0 %v2642
        %2940 = vmatprep.subr.bf16.mxu0 0
        %2941 = vmatpush2.bf16.msra.mxu0 %v2641
        %2942 = vmatprep.subr.bf16.mxu0 0
        %2943 = vmatpush2.bf16.msra.mxu0 %v2640
        %2944 = vmatprep.mubr.bf16.mxu0 %v1828
        %2945 = vmatmul.mubr.bf16.gmra.mxu0 %v1827
        %v2946 = vpop.f32.mrf.mxu0
        %v2947 = vadd.f32 %v2907, %v2946
        %v2948 = vpop.f32.mrf.mxu0
        %v2949 = vpop.f32.mrf.mxu0
        %v2950 = vpop.f32.mrf.mxu0
        %2951 = vdwg.mxu0
        %2952 = vmatprep.subr.bf16.mxu0 0
        %2953 = vmatpush1.bf16.msra.mxu0 %v2655
        %2954 = vmatprep.subr.bf16.mxu0 0
        %2955 = vmatpush1.bf16.msra.mxu0 %v2654
        %2956 = vmatprep.subr.bf16.mxu0 0
        %2957 = vmatpush1.bf16.msra.mxu0 %v2653
        %2958 = vmatprep.subr.bf16.mxu0 0
        %2959 = vmatpush1.bf16.msra.mxu0 %v2652
        %2960 = vmatprep.subr.bf16.mxu0 0
        %2961 = vmatpush1.bf16.msra.mxu0 %v2651
        %2962 = vmatprep.subr.bf16.mxu0 0
        %2963 = vmatpush1.bf16.msra.mxu0 %v2650
        %2964 = vmatprep.subr.bf16.mxu0 0
        %2965 = vmatpush1.bf16.msra.mxu0 %v2649
        %2966 = vmatprep.subr.bf16.mxu0 0
        %2967 = vmatpush1.bf16.msra.mxu0 %v2648
        %2968 = vmatprep.subr.bf16.mxu0 0
        %2969 = vmatpush2.bf16.msra.mxu0 %v2663
        %2970 = vmatprep.subr.bf16.mxu0 0
        %2971 = vmatpush2.bf16.msra.mxu0 %v2662
        %2972 = vmatprep.subr.bf16.mxu0 0
        %2973 = vmatpush2.bf16.msra.mxu0 %v2661
        %2974 = vmatprep.subr.bf16.mxu0 0
        %2975 = vmatpush2.bf16.msra.mxu0 %v2660
        %2976 = vmatprep.subr.bf16.mxu0 0
        %2977 = vmatpush2.bf16.msra.mxu0 %v2659
        %2978 = vmatprep.subr.bf16.mxu0 0
        %2979 = vmatpush2.bf16.msra.mxu0 %v2658
        %2980 = vmatprep.subr.bf16.mxu0 0
        %2981 = vmatpush2.bf16.msra.mxu0 %v2657
        %2982 = vmatprep.subr.bf16.mxu0 0
        %2983 = vmatpush2.bf16.msra.mxu0 %v2656
        %2984 = vmatprep.mubr.bf16.mxu0 %v1830
        %2985 = vmatmul.mubr.bf16.gmra.mxu0 %v1829
        %v2986 = vpop.f32.mrf.mxu0
        %v2987 = vadd.f32 %v2947, %v2986
        %v2988 = vpop.f32.mrf.mxu0
        %v2989 = vpop.f32.mrf.mxu0
        %v2990 = vpop.f32.mrf.mxu0
        %2991 = vdwg.mxu0
        %2992 = vmatprep.subr.bf16.mxu0 0
        %2993 = vmatpush1.bf16.msra.mxu0 %v2671
        %2994 = vmatprep.subr.bf16.mxu0 0
        %2995 = vmatpush1.bf16.msra.mxu0 %v2670
        %2996 = vmatprep.subr.bf16.mxu0 0
        %2997 = vmatpush1.bf16.msra.mxu0 %v2669
        %2998 = vmatprep.subr.bf16.mxu0 0
        %2999 = vmatpush1.bf16.msra.mxu0 %v2668
        %3000 = vmatprep.subr.bf16.mxu0 0
        %3001 = vmatpush1.bf16.msra.mxu0 %v2667
        %3002 = vmatprep.subr.bf16.mxu0 0
        %3003 = vmatpush1.bf16.msra.mxu0 %v2666
        %3004 = vmatprep.subr.bf16.mxu0 0
        %3005 = vmatpush1.bf16.msra.mxu0 %v2665
        %3006 = vmatprep.subr.bf16.mxu0 0
        %3007 = vmatpush1.bf16.msra.mxu0 %v2664
        %3008 = vmatprep.subr.bf16.mxu0 0
        %3009 = vmatpush2.bf16.msra.mxu0 %v2679
        %3010 = vmatprep.subr.bf16.mxu0 0
        %3011 = vmatpush2.bf16.msra.mxu0 %v2678
        %3012 = vmatprep.subr.bf16.mxu0 0
        %3013 = vmatpush2.bf16.msra.mxu0 %v2677
        %3014 = vmatprep.subr.bf16.mxu0 0
        %3015 = vmatpush2.bf16.msra.mxu0 %v2676
        %3016 = vmatprep.subr.bf16.mxu0 0
        %3017 = vmatpush2.bf16.msra.mxu0 %v2675
        %3018 = vmatprep.subr.bf16.mxu0 0
        %3019 = vmatpush2.bf16.msra.mxu0 %v2674
        %3020 = vmatprep.subr.bf16.mxu0 0
        %3021 = vmatpush2.bf16.msra.mxu0 %v2673
        %3022 = vmatprep.subr.bf16.mxu0 0
        %3023 = vmatpush2.bf16.msra.mxu0 %v2672
        %3024 = vmatprep.mubr.bf16.mxu0 %v1832
        %3025 = vmatmul.mubr.bf16.gmra.mxu0 %v1831
        %v3026 = vpop.f32.mrf.mxu0
        %v3027 = vadd.f32 %v2987, %v3026
        %v3028 = vpop.f32.mrf.mxu0
        %v3029 = vpop.f32.mrf.mxu0
        %v3030 = vpop.f32.mrf.mxu0
        %3031 = vdwg.mxu0
        %3032 = vmatprep.subr.bf16.mxu0 0
        %3033 = vmatpush1.bf16.msra.mxu0 %v2687
        %3034 = vmatprep.subr.bf16.mxu0 0
        %3035 = vmatpush1.bf16.msra.mxu0 %v2686
        %3036 = vmatprep.subr.bf16.mxu0 0
        %3037 = vmatpush1.bf16.msra.mxu0 %v2685
        %3038 = vmatprep.subr.bf16.mxu0 0
        %3039 = vmatpush1.bf16.msra.mxu0 %v2684
        %3040 = vmatprep.subr.bf16.mxu0 0
        %3041 = vmatpush1.bf16.msra.mxu0 %v2683
        %3042 = vmatprep.subr.bf16.mxu0 0
        %3043 = vmatpush1.bf16.msra.mxu0 %v2682
        %3044 = vmatprep.subr.bf16.mxu0 0
        %3045 = vmatpush1.bf16.msra.mxu0 %v2681
        %3046 = vmatprep.subr.bf16.mxu0 0
        %3047 = vmatpush1.bf16.msra.mxu0 %v2680
        %3048 = vmatprep.subr.bf16.mxu0 0
        %3049 = vmatpush2.bf16.msra.mxu0 %v2695
        %3050 = vmatprep.subr.bf16.mxu0 0
        %3051 = vmatpush2.bf16.msra.mxu0 %v2694
        %3052 = vmatprep.subr.bf16.mxu0 0
        %3053 = vmatpush2.bf16.msra.mxu0 %v2693
        %3054 = vmatprep.subr.bf16.mxu0 0
        %3055 = vmatpush2.bf16.msra.mxu0 %v2692
        %3056 = vmatprep.subr.bf16.mxu0 0
        %3057 = vmatpush2.bf16.msra.mxu0 %v2691
        %3058 = vmatprep.subr.bf16.mxu0 0
        %3059 = vmatpush2.bf16.msra.mxu0 %v2690
        %3060 = vmatprep.subr.bf16.mxu0 0
        %3061 = vmatpush2.bf16.msra.mxu0 %v2689
        %3062 = vmatprep.subr.bf16.mxu0 0
        %3063 = vmatpush2.bf16.msra.mxu0 %v2688
        %3064 = vmatprep.mubr.bf16.mxu0 %v1834
        %3065 = vmatmul.mubr.bf16.gmra.mxu0 %v1833
        %v3066 = vpop.f32.mrf.mxu0
        %v3067 = vadd.f32 %v3027, %v3066
        %v3068 = vpop.f32.mrf.mxu0
        %v3069 = vpop.f32.mrf.mxu0
        %v3070 = vpop.f32.mrf.mxu0
        %3071 = vdwg.mxu0
        %3072 = vmatprep.subr.bf16.mxu0 0
        %3073 = vmatpush1.bf16.msra.mxu0 %v2703
        %3074 = vmatprep.subr.bf16.mxu0 0
        %3075 = vmatpush1.bf16.msra.mxu0 %v2702
        %3076 = vmatprep.subr.bf16.mxu0 0
        %3077 = vmatpush1.bf16.msra.mxu0 %v2701
        %3078 = vmatprep.subr.bf16.mxu0 0
        %3079 = vmatpush1.bf16.msra.mxu0 %v2700
        %3080 = vmatprep.subr.bf16.mxu0 0
        %3081 = vmatpush1.bf16.msra.mxu0 %v2699
        %3082 = vmatprep.subr.bf16.mxu0 0
        %3083 = vmatpush1.bf16.msra.mxu0 %v2698
        %3084 = vmatprep.subr.bf16.mxu0 0
        %3085 = vmatpush1.bf16.msra.mxu0 %v2697
        %3086 = vmatprep.subr.bf16.mxu0 0
        %3087 = vmatpush1.bf16.msra.mxu0 %v2696
        %3088 = vmatprep.subr.bf16.mxu0 0
        %3089 = vmatpush2.bf16.msra.mxu0 %v2711
        %3090 = vmatprep.subr.bf16.mxu0 0
        %3091 = vmatpush2.bf16.msra.mxu0 %v2710
        %3092 = vmatprep.subr.bf16.mxu0 0
        %3093 = vmatpush2.bf16.msra.mxu0 %v2709
        %3094 = vmatprep.subr.bf16.mxu0 0
        %3095 = vmatpush2.bf16.msra.mxu0 %v2708
        %3096 = vmatprep.subr.bf16.mxu0 0
        %3097 = vmatpush2.bf16.msra.mxu0 %v2707
        %3098 = vmatprep.subr.bf16.mxu0 0
        %3099 = vmatpush2.bf16.msra.mxu0 %v2706
        %3100 = vmatprep.subr.bf16.mxu0 0
        %3101 = vmatpush2.bf16.msra.mxu0 %v2705
        %3102 = vmatprep.subr.bf16.mxu0 0
        %3103 = vmatpush2.bf16.msra.mxu0 %v2704
        %3104 = vmatprep.mubr.bf16.mxu0 %v1836
        %3105 = vmatmul.mubr.bf16.gmra.mxu0 %v1835
        %v3106 = vpop.f32.mrf.mxu0
        %v3107 = vadd.f32 %v3067, %v3106
        %v3108 = vpop.f32.mrf.mxu0
        %v3109 = vpop.f32.mrf.mxu0
        %v3110 = vpop.f32.mrf.mxu0
        %3111 = vdwg.mxu0
        %3112 = vmatprep.subr.bf16.mxu0 0
        %3113 = vmatpush1.bf16.msra.mxu0 %v2719
        %3114 = vmatprep.subr.bf16.mxu0 0
        %3115 = vmatpush1.bf16.msra.mxu0 %v2718
        %3116 = vmatprep.subr.bf16.mxu0 0
        %3117 = vmatpush1.bf16.msra.mxu0 %v2717
        %3118 = vmatprep.subr.bf16.mxu0 0
        %3119 = vmatpush1.bf16.msra.mxu0 %v2716
        %3120 = vmatprep.subr.bf16.mxu0 0
        %3121 = vmatpush1.bf16.msra.mxu0 %v2715
        %3122 = vmatprep.subr.bf16.mxu0 0
        %3123 = vmatpush1.bf16.msra.mxu0 %v2714
        %3124 = vmatprep.subr.bf16.mxu0 0
        %3125 = vmatpush1.bf16.msra.mxu0 %v2713
        %3126 = vmatprep.subr.bf16.mxu0 0
        %3127 = vmatpush1.bf16.msra.mxu0 %v2712
        %3128 = vmatprep.subr.bf16.mxu0 0
        %3129 = vmatpush2.bf16.msra.mxu0 %v2727
        %3130 = vmatprep.subr.bf16.mxu0 0
        %3131 = vmatpush2.bf16.msra.mxu0 %v2726
        %3132 = vmatprep.subr.bf16.mxu0 0
        %3133 = vmatpush2.bf16.msra.mxu0 %v2725
        %3134 = vmatprep.subr.bf16.mxu0 0
        %3135 = vmatpush2.bf16.msra.mxu0 %v2724
        %3136 = vmatprep.subr.bf16.mxu0 0
        %3137 = vmatpush2.bf16.msra.mxu0 %v2723
        %3138 = vmatprep.subr.bf16.mxu0 0
        %3139 = vmatpush2.bf16.msra.mxu0 %v2722
        %3140 = vmatprep.subr.bf16.mxu0 0
        %3141 = vmatpush2.bf16.msra.mxu0 %v2721
        %3142 = vmatprep.subr.bf16.mxu0 0
        %3143 = vmatpush2.bf16.msra.mxu0 %v2720
        %3144 = vmatprep.mubr.bf16.mxu0 %v1838
        %3145 = vmatmul.mubr.bf16.gmra.mxu0 %v1837
        %v3146 = vpop.f32.mrf.mxu0
        %v3147 = vadd.f32 %v3107, %v3146
        %v3148 = vpop.f32.mrf.mxu0
        %v3149 = vpop.f32.mrf.mxu0
        %v3150 = vpop.f32.mrf.mxu0
        %3151 = vdwg.mxu0
        %3152 = vmatprep.subr.bf16.mxu0 0
        %3153 = vmatpush1.bf16.msra.mxu0 %v2735
        %3154 = vmatprep.subr.bf16.mxu0 0
        %3155 = vmatpush1.bf16.msra.mxu0 %v2734
        %3156 = vmatprep.subr.bf16.mxu0 0
        %3157 = vmatpush1.bf16.msra.mxu0 %v2733
        %3158 = vmatprep.subr.bf16.mxu0 0
        %3159 = vmatpush1.bf16.msra.mxu0 %v2732
        %3160 = vmatprep.subr.bf16.mxu0 0
        %3161 = vmatpush1.bf16.msra.mxu0 %v2731
        %3162 = vmatprep.subr.bf16.mxu0 0
        %3163 = vmatpush1.bf16.msra.mxu0 %v2730
        %3164 = vmatprep.subr.bf16.mxu0 0
        %3165 = vmatpush1.bf16.msra.mxu0 %v2729
        %3166 = vmatprep.subr.bf16.mxu0 0
        %3167 = vmatpush1.bf16.msra.mxu0 %v2728
        %3168 = vmatprep.subr.bf16.mxu0 0
        %3169 = vmatpush2.bf16.msra.mxu0 %v2743
        %3170 = vmatprep.subr.bf16.mxu0 0
        %3171 = vmatpush2.bf16.msra.mxu0 %v2742
        %3172 = vmatprep.subr.bf16.mxu0 0
        %3173 = vmatpush2.bf16.msra.mxu0 %v2741
        %3174 = vmatprep.subr.bf16.mxu0 0
        %3175 = vmatpush2.bf16.msra.mxu0 %v2740
        %3176 = vmatprep.subr.bf16.mxu0 0
        %3177 = vmatpush2.bf16.msra.mxu0 %v2739
        %3178 = vmatprep.subr.bf16.mxu0 0
        %3179 = vmatpush2.bf16.msra.mxu0 %v2738
        %3180 = vmatprep.subr.bf16.mxu0 0
        %3181 = vmatpush2.bf16.msra.mxu0 %v2737
        %3182 = vmatprep.subr.bf16.mxu0 0
        %3183 = vmatpush2.bf16.msra.mxu0 %v2736
        %3184 = vmatprep.mubr.bf16.mxu0 %v1840
        %3185 = vmatmul.mubr.bf16.gmra.mxu0 %v1839
        %v3186 = vpop.f32.mrf.mxu0
        %v3187 = vadd.f32 %v3147, %v3186
        %v3188 = vpop.f32.mrf.mxu0
        %v3189 = vpop.f32.mrf.mxu0
        %v3190 = vpop.f32.mrf.mxu0
        %3191 = vdwg.mxu0
        %v3192 = vadd.f32 %v1200, %v3187
        %v3193 = vld [vmem:[%s10] sm:$0x1]
        %v3194 = vld [vmem:[%s11] sm:$0x1]
        %v3195 = vsel %vm506, %v3192, 0.0
        %3196 = vadd.xlane.f32.xlu0 %v3195
        %v3197 = vpop.xlane.xlu0 %3196
        %v3198 = vrcp.pop 32.0
        %v3199 = vmul.f32 %v3197, %v3198
        %v3200 = vsub.f32 %v3192, %v3199
        %v3201 = vmul.f32 %v3200, %v3200
        %v3202 = vsel %vm506, %v3201, 0.0
        %3203 = vadd.xlane.f32.xlu0 %v3202
        %v3204 = vpop.xlane.xlu0 %3203
        %v3205 = vmul.f32 %v3204, 0.032258064
        %v3206 = vrsqrt.pop %v3205
        %v3207 = vmul.f32 %v3205, %v3206
        %vm3208 = vcmp.eq.f32.partialorder %v3205, inf
        %v3209 = vsel %vm3208, %v3205, %v3207
        %vm3210 = vcmp.eq.f32.partialorder %v3205, 0.0
        %v3211 = vand.u32 %v3205, 2147483648
        %v3212 = vsel %vm3210, %v3211, %v3209
        %v3213 = vadd.f32 %v3212, 1e-06
        %v3214 = vrcp.pop %v3213
        %v3216 = vlaneseq
        %v3217 = vshrl.u32 %v3216, 7
        %v3218 = vsub.s32 0, %v3217
        %v3219 = vrot.slane %v3193, %v3218
        %v3221 = vmul.f32 %v3219, %v3200
        %v3222 = vmul.f32 %v3221, %v3214
        %v3224 = vlaneseq
        %v3225 = vshrl.u32 %v3224, 7
        %v3226 = vsub.s32 0, %v3225
        %v3227 = vrot.slane %v3194, %v3226
        %v3229 = vadd.f32 %v3222, %v3227
        %v3230 = vld [vmem:[%s12] sm:$0x1]
        %v3231 = vld [vmem:[%s13] sm:$0x1]
        %v3232 = vsel %vm506, %v3229, 0.0
        %3233 = vadd.xlane.f32.xlu0 %v3232
        %v3234 = vpop.xlane.xlu0 %3233
        %v3235 = vmul.f32 %v3234, %v3198
        %v3236 = vsub.f32 %v3229, %v3235
        %v3237 = vmul.f32 %v3236, %v3236
        %v3238 = vsel %vm506, %v3237, 0.0
        %3239 = vadd.xlane.f32.xlu0 %v3238
        %v3240 = vpop.xlane.xlu0 %3239
        %v3241 = vmul.f32 %v3240, 0.032258064
        %v3242 = vrsqrt.pop %v3241
        %v3243 = vmul.f32 %v3241, %v3242
        %vm3244 = vcmp.eq.f32.partialorder %v3241, inf
        %v3245 = vsel %vm3244, %v3241, %v3243
        %vm3246 = vcmp.eq.f32.partialorder %v3241, 0.0
        %v3247 = vand.u32 %v3241, 2147483648
        %v3248 = vsel %vm3246, %v3247, %v3245
        %v3249 = vadd.f32 %v3248, 1e-06
        %v3250 = vrcp.pop %v3249
        %v3252 = vlaneseq
        %v3253 = vshrl.u32 %v3252, 7
        %v3254 = vsub.s32 0, %v3253
        %v3255 = vrot.slane %v3230, %v3254
        %v3257 = vmul.f32 %v3255, %v3236
        %v3258 = vmul.f32 %v3257, %v3250
        %v3260 = vlaneseq
        %v3261 = vshrl.u32 %v3260, 7
        %v3262 = vsub.s32 0, %v3261
        %v3263 = vrot.slane %v3231, %v3262
        %v3265 = vadd.f32 %v3258, %v3263
        %3266 = vst.msk [vmem:[%s471] sm:$0xff] %vm506, %v3265
        %s3267 = sand.u32 %s340, 1
        %s3268 = scalar_lea.sflag [#allocation3], %s3267
        %s3269 = sand.u32 %s340, 1
        %s3270 = smul.addr %s3269, 8
        %s3271 = scalar_lea.vmem [#allocation2], %s3270
        // Predicated region
        $region77: #{encoder_forward.3} parent=75 // pred_check
          %p3272 = pneg %p350
        $region78: #{encoder_forward.3} parent=75 // pred_check_branch
          %3274 = sbr.rel (%p3272) target = $region80
        $region79: #{encoder_forward.3} parent=75 // pred_region
          %s3276 = ssub.s32 128, 128
          %3277 = vsyncadd %s3268, %s3276
          %s3278 = smul.addr %s28, 128
          %s3279 = scalar_lea.hbm %s14, %s3278
          %s3281 = sshll.u32 %s3271, 4
          %s3282 = int_to_ptr.vmem [resolvable:$true] %s3281
          %3284 = dma.vmem_to_hbm [thread:$0]  %s3282, 128, %s3279, %s3268
        $region80: #{encoder_forward.3} parent=75 // pred_fallthru
          _
      $region76: #{encoder_forward.3} parent=5 // pred_fallthru
        _
      %p3285 = scmp.le.s32.totalorder 2, %s23
      // Predicated region
      $region81: #{encoder_forward.3} parent=5 // pred_check
        %p3286 = pneg %p3285
      $region82: #{encoder_forward.3} parent=5 // pred_check_branch
        %3288 = sbr.rel (%p3286) target = $region84
      $region83: #{encoder_forward.3} parent=5 // pred_region
        %s3289 = ssub.s32 %s23, 2
        // Predicated region
        $region85: #{encoder_forward.3} parent=83 // pred_check
          %p3290 = pneg %p356
        $region86: #{encoder_forward.3} parent=83 // pred_check_branch
          %3292 = sbr.rel (%p3290) target = $region88
        $region87: #{encoder_forward.3} parent=83 // pred_region
          %s3293 = sand.u32 %s341, 1
          %s3294 = scalar_lea.sflag [#allocation3], %s3293
          %s3295 = sand.u32 %s341, 1
          %s3296 = smul.addr %s3295, 8
          %s3297 = scalar_lea.vmem [#allocation2], %s3296
          %3298 = dma.done %s3294, 128
        $region88: #{encoder_forward.3} parent=83 // pred_fallthru
          _
      $region84: #{encoder_forward.3} parent=5 // pred_fallthru
        _
    $region6: #{encoder_forward.3} parent=1 // loop_footer
      %s27 = sadd.s32 1, %s23
    $region7: #{encoder_forward.3} parent=1 // loop_footer_branch
      %22 = sbr.rel target = $region3
    $region8: #{encoder_forward.3} parent=1 // loop_exit
      _
    %3299 = vsyncpa [#allocation3], 1
    %s3300 = scalar_lea.sflag [#allocation3], 1
    %3301 = vsyncpa %s3300, 1

// kernel: encoder_forward.2
$region0: #{encoder_forward.2}
  #allocation0 [shape = 'u32[]', space=smem, size = 0x4, offset = 0x4, fixed_abs, tag = 'smem constant byte address 0x4 - core index']
  #allocation1 [shape = 'u32[144,128]{1,0:T(1,128)}', space=vmem, size = 0x12000, scoped, tag = 'internal scratch']
  %s0 = inlined_call_operand.vmem [shape: f32[2,8,32], index: 0, kind: input, shape index: {}]
  %s1 = inlined_call_operand.vmem [shape: f32[2,8,8], index: 1, kind: input, shape index: {}]
  %s2 = inlined_call_operand.vmem [shape: bf16[32,96], index: 2, kind: input, shape index: {}]
  %s3 = inlined_call_operand.vmem [shape: f32[1,96], index: 3, kind: input, shape index: {}]
  %s4 = inlined_call_operand.vmem [shape: bf16[4,8,32], index: 4, kind: input, shape index: {}]
  %s5 = inlined_call_operand.vmem [shape: f32[1,32], index: 5, kind: input, shape index: {}]
  %s6 = inlined_call_operand.vmem [shape: bf16[32,2048], index: 6, kind: input, shape index: {}]
  %s7 = inlined_call_operand.vmem [shape: f32[1,2048], index: 7, kind: input, shape index: {}]
  %s8 = inlined_call_operand.vmem [shape: bf16[2048,32], index: 8, kind: input, shape index: {}]
  %s9 = inlined_call_operand.vmem [shape: f32[1,32], index: 9, kind: input, shape index: {}]
  %s10 = inlined_call_operand.vmem [shape: f32[1,32], index: 10, kind: input, shape index: {}, may-alias: {10,12}]
  %s11 = inlined_call_operand.vmem [shape: f32[1,32], index: 11, kind: input, shape index: {}, may-alias: {11,13}]
  %s12 = inlined_call_operand.vmem [shape: f32[1,32], index: 12, kind: input, shape index: {}, may-alias: {10,12}]
  %s13 = inlined_call_operand.vmem [shape: f32[1,32], index: 13, kind: input, shape index: {}, may-alias: {11,13}]
  %s14 = inlined_call_operand.vmem [shape: f32[2,8,32], index: 14, kind: output, shape index: {}]
  %s15 = sld [smem:[#allocation0]]
  $region89: #{encoder_forward.2} parent=0
    _
  %s17 = ssub.s32 1, %s15
  %s18 = scalar_select 0, %s17, %s15
  loop: start=0, step=1, limit=4
  $region2: #{encoder_forward.2} parent=0 // loop_pre_header
    _
  $region3: #{encoder_forward.2} parent=0 // loop_header
    %s20 = sphi 0, %s24
    %p21 = scmp.ge.s32.totalorder %s20, 4
    %s30 = sphi 0, %s32
    %s33 = sphi 0, %s30
    %s34 = sphi 0, %s33
    %s50 = sphi 0, %s34
    %s56 = sphi 0, %s58
    %s59 = sphi 0, %s56
    %s60 = sphi 0, %s59
    %s76 = sphi 0, %s60
    %s80 = sphi 0, %s80
    %s82 = sphi 0, %s80
    %s83 = sphi 0, %s82
    %s97 = sphi 0, %s83
    %s101 = sphi 0, %s101
    %s103 = sphi 0, %s101
    %s104 = sphi 0, %s103
    %s118 = sphi 0, %s104
    %s122 = sphi 0, %s122
    %s124 = sphi 0, %s122
    %s125 = sphi 0, %s124
    %s139 = sphi 0, %s125
    %s143 = sphi 0, %s143
    %s145 = sphi 0, %s143
    %s146 = sphi 0, %s145
    %s160 = sphi 0, %s146
    %s164 = sphi 0, %s164
    %s166 = sphi 0, %s164
    %s167 = sphi 0, %s166
    %s181 = sphi 0, %s167
    %s185 = sphi 0, %s185
    %s187 = sphi 0, %s185
    %s188 = sphi 0, %s187
    %s202 = sphi 0, %s188
    %s206 = sphi 0, %s206
    %s208 = sphi 0, %s206
    %s209 = sphi 0, %s208
    %s223 = sphi 0, %s209
    %s227 = sphi 0, %s227
    %s229 = sphi 0, %s227
    %s230 = sphi 0, %s229
    %s244 = sphi 0, %s230
    %s248 = sphi 0, %s248
    %s250 = sphi 0, %s248
    %s251 = sphi 0, %s250
    %s265 = sphi 0, %s251
    %s269 = sphi 0, %s269
    %s271 = sphi 0, %s269
    %s272 = sphi 0, %s271
    %s286 = sphi 0, %s272
    %s290 = sphi 0, %s290
    %s292 = sphi 0, %s290
    %s293 = sphi 0, %s292
    %s307 = sphi 0, %s293
    %s311 = sphi 0, %s311
    %s313 = sphi 0, %s311
    %s314 = sphi 0, %s313
    %s328 = sphi 0, %s314
    %s334 = sphi 0, %s336
    %s337 = sphi 0, %s334
    %s338 = sphi 0, %s337
    %s354 = sphi 0, %s338
  $region4: #{encoder_forward.2} parent=0 // loop_header_branch
    %23 = sbr.rel (%p21) target = $region8
  $region5: #{encoder_forward.2} parent=0 // loop_body
    %s25 = ssub.s32 %s20, 1
    %s26 = ssub.s32 %s20, 2
    %s27 = sadd.s32 %s20, 1
    %s28 = ssub.s32 %s20, %s27
    %p29 = scmp.eq.s32.totalorder %s28, 0
    %s31 = sadd.s32 %s30, 1
    %s32 = scalar_select %p29, %s30, %s31
    %p35 = pneg %p29
    %p36 = scmp.eq.s32.totalorder %s20, 1
    %p37 = por %p35, %p36
    %p38 = scmp.ne.s32.totalorder %s30, %s33
    %p39 = scmp.eq.s32.totalorder %s20, 0
    %p40 = por %p38, %p39
    %p41 = scmp.ne.s32.totalorder %s30, %s33
    %p42 = scmp.eq.s32.totalorder %s25, 1
    %p43 = por %p41, %p42
    %p44 = scmp.ne.s32.totalorder %s33, %s34
    %p45 = scmp.eq.s32.totalorder %s25, 0
    %p46 = por %p44, %p45
    %p47 = scmp.ne.s32.totalorder %s33, %s34
    %p48 = scmp.eq.s32.totalorder %s26, 1
    %p49 = por %p47, %p48
    %p51 = scmp.ne.s32.totalorder %s34, %s50
    %p52 = scmp.eq.s32.totalorder %s26, 0
    %p53 = por %p51, %p52
    %s54 = ssub.s32 %s20, %s27
    %p55 = scmp.eq.s32.totalorder %s54, 0
    %s57 = sadd.s32 %s56, 1
    %s58 = scalar_select %p55, %s56, %s57
    %p61 = pneg %p55
    %p62 = scmp.eq.s32.totalorder %s20, 1
    %p63 = por %p61, %p62
    %p64 = scmp.ne.s32.totalorder %s56, %s59
    %p65 = scmp.eq.s32.totalorder %s20, 0
    %p66 = por %p64, %p65
    %p67 = scmp.ne.s32.totalorder %s56, %s59
    %p68 = scmp.eq.s32.totalorder %s25, 1
    %p69 = por %p67, %p68
    %p70 = scmp.ne.s32.totalorder %s59, %s60
    %p71 = scmp.eq.s32.totalorder %s25, 0
    %p72 = por %p70, %p71
    %p73 = scmp.ne.s32.totalorder %s59, %s60
    %p74 = scmp.eq.s32.totalorder %s26, 1
    %p75 = por %p73, %p74
    %p77 = scmp.ne.s32.totalorder %s60, %s76
    %p78 = scmp.eq.s32.totalorder %s26, 0
    %p79 = por %p77, %p78
    %s81 = sadd.s32 %s80, 1
    %p84 = scmp.eq.s32.totalorder %s20, 1
    %p85 = scmp.ne.s32.totalorder %s80, %s82
    %p86 = scmp.eq.s32.totalorder %s20, 0
    %p87 = por %p85, %p86
    %p88 = scmp.ne.s32.totalorder %s80, %s82
    %p89 = scmp.eq.s32.totalorder %s25, 1
    %p90 = por %p88, %p89
    %p91 = scmp.ne.s32.totalorder %s82, %s83
    %p92 = scmp.eq.s32.totalorder %s25, 0
    %p93 = por %p91, %p92
    %p94 = scmp.ne.s32.totalorder %s82, %s83
    %p95 = scmp.eq.s32.totalorder %s26, 1
    %p96 = por %p94, %p95
    %p98 = scmp.ne.s32.totalorder %s83, %s97
    %p99 = scmp.eq.s32.totalorder %s26, 0
    %p100 = por %p98, %p99
    %s102 = sadd.s32 %s101, 1
    %p105 = scmp.eq.s32.totalorder %s20, 1
    %p106 = scmp.ne.s32.totalorder %s101, %s103
    %p107 = scmp.eq.s32.totalorder %s20, 0
    %p108 = por %p106, %p107
    %p109 = scmp.ne.s32.totalorder %s101, %s103
    %p110 = scmp.eq.s32.totalorder %s25, 1
    %p111 = por %p109, %p110
    %p112 = scmp.ne.s32.totalorder %s103, %s104
    %p113 = scmp.eq.s32.totalorder %s25, 0
    %p114 = por %p112, %p113
    %p115 = scmp.ne.s32.totalorder %s103, %s104
    %p116 = scmp.eq.s32.totalorder %s26, 1
    %p117 = por %p115, %p116
    %p119 = scmp.ne.s32.totalorder %s104, %s118
    %p120 = scmp.eq.s32.totalorder %s26, 0
    %p121 = por %p119, %p120
    %s123 = sadd.s32 %s122, 1
    %p126 = scmp.eq.s32.totalorder %s20, 1
    %p127 = scmp.ne.s32.totalorder %s122, %s124
    %p128 = scmp.eq.s32.totalorder %s20, 0
    %p129 = por %p127, %p128
    %p130 = scmp.ne.s32.totalorder %s122, %s124
    %p131 = scmp.eq.s32.totalorder %s25, 1
    %p132 = por %p130, %p131
    %p133 = scmp.ne.s32.totalorder %s124, %s125
    %p134 = scmp.eq.s32.totalorder %s25, 0
    %p135 = por %p133, %p134
    %p136 = scmp.ne.s32.totalorder %s124, %s125
    %p137 = scmp.eq.s32.totalorder %s26, 1
    %p138 = por %p136, %p137
    %p140 = scmp.ne.s32.totalorder %s125, %s139
    %p141 = scmp.eq.s32.totalorder %s26, 0
    %p142 = por %p140, %p141
    %s144 = sadd.s32 %s143, 1
    %p147 = scmp.eq.s32.totalorder %s20, 1
    %p148 = scmp.ne.s32.totalorder %s143, %s145
    %p149 = scmp.eq.s32.totalorder %s20, 0
    %p150 = por %p148, %p149
    %p151 = scmp.ne.s32.totalorder %s143, %s145
    %p152 = scmp.eq.s32.totalorder %s25, 1
    %p153 = por %p151, %p152
    %p154 = scmp.ne.s32.totalorder %s145, %s146
    %p155 = scmp.eq.s32.totalorder %s25, 0
    %p156 = por %p154, %p155
    %p157 = scmp.ne.s32.totalorder %s145, %s146
    %p158 = scmp.eq.s32.totalorder %s26, 1
    %p159 = por %p157, %p158
    %p161 = scmp.ne.s32.totalorder %s146, %s160
    %p162 = scmp.eq.s32.totalorder %s26, 0
    %p163 = por %p161, %p162
    %s165 = sadd.s32 %s164, 1
    %p168 = scmp.eq.s32.totalorder %s20, 1
    %p169 = scmp.ne.s32.totalorder %s164, %s166
    %p170 = scmp.eq.s32.totalorder %s20, 0
    %p171 = por %p169, %p170
    %p172 = scmp.ne.s32.totalorder %s164, %s166
    %p173 = scmp.eq.s32.totalorder %s25, 1
    %p174 = por %p172, %p173
    %p175 = scmp.ne.s32.totalorder %s166, %s167
    %p176 = scmp.eq.s32.totalorder %s25, 0
    %p177 = por %p175, %p176
    %p178 = scmp.ne.s32.totalorder %s166, %s167
    %p179 = scmp.eq.s32.totalorder %s26, 1
    %p180 = por %p178, %p179
    %p182 = scmp.ne.s32.totalorder %s167, %s181
    %p183 = scmp.eq.s32.totalorder %s26, 0
    %p184 = por %p182, %p183
    %s186 = sadd.s32 %s185, 1
    %p189 = scmp.eq.s32.totalorder %s20, 1
    %p190 = scmp.ne.s32.totalorder %s185, %s187
    %p191 = scmp.eq.s32.totalorder %s20, 0
    %p192 = por %p190, %p191
    %p193 = scmp.ne.s32.totalorder %s185, %s187
    %p194 = scmp.eq.s32.totalorder %s25, 1
    %p195 = por %p193, %p194
    %p196 = scmp.ne.s32.totalorder %s187, %s188
    %p197 = scmp.eq.s32.totalorder %s25, 0
    %p198 = por %p196, %p197
    %p199 = scmp.ne.s32.totalorder %s187, %s188
    %p200 = scmp.eq.s32.totalorder %s26, 1
    %p201 = por %p199, %p200
    %p203 = scmp.ne.s32.totalorder %s188, %s202
    %p204 = scmp.eq.s32.totalorder %s26, 0
    %p205 = por %p203, %p204
    %s207 = sadd.s32 %s206, 1
    %p210 = scmp.eq.s32.totalorder %s20, 1
    %p211 = scmp.ne.s32.totalorder %s206, %s208
    %p212 = scmp.eq.s32.totalorder %s20, 0
    %p213 = por %p211, %p212
    %p214 = scmp.ne.s32.totalorder %s206, %s208
    %p215 = scmp.eq.s32.totalorder %s25, 1
    %p216 = por %p214, %p215
    %p217 = scmp.ne.s32.totalorder %s208, %s209
    %p218 = scmp.eq.s32.totalorder %s25, 0
    %p219 = por %p217, %p218
    %p220 = scmp.ne.s32.totalorder %s208, %s209
    %p221 = scmp.eq.s32.totalorder %s26, 1
    %p222 = por %p220, %p221
    %p224 = scmp.ne.s32.totalorder %s209, %s223
    %p225 = scmp.eq.s32.totalorder %s26, 0
    %p226 = por %p224, %p225
    %s228 = sadd.s32 %s227, 1
    %p231 = scmp.eq.s32.totalorder %s20, 1
    %p232 = scmp.ne.s32.totalorder %s227, %s229
    %p233 = scmp.eq.s32.totalorder %s20, 0
    %p234 = por %p232, %p233
    %p235 = scmp.ne.s32.totalorder %s227, %s229
    %p236 = scmp.eq.s32.totalorder %s25, 1
    %p237 = por %p235, %p236
    %p238 = scmp.ne.s32.totalorder %s229, %s230
    %p239 = scmp.eq.s32.totalorder %s25, 0
    %p240 = por %p238, %p239
    %p241 = scmp.ne.s32.totalorder %s229, %s230
    %p242 = scmp.eq.s32.totalorder %s26, 1
    %p243 = por %p241, %p242
    %p245 = scmp.ne.s32.totalorder %s230, %s244
    %p246 = scmp.eq.s32.totalorder %s26, 0
    %p247 = por %p245, %p246
    %s249 = sadd.s32 %s248, 1
    %p252 = scmp.eq.s32.totalorder %s20, 1
    %p253 = scmp.ne.s32.totalorder %s248, %s250
    %p254 = scmp.eq.s32.totalorder %s20, 0
    %p255 = por %p253, %p254
    %p256 = scmp.ne.s32.totalorder %s248, %s250
    %p257 = scmp.eq.s32.totalorder %s25, 1
    %p258 = por %p256, %p257
    %p259 = scmp.ne.s32.totalorder %s250, %s251
    %p260 = scmp.eq.s32.totalorder %s25, 0
    %p261 = por %p259, %p260
    %p262 = scmp.ne.s32.totalorder %s250, %s251
    %p263 = scmp.eq.s32.totalorder %s26, 1
    %p264 = por %p262, %p263
    %p266 = scmp.ne.s32.totalorder %s251, %s265
    %p267 = scmp.eq.s32.totalorder %s26, 0
    %p268 = por %p266, %p267
    %s270 = sadd.s32 %s269, 1
    %p273 = scmp.eq.s32.totalorder %s20, 1
    %p274 = scmp.ne.s32.totalorder %s269, %s271
    %p275 = scmp.eq.s32.totalorder %s20, 0
    %p276 = por %p274, %p275
    %p277 = scmp.ne.s32.totalorder %s269, %s271
    %p278 = scmp.eq.s32.totalorder %s25, 1
    %p279 = por %p277, %p278
    %p280 = scmp.ne.s32.totalorder %s271, %s272
    %p281 = scmp.eq.s32.totalorder %s25, 0
    %p282 = por %p280, %p281
    %p283 = scmp.ne.s32.totalorder %s271, %s272
    %p284 = scmp.eq.s32.totalorder %s26, 1
    %p285 = por %p283, %p284
    %p287 = scmp.ne.s32.totalorder %s272, %s286
    %p288 = scmp.eq.s32.totalorder %s26, 0
    %p289 = por %p287, %p288
    %s291 = sadd.s32 %s290, 1
    %p294 = scmp.eq.s32.totalorder %s20, 1
    %p295 = scmp.ne.s32.totalorder %s290, %s292
    %p296 = scmp.eq.s32.totalorder %s20, 0
    %p297 = por %p295, %p296
    %p298 = scmp.ne.s32.totalorder %s290, %s292
    %p299 = scmp.eq.s32.totalorder %s25, 1
    %p300 = por %p298, %p299
    %p301 = scmp.ne.s32.totalorder %s292, %s293
    %p302 = scmp.eq.s32.totalorder %s25, 0
    %p303 = por %p301, %p302
    %p304 = scmp.ne.s32.totalorder %s292, %s293
    %p305 = scmp.eq.s32.totalorder %s26, 1
    %p306 = por %p304, %p305
    %p308 = scmp.ne.s32.totalorder %s293, %s307
    %p309 = scmp.eq.s32.totalorder %s26, 0
    %p310 = por %p308, %p309
    %s312 = sadd.s32 %s311, 1
    %p315 = scmp.eq.s32.totalorder %s20, 1
    %p316 = scmp.ne.s32.totalorder %s311, %s313
    %p317 = scmp.eq.s32.totalorder %s20, 0
    %p318 = por %p316, %p317
    %p319 = scmp.ne.s32.totalorder %s311, %s313
    %p320 = scmp.eq.s32.totalorder %s25, 1
    %p321 = por %p319, %p320
    %p322 = scmp.ne.s32.totalorder %s313, %s314
    %p323 = scmp.eq.s32.totalorder %s25, 0
    %p324 = por %p322, %p323
    %p325 = scmp.ne.s32.totalorder %s313, %s314
    %p326 = scmp.eq.s32.totalorder %s26, 1
    %p327 = por %p325, %p326
    %p329 = scmp.ne.s32.totalorder %s314, %s328
    %p330 = scmp.eq.s32.totalorder %s26, 0
    %p331 = por %p329, %p330
    %s332 = ssub.s32 %s20, %s27
    %p333 = scmp.eq.s32.totalorder %s332, 0
    %s335 = sadd.s32 %s334, 1
    %s336 = scalar_select %p333, %s334, %s335
    %p339 = pneg %p333
    %p340 = scmp.eq.s32.totalorder %s20, 1
    %p341 = por %p339, %p340
    %p342 = scmp.ne.s32.totalorder %s334, %s337
    %p343 = scmp.eq.s32.totalorder %s20, 0
    %p344 = por %p342, %p343
    %p345 = scmp.ne.s32.totalorder %s334, %s337
    %p346 = scmp.eq.s32.totalorder %s25, 1
    %p347 = por %p345, %p346
    %p348 = scmp.ne.s32.totalorder %s337, %s338
    %p349 = scmp.eq.s32.totalorder %s25, 0
    %p350 = por %p348, %p349
    %p351 = scmp.ne.s32.totalorder %s337, %s338
    %p352 = scmp.eq.s32.totalorder %s26, 1
    %p353 = por %p351, %p352
    %p355 = scmp.ne.s32.totalorder %s338, %s354
    %p356 = scmp.eq.s32.totalorder %s26, 0
    %p357 = por %p355, %p356
    %p358 = scmp.le.s32.totalorder 1, %s20
    %p359 = scmp.lt.s32.totalorder %s20, 3
    %p360 = pnand %p358, %p359
    %p361 = pneg %p360
    // Predicated region
    $region9: #{encoder_forward.2} parent=5 // pred_check
      _
    $region10: #{encoder_forward.2} parent=5 // pred_check_branch
      %363 = sbr.rel (%p360) target = $region12
    $region11: #{encoder_forward.2} parent=5 // pred_region
      %s364 = ssub.s32 %s20, 1
      // Predicated region
      $region13: #{encoder_forward.2} parent=11 // pred_check
        %p365 = pneg %p93
      $region14: #{encoder_forward.2} parent=11 // pred_check_branch
        %367 = sbr.rel (%p365) target = $region16
      $region15: #{encoder_forward.2} parent=11 // pred_region
        _
      $region16: #{encoder_forward.2} parent=11 // pred_fallthru
        _
      // Predicated region
      $region17: #{encoder_forward.2} parent=11 // pred_check
        %p368 = pneg %p114
      $region18: #{encoder_forward.2} parent=11 // pred_check_branch
        %370 = sbr.rel (%p368) target = $region20
      $region19: #{encoder_forward.2} parent=11 // pred_region
        _
      $region20: #{encoder_forward.2} parent=11 // pred_fallthru
        _
      // Predicated region
      $region21: #{encoder_forward.2} parent=11 // pred_check
        %p371 = pneg %p135
      $region22: #{encoder_forward.2} parent=11 // pred_check_branch
        %373 = sbr.rel (%p371) target = $region24
      $region23: #{encoder_forward.2} parent=11 // pred_region
        _
      $region24: #{encoder_forward.2} parent=11 // pred_fallthru
        _
      // Predicated region
      $region25: #{encoder_forward.2} parent=11 // pred_check
        %p374 = pneg %p156
      $region26: #{encoder_forward.2} parent=11 // pred_check_branch
        %376 = sbr.rel (%p374) target = $region28
      $region27: #{encoder_forward.2} parent=11 // pred_region
        _
      $region28: #{encoder_forward.2} parent=11 // pred_fallthru
        _
      // Predicated region
      $region29: #{encoder_forward.2} parent=11 // pred_check
        %p377 = pneg %p177
      $region30: #{encoder_forward.2} parent=11 // pred_check_branch
        %379 = sbr.rel (%p377) target = $region32
      $region31: #{encoder_forward.2} parent=11 // pred_region
        _
      $region32: #{encoder_forward.2} parent=11 // pred_fallthru
        _
      // Predicated region
      $region33: #{encoder_forward.2} parent=11 // pred_check
        %p380 = pneg %p198
      $region34: #{encoder_forward.2} parent=11 // pred_check_branch
        %382 = sbr.rel (%p380) target = $region36
      $region35: #{encoder_forward.2} parent=11 // pred_region
        _
      $region36: #{encoder_forward.2} parent=11 // pred_fallthru
        _
      // Predicated region
      $region37: #{encoder_forward.2} parent=11 // pred_check
        %p383 = pneg %p219
      $region38: #{encoder_forward.2} parent=11 // pred_check_branch
        %385 = sbr.rel (%p383) target = $region40
      $region39: #{encoder_forward.2} parent=11 // pred_region
        _
      $region40: #{encoder_forward.2} parent=11 // pred_fallthru
        _
      // Predicated region
      $region41: #{encoder_forward.2} parent=11 // pred_check
        %p386 = pneg %p240
      $region42: #{encoder_forward.2} parent=11 // pred_check_branch
        %388 = sbr.rel (%p386) target = $region44
      $region43: #{encoder_forward.2} parent=11 // pred_region
        _
      $region44: #{encoder_forward.2} parent=11 // pred_fallthru
        _
      // Predicated region
      $region45: #{encoder_forward.2} parent=11 // pred_check
        %p389 = pneg %p261
      $region46: #{encoder_forward.2} parent=11 // pred_check_branch
        %391 = sbr.rel (%p389) target = $region48
      $region47: #{encoder_forward.2} parent=11 // pred_region
        _
      $region48: #{encoder_forward.2} parent=11 // pred_fallthru
        _
      // Predicated region
      $region49: #{encoder_forward.2} parent=11 // pred_check
        %p392 = pneg %p282
      $region50: #{encoder_forward.2} parent=11 // pred_check_branch
        %394 = sbr.rel (%p392) target = $region52
      $region51: #{encoder_forward.2} parent=11 // pred_region
        _
      $region52: #{encoder_forward.2} parent=11 // pred_fallthru
        _
      // Predicated region
      $region53: #{encoder_forward.2} parent=11 // pred_check
        %p395 = pneg %p303
      $region54: #{encoder_forward.2} parent=11 // pred_check_branch
        %397 = sbr.rel (%p395) target = $region56
      $region55: #{encoder_forward.2} parent=11 // pred_region
        _
      $region56: #{encoder_forward.2} parent=11 // pred_fallthru
        _
      // Predicated region
      $region57: #{encoder_forward.2} parent=11 // pred_check
        %p398 = pneg %p324
      $region58: #{encoder_forward.2} parent=11 // pred_check_branch
        %400 = sbr.rel (%p398) target = $region60
      $region59: #{encoder_forward.2} parent=11 // pred_region
        _
      $region60: #{encoder_forward.2} parent=11 // pred_fallthru
        _
    $region12: #{encoder_forward.2} parent=5 // pred_fallthru
      _
    %p401 = scmp.lt.s32.totalorder %s20, 2
    // Predicated region
    $region61: #{encoder_forward.2} parent=5 // pred_check
      %p402 = pneg %p401
    $region62: #{encoder_forward.2} parent=5 // pred_check_branch
      %404 = sbr.rel (%p402) target = $region64
    $region63: #{encoder_forward.2} parent=5 // pred_region
      // Predicated region
      $region65: #{encoder_forward.2} parent=63 // pred_check
        %p405 = pneg %p40
      $region66: #{encoder_forward.2} parent=63 // pred_check_branch
        %407 = sbr.rel (%p405) target = $region68
      $region67: #{encoder_forward.2} parent=63 // pred_region
        %p408 = scmp.lt.s32.totalorder %s20, 1
        %s409 = scalar_select %p408, %s20, 1
        %s410 = smul.addr %s409, 8
        %s411 = scalar_lea.vmem %s0, %s410
      $region68: #{encoder_forward.2} parent=63 // pred_fallthru
        _
      // Predicated region
      $region69: #{encoder_forward.2} parent=63 // pred_check
        %p412 = pneg %p66
      $region70: #{encoder_forward.2} parent=63 // pred_check_branch
        %414 = sbr.rel (%p412) target = $region72
      $region71: #{encoder_forward.2} parent=63 // pred_region
        %p415 = scmp.lt.s32.totalorder %s20, 1
        %s416 = scalar_select %p415, %s20, 1
        %s417 = smul.addr %s416, 8
        %s418 = scalar_lea.vmem %s1, %s417
      $region72: #{encoder_forward.2} parent=63 // pred_fallthru
        _
    $region64: #{encoder_forward.2} parent=5 // pred_fallthru
      _
    %p419 = scmp.le.s32.totalorder 1, %s20
    %p420 = scmp.lt.s32.totalorder %s20, 3
    %p421 = pnand %p419, %p420
    %p422 = pneg %p421
    // Predicated region
    $region73: #{encoder_forward.2} parent=5 // pred_check
      _
    $region74: #{encoder_forward.2} parent=5 // pred_check_branch
      %424 = sbr.rel (%p421) target = $region76
    $region75: #{encoder_forward.2} parent=5 // pred_region
      %s425 = ssub.s32 %s20, 1
      %p426 = scmp.lt.s32.totalorder %s25, 1
      %s427 = scalar_select %p426, %s25, 1
      %s428 = smul.addr %s427, 8
      %s429 = scalar_lea.vmem %s0, %s428
      %p430 = pneg %p46
      %p431 = pneg %p43
      %p432 = scmp.lt.s32.totalorder %s25, 1
      %s433 = scalar_select %p432, %s25, 1
      %s434 = smul.addr %s433, 8
      %s435 = scalar_lea.vmem %s1, %s434
      %p436 = pneg %p72
      %p437 = pneg %p69
      %p438 = pneg %p93
      %p439 = pneg %p90
      %p440 = pneg %p114
      %p441 = pneg %p111
      %p442 = pneg %p135
      %p443 = pneg %p132
      %p444 = pneg %p156
      %p445 = pneg %p153
      %p446 = pneg %p177
      %p447 = pneg %p174
      %p448 = pneg %p198
      %p449 = pneg %p195
      %p450 = pneg %p219
      %p451 = pneg %p216
      %p452 = pneg %p240
      %p453 = pneg %p237
      %p454 = pneg %p261
      %p455 = pneg %p258
      %p456 = pneg %p282
      %p457 = pneg %p279
      %p458 = pneg %p303
      %p459 = pneg %p300
      %p460 = pneg %p324
      %p461 = pneg %p321
      %p462 = pneg %p350
      %p463 = pneg %p347
      %p464 = scmp.lt.s32.totalorder %s25, 1
      %s465 = scalar_select %p464, %s25, 1
      %s466 = smul.addr %s465, 8
      %s467 = scalar_lea.vmem %s14, %s466
      %p468 = scmp.lt.s32.totalorder %s25, 1
      %s469 = scalar_select %p468, %s25, 1
      %s470 = smul.addr %s469, 8
      %s471 = scalar_lea.vmem %s0, %s470
      %p472 = scmp.lt.s32.totalorder %s25, 1
      %s473 = scalar_select %p472, %s25, 1
      %s474 = smul.addr %s473, 8
      %s475 = scalar_lea.vmem %s1, %s474
      %p476 = scmp.lt.s32.totalorder %s25, 1
      %s477 = scalar_select %p476, %s25, 1
      %s478 = smul.addr %s477, 8
      %s479 = scalar_lea.vmem %s14, %s478
      %v481 = vld [vmem:[%s471] sm:$0xff]
      %v482 = vpack.c.bf16 %v481, %v481
      %v483 = vld [vmem:[%s2] sm:$0xf]
      %v484 = vld [vmem:[%s2 + $0x4] sm:$0xf]
      %v485 = vld [vmem:[%s2 + $0x8] sm:$0xf]
      %v486 = vld [vmem:[%s2 + $0xc] sm:$0xf]
      %v487 = vld [vmem:[%s3] sm:$0x1]
      %v489 = vlaneseq
      %v490 = vshrl.u32 %v489, 7
      %v491 = vsub.s32 0, %v490
      %v492 = vrot.slane %v487, %v491
      %v498 = vunpack.c.l.b16 %v483
      %v499 = vunpack.c.l.b16 %v484
      %v500 = vunpack.c.l.b16 %v485
      %v501 = vunpack.c.l.b16 %v486
      %v502 = vpack.c.b16 %v499, %v498
      %v503 = vpack.c.b16 %v501, %v500
      %vm506 = vcmask 261120
      %v508 = vsel %vm506, %v482, 0
      %510 = vmatprep.subr.bf16.mxu0 0
      %511 = vmatpush1.bf16.msra.mxu0 0
      %512 = vmatprep.subr.bf16.mxu0 0
      %513 = vmatpush1.bf16.msra.mxu0 0
      %514 = vmatprep.subr.bf16.mxu0 0
      %515 = vmatpush1.bf16.msra.mxu0 0
      %516 = vmatprep.subr.bf16.mxu0 0
      %517 = vmatpush1.bf16.msra.mxu0 0
      %518 = vmatprep.subr.bf16.mxu0 0
      %519 = vmatpush1.bf16.msra.mxu0 0
      %520 = vmatprep.subr.bf16.mxu0 0
      %521 = vmatpush1.bf16.msra.mxu0 0
      %522 = vmatprep.subr.bf16.mxu0 0
      %523 = vmatpush1.bf16.msra.mxu0 %v503
      %524 = vmatprep.subr.bf16.mxu0 0
      %525 = vmatpush1.bf16.msra.mxu0 %v502
      %526 = vmatprep.subr.bf16.mxu0 0
      %527 = vmatpush2.bf16.msra.mxu0 0
      %528 = vmatprep.subr.bf16.mxu0 0
      %529 = vmatpush2.bf16.msra.mxu0 0
      %530 = vmatprep.subr.bf16.mxu0 0
      %531 = vmatpush2.bf16.msra.mxu0 0
      %532 = vmatprep.subr.bf16.mxu0 0
      %533 = vmatpush2.bf16.msra.mxu0 0
      %534 = vmatprep.subr.bf16.mxu0 0
      %535 = vmatpush2.bf16.msra.mxu0 0
      %536 = vmatprep.subr.bf16.mxu0 0
      %537 = vmatpush2.bf16.msra.mxu0 0
      %538 = vmatprep.subr.bf16.mxu0 0
      %539 = vmatpush2.bf16.msra.mxu0 0
      %540 = vmatprep.subr.bf16.mxu0 0
      %541 = vmatpush2.bf16.msra.mxu0 0
      %542 = vmatprep.mubr.bf16.mxu0 0
      %543 = vmatmul.mubr.bf16.gmra.mxu0 %v508
      %v544 = vpop.f32.mrf.mxu0
      %v545 = vadd.f32 %v492, %v544
      %v546 = vpop.f32.mrf.mxu0
      %v547 = vpop.f32.mrf.mxu0
      %v548 = vpop.f32.mrf.mxu0
      %549 = vdwg.mxu0
      %v550 = vpack.c.bf16 %v545, %v545
      %552 = vrot.lane.b32.xlu0 %v550, 120
      %v553 = vpop.permute.xlu0 %552
      %554 = vrot.lane.b32.xlu0 %v550, 112
      %v555 = vpop.permute.xlu0 %554
      %556 = vrot.lane.b32.xlu0 %v550, 104
      %v557 = vpop.permute.xlu0 %556
      %v558 = vld [vmem:[%s475] sm:$0xff]
      %559 = vrot.lane.b32.xlu0 %v550, 96
      %v560 = vpop.permute.xlu0 %559
      %vm561 = vcmask 64512
      %v563 = vsel %vm561, %v550, 0
      %v566 = vsel %vm561, %v560, 0
      %568 = vmatprep.subr.bf16.mxu0 0
      %569 = vmatpush1.bf16.xpose.msra.mxu0 0
      %570 = vmatprep.subr.bf16.mxu0 0
      %571 = vmatpush1.bf16.xpose.msra.mxu0 0
      %572 = vmatprep.subr.bf16.mxu0 0
      %573 = vmatpush1.bf16.xpose.msra.mxu0 0
      %574 = vmatprep.subr.bf16.mxu0 0
      %575 = vmatpush1.bf16.xpose.msra.mxu0 0
      %576 = vmatprep.subr.bf16.mxu0 0
      %577 = vmatpush1.bf16.xpose.msra.mxu0 0
      %578 = vmatprep.subr.bf16.mxu0 0
      %579 = vmatpush1.bf16.xpose.msra.mxu0 0
      %580 = vmatprep.subr.bf16.mxu0 0
      %581 = vmatpush1.bf16.xpose.msra.mxu0 0
      %582 = vmatprep.subr.bf16.mxu0 0
      %583 = vmatpush1.bf16.xpose.msra.mxu0 %v566
      %584 = vmatprep.subr.bf16.mxu0 0
      %585 = vmatpush2.bf16.xpose.msra.mxu0 0
      %586 = vmatprep.subr.bf16.mxu0 0
      %587 = vmatpush2.bf16.xpose.msra.mxu0 0
      %588 = vmatprep.subr.bf16.mxu0 0
      %589 = vmatpush2.bf16.xpose.msra.mxu0 0
      %590 = vmatprep.subr.bf16.mxu0 0
      %591 = vmatpush2.bf16.xpose.msra.mxu0 0
      %592 = vmatprep.subr.bf16.mxu0 0
      %593 = vmatpush2.bf16.xpose.msra.mxu0 0
      %594 = vmatprep.subr.bf16.mxu0 0
      %595 = vmatpush2.bf16.xpose.msra.mxu0 0
      %596 = vmatprep.subr.bf16.mxu0 0
      %597 = vmatpush2.bf16.xpose.msra.mxu0 0
      %598 = vmatprep.subr.bf16.mxu0 0
      %599 = vmatpush2.bf16.xpose.msra.mxu0 0
      %600 = vmatprep.mubr.bf16.mxu0 0
      %601 = vmatmul.mubr.bf16.gmra.mxu0 %v563
      %v602 = vpop.f32.mrf.mxu0
      %v603 = vadd.f32 %v558, %v602
      %v604 = vpop.f32.mrf.mxu0
      %v605 = vpop.f32.mrf.mxu0
      %v606 = vpop.f32.mrf.mxu0
      %607 = vdwg.mxu0
      %608 = vrot.lane.b32.xlu0 %v553, 96
      %v609 = vpop.permute.xlu0 %608
      %v611 = vsel %vm561, %v553, 0
      %v614 = vsel %vm561, %v609, 0
      %616 = vmatprep.subr.bf16.mxu0 0
      %617 = vmatpush1.bf16.xpose.msra.mxu0 0
      %618 = vmatprep.subr.bf16.mxu0 0
      %619 = vmatpush1.bf16.xpose.msra.mxu0 0
      %620 = vmatprep.subr.bf16.mxu0 0
      %621 = vmatpush1.bf16.xpose.msra.mxu0 0
      %622 = vmatprep.subr.bf16.mxu0 0
      %623 = vmatpush1.bf16.xpose.msra.mxu0 0
      %624 = vmatprep.subr.bf16.mxu0 0
      %625 = vmatpush1.bf16.xpose.msra.mxu0 0
      %626 = vmatprep.subr.bf16.mxu0 0
      %627 = vmatpush1.bf16.xpose.msra.mxu0 0
      %628 = vmatprep.subr.bf16.mxu0 0
      %629 = vmatpush1.bf16.xpose.msra.mxu0 0
      %630 = vmatprep.subr.bf16.mxu0 0
      %631 = vmatpush1.bf16.xpose.msra.mxu0 %v614
      %632 = vmatprep.subr.bf16.mxu0 0
      %633 = vmatpush2.bf16.xpose.msra.mxu0 0
      %634 = vmatprep.subr.bf16.mxu0 0
      %635 = vmatpush2.bf16.xpose.msra.mxu0 0
      %636 = vmatprep.subr.bf16.mxu0 0
      %637 = vmatpush2.bf16.xpose.msra.mxu0 0
      %638 = vmatprep.subr.bf16.mxu0 0
      %639 = vmatpush2.bf16.xpose.msra.mxu0 0
      %640 = vmatprep.subr.bf16.mxu0 0
      %641 = vmatpush2.bf16.xpose.msra.mxu0 0
      %642 = vmatprep.subr.bf16.mxu0 0
      %643 = vmatpush2.bf16.xpose.msra.mxu0 0
      %644 = vmatprep.subr.bf16.mxu0 0
      %645 = vmatpush2.bf16.xpose.msra.mxu0 0
      %646 = vmatprep.subr.bf16.mxu0 0
      %647 = vmatpush2.bf16.xpose.msra.mxu0 0
      %648 = vmatprep.mubr.bf16.mxu0 0
      %649 = vmatmul.mubr.bf16.gmra.mxu0 %v611
      %v650 = vpop.f32.mrf.mxu0
      %v651 = vadd.f32 %v558, %v650
      %v652 = vpop.f32.mrf.mxu0
      %v653 = vpop.f32.mrf.mxu0
      %v654 = vpop.f32.mrf.mxu0
      %655 = vdwg.mxu0
      %656 = vrot.lane.b32.xlu0 %v555, 96
      %v657 = vpop.permute.xlu0 %656
      %v659 = vsel %vm561, %v555, 0
      %v662 = vsel %vm561, %v657, 0
      %664 = vmatprep.subr.bf16.mxu0 0
      %665 = vmatpush1.bf16.xpose.msra.mxu0 0
      %666 = vmatprep.subr.bf16.mxu0 0
      %667 = vmatpush1.bf16.xpose.msra.mxu0 0
      %668 = vmatprep.subr.bf16.mxu0 0
      %669 = vmatpush1.bf16.xpose.msra.mxu0 0
      %670 = vmatprep.subr.bf16.mxu0 0
      %671 = vmatpush1.bf16.xpose.msra.mxu0 0
      %672 = vmatprep.subr.bf16.mxu0 0
      %673 = vmatpush1.bf16.xpose.msra.mxu0 0
      %674 = vmatprep.subr.bf16.mxu0 0
      %675 = vmatpush1.bf16.xpose.msra.mxu0 0
      %676 = vmatprep.subr.bf16.mxu0 0
      %677 = vmatpush1.bf16.xpose.msra.mxu0 0
      %678 = vmatprep.subr.bf16.mxu0 0
      %679 = vmatpush1.bf16.xpose.msra.mxu0 %v662
      %680 = vmatprep.subr.bf16.mxu0 0
      %681 = vmatpush2.bf16.xpose.msra.mxu0 0
      %682 = vmatprep.subr.bf16.mxu0 0
      %683 = vmatpush2.bf16.xpose.msra.mxu0 0
      %684 = vmatprep.subr.bf16.mxu0 0
      %685 = vmatpush2.bf16.xpose.msra.mxu0 0
      %686 = vmatprep.subr.bf16.mxu0 0
      %687 = vmatpush2.bf16.xpose.msra.mxu0 0
      %688 = vmatprep.subr.bf16.mxu0 0
      %689 = vmatpush2.bf16.xpose.msra.mxu0 0
      %690 = vmatprep.subr.bf16.mxu0 0
      %691 = vmatpush2.bf16.xpose.msra.mxu0 0
      %692 = vmatprep.subr.bf16.mxu0 0
      %693 = vmatpush2.bf16.xpose.msra.mxu0 0
      %694 = vmatprep.subr.bf16.mxu0 0
      %695 = vmatpush2.bf16.xpose.msra.mxu0 0
      %696 = vmatprep.mubr.bf16.mxu0 0
      %697 = vmatmul.mubr.bf16.gmra.mxu0 %v659
      %v698 = vpop.f32.mrf.mxu0
      %v699 = vadd.f32 %v558, %v698
      %v700 = vpop.f32.mrf.mxu0
      %v701 = vpop.f32.mrf.mxu0
      %v702 = vpop.f32.mrf.mxu0
      %703 = vdwg.mxu0
      %704 = vrot.lane.b32.xlu0 %v557, 96
      %v705 = vpop.permute.xlu0 %704
      %v707 = vsel %vm561, %v557, 0
      %v710 = vsel %vm561, %v705, 0
      %712 = vmatprep.subr.bf16.mxu0 0
      %713 = vmatpush1.bf16.xpose.msra.mxu0 0
      %714 = vmatprep.subr.bf16.mxu0 0
      %715 = vmatpush1.bf16.xpose.msra.mxu0 0
      %716 = vmatprep.subr.bf16.mxu0 0
      %717 = vmatpush1.bf16.xpose.msra.mxu0 0
      %718 = vmatprep.subr.bf16.mxu0 0
      %719 = vmatpush1.bf16.xpose.msra.mxu0 0
      %720 = vmatprep.subr.bf16.mxu0 0
      %721 = vmatpush1.bf16.xpose.msra.mxu0 0
      %722 = vmatprep.subr.bf16.mxu0 0
      %723 = vmatpush1.bf16.xpose.msra.mxu0 0
      %724 = vmatprep.subr.bf16.mxu0 0
      %725 = vmatpush1.bf16.xpose.msra.mxu0 0
      %726 = vmatprep.subr.bf16.mxu0 0
      %727 = vmatpush1.bf16.xpose.msra.mxu0 %v710
      %728 = vmatprep.subr.bf16.mxu0 0
      %729 = vmatpush2.bf16.xpose.msra.mxu0 0
      %730 = vmatprep.subr.bf16.mxu0 0
      %731 = vmatpush2.bf16.xpose.msra.mxu0 0
      %732 = vmatprep.subr.bf16.mxu0 0
      %733 = vmatpush2.bf16.xpose.msra.mxu0 0
      %734 = vmatprep.subr.bf16.mxu0 0
      %735 = vmatpush2.bf16.xpose.msra.mxu0 0
      %736 = vmatprep.subr.bf16.mxu0 0
      %737 = vmatpush2.bf16.xpose.msra.mxu0 0
      %738 = vmatprep.subr.bf16.mxu0 0
      %739 = vmatpush2.bf16.xpose.msra.mxu0 0
      %740 = vmatprep.subr.bf16.mxu0 0
      %741 = vmatpush2.bf16.xpose.msra.mxu0 0
      %742 = vmatprep.subr.bf16.mxu0 0
      %743 = vmatpush2.bf16.xpose.msra.mxu0 0
      %744 = vmatprep.mubr.bf16.mxu0 0
      %745 = vmatmul.mubr.bf16.gmra.mxu0 %v707
      %v746 = vpop.f32.mrf.mxu0
      %v747 = vadd.f32 %v558, %v746
      %v748 = vpop.f32.mrf.mxu0
      %v749 = vpop.f32.mrf.mxu0
      %v750 = vpop.f32.mrf.mxu0
      %751 = vdwg.mxu0
      %v752 = vsel %vm561, %v603, -inf
      %753 = vmax.xlane.f32.xlu0 %v752
      %v754 = vpop.xlane.xlu0 %753
      %v755 = vsel %vm561, %v651, -inf
      %756 = vmax.xlane.f32.xlu0 %v755
      %v757 = vpop.xlane.xlu0 %756
      %v758 = vsel %vm561, %v699, -inf
      %759 = vmax.xlane.f32.xlu0 %v758
      %v760 = vpop.xlane.xlu0 %759
      %v761 = vsel %vm561, %v747, -inf
      %762 = vmax.xlane.f32.xlu0 %v761
      %v763 = vpop.xlane.xlu0 %762
      %v764 = vsub.f32 %v603, %v754
      %v765 = vsub.f32 %v651, %v757
      %v766 = vsub.f32 %v699, %v760
      %v767 = vsub.f32 %v747, %v763
      %v768 = vmul.f32 %v764, 1.442695
      %v769 = vpow.pop %v768
      %v770 = vmul.f32 %v765, 1.442695
      %v771 = vpow.pop %v770
      %v772 = vmul.f32 %v766, 1.442695
      %v773 = vpow.pop %v772
      %v774 = vmul.f32 %v767, 1.442695
      %v775 = vpow.pop %v774
      %v776 = vsel %vm561, %v769, 0.0
      %777 = vadd.xlane.f32.xlu0 %v776
      %v778 = vpop.xlane.xlu0 %777
      %v779 = vsel %vm561, %v771, 0.0
      %780 = vadd.xlane.f32.xlu0 %v779
      %v781 = vpop.xlane.xlu0 %780
      %v782 = vsel %vm561, %v773, 0.0
      %783 = vadd.xlane.f32.xlu0 %v782
      %v784 = vpop.xlane.xlu0 %783
      %v785 = vsel %vm561, %v775, 0.0
      %786 = vadd.xlane.f32.xlu0 %v785
      %v787 = vpop.xlane.xlu0 %786
      %v788 = vrcp.pop %v778
      %v789 = vrcp.pop %v781
      %v790 = vrcp.pop %v784
      %v791 = vrcp.pop %v787
      %v792 = vmul.f32 %v769, %v788
      %v793 = vmul.f32 %v771, %v789
      %v794 = vmul.f32 %v773, %v790
      %v795 = vmul.f32 %v775, %v791
      %v796 = vpack.c.bf16 %v792, %v792
      %v797 = vpack.c.bf16 %v793, %v793
      %v798 = vpack.c.bf16 %v794, %v794
      %v799 = vpack.c.bf16 %v795, %v795
      %800 = vrot.lane.b32.xlu0 %v550, 64
      %v801 = vpop.permute.xlu0 %800
      %v803 = vsel %vm561, %v796, 0
      %vm805 = vcmask 1043456
      %v807 = vsel %vm805, %v801, 0
      %809 = vmatprep.subr.bf16.mxu0 0
      %810 = vmatpush1.bf16.msra.mxu0 0
      %811 = vmatprep.subr.bf16.mxu0 0
      %812 = vmatpush1.bf16.msra.mxu0 0
      %813 = vmatprep.subr.bf16.mxu0 0
      %814 = vmatpush1.bf16.msra.mxu0 0
      %815 = vmatprep.subr.bf16.mxu0 0
      %816 = vmatpush1.bf16.msra.mxu0 0
      %817 = vmatprep.subr.bf16.mxu0 0
      %818 = vmatpush1.bf16.msra.mxu0 0
      %819 = vmatprep.subr.bf16.mxu0 0
      %820 = vmatpush1.bf16.msra.mxu0 0
      %821 = vmatprep.subr.bf16.mxu0 0
      %822 = vmatpush1.bf16.msra.mxu0 0
      %823 = vmatprep.subr.bf16.mxu0 0
      %824 = vmatpush1.bf16.msra.mxu0 %v807
      %825 = vmatprep.subr.bf16.mxu0 0
      %826 = vmatpush2.bf16.msra.mxu0 0
      %827 = vmatprep.subr.bf16.mxu0 0
      %828 = vmatpush2.bf16.msra.mxu0 0
      %829 = vmatprep.subr.bf16.mxu0 0
      %830 = vmatpush2.bf16.msra.mxu0 0
      %831 = vmatprep.subr.bf16.mxu0 0
      %832 = vmatpush2.bf16.msra.mxu0 0
      %833 = vmatprep.subr.bf16.mxu0 0
      %834 = vmatpush2.bf16.msra.mxu0 0
      %835 = vmatprep.subr.bf16.mxu0 0
      %836 = vmatpush2.bf16.msra.mxu0 0
      %837 = vmatprep.subr.bf16.mxu0 0
      %838 = vmatpush2.bf16.msra.mxu0 0
      %839 = vmatprep.subr.bf16.mxu0 0
      %840 = vmatpush2.bf16.msra.mxu0 0
      %841 = vmatprep.mubr.bf16.mxu0 0
      %842 = vmatmul.mubr.bf16.gmra.mxu0 %v803
      %v843 = vpop.f32.mrf.mxu0
      %v844 = vadd.f32 0.0, %v843
      %v845 = vpop.f32.mrf.mxu0
      %v846 = vpop.f32.mrf.mxu0
      %v847 = vpop.f32.mrf.mxu0
      %848 = vdwg.mxu0
      %849 = vrot.lane.b32.xlu0 %v553, 64
      %v850 = vpop.permute.xlu0 %849
      %v852 = vsel %vm561, %v797, 0
      %v855 = vsel %vm805, %v850, 0
      %857 = vmatprep.subr.bf16.mxu0 0
      %858 = vmatpush1.bf16.msra.mxu0 0
      %859 = vmatprep.subr.bf16.mxu0 0
      %860 = vmatpush1.bf16.msra.mxu0 0
      %861 = vmatprep.subr.bf16.mxu0 0
      %862 = vmatpush1.bf16.msra.mxu0 0
      %863 = vmatprep.subr.bf16.mxu0 0
      %864 = vmatpush1.bf16.msra.mxu0 0
      %865 = vmatprep.subr.bf16.mxu0 0
      %866 = vmatpush1.bf16.msra.mxu0 0
      %867 = vmatprep.subr.bf16.mxu0 0
      %868 = vmatpush1.bf16.msra.mxu0 0
      %869 = vmatprep.subr.bf16.mxu0 0
      %870 = vmatpush1.bf16.msra.mxu0 0
      %871 = vmatprep.subr.bf16.mxu0 0
      %872 = vmatpush1.bf16.msra.mxu0 %v855
      %873 = vmatprep.subr.bf16.mxu0 0
      %874 = vmatpush2.bf16.msra.mxu0 0
      %875 = vmatprep.subr.bf16.mxu0 0
      %876 = vmatpush2.bf16.msra.mxu0 0
      %877 = vmatprep.subr.bf16.mxu0 0
      %878 = vmatpush2.bf16.msra.mxu0 0
      %879 = vmatprep.subr.bf16.mxu0 0
      %880 = vmatpush2.bf16.msra.mxu0 0
      %881 = vmatprep.subr.bf16.mxu0 0
      %882 = vmatpush2.bf16.msra.mxu0 0
      %883 = vmatprep.subr.bf16.mxu0 0
      %884 = vmatpush2.bf16.msra.mxu0 0
      %885 = vmatprep.subr.bf16.mxu0 0
      %886 = vmatpush2.bf16.msra.mxu0 0
      %887 = vmatprep.subr.bf16.mxu0 0
      %888 = vmatpush2.bf16.msra.mxu0 0
      %889 = vmatprep.mubr.bf16.mxu0 0
      %890 = vmatmul.mubr.bf16.gmra.mxu0 %v852
      %v891 = vpop.f32.mrf.mxu0
      %v892 = vadd.f32 0.0, %v891
      %v893 = vpop.f32.mrf.mxu0
      %v894 = vpop.f32.mrf.mxu0
      %v895 = vpop.f32.mrf.mxu0
      %896 = vdwg.mxu0
      %897 = vrot.lane.b32.xlu0 %v555, 64
      %v898 = vpop.permute.xlu0 %897
      %v900 = vsel %vm561, %v798, 0
      %v903 = vsel %vm805, %v898, 0
      %905 = vmatprep.subr.bf16.mxu0 0
      %906 = vmatpush1.bf16.msra.mxu0 0
      %907 = vmatprep.subr.bf16.mxu0 0
      %908 = vmatpush1.bf16.msra.mxu0 0
      %909 = vmatprep.subr.bf16.mxu0 0
      %910 = vmatpush1.bf16.msra.mxu0 0
      %911 = vmatprep.subr.bf16.mxu0 0
      %912 = vmatpush1.bf16.msra.mxu0 0
      %913 = vmatprep.subr.bf16.mxu0 0
      %914 = vmatpush1.bf16.msra.mxu0 0
      %915 = vmatprep.subr.bf16.mxu0 0
      %916 = vmatpush1.bf16.msra.mxu0 0
      %917 = vmatprep.subr.bf16.mxu0 0
      %918 = vmatpush1.bf16.msra.mxu0 0
      %919 = vmatprep.subr.bf16.mxu0 0
      %920 = vmatpush1.bf16.msra.mxu0 %v903
      %921 = vmatprep.subr.bf16.mxu0 0
      %922 = vmatpush2.bf16.msra.mxu0 0
      %923 = vmatprep.subr.bf16.mxu0 0
      %924 = vmatpush2.bf16.msra.mxu0 0
      %925 = vmatprep.subr.bf16.mxu0 0
      %926 = vmatpush2.bf16.msra.mxu0 0
      %927 = vmatprep.subr.bf16.mxu0 0
      %928 = vmatpush2.bf16.msra.mxu0 0
      %929 = vmatprep.subr.bf16.mxu0 0
      %930 = vmatpush2.bf16.msra.mxu0 0
      %931 = vmatprep.subr.bf16.mxu0 0
      %932 = vmatpush2.bf16.msra.mxu0 0
      %933 = vmatprep.subr.bf16.mxu0 0
      %934 = vmatpush2.bf16.msra.mxu0 0
      %935 = vmatprep.subr.bf16.mxu0 0
      %936 = vmatpush2.bf16.msra.mxu0 0
      %937 = vmatprep.mubr.bf16.mxu0 0
      %938 = vmatmul.mubr.bf16.gmra.mxu0 %v900
      %v939 = vpop.f32.mrf.mxu0
      %v940 = vadd.f32 0.0, %v939
      %v941 = vpop.f32.mrf.mxu0
      %v942 = vpop.f32.mrf.mxu0
      %v943 = vpop.f32.mrf.mxu0
      %944 = vdwg.mxu0
      %945 = vrot.lane.b32.xlu0 %v557, 64
      %v946 = vpop.permute.xlu0 %945
      %v948 = vsel %vm561, %v799, 0
      %v951 = vsel %vm805, %v946, 0
      %953 = vmatprep.subr.bf16.mxu0 0
      %954 = vmatpush1.bf16.msra.mxu0 0
      %955 = vmatprep.subr.bf16.mxu0 0
      %956 = vmatpush1.bf16.msra.mxu0 0
      %957 = vmatprep.subr.bf16.mxu0 0
      %958 = vmatpush1.bf16.msra.mxu0 0
      %959 = vmatprep.subr.bf16.mxu0 0
      %960 = vmatpush1.bf16.msra.mxu0 0
      %961 = vmatprep.subr.bf16.mxu0 0
      %962 = vmatpush1.bf16.msra.mxu0 0
      %963 = vmatprep.subr.bf16.mxu0 0
      %964 = vmatpush1.bf16.msra.mxu0 0
      %965 = vmatprep.subr.bf16.mxu0 0
      %966 = vmatpush1.bf16.msra.mxu0 0
      %967 = vmatprep.subr.bf16.mxu0 0
      %968 = vmatpush1.bf16.msra.mxu0 %v951
      %969 = vmatprep.subr.bf16.mxu0 0
      %970 = vmatpush2.bf16.msra.mxu0 0
      %971 = vmatprep.subr.bf16.mxu0 0
      %972 = vmatpush2.bf16.msra.mxu0 0
      %973 = vmatprep.subr.bf16.mxu0 0
      %974 = vmatpush2.bf16.msra.mxu0 0
      %975 = vmatprep.subr.bf16.mxu0 0
      %976 = vmatpush2.bf16.msra.mxu0 0
      %977 = vmatprep.subr.bf16.mxu0 0
      %978 = vmatpush2.bf16.msra.mxu0 0
      %979 = vmatprep.subr.bf16.mxu0 0
      %980 = vmatpush2.bf16.msra.mxu0 0
      %981 = vmatprep.subr.bf16.mxu0 0
      %982 = vmatpush2.bf16.msra.mxu0 0
      %983 = vmatprep.subr.bf16.mxu0 0
      %984 = vmatpush2.bf16.msra.mxu0 0
      %985 = vmatprep.mubr.bf16.mxu0 0
      %986 = vmatmul.mubr.bf16.gmra.mxu0 %v948
      %v987 = vpop.f32.mrf.mxu0
      %v988 = vadd.f32 0.0, %v987
      %v989 = vpop.f32.mrf.mxu0
      %v990 = vpop.f32.mrf.mxu0
      %v991 = vpop.f32.mrf.mxu0
      %992 = vdwg.mxu0
      %v993 = vpack.c.bf16 %v844, %v844
      %v994 = vpack.c.bf16 %v892, %v892
      %v995 = vpack.c.bf16 %v940, %v940
      %v996 = vpack.c.bf16 %v988, %v988
      %v997 = vld [vmem:[%s4] sm:$0xf]
      %v998 = vld [vmem:[%s4 + $0x4] sm:$0xf]
      %v999 = vld [vmem:[%s4 + $0x8] sm:$0xf]
      %v1000 = vld [vmem:[%s4 + $0xc] sm:$0xf]
      %v1002 = vsel %vm561, %v993, 0
      %v1005 = vsel %vm805, %v997, 0
      %1007 = vmatprep.subr.bf16.mxu0 0
      %1008 = vmatpush1.bf16.msra.mxu0 0
      %1009 = vmatprep.subr.bf16.mxu0 0
      %1010 = vmatpush1.bf16.msra.mxu0 0
      %1011 = vmatprep.subr.bf16.mxu0 0
      %1012 = vmatpush1.bf16.msra.mxu0 0
      %1013 = vmatprep.subr.bf16.mxu0 0
      %1014 = vmatpush1.bf16.msra.mxu0 0
      %1015 = vmatprep.subr.bf16.mxu0 0
      %1016 = vmatpush1.bf16.msra.mxu0 0
      %1017 = vmatprep.subr.bf16.mxu0 0
      %1018 = vmatpush1.bf16.msra.mxu0 0
      %1019 = vmatprep.subr.bf16.mxu0 0
      %1020 = vmatpush1.bf16.msra.mxu0 0
      %1021 = vmatprep.subr.bf16.mxu0 0
      %1022 = vmatpush1.bf16.msra.mxu0 %v1005
      %1023 = vmatprep.subr.bf16.mxu0 0
      %1024 = vmatpush2.bf16.msra.mxu0 0
      %1025 = vmatprep.subr.bf16.mxu0 0
      %1026 = vmatpush2.bf16.msra.mxu0 0
      %1027 = vmatprep.subr.bf16.mxu0 0
      %1028 = vmatpush2.bf16.msra.mxu0 0
      %1029 = vmatprep.subr.bf16.mxu0 0
      %1030 = vmatpush2.bf16.msra.mxu0 0
      %1031 = vmatprep.subr.bf16.mxu0 0
      %1032 = vmatpush2.bf16.msra.mxu0 0
      %1033 = vmatprep.subr.bf16.mxu0 0
      %1034 = vmatpush2.bf16.msra.mxu0 0
      %1035 = vmatprep.subr.bf16.mxu0 0
      %1036 = vmatpush2.bf16.msra.mxu0 0
      %1037 = vmatprep.subr.bf16.mxu0 0
      %1038 = vmatpush2.bf16.msra.mxu0 0
      %1039 = vmatprep.mubr.bf16.mxu0 0
      %1040 = vmatmul.mubr.bf16.gmra.mxu0 %v1002
      %v1041 = vpop.f32.mrf.mxu0
      %v1042 = vadd.f32 0.0, %v1041
      %v1043 = vpop.f32.mrf.mxu0
      %v1044 = vpop.f32.mrf.mxu0
      %v1045 = vpop.f32.mrf.mxu0
      %1046 = vdwg.mxu0
      %v1048 = vsel %vm561, %v994, 0
      %v1051 = vsel %vm805, %v998, 0
      %1053 = vmatprep.subr.bf16.mxu0 0
      %1054 = vmatpush1.bf16.msra.mxu0 0
      %1055 = vmatprep.subr.bf16.mxu0 0
      %1056 = vmatpush1.bf16.msra.mxu0 0
      %1057 = vmatprep.subr.bf16.mxu0 0
      %1058 = vmatpush1.bf16.msra.mxu0 0
      %1059 = vmatprep.subr.bf16.mxu0 0
      %1060 = vmatpush1.bf16.msra.mxu0 0
      %1061 = vmatprep.subr.bf16.mxu0 0
      %1062 = vmatpush1.bf16.msra.mxu0 0
      %1063 = vmatprep.subr.bf16.mxu0 0
      %1064 = vmatpush1.bf16.msra.mxu0 0
      %1065 = vmatprep.subr.bf16.mxu0 0
      %1066 = vmatpush1.bf16.msra.mxu0 0
      %1067 = vmatprep.subr.bf16.mxu0 0
      %1068 = vmatpush1.bf16.msra.mxu0 %v1051
      %1069 = vmatprep.subr.bf16.mxu0 0
      %1070 = vmatpush2.bf16.msra.mxu0 0
      %1071 = vmatprep.subr.bf16.mxu0 0
      %1072 = vmatpush2.bf16.msra.mxu0 0
      %1073 = vmatprep.subr.bf16.mxu0 0
      %1074 = vmatpush2.bf16.msra.mxu0 0
      %1075 = vmatprep.subr.bf16.mxu0 0
      %1076 = vmatpush2.bf16.msra.mxu0 0
      %1077 = vmatprep.subr.bf16.mxu0 0
      %1078 = vmatpush2.bf16.msra.mxu0 0
      %1079 = vmatprep.subr.bf16.mxu0 0
      %1080 = vmatpush2.bf16.msra.mxu0 0
      %1081 = vmatprep.subr.bf16.mxu0 0
      %1082 = vmatpush2.bf16.msra.mxu0 0
      %1083 = vmatprep.subr.bf16.mxu0 0
      %1084 = vmatpush2.bf16.msra.mxu0 0
      %1085 = vmatprep.mubr.bf16.mxu0 0
      %1086 = vmatmul.mubr.bf16.gmra.mxu0 %v1048
      %v1087 = vpop.f32.mrf.mxu0
      %v1088 = vadd.f32 0.0, %v1087
      %v1089 = vpop.f32.mrf.mxu0
      %v1090 = vpop.f32.mrf.mxu0
      %v1091 = vpop.f32.mrf.mxu0
      %1092 = vdwg.mxu0
      %v1094 = vsel %vm561, %v995, 0
      %v1097 = vsel %vm805, %v999, 0
      %1099 = vmatprep.subr.bf16.mxu0 0
      %1100 = vmatpush1.bf16.msra.mxu0 0
      %1101 = vmatprep.subr.bf16.mxu0 0
      %1102 = vmatpush1.bf16.msra.mxu0 0
      %1103 = vmatprep.subr.bf16.mxu0 0
      %1104 = vmatpush1.bf16.msra.mxu0 0
      %1105 = vmatprep.subr.bf16.mxu0 0
      %1106 = vmatpush1.bf16.msra.mxu0 0
      %1107 = vmatprep.subr.bf16.mxu0 0
      %1108 = vmatpush1.bf16.msra.mxu0 0
      %1109 = vmatprep.subr.bf16.mxu0 0
      %1110 = vmatpush1.bf16.msra.mxu0 0
      %1111 = vmatprep.subr.bf16.mxu0 0
      %1112 = vmatpush1.bf16.msra.mxu0 0
      %1113 = vmatprep.subr.bf16.mxu0 0
      %1114 = vmatpush1.bf16.msra.mxu0 %v1097
      %1115 = vmatprep.subr.bf16.mxu0 0
      %1116 = vmatpush2.bf16.msra.mxu0 0
      %1117 = vmatprep.subr.bf16.mxu0 0
      %1118 = vmatpush2.bf16.msra.mxu0 0
      %1119 = vmatprep.subr.bf16.mxu0 0
      %1120 = vmatpush2.bf16.msra.mxu0 0
      %1121 = vmatprep.subr.bf16.mxu0 0
      %1122 = vmatpush2.bf16.msra.mxu0 0
      %1123 = vmatprep.subr.bf16.mxu0 0
      %1124 = vmatpush2.bf16.msra.mxu0 0
      %1125 = vmatprep.subr.bf16.mxu0 0
      %1126 = vmatpush2.bf16.msra.mxu0 0
      %1127 = vmatprep.subr.bf16.mxu0 0
      %1128 = vmatpush2.bf16.msra.mxu0 0
      %1129 = vmatprep.subr.bf16.mxu0 0
      %1130 = vmatpush2.bf16.msra.mxu0 0
      %1131 = vmatprep.mubr.bf16.mxu0 0
      %1132 = vmatmul.mubr.bf16.gmra.mxu0 %v1094
      %v1133 = vpop.f32.mrf.mxu0
      %v1134 = vadd.f32 0.0, %v1133
      %v1135 = vpop.f32.mrf.mxu0
      %v1136 = vpop.f32.mrf.mxu0
      %v1137 = vpop.f32.mrf.mxu0
      %1138 = vdwg.mxu0
      %v1140 = vsel %vm561, %v996, 0
      %v1143 = vsel %vm805, %v1000, 0
      %1145 = vmatprep.subr.bf16.mxu0 0
      %1146 = vmatpush1.bf16.msra.mxu0 0
      %1147 = vmatprep.subr.bf16.mxu0 0
      %1148 = vmatpush1.bf16.msra.mxu0 0
      %1149 = vmatprep.subr.bf16.mxu0 0
      %1150 = vmatpush1.bf16.msra.mxu0 0
      %1151 = vmatprep.subr.bf16.mxu0 0
      %1152 = vmatpush1.bf16.msra.mxu0 0
      %1153 = vmatprep.subr.bf16.mxu0 0
      %1154 = vmatpush1.bf16.msra.mxu0 0
      %1155 = vmatprep.subr.bf16.mxu0 0
      %1156 = vmatpush1.bf16.msra.mxu0 0
      %1157 = vmatprep.subr.bf16.mxu0 0
      %1158 = vmatpush1.bf16.msra.mxu0 0
      %1159 = vmatprep.subr.bf16.mxu0 0
      %1160 = vmatpush1.bf16.msra.mxu0 %v1143
      %1161 = vmatprep.subr.bf16.mxu0 0
      %1162 = vmatpush2.bf16.msra.mxu0 0
      %1163 = vmatprep.subr.bf16.mxu0 0
      %1164 = vmatpush2.bf16.msra.mxu0 0
      %1165 = vmatprep.subr.bf16.mxu0 0
      %1166 = vmatpush2.bf16.msra.mxu0 0
      %1167 = vmatprep.subr.bf16.mxu0 0
      %1168 = vmatpush2.bf16.msra.mxu0 0
      %1169 = vmatprep.subr.bf16.mxu0 0
      %1170 = vmatpush2.bf16.msra.mxu0 0
      %1171 = vmatprep.subr.bf16.mxu0 0
      %1172 = vmatpush2.bf16.msra.mxu0 0
      %1173 = vmatprep.subr.bf16.mxu0 0
      %1174 = vmatpush2.bf16.msra.mxu0 0
      %1175 = vmatprep.subr.bf16.mxu0 0
      %1176 = vmatpush2.bf16.msra.mxu0 0
      %1177 = vmatprep.mubr.bf16.mxu0 0
      %1178 = vmatmul.mubr.bf16.gmra.mxu0 %v1140
      %v1179 = vpop.f32.mrf.mxu0
      %v1180 = vadd.f32 0.0, %v1179
      %v1181 = vpop.f32.mrf.mxu0
      %v1182 = vpop.f32.mrf.mxu0
      %v1183 = vpop.f32.mrf.mxu0
      %1184 = vdwg.mxu0
      %v1185 = vsel %vm506, %v1042, 0.0
      %v1186 = vsel %vm506, %v1088, 0.0
      %v1187 = vadd.f32 %v1185, %v1186
      %v1188 = vsel %vm506, %v1134, 0.0
      %v1189 = vadd.f32 %v1187, %v1188
      %v1190 = vsel %vm506, %v1180, 0.0
      %v1191 = vadd.f32 %v1189, %v1190
      %v1192 = vadd.f32 %v481, %v1191
      %v1193 = vld [vmem:[%s5] sm:$0x1]
      %v1195 = vlaneseq
      %v1196 = vshrl.u32 %v1195, 7
      %v1197 = vsub.s32 0, %v1196
      %v1198 = vrot.slane %v1193, %v1197
      %v1200 = vadd.f32 %v1192, %v1198
      %v1201 = vpack.c.bf16 %v1200, %v1200
      %v1202 = vld [vmem:[%s6] sm:$0xff]
      %v1203 = vld [vmem:[%s6 + $0x8] sm:$0xff]
      %v1204 = vld [vmem:[%s6 + $0x10] sm:$0xff]
      %v1205 = vld [vmem:[%s6 + $0x18] sm:$0xff]
      %v1206 = vld [vmem:[%s6 + $0x20] sm:$0xff]
      %v1207 = vld [vmem:[%s6 + $0x28] sm:$0xff]
      %v1208 = vld [vmem:[%s6 + $0x30] sm:$0xff]
      %v1209 = vld [vmem:[%s6 + $0x38] sm:$0xff]
      %v1210 = vld [vmem:[%s6 + $0x40] sm:$0xff]
      %v1211 = vld [vmem:[%s6 + $0x48] sm:$0xff]
      %v1212 = vld [vmem:[%s6 + $0x50] sm:$0xff]
      %v1213 = vld [vmem:[%s6 + $0x58] sm:$0xff]
      %v1214 = vld [vmem:[%s6 + $0x60] sm:$0xff]
      %v1215 = vld [vmem:[%s6 + $0x68] sm:$0xff]
      %v1216 = vld [vmem:[%s6 + $0x70] sm:$0xff]
      %v1217 = vld [vmem:[%s6 + $0x78] sm:$0xff]
      %v1218 = vld [vmem:[%s6 + $0x80] sm:$0xff]
      %v1219 = vld [vmem:[%s6 + $0x88] sm:$0xff]
      %v1220 = vld [vmem:[%s6 + $0x90] sm:$0xff]
      %v1221 = vld [vmem:[%s6 + $0x98] sm:$0xff]
      %v1222 = vld [vmem:[%s6 + $0xa0] sm:$0xff]
      %v1223 = vld [vmem:[%s6 + $0xa8] sm:$0xff]
      %v1224 = vld [vmem:[%s6 + $0xb0] sm:$0xff]
      %v1225 = vld [vmem:[%s6 + $0xb8] sm:$0xff]
      %v1226 = vld [vmem:[%s6 + $0xc0] sm:$0xff]
      %v1227 = vld [vmem:[%s6 + $0xc8] sm:$0xff]
      %v1228 = vld [vmem:[%s6 + $0xd0] sm:$0xff]
      %v1229 = vld [vmem:[%s6 + $0xd8] sm:$0xff]
      %v1230 = vld [vmem:[%s6 + $0xe0] sm:$0xff]
      %v1231 = vld [vmem:[%s6 + $0xe8] sm:$0xff]
      %v1232 = vld [vmem:[%s6 + $0xf0] sm:$0xff]
      %v1233 = vld [vmem:[%s6 + $0xf8] sm:$0xff]
      %v1234 = vld [vmem:[%s7] sm:$0xff]
      %v1235 = vld [vmem:[%s7 + $0x8] sm:$0xff]
      %v1238 = vlaneseq
      %v1239 = vshrl.u32 %v1238, 7
      %v1240 = vsub.s32 0, %v1239
      %v1241 = vrot.slane %v1234, %v1240
      %v1242 = vlaneseq
      %v1243 = vshrl.u32 %v1242, 7
      %v1244 = vsub.s32 1, %v1243
      %v1245 = vrot.slane %v1234, %v1244
      %v1246 = vlaneseq
      %v1247 = vshrl.u32 %v1246, 7
      %v1248 = vsub.s32 2, %v1247
      %v1249 = vrot.slane %v1234, %v1248
      %v1250 = vlaneseq
      %v1251 = vshrl.u32 %v1250, 7
      %v1252 = vsub.s32 3, %v1251
      %v1253 = vrot.slane %v1234, %v1252
      %v1254 = vlaneseq
      %v1255 = vshrl.u32 %v1254, 7
      %v1256 = vsub.s32 4, %v1255
      %v1257 = vrot.slane %v1234, %v1256
      %v1258 = vlaneseq
      %v1259 = vshrl.u32 %v1258, 7
      %v1260 = vsub.s32 5, %v1259
      %v1261 = vrot.slane %v1234, %v1260
      %v1262 = vlaneseq
      %v1263 = vshrl.u32 %v1262, 7
      %v1264 = vsub.s32 6, %v1263
      %v1265 = vrot.slane %v1234, %v1264
      %v1266 = vlaneseq
      %v1267 = vshrl.u32 %v1266, 7
      %v1268 = vsub.s32 7, %v1267
      %v1269 = vrot.slane %v1234, %v1268
      %v1270 = vlaneseq
      %v1271 = vshrl.u32 %v1270, 7
      %v1272 = vsub.s32 0, %v1271
      %v1273 = vrot.slane %v1235, %v1272
      %v1274 = vlaneseq
      %v1275 = vshrl.u32 %v1274, 7
      %v1276 = vsub.s32 1, %v1275
      %v1277 = vrot.slane %v1235, %v1276
      %v1278 = vlaneseq
      %v1279 = vshrl.u32 %v1278, 7
      %v1280 = vsub.s32 2, %v1279
      %v1281 = vrot.slane %v1235, %v1280
      %v1282 = vlaneseq
      %v1283 = vshrl.u32 %v1282, 7
      %v1284 = vsub.s32 3, %v1283
      %v1285 = vrot.slane %v1235, %v1284
      %v1286 = vlaneseq
      %v1287 = vshrl.u32 %v1286, 7
      %v1288 = vsub.s32 4, %v1287
      %v1289 = vrot.slane %v1235, %v1288
      %v1290 = vlaneseq
      %v1291 = vshrl.u32 %v1290, 7
      %v1292 = vsub.s32 5, %v1291
      %v1293 = vrot.slane %v1235, %v1292
      %v1294 = vlaneseq
      %v1295 = vshrl.u32 %v1294, 7
      %v1296 = vsub.s32 6, %v1295
      %v1297 = vrot.slane %v1235, %v1296
      %v1298 = vlaneseq
      %v1299 = vshrl.u32 %v1298, 7
      %v1300 = vsub.s32 7, %v1299
      %v1301 = vrot.slane %v1235, %v1300
      %v1350 = vunpack.c.l.b16 %v1202
      %v1351 = vunpack.c.h.b16 %v1202
      %v1352 = vunpack.c.l.b16 %v1203
      %v1353 = vunpack.c.h.b16 %v1203
      %v1354 = vunpack.c.l.b16 %v1204
      %v1355 = vunpack.c.h.b16 %v1204
      %v1356 = vunpack.c.l.b16 %v1205
      %v1357 = vunpack.c.h.b16 %v1205
      %v1358 = vunpack.c.l.b16 %v1206
      %v1359 = vunpack.c.h.b16 %v1206
      %v1360 = vunpack.c.l.b16 %v1207
      %v1361 = vunpack.c.h.b16 %v1207
      %v1362 = vunpack.c.l.b16 %v1208
      %v1363 = vunpack.c.h.b16 %v1208
      %v1364 = vunpack.c.l.b16 %v1209
      %v1365 = vunpack.c.h.b16 %v1209
      %v1366 = vunpack.c.l.b16 %v1210
      %v1367 = vunpack.c.h.b16 %v1210
      %v1368 = vunpack.c.l.b16 %v1211
      %v1369 = vunpack.c.h.b16 %v1211
      %v1370 = vunpack.c.l.b16 %v1212
      %v1371 = vunpack.c.h.b16 %v1212
      %v1372 = vunpack.c.l.b16 %v1213
      %v1373 = vunpack.c.h.b16 %v1213
      %v1374 = vunpack.c.l.b16 %v1214
      %v1375 = vunpack.c.h.b16 %v1214
      %v1376 = vunpack.c.l.b16 %v1215
      %v1377 = vunpack.c.h.b16 %v1215
      %v1378 = vunpack.c.l.b16 %v1216
      %v1379 = vunpack.c.h.b16 %v1216
      %v1380 = vunpack.c.l.b16 %v1217
      %v1381 = vunpack.c.h.b16 %v1217
      %v1382 = vunpack.c.l.b16 %v1218
      %v1383 = vunpack.c.h.b16 %v1218
      %v1384 = vunpack.c.l.b16 %v1219
      %v1385 = vunpack.c.h.b16 %v1219
      %v1386 = vunpack.c.l.b16 %v1220
      %v1387 = vunpack.c.h.b16 %v1220
      %v1388 = vunpack.c.l.b16 %v1221
      %v1389 = vunpack.c.h.b16 %v1221
      %v1390 = vunpack.c.l.b16 %v1222
      %v1391 = vunpack.c.h.b16 %v1222
      %v1392 = vunpack.c.l.b16 %v1223
      %v1393 = vunpack.c.h.b16 %v1223
      %v1394 = vunpack.c.l.b16 %v1224
      %v1395 = vunpack.c.h.b16 %v1224
      %v1396 = vunpack.c.l.b16 %v1225
      %v1397 = vunpack.c.h.b16 %v1225
      %v1398 = vunpack.c.l.b16 %v1226
      %v1399 = vunpack.c.h.b16 %v1226
      %v1400 = vunpack.c.l.b16 %v1227
      %v1401 = vunpack.c.h.b16 %v1227
      %v1402 = vunpack.c.l.b16 %v1228
      %v1403 = vunpack.c.h.b16 %v1228
      %v1404 = vunpack.c.l.b16 %v1229
      %v1405 = vunpack.c.h.b16 %v1229
      %v1406 = vunpack.c.l.b16 %v1230
      %v1407 = vunpack.c.h.b16 %v1230
      %v1408 = vunpack.c.l.b16 %v1231
      %v1409 = vunpack.c.h.b16 %v1231
      %v1410 = vunpack.c.l.b16 %v1232
      %v1411 = vunpack.c.h.b16 %v1232
      %v1412 = vunpack.c.l.b16 %v1233
      %v1413 = vunpack.c.h.b16 %v1233
      %v1414 = vpack.c.b16 %v1366, %v1350
      %v1415 = vpack.c.b16 %v1367, %v1351
      %v1416 = vpack.c.b16 %v1368, %v1352
      %v1417 = vpack.c.b16 %v1369, %v1353
      %v1418 = vpack.c.b16 %v1370, %v1354
      %v1419 = vpack.c.b16 %v1371, %v1355
      %v1420 = vpack.c.b16 %v1372, %v1356
      %v1421 = vpack.c.b16 %v1373, %v1357
      %v1422 = vpack.c.b16 %v1374, %v1358
      %v1423 = vpack.c.b16 %v1375, %v1359
      %v1424 = vpack.c.b16 %v1376, %v1360
      %v1425 = vpack.c.b16 %v1377, %v1361
      %v1426 = vpack.c.b16 %v1378, %v1362
      %v1427 = vpack.c.b16 %v1379, %v1363
      %v1428 = vpack.c.b16 %v1380, %v1364
      %v1429 = vpack.c.b16 %v1381, %v1365
      %v1430 = vpack.c.b16 %v1398, %v1382
      %v1431 = vpack.c.b16 %v1399, %v1383
      %v1432 = vpack.c.b16 %v1400, %v1384
      %v1433 = vpack.c.b16 %v1401, %v1385
      %v1434 = vpack.c.b16 %v1402, %v1386
      %v1435 = vpack.c.b16 %v1403, %v1387
      %v1436 = vpack.c.b16 %v1404, %v1388
      %v1437 = vpack.c.b16 %v1405, %v1389
      %v1438 = vpack.c.b16 %v1406, %v1390
      %v1439 = vpack.c.b16 %v1407, %v1391
      %v1440 = vpack.c.b16 %v1408, %v1392
      %v1441 = vpack.c.b16 %v1409, %v1393
      %v1442 = vpack.c.b16 %v1410, %v1394
      %v1443 = vpack.c.b16 %v1411, %v1395
      %v1444 = vpack.c.b16 %v1412, %v1396
      %v1445 = vpack.c.b16 %v1413, %v1397
      %v1479 = vsel %vm506, %v1201, 0
      %1481 = vmatprep.subr.bf16.mxu0 0
      %1482 = vmatpush1.bf16.msra.mxu0 0
      %1483 = vmatprep.subr.bf16.mxu0 0
      %1484 = vmatpush1.bf16.msra.mxu0 0
      %1485 = vmatprep.subr.bf16.mxu0 0
      %1486 = vmatpush1.bf16.msra.mxu0 0
      %1487 = vmatprep.subr.bf16.mxu0 0
      %1488 = vmatpush1.bf16.msra.mxu0 0
      %1489 = vmatprep.subr.bf16.mxu0 0
      %1490 = vmatpush1.bf16.msra.mxu0 0
      %1491 = vmatprep.subr.bf16.mxu0 0
      %1492 = vmatpush1.bf16.msra.mxu0 0
      %1493 = vmatprep.subr.bf16.mxu0 %v1431
      %1494 = vmatpush1.bf16.msra.mxu0 %v1430
      %1495 = vmatprep.subr.bf16.mxu0 %v1415
      %1496 = vmatpush1.bf16.msra.mxu0 %v1414
      %1497 = vmatprep.subr.bf16.mxu0 0
      %1498 = vmatpush2.bf16.msra.mxu0 0
      %1499 = vmatprep.subr.bf16.mxu0 0
      %1500 = vmatpush2.bf16.msra.mxu0 0
      %1501 = vmatprep.subr.bf16.mxu0 0
      %1502 = vmatpush2.bf16.msra.mxu0 0
      %1503 = vmatprep.subr.bf16.mxu0 0
      %1504 = vmatpush2.bf16.msra.mxu0 0
      %1505 = vmatprep.subr.bf16.mxu0 0
      %1506 = vmatpush2.bf16.msra.mxu0 0
      %1507 = vmatprep.subr.bf16.mxu0 0
      %1508 = vmatpush2.bf16.msra.mxu0 0
      %1509 = vmatprep.subr.bf16.mxu0 0
      %1510 = vmatpush2.bf16.msra.mxu0 0
      %1511 = vmatprep.subr.bf16.mxu0 0
      %1512 = vmatpush2.bf16.msra.mxu0 0
      %1513 = vmatprep.mubr.bf16.mxu0 0
      %1514 = vmatmul.mubr.bf16.gmra.mxu0 %v1479
      %v1515 = vpop.f32.mrf.mxu0
      %v1516 = vadd.f32 %v1241, %v1515
      %v1517 = vpop.f32.mrf.mxu0
      %v1518 = vadd.f32 %v1245, %v1517
      %v1519 = vpop.f32.mrf.mxu0
      %v1520 = vpop.f32.mrf.mxu0
      %1521 = vdwg.mxu0
      %1522 = vmatprep.subr.bf16.mxu0 0
      %1523 = vmatpush1.bf16.msra.mxu0 0
      %1524 = vmatprep.subr.bf16.mxu0 0
      %1525 = vmatpush1.bf16.msra.mxu0 0
      %1526 = vmatprep.subr.bf16.mxu0 0
      %1527 = vmatpush1.bf16.msra.mxu0 0
      %1528 = vmatprep.subr.bf16.mxu0 0
      %1529 = vmatpush1.bf16.msra.mxu0 0
      %1530 = vmatprep.subr.bf16.mxu0 0
      %1531 = vmatpush1.bf16.msra.mxu0 0
      %1532 = vmatprep.subr.bf16.mxu0 0
      %1533 = vmatpush1.bf16.msra.mxu0 0
      %1534 = vmatprep.subr.bf16.mxu0 %v1433
      %1535 = vmatpush1.bf16.msra.mxu0 %v1432
      %1536 = vmatprep.subr.bf16.mxu0 %v1417
      %1537 = vmatpush1.bf16.msra.mxu0 %v1416
      %1538 = vmatprep.subr.bf16.mxu0 0
      %1539 = vmatpush2.bf16.msra.mxu0 0
      %1540 = vmatprep.subr.bf16.mxu0 0
      %1541 = vmatpush2.bf16.msra.mxu0 0
      %1542 = vmatprep.subr.bf16.mxu0 0
      %1543 = vmatpush2.bf16.msra.mxu0 0
      %1544 = vmatprep.subr.bf16.mxu0 0
      %1545 = vmatpush2.bf16.msra.mxu0 0
      %1546 = vmatprep.subr.bf16.mxu0 0
      %1547 = vmatpush2.bf16.msra.mxu0 0
      %1548 = vmatprep.subr.bf16.mxu0 0
      %1549 = vmatpush2.bf16.msra.mxu0 0
      %1550 = vmatprep.subr.bf16.mxu0 0
      %1551 = vmatpush2.bf16.msra.mxu0 0
      %1552 = vmatprep.subr.bf16.mxu0 0
      %1553 = vmatpush2.bf16.msra.mxu0 0
      %1554 = vmatprep.mubr.bf16.mxu0 0
      %1555 = vmatmul.mubr.bf16.gmra.mxu0 %v1479
      %v1556 = vpop.f32.mrf.mxu0
      %v1557 = vadd.f32 %v1249, %v1556
      %v1558 = vpop.f32.mrf.mxu0
      %v1559 = vadd.f32 %v1253, %v1558
      %v1560 = vpop.f32.mrf.mxu0
      %v1561 = vpop.f32.mrf.mxu0
      %1562 = vdwg.mxu0
      %1563 = vmatprep.subr.bf16.mxu0 0
      %1564 = vmatpush1.bf16.msra.mxu0 0
      %1565 = vmatprep.subr.bf16.mxu0 0
      %1566 = vmatpush1.bf16.msra.mxu0 0
      %1567 = vmatprep.subr.bf16.mxu0 0
      %1568 = vmatpush1.bf16.msra.mxu0 0
      %1569 = vmatprep.subr.bf16.mxu0 0
      %1570 = vmatpush1.bf16.msra.mxu0 0
      %1571 = vmatprep.subr.bf16.mxu0 0
      %1572 = vmatpush1.bf16.msra.mxu0 0
      %1573 = vmatprep.subr.bf16.mxu0 0
      %1574 = vmatpush1.bf16.msra.mxu0 0
      %1575 = vmatprep.subr.bf16.mxu0 %v1435
      %1576 = vmatpush1.bf16.msra.mxu0 %v1434
      %1577 = vmatprep.subr.bf16.mxu0 %v1419
      %1578 = vmatpush1.bf16.msra.mxu0 %v1418
      %1579 = vmatprep.subr.bf16.mxu0 0
      %1580 = vmatpush2.bf16.msra.mxu0 0
      %1581 = vmatprep.subr.bf16.mxu0 0
      %1582 = vmatpush2.bf16.msra.mxu0 0
      %1583 = vmatprep.subr.bf16.mxu0 0
      %1584 = vmatpush2.bf16.msra.mxu0 0
      %1585 = vmatprep.subr.bf16.mxu0 0
      %1586 = vmatpush2.bf16.msra.mxu0 0
      %1587 = vmatprep.subr.bf16.mxu0 0
      %1588 = vmatpush2.bf16.msra.mxu0 0
      %1589 = vmatprep.subr.bf16.mxu0 0
      %1590 = vmatpush2.bf16.msra.mxu0 0
      %1591 = vmatprep.subr.bf16.mxu0 0
      %1592 = vmatpush2.bf16.msra.mxu0 0
      %1593 = vmatprep.subr.bf16.mxu0 0
      %1594 = vmatpush2.bf16.msra.mxu0 0
      %1595 = vmatprep.mubr.bf16.mxu0 0
      %1596 = vmatmul.mubr.bf16.gmra.mxu0 %v1479
      %v1597 = vpop.f32.mrf.mxu0
      %v1598 = vadd.f32 %v1257, %v1597
      %v1599 = vpop.f32.mrf.mxu0
      %v1600 = vadd.f32 %v1261, %v1599
      %v1601 = vpop.f32.mrf.mxu0
      %v1602 = vpop.f32.mrf.mxu0
      %1603 = vdwg.mxu0
      %1604 = vmatprep.subr.bf16.mxu0 0
      %1605 = vmatpush1.bf16.msra.mxu0 0
      %1606 = vmatprep.subr.bf16.mxu0 0
      %1607 = vmatpush1.bf16.msra.mxu0 0
      %1608 = vmatprep.subr.bf16.mxu0 0
      %1609 = vmatpush1.bf16.msra.mxu0 0
      %1610 = vmatprep.subr.bf16.mxu0 0
      %1611 = vmatpush1.bf16.msra.mxu0 0
      %1612 = vmatprep.subr.bf16.mxu0 0
      %1613 = vmatpush1.bf16.msra.mxu0 0
      %1614 = vmatprep.subr.bf16.mxu0 0
      %1615 = vmatpush1.bf16.msra.mxu0 0
      %1616 = vmatprep.subr.bf16.mxu0 %v1437
      %1617 = vmatpush1.bf16.msra.mxu0 %v1436
      %1618 = vmatprep.subr.bf16.mxu0 %v1421
      %1619 = vmatpush1.bf16.msra.mxu0 %v1420
      %1620 = vmatprep.subr.bf16.mxu0 0
      %1621 = vmatpush2.bf16.msra.mxu0 0
      %1622 = vmatprep.subr.bf16.mxu0 0
      %1623 = vmatpush2.bf16.msra.mxu0 0
      %1624 = vmatprep.subr.bf16.mxu0 0
      %1625 = vmatpush2.bf16.msra.mxu0 0
      %1626 = vmatprep.subr.bf16.mxu0 0
      %1627 = vmatpush2.bf16.msra.mxu0 0
      %1628 = vmatprep.subr.bf16.mxu0 0
      %1629 = vmatpush2.bf16.msra.mxu0 0
      %1630 = vmatprep.subr.bf16.mxu0 0
      %1631 = vmatpush2.bf16.msra.mxu0 0
      %1632 = vmatprep.subr.bf16.mxu0 0
      %1633 = vmatpush2.bf16.msra.mxu0 0
      %1634 = vmatprep.subr.bf16.mxu0 0
      %1635 = vmatpush2.bf16.msra.mxu0 0
      %1636 = vmatprep.mubr.bf16.mxu0 0
      %1637 = vmatmul.mubr.bf16.gmra.mxu0 %v1479
      %v1638 = vpop.f32.mrf.mxu0
      %v1639 = vadd.f32 %v1265, %v1638
      %v1640 = vpop.f32.mrf.mxu0
      %v1641 = vadd.f32 %v1269, %v1640
      %v1642 = vpop.f32.mrf.mxu0
      %v1643 = vpop.f32.mrf.mxu0
      %1644 = vdwg.mxu0
      %1645 = vmatprep.subr.bf16.mxu0 0
      %1646 = vmatpush1.bf16.msra.mxu0 0
      %1647 = vmatprep.subr.bf16.mxu0 0
      %1648 = vmatpush1.bf16.msra.mxu0 0
      %1649 = vmatprep.subr.bf16.mxu0 0
      %1650 = vmatpush1.bf16.msra.mxu0 0
      %1651 = vmatprep.subr.bf16.mxu0 0
      %1652 = vmatpush1.bf16.msra.mxu0 0
      %1653 = vmatprep.subr.bf16.mxu0 0
      %1654 = vmatpush1.bf16.msra.mxu0 0
      %1655 = vmatprep.subr.bf16.mxu0 0
      %1656 = vmatpush1.bf16.msra.mxu0 0
      %1657 = vmatprep.subr.bf16.mxu0 %v1439
      %1658 = vmatpush1.bf16.msra.mxu0 %v1438
      %1659 = vmatprep.subr.bf16.mxu0 %v1423
      %1660 = vmatpush1.bf16.msra.mxu0 %v1422
      %1661 = vmatprep.subr.bf16.mxu0 0
      %1662 = vmatpush2.bf16.msra.mxu0 0
      %1663 = vmatprep.subr.bf16.mxu0 0
      %1664 = vmatpush2.bf16.msra.mxu0 0
      %1665 = vmatprep.subr.bf16.mxu0 0
      %1666 = vmatpush2.bf16.msra.mxu0 0
      %1667 = vmatprep.subr.bf16.mxu0 0
      %1668 = vmatpush2.bf16.msra.mxu0 0
      %1669 = vmatprep.subr.bf16.mxu0 0
      %1670 = vmatpush2.bf16.msra.mxu0 0
      %1671 = vmatprep.subr.bf16.mxu0 0
      %1672 = vmatpush2.bf16.msra.mxu0 0
      %1673 = vmatprep.subr.bf16.mxu0 0
      %1674 = vmatpush2.bf16.msra.mxu0 0
      %1675 = vmatprep.subr.bf16.mxu0 0
      %1676 = vmatpush2.bf16.msra.mxu0 0
      %1677 = vmatprep.mubr.bf16.mxu0 0
      %1678 = vmatmul.mubr.bf16.gmra.mxu0 %v1479
      %v1679 = vpop.f32.mrf.mxu0
      %v1680 = vadd.f32 %v1273, %v1679
      %v1681 = vpop.f32.mrf.mxu0
      %v1682 = vadd.f32 %v1277, %v1681
      %v1683 = vpop.f32.mrf.mxu0
      %v1684 = vpop.f32.mrf.mxu0
      %1685 = vdwg.mxu0
      %1686 = vmatprep.subr.bf16.mxu0 0
      %1687 = vmatpush1.bf16.msra.mxu0 0
      %1688 = vmatprep.subr.bf16.mxu0 0
      %1689 = vmatpush1.bf16.msra.mxu0 0
      %1690 = vmatprep.subr.bf16.mxu0 0
      %1691 = vmatpush1.bf16.msra.mxu0 0
      %1692 = vmatprep.subr.bf16.mxu0 0
      %1693 = vmatpush1.bf16.msra.mxu0 0
      %1694 = vmatprep.subr.bf16.mxu0 0
      %1695 = vmatpush1.bf16.msra.mxu0 0
      %1696 = vmatprep.subr.bf16.mxu0 0
      %1697 = vmatpush1.bf16.msra.mxu0 0
      %1698 = vmatprep.subr.bf16.mxu0 %v1441
      %1699 = vmatpush1.bf16.msra.mxu0 %v1440
      %1700 = vmatprep.subr.bf16.mxu0 %v1425
      %1701 = vmatpush1.bf16.msra.mxu0 %v1424
      %1702 = vmatprep.subr.bf16.mxu0 0
      %1703 = vmatpush2.bf16.msra.mxu0 0
      %1704 = vmatprep.subr.bf16.mxu0 0
      %1705 = vmatpush2.bf16.msra.mxu0 0
      %1706 = vmatprep.subr.bf16.mxu0 0
      %1707 = vmatpush2.bf16.msra.mxu0 0
      %1708 = vmatprep.subr.bf16.mxu0 0
      %1709 = vmatpush2.bf16.msra.mxu0 0
      %1710 = vmatprep.subr.bf16.mxu0 0
      %1711 = vmatpush2.bf16.msra.mxu0 0
      %1712 = vmatprep.subr.bf16.mxu0 0
      %1713 = vmatpush2.bf16.msra.mxu0 0
      %1714 = vmatprep.subr.bf16.mxu0 0
      %1715 = vmatpush2.bf16.msra.mxu0 0
      %1716 = vmatprep.subr.bf16.mxu0 0
      %1717 = vmatpush2.bf16.msra.mxu0 0
      %1718 = vmatprep.mubr.bf16.mxu0 0
      %1719 = vmatmul.mubr.bf16.gmra.mxu0 %v1479
      %v1720 = vpop.f32.mrf.mxu0
      %v1721 = vadd.f32 %v1281, %v1720
      %v1722 = vpop.f32.mrf.mxu0
      %v1723 = vadd.f32 %v1285, %v1722
      %v1724 = vpop.f32.mrf.mxu0
      %v1725 = vpop.f32.mrf.mxu0
      %1726 = vdwg.mxu0
      %1727 = vmatprep.subr.bf16.mxu0 0
      %1728 = vmatpush1.bf16.msra.mxu0 0
      %1729 = vmatprep.subr.bf16.mxu0 0
      %1730 = vmatpush1.bf16.msra.mxu0 0
      %1731 = vmatprep.subr.bf16.mxu0 0
      %1732 = vmatpush1.bf16.msra.mxu0 0
      %1733 = vmatprep.subr.bf16.mxu0 0
      %1734 = vmatpush1.bf16.msra.mxu0 0
      %1735 = vmatprep.subr.bf16.mxu0 0
      %1736 = vmatpush1.bf16.msra.mxu0 0
      %1737 = vmatprep.subr.bf16.mxu0 0
      %1738 = vmatpush1.bf16.msra.mxu0 0
      %1739 = vmatprep.subr.bf16.mxu0 %v1443
      %1740 = vmatpush1.bf16.msra.mxu0 %v1442
      %1741 = vmatprep.subr.bf16.mxu0 %v1427
      %1742 = vmatpush1.bf16.msra.mxu0 %v1426
      %1743 = vmatprep.subr.bf16.mxu0 0
      %1744 = vmatpush2.bf16.msra.mxu0 0
      %1745 = vmatprep.subr.bf16.mxu0 0
      %1746 = vmatpush2.bf16.msra.mxu0 0
      %1747 = vmatprep.subr.bf16.mxu0 0
      %1748 = vmatpush2.bf16.msra.mxu0 0
      %1749 = vmatprep.subr.bf16.mxu0 0
      %1750 = vmatpush2.bf16.msra.mxu0 0
      %1751 = vmatprep.subr.bf16.mxu0 0
      %1752 = vmatpush2.bf16.msra.mxu0 0
      %1753 = vmatprep.subr.bf16.mxu0 0
      %1754 = vmatpush2.bf16.msra.mxu0 0
      %1755 = vmatprep.subr.bf16.mxu0 0
      %1756 = vmatpush2.bf16.msra.mxu0 0
      %1757 = vmatprep.subr.bf16.mxu0 0
      %1758 = vmatpush2.bf16.msra.mxu0 0
      %1759 = vmatprep.mubr.bf16.mxu0 0
      %1760 = vmatmul.mubr.bf16.gmra.mxu0 %v1479
      %v1761 = vpop.f32.mrf.mxu0
      %v1762 = vadd.f32 %v1289, %v1761
      %v1763 = vpop.f32.mrf.mxu0
      %v1764 = vadd.f32 %v1293, %v1763
      %v1765 = vpop.f32.mrf.mxu0
      %v1766 = vpop.f32.mrf.mxu0
      %1767 = vdwg.mxu0
      %1768 = vmatprep.subr.bf16.mxu0 0
      %1769 = vmatpush1.bf16.msra.mxu0 0
      %1770 = vmatprep.subr.bf16.mxu0 0
      %1771 = vmatpush1.bf16.msra.mxu0 0
      %1772 = vmatprep.subr.bf16.mxu0 0
      %1773 = vmatpush1.bf16.msra.mxu0 0
      %1774 = vmatprep.subr.bf16.mxu0 0
      %1775 = vmatpush1.bf16.msra.mxu0 0
      %1776 = vmatprep.subr.bf16.mxu0 0
      %1777 = vmatpush1.bf16.msra.mxu0 0
      %1778 = vmatprep.subr.bf16.mxu0 0
      %1779 = vmatpush1.bf16.msra.mxu0 0
      %1780 = vmatprep.subr.bf16.mxu0 %v1445
      %1781 = vmatpush1.bf16.msra.mxu0 %v1444
      %1782 = vmatprep.subr.bf16.mxu0 %v1429
      %1783 = vmatpush1.bf16.msra.mxu0 %v1428
      %1784 = vmatprep.subr.bf16.mxu0 0
      %1785 = vmatpush2.bf16.msra.mxu0 0
      %1786 = vmatprep.subr.bf16.mxu0 0
      %1787 = vmatpush2.bf16.msra.mxu0 0
      %1788 = vmatprep.subr.bf16.mxu0 0
      %1789 = vmatpush2.bf16.msra.mxu0 0
      %1790 = vmatprep.subr.bf16.mxu0 0
      %1791 = vmatpush2.bf16.msra.mxu0 0
      %1792 = vmatprep.subr.bf16.mxu0 0
      %1793 = vmatpush2.bf16.msra.mxu0 0
      %1794 = vmatprep.subr.bf16.mxu0 0
      %1795 = vmatpush2.bf16.msra.mxu0 0
      %1796 = vmatprep.subr.bf16.mxu0 0
      %1797 = vmatpush2.bf16.msra.mxu0 0
      %1798 = vmatprep.subr.bf16.mxu0 0
      %1799 = vmatpush2.bf16.msra.mxu0 0
      %1800 = vmatprep.mubr.bf16.mxu0 0
      %1801 = vmatmul.mubr.bf16.gmra.mxu0 %v1479
      %v1802 = vpop.f32.mrf.mxu0
      %v1803 = vadd.f32 %v1297, %v1802
      %v1804 = vpop.f32.mrf.mxu0
      %v1805 = vadd.f32 %v1301, %v1804
      %v1806 = vpop.f32.mrf.mxu0
      %v1807 = vpop.f32.mrf.mxu0
      %1808 = vdwg.mxu0
      %v1809 = vmax.f32 %v1516, 0.0
      %v1810 = vmax.f32 %v1518, 0.0
      %v1811 = vmax.f32 %v1557, 0.0
      %v1812 = vmax.f32 %v1559, 0.0
      %v1813 = vmax.f32 %v1598, 0.0
      %v1814 = vmax.f32 %v1600, 0.0
      %v1815 = vmax.f32 %v1639, 0.0
      %v1816 = vmax.f32 %v1641, 0.0
      %v1817 = vmax.f32 %v1680, 0.0
      %v1818 = vmax.f32 %v1682, 0.0
      %v1819 = vmax.f32 %v1721, 0.0
      %v1820 = vmax.f32 %v1723, 0.0
      %v1821 = vmax.f32 %v1762, 0.0
      %v1822 = vmax.f32 %v1764, 0.0
      %v1823 = vmax.f32 %v1803, 0.0
      %v1824 = vmax.f32 %v1805, 0.0
      %v1825 = vpack.c.bf16 %v1809, %v1809
      %v1826 = vpack.c.bf16 %v1810, %v1810
      %v1827 = vpack.c.bf16 %v1811, %v1811
      %v1828 = vpack.c.bf16 %v1812, %v1812
      %v1829 = vpack.c.bf16 %v1813, %v1813
      %v1830 = vpack.c.bf16 %v1814, %v1814
      %v1831 = vpack.c.bf16 %v1815, %v1815
      %v1832 = vpack.c.bf16 %v1816, %v1816
      %v1833 = vpack.c.bf16 %v1817, %v1817
      %v1834 = vpack.c.bf16 %v1818, %v1818
      %v1835 = vpack.c.bf16 %v1819, %v1819
      %v1836 = vpack.c.bf16 %v1820, %v1820
      %v1837 = vpack.c.bf16 %v1821, %v1821
      %v1838 = vpack.c.bf16 %v1822, %v1822
      %v1839 = vpack.c.bf16 %v1823, %v1823
      %v1840 = vpack.c.bf16 %v1824, %v1824
      %v1841 = vld [vmem:[%s8] sm:$0xf]
      %v1842 = vld [vmem:[%s8 + $0x4] sm:$0xf]
      %v1843 = vld [vmem:[%s8 + $0x8] sm:$0xf]
      %v1844 = vld [vmem:[%s8 + $0xc] sm:$0xf]
      %v1845 = vld [vmem:[%s8 + $0x10] sm:$0xf]
      %v1846 = vld [vmem:[%s8 + $0x14] sm:$0xf]
      %v1847 = vld [vmem:[%s8 + $0x18] sm:$0xf]
      %v1848 = vld [vmem:[%s8 + $0x1c] sm:$0xf]
      %v1849 = vld [vmem:[%s8 + $0x20] sm:$0xf]
      %v1850 = vld [vmem:[%s8 + $0x24] sm:$0xf]
      %v1851 = vld [vmem:[%s8 + $0x28] sm:$0xf]
      %v1852 = vld [vmem:[%s8 + $0x2c] sm:$0xf]
      %v1853 = vld [vmem:[%s8 + $0x30] sm:$0xf]
      %v1854 = vld [vmem:[%s8 + $0x34] sm:$0xf]
      %v1855 = vld [vmem:[%s8 + $0x38] sm:$0xf]
      %v1856 = vld [vmem:[%s8 + $0x3c] sm:$0xf]
      %v1857 = vld [vmem:[%s8 + $0x40] sm:$0xf]
      %v1858 = vld [vmem:[%s8 + $0x44] sm:$0xf]
      %v1859 = vld [vmem:[%s8 + $0x48] sm:$0xf]
      %v1860 = vld [vmem:[%s8 + $0x4c] sm:$0xf]
      %v1861 = vld [vmem:[%s8 + $0x50] sm:$0xf]
      %v1862 = vld [vmem:[%s8 + $0x54] sm:$0xf]
      %v1863 = vld [vmem:[%s8 + $0x58] sm:$0xf]
      %v1864 = vld [vmem:[%s8 + $0x5c] sm:$0xf]
      %v1865 = vld [vmem:[%s8 + $0x60] sm:$0xf]
      %v1866 = vld [vmem:[%s8 + $0x64] sm:$0xf]
      %v1867 = vld [vmem:[%s8 + $0x68] sm:$0xf]
      %v1868 = vld [vmem:[%s8 + $0x6c] sm:$0xf]
      %v1869 = vld [vmem:[%s8 + $0x70] sm:$0xf]
      %v1870 = vld [vmem:[%s8 + $0x74] sm:$0xf]
      %v1871 = vld [vmem:[%s8 + $0x78] sm:$0xf]
      %v1872 = vld [vmem:[%s8 + $0x7c] sm:$0xf]
      %v1873 = vld [vmem:[%s8 + $0x80] sm:$0xf]
      %v1874 = vld [vmem:[%s8 + $0x84] sm:$0xf]
      %v1875 = vld [vmem:[%s8 + $0x88] sm:$0xf]
      %v1876 = vld [vmem:[%s8 + $0x8c] sm:$0xf]
      %v1877 = vld [vmem:[%s8 + $0x90] sm:$0xf]
      %v1878 = vld [vmem:[%s8 + $0x94] sm:$0xf]
      %v1879 = vld [vmem:[%s8 + $0x98] sm:$0xf]
      %v1880 = vld [vmem:[%s8 + $0x9c] sm:$0xf]
      %v1881 = vld [vmem:[%s8 + $0xa0] sm:$0xf]
      %v1882 = vld [vmem:[%s8 + $0xa4] sm:$0xf]
      %v1883 = vld [vmem:[%s8 + $0xa8] sm:$0xf]
      %v1884 = vld [vmem:[%s8 + $0xac] sm:$0xf]
      %v1885 = vld [vmem:[%s8 + $0xb0] sm:$0xf]
      %v1886 = vld [vmem:[%s8 + $0xb4] sm:$0xf]
      %v1887 = vld [vmem:[%s8 + $0xb8] sm:$0xf]
      %v1888 = vld [vmem:[%s8 + $0xbc] sm:$0xf]
      %v1889 = vld [vmem:[%s8 + $0xc0] sm:$0xf]
      %v1890 = vld [vmem:[%s8 + $0xc4] sm:$0xf]
      %v1891 = vld [vmem:[%s8 + $0xc8] sm:$0xf]
      %v1892 = vld [vmem:[%s8 + $0xcc] sm:$0xf]
      %v1893 = vld [vmem:[%s8 + $0xd0] sm:$0xf]
      %v1894 = vld [vmem:[%s8 + $0xd4] sm:$0xf]
      %v1895 = vld [vmem:[%s8 + $0xd8] sm:$0xf]
      %v1896 = vld [vmem:[%s8 + $0xdc] sm:$0xf]
      %v1897 = vld [vmem:[%s8 + $0xe0] sm:$0xf]
      %v1898 = vld [vmem:[%s8 + $0xe4] sm:$0xf]
      %v1899 = vld [vmem:[%s8 + $0xe8] sm:$0xf]
      %v1900 = vld [vmem:[%s8 + $0xec] sm:$0xf]
      %v1901 = vld [vmem:[%s8 + $0xf0] sm:$0xf]
      %v1902 = vld [vmem:[%s8 + $0xf4] sm:$0xf]
      %v1903 = vld [vmem:[%s8 + $0xf8] sm:$0xf]
      %v1904 = vld [vmem:[%s8 + $0xfc] sm:$0xf]
      %v1905 = vld [vmem:[%s8 + $0x100] sm:$0xf]
      %v1906 = vld [vmem:[%s8 + $0x104] sm:$0xf]
      %v1907 = vld [vmem:[%s8 + $0x108] sm:$0xf]
      %v1908 = vld [vmem:[%s8 + $0x10c] sm:$0xf]
      %v1909 = vld [vmem:[%s8 + $0x110] sm:$0xf]
      %v1910 = vld [vmem:[%s8 + $0x114] sm:$0xf]
      %v1911 = vld [vmem:[%s8 + $0x118] sm:$0xf]
      %v1912 = vld [vmem:[%s8 + $0x11c] sm:$0xf]
      %v1913 = vld [vmem:[%s8 + $0x120] sm:$0xf]
      %v1914 = vld [vmem:[%s8 + $0x124] sm:$0xf]
      %v1915 = vld [vmem:[%s8 + $0x128] sm:$0xf]
      %v1916 = vld [vmem:[%s8 + $0x12c] sm:$0xf]
      %v1917 = vld [vmem:[%s8 + $0x130] sm:$0xf]
      %v1918 = vld [vmem:[%s8 + $0x134] sm:$0xf]
      %v1919 = vld [vmem:[%s8 + $0x138] sm:$0xf]
      %v1920 = vld [vmem:[%s8 + $0x13c] sm:$0xf]
      %v1921 = vld [vmem:[%s8 + $0x140] sm:$0xf]
      %v1922 = vld [vmem:[%s8 + $0x144] sm:$0xf]
      %v1923 = vld [vmem:[%s8 + $0x148] sm:$0xf]
      %v1924 = vld [vmem:[%s8 + $0x14c] sm:$0xf]
      %v1925 = vld [vmem:[%s8 + $0x150] sm:$0xf]
      %v1926 = vld [vmem:[%s8 + $0x154] sm:$0xf]
      %v1927 = vld [vmem:[%s8 + $0x158] sm:$0xf]
      %v1928 = vld [vmem:[%s8 + $0x15c] sm:$0xf]
      %v1929 = vld [vmem:[%s8 + $0x160] sm:$0xf]
      %v1930 = vld [vmem:[%s8 + $0x164] sm:$0xf]
      %v1931 = vld [vmem:[%s8 + $0x168] sm:$0xf]
      %v1932 = vld [vmem:[%s8 + $0x16c] sm:$0xf]
      %v1933 = vld [vmem:[%s8 + $0x170] sm:$0xf]
      %v1934 = vld [vmem:[%s8 + $0x174] sm:$0xf]
      %v1935 = vld [vmem:[%s8 + $0x178] sm:$0xf]
      %v1936 = vld [vmem:[%s8 + $0x17c] sm:$0xf]
      %v1937 = vld [vmem:[%s8 + $0x180] sm:$0xf]
      %v1938 = vld [vmem:[%s8 + $0x184] sm:$0xf]
      %v1939 = vld [vmem:[%s8 + $0x188] sm:$0xf]
      %v1940 = vld [vmem:[%s8 + $0x18c] sm:$0xf]
      %v1941 = vld [vmem:[%s8 + $0x190] sm:$0xf]
      %v1942 = vld [vmem:[%s8 + $0x194] sm:$0xf]
      %v1943 = vld [vmem:[%s8 + $0x198] sm:$0xf]
      %v1944 = vld [vmem:[%s8 + $0x19c] sm:$0xf]
      %v1945 = vld [vmem:[%s8 + $0x1a0] sm:$0xf]
      %v1946 = vld [vmem:[%s8 + $0x1a4] sm:$0xf]
      %v1947 = vld [vmem:[%s8 + $0x1a8] sm:$0xf]
      %v1948 = vld [vmem:[%s8 + $0x1ac] sm:$0xf]
      %v1949 = vld [vmem:[%s8 + $0x1b0] sm:$0xf]
      %v1950 = vld [vmem:[%s8 + $0x1b4] sm:$0xf]
      %v1951 = vld [vmem:[%s8 + $0x1b8] sm:$0xf]
      %v1952 = vld [vmem:[%s8 + $0x1bc] sm:$0xf]
      %v1953 = vld [vmem:[%s8 + $0x1c0] sm:$0xf]
      %v1954 = vld [vmem:[%s8 + $0x1c4] sm:$0xf]
      %v1955 = vld [vmem:[%s8 + $0x1c8] sm:$0xf]
      %v1956 = vld [vmem:[%s8 + $0x1cc] sm:$0xf]
      %v1957 = vld [vmem:[%s8 + $0x1d0] sm:$0xf]
      %v1958 = vld [vmem:[%s8 + $0x1d4] sm:$0xf]
      %v1959 = vld [vmem:[%s8 + $0x1d8] sm:$0xf]
      %v1960 = vld [vmem:[%s8 + $0x1dc] sm:$0xf]
      %v1961 = vld [vmem:[%s8 + $0x1e0] sm:$0xf]
      %v1962 = vld [vmem:[%s8 + $0x1e4] sm:$0xf]
      %v1963 = vld [vmem:[%s8 + $0x1e8] sm:$0xf]
      %v1964 = vld [vmem:[%s8 + $0x1ec] sm:$0xf]
      %v1965 = vld [vmem:[%s8 + $0x1f0] sm:$0xf]
      %v1966 = vld [vmem:[%s8 + $0x1f4] sm:$0xf]
      %v1967 = vld [vmem:[%s8 + $0x1f8] sm:$0xf]
      %v1968 = vld [vmem:[%s8 + $0x1fc] sm:$0xf]
      %v1969 = vld [vmem:[%s8 + $0x200] sm:$0xf]
      %v1970 = vld [vmem:[%s8 + $0x204] sm:$0xf]
      %v1971 = vld [vmem:[%s8 + $0x208] sm:$0xf]
      %v1972 = vld [vmem:[%s8 + $0x20c] sm:$0xf]
      %v1973 = vld [vmem:[%s8 + $0x210] sm:$0xf]
      %v1974 = vld [vmem:[%s8 + $0x214] sm:$0xf]
      %v1975 = vld [vmem:[%s8 + $0x218] sm:$0xf]
      %v1976 = vld [vmem:[%s8 + $0x21c] sm:$0xf]
      %v1977 = vld [vmem:[%s8 + $0x220] sm:$0xf]
      %v1978 = vld [vmem:[%s8 + $0x224] sm:$0xf]
      %v1979 = vld [vmem:[%s8 + $0x228] sm:$0xf]
      %v1980 = vld [vmem:[%s8 + $0x22c] sm:$0xf]
      %v1981 = vld [vmem:[%s8 + $0x230] sm:$0xf]
      %v1982 = vld [vmem:[%s8 + $0x234] sm:$0xf]
      %v1983 = vld [vmem:[%s8 + $0x238] sm:$0xf]
      %v1984 = vld [vmem:[%s8 + $0x23c] sm:$0xf]
      %v1985 = vld [vmem:[%s8 + $0x240] sm:$0xf]
      %v1986 = vld [vmem:[%s8 + $0x244] sm:$0xf]
      %v1987 = vld [vmem:[%s8 + $0x248] sm:$0xf]
      %v1988 = vld [vmem:[%s8 + $0x24c] sm:$0xf]
      %v1989 = vld [vmem:[%s8 + $0x250] sm:$0xf]
      %v1990 = vld [vmem:[%s8 + $0x254] sm:$0xf]
      %v1991 = vld [vmem:[%s8 + $0x258] sm:$0xf]
      %v1992 = vld [vmem:[%s8 + $0x25c] sm:$0xf]
      %v1993 = vld [vmem:[%s8 + $0x260] sm:$0xf]
      %v1994 = vld [vmem:[%s8 + $0x264] sm:$0xf]
      %v1995 = vld [vmem:[%s8 + $0x268] sm:$0xf]
      %v1996 = vld [vmem:[%s8 + $0x26c] sm:$0xf]
      %v1997 = vld [vmem:[%s8 + $0x270] sm:$0xf]
      %v1998 = vld [vmem:[%s8 + $0x274] sm:$0xf]
      %v1999 = vld [vmem:[%s8 + $0x278] sm:$0xf]
      %v2000 = vld [vmem:[%s8 + $0x27c] sm:$0xf]
      %v2001 = vld [vmem:[%s8 + $0x280] sm:$0xf]
      %v2002 = vld [vmem:[%s8 + $0x284] sm:$0xf]
      %v2003 = vld [vmem:[%s8 + $0x288] sm:$0xf]
      %v2004 = vld [vmem:[%s8 + $0x28c] sm:$0xf]
      %v2005 = vld [vmem:[%s8 + $0x290] sm:$0xf]
      %v2006 = vld [vmem:[%s8 + $0x294] sm:$0xf]
      %v2007 = vld [vmem:[%s8 + $0x298] sm:$0xf]
      %v2008 = vld [vmem:[%s8 + $0x29c] sm:$0xf]
      %v2009 = vld [vmem:[%s8 + $0x2a0] sm:$0xf]
      %v2010 = vld [vmem:[%s8 + $0x2a4] sm:$0xf]
      %v2011 = vld [vmem:[%s8 + $0x2a8] sm:$0xf]
      %v2012 = vld [vmem:[%s8 + $0x2ac] sm:$0xf]
      %v2013 = vld [vmem:[%s8 + $0x2b0] sm:$0xf]
      %v2014 = vld [vmem:[%s8 + $0x2b4] sm:$0xf]
      %v2015 = vld [vmem:[%s8 + $0x2b8] sm:$0xf]
      %v2016 = vld [vmem:[%s8 + $0x2bc] sm:$0xf]
      %v2017 = vld [vmem:[%s8 + $0x2c0] sm:$0xf]
      %v2018 = vld [vmem:[%s8 + $0x2c4] sm:$0xf]
      %v2019 = vld [vmem:[%s8 + $0x2c8] sm:$0xf]
      %v2020 = vld [vmem:[%s8 + $0x2cc] sm:$0xf]
      %v2021 = vld [vmem:[%s8 + $0x2d0] sm:$0xf]
      %v2022 = vld [vmem:[%s8 + $0x2d4] sm:$0xf]
      %v2023 = vld [vmem:[%s8 + $0x2d8] sm:$0xf]
      %v2024 = vld [vmem:[%s8 + $0x2dc] sm:$0xf]
      %v2025 = vld [vmem:[%s8 + $0x2e0] sm:$0xf]
      %v2026 = vld [vmem:[%s8 + $0x2e4] sm:$0xf]
      %v2027 = vld [vmem:[%s8 + $0x2e8] sm:$0xf]
      %v2028 = vld [vmem:[%s8 + $0x2ec] sm:$0xf]
      %v2029 = vld [vmem:[%s8 + $0x2f0] sm:$0xf]
      %v2030 = vld [vmem:[%s8 + $0x2f4] sm:$0xf]
      %v2031 = vld [vmem:[%s8 + $0x2f8] sm:$0xf]
      %v2032 = vld [vmem:[%s8 + $0x2fc] sm:$0xf]
      %v2033 = vld [vmem:[%s8 + $0x300] sm:$0xf]
      %v2034 = vld [vmem:[%s8 + $0x304] sm:$0xf]
      %v2035 = vld [vmem:[%s8 + $0x308] sm:$0xf]
      %v2036 = vld [vmem:[%s8 + $0x30c] sm:$0xf]
      %v2037 = vld [vmem:[%s8 + $0x310] sm:$0xf]
      %v2038 = vld [vmem:[%s8 + $0x314] sm:$0xf]
      %v2039 = vld [vmem:[%s8 + $0x318] sm:$0xf]
      %v2040 = vld [vmem:[%s8 + $0x31c] sm:$0xf]
      %v2041 = vld [vmem:[%s8 + $0x320] sm:$0xf]
      %v2042 = vld [vmem:[%s8 + $0x324] sm:$0xf]
      %v2043 = vld [vmem:[%s8 + $0x328] sm:$0xf]
      %v2044 = vld [vmem:[%s8 + $0x32c] sm:$0xf]
      %v2045 = vld [vmem:[%s8 + $0x330] sm:$0xf]
      %v2046 = vld [vmem:[%s8 + $0x334] sm:$0xf]
      %v2047 = vld [vmem:[%s8 + $0x338] sm:$0xf]
      %v2048 = vld [vmem:[%s8 + $0x33c] sm:$0xf]
      %v2049 = vld [vmem:[%s8 + $0x340] sm:$0xf]
      %v2050 = vld [vmem:[%s8 + $0x344] sm:$0xf]
      %v2051 = vld [vmem:[%s8 + $0x348] sm:$0xf]
      %v2052 = vld [vmem:[%s8 + $0x34c] sm:$0xf]
      %v2053 = vld [vmem:[%s8 + $0x350] sm:$0xf]
      %v2054 = vld [vmem:[%s8 + $0x354] sm:$0xf]
      %v2055 = vld [vmem:[%s8 + $0x358] sm:$0xf]
      %v2056 = vld [vmem:[%s8 + $0x35c] sm:$0xf]
      %v2057 = vld [vmem:[%s8 + $0x360] sm:$0xf]
      %v2058 = vld [vmem:[%s8 + $0x364] sm:$0xf]
      %v2059 = vld [vmem:[%s8 + $0x368] sm:$0xf]
      %v2060 = vld [vmem:[%s8 + $0x36c] sm:$0xf]
      %v2061 = vld [vmem:[%s8 + $0x370] sm:$0xf]
      %v2062 = vld [vmem:[%s8 + $0x374] sm:$0xf]
      %v2063 = vld [vmem:[%s8 + $0x378] sm:$0xf]
      %v2064 = vld [vmem:[%s8 + $0x37c] sm:$0xf]
      %v2065 = vld [vmem:[%s8 + $0x380] sm:$0xf]
      %v2066 = vld [vmem:[%s8 + $0x384] sm:$0xf]
      %v2067 = vld [vmem:[%s8 + $0x388] sm:$0xf]
      %v2068 = vld [vmem:[%s8 + $0x38c] sm:$0xf]
      %v2069 = vld [vmem:[%s8 + $0x390] sm:$0xf]
      %v2070 = vld [vmem:[%s8 + $0x394] sm:$0xf]
      %v2071 = vld [vmem:[%s8 + $0x398] sm:$0xf]
      %v2072 = vld [vmem:[%s8 + $0x39c] sm:$0xf]
      %v2073 = vld [vmem:[%s8 + $0x3a0] sm:$0xf]
      %v2074 = vld [vmem:[%s8 + $0x3a4] sm:$0xf]
      %v2075 = vld [vmem:[%s8 + $0x3a8] sm:$0xf]
      %v2076 = vld [vmem:[%s8 + $0x3ac] sm:$0xf]
      %v2077 = vld [vmem:[%s8 + $0x3b0] sm:$0xf]
      %v2078 = vld [vmem:[%s8 + $0x3b4] sm:$0xf]
      %v2079 = vld [vmem:[%s8 + $0x3b8] sm:$0xf]
      %v2080 = vld [vmem:[%s8 + $0x3bc] sm:$0xf]
      %v2081 = vld [vmem:[%s8 + $0x3c0] sm:$0xf]
      %v2082 = vld [vmem:[%s8 + $0x3c4] sm:$0xf]
      %v2083 = vld [vmem:[%s8 + $0x3c8] sm:$0xf]
      %v2084 = vld [vmem:[%s8 + $0x3cc] sm:$0xf]
      %v2085 = vld [vmem:[%s8 + $0x3d0] sm:$0xf]
      %v2086 = vld [vmem:[%s8 + $0x3d4] sm:$0xf]
      %v2087 = vld [vmem:[%s8 + $0x3d8] sm:$0xf]
      %v2088 = vld [vmem:[%s8 + $0x3dc] sm:$0xf]
      %v2089 = vld [vmem:[%s8 + $0x3e0] sm:$0xf]
      %v2090 = vld [vmem:[%s8 + $0x3e4] sm:$0xf]
      %v2091 = vld [vmem:[%s8 + $0x3e8] sm:$0xf]
      %v2092 = vld [vmem:[%s8 + $0x3ec] sm:$0xf]
      %v2093 = vld [vmem:[%s8 + $0x3f0] sm:$0xf]
      %v2094 = vld [vmem:[%s8 + $0x3f4] sm:$0xf]
      %v2095 = vld [vmem:[%s8 + $0x3f8] sm:$0xf]
      %v2096 = vld [vmem:[%s8 + $0x3fc] sm:$0xf]
      %v2097 = vld [vmem:[%s9] sm:$0x1]
      %v2099 = vlaneseq
      %v2100 = vshrl.u32 %v2099, 7
      %v2101 = vsub.s32 0, %v2100
      %v2102 = vrot.slane %v2097, %v2101
      %v2360 = vunpack.c.l.b16 %v1841
      %v2361 = vunpack.c.l.b16 %v1842
      %v2362 = vunpack.c.l.b16 %v1843
      %v2363 = vunpack.c.l.b16 %v1844
      %v2364 = vunpack.c.l.b16 %v1845
      %v2365 = vunpack.c.l.b16 %v1846
      %v2366 = vunpack.c.l.b16 %v1847
      %v2367 = vunpack.c.l.b16 %v1848
      %v2368 = vunpack.c.l.b16 %v1849
      %v2369 = vunpack.c.l.b16 %v1850
      %v2370 = vunpack.c.l.b16 %v1851
      %v2371 = vunpack.c.l.b16 %v1852
      %v2372 = vunpack.c.l.b16 %v1853
      %v2373 = vunpack.c.l.b16 %v1854
      %v2374 = vunpack.c.l.b16 %v1855
      %v2375 = vunpack.c.l.b16 %v1856
      %v2376 = vunpack.c.l.b16 %v1857
      %v2377 = vunpack.c.l.b16 %v1858
      %v2378 = vunpack.c.l.b16 %v1859
      %v2379 = vunpack.c.l.b16 %v1860
      %v2380 = vunpack.c.l.b16 %v1861
      %v2381 = vunpack.c.l.b16 %v1862
      %v2382 = vunpack.c.l.b16 %v1863
      %v2383 = vunpack.c.l.b16 %v1864
      %v2384 = vunpack.c.l.b16 %v1865
      %v2385 = vunpack.c.l.b16 %v1866
      %v2386 = vunpack.c.l.b16 %v1867
      %v2387 = vunpack.c.l.b16 %v1868
      %v2388 = vunpack.c.l.b16 %v1869
      %v2389 = vunpack.c.l.b16 %v1870
      %v2390 = vunpack.c.l.b16 %v1871
      %v2391 = vunpack.c.l.b16 %v1872
      %v2392 = vunpack.c.l.b16 %v1873
      %v2393 = vunpack.c.l.b16 %v1874
      %v2394 = vunpack.c.l.b16 %v1875
      %v2395 = vunpack.c.l.b16 %v1876
      %v2396 = vunpack.c.l.b16 %v1877
      %v2397 = vunpack.c.l.b16 %v1878
      %v2398 = vunpack.c.l.b16 %v1879
      %v2399 = vunpack.c.l.b16 %v1880
      %v2400 = vunpack.c.l.b16 %v1881
      %v2401 = vunpack.c.l.b16 %v1882
      %v2402 = vunpack.c.l.b16 %v1883
      %v2403 = vunpack.c.l.b16 %v1884
      %v2404 = vunpack.c.l.b16 %v1885
      %v2405 = vunpack.c.l.b16 %v1886
      %v2406 = vunpack.c.l.b16 %v1887
      %v2407 = vunpack.c.l.b16 %v1888
      %v2408 = vunpack.c.l.b16 %v1889
      %v2409 = vunpack.c.l.b16 %v1890
      %v2410 = vunpack.c.l.b16 %v1891
      %v2411 = vunpack.c.l.b16 %v1892
      %v2412 = vunpack.c.l.b16 %v1893
      %v2413 = vunpack.c.l.b16 %v1894
      %v2414 = vunpack.c.l.b16 %v1895
      %v2415 = vunpack.c.l.b16 %v1896
      %v2416 = vunpack.c.l.b16 %v1897
      %v2417 = vunpack.c.l.b16 %v1898
      %v2418 = vunpack.c.l.b16 %v1899
      %v2419 = vunpack.c.l.b16 %v1900
      %v2420 = vunpack.c.l.b16 %v1901
      %v2421 = vunpack.c.l.b16 %v1902
      %v2422 = vunpack.c.l.b16 %v1903
      %v2423 = vunpack.c.l.b16 %v1904
      %v2424 = vunpack.c.l.b16 %v1905
      %v2425 = vunpack.c.l.b16 %v1906
      %v2426 = vunpack.c.l.b16 %v1907
      %v2427 = vunpack.c.l.b16 %v1908
      %v2428 = vunpack.c.l.b16 %v1909
      %v2429 = vunpack.c.l.b16 %v1910
      %v2430 = vunpack.c.l.b16 %v1911
      %v2431 = vunpack.c.l.b16 %v1912
      %v2432 = vunpack.c.l.b16 %v1913
      %v2433 = vunpack.c.l.b16 %v1914
      %v2434 = vunpack.c.l.b16 %v1915
      %v2435 = vunpack.c.l.b16 %v1916
      %v2436 = vunpack.c.l.b16 %v1917
      %v2437 = vunpack.c.l.b16 %v1918
      %v2438 = vunpack.c.l.b16 %v1919
      %v2439 = vunpack.c.l.b16 %v1920
      %v2440 = vunpack.c.l.b16 %v1921
      %v2441 = vunpack.c.l.b16 %v1922
      %v2442 = vunpack.c.l.b16 %v1923
      %v2443 = vunpack.c.l.b16 %v1924
      %v2444 = vunpack.c.l.b16 %v1925
      %v2445 = vunpack.c.l.b16 %v1926
      %v2446 = vunpack.c.l.b16 %v1927
      %v2447 = vunpack.c.l.b16 %v1928
      %v2448 = vunpack.c.l.b16 %v1929
      %v2449 = vunpack.c.l.b16 %v1930
      %v2450 = vunpack.c.l.b16 %v1931
      %v2451 = vunpack.c.l.b16 %v1932
      %v2452 = vunpack.c.l.b16 %v1933
      %v2453 = vunpack.c.l.b16 %v1934
      %v2454 = vunpack.c.l.b16 %v1935
      %v2455 = vunpack.c.l.b16 %v1936
      %v2456 = vunpack.c.l.b16 %v1937
      %v2457 = vunpack.c.l.b16 %v1938
      %v2458 = vunpack.c.l.b16 %v1939
      %v2459 = vunpack.c.l.b16 %v1940
      %v2460 = vunpack.c.l.b16 %v1941
      %v2461 = vunpack.c.l.b16 %v1942
      %v2462 = vunpack.c.l.b16 %v1943
      %v2463 = vunpack.c.l.b16 %v1944
      %v2464 = vunpack.c.l.b16 %v1945
      %v2465 = vunpack.c.l.b16 %v1946
      %v2466 = vunpack.c.l.b16 %v1947
      %v2467 = vunpack.c.l.b16 %v1948
      %v2468 = vunpack.c.l.b16 %v1949
      %v2469 = vunpack.c.l.b16 %v1950
      %v2470 = vunpack.c.l.b16 %v1951
      %v2471 = vunpack.c.l.b16 %v1952
      %v2472 = vunpack.c.l.b16 %v1953
      %v2473 = vunpack.c.l.b16 %v1954
      %v2474 = vunpack.c.l.b16 %v1955
      %v2475 = vunpack.c.l.b16 %v1956
      %v2476 = vunpack.c.l.b16 %v1957
      %v2477 = vunpack.c.l.b16 %v1958
      %v2478 = vunpack.c.l.b16 %v1959
      %v2479 = vunpack.c.l.b16 %v1960
      %v2480 = vunpack.c.l.b16 %v1961
      %v2481 = vunpack.c.l.b16 %v1962
      %v2482 = vunpack.c.l.b16 %v1963
      %v2483 = vunpack.c.l.b16 %v1964
      %v2484 = vunpack.c.l.b16 %v1965
      %v2485 = vunpack.c.l.b16 %v1966
      %v2486 = vunpack.c.l.b16 %v1967
      %v2487 = vunpack.c.l.b16 %v1968
      %v2488 = vunpack.c.l.b16 %v1969
      %v2489 = vunpack.c.l.b16 %v1970
      %v2490 = vunpack.c.l.b16 %v1971
      %v2491 = vunpack.c.l.b16 %v1972
      %v2492 = vunpack.c.l.b16 %v1973
      %v2493 = vunpack.c.l.b16 %v1974
      %v2494 = vunpack.c.l.b16 %v1975
      %v2495 = vunpack.c.l.b16 %v1976
      %v2496 = vunpack.c.l.b16 %v1977
      %v2497 = vunpack.c.l.b16 %v1978
      %v2498 = vunpack.c.l.b16 %v1979
      %v2499 = vunpack.c.l.b16 %v1980
      %v2500 = vunpack.c.l.b16 %v1981
      %v2501 = vunpack.c.l.b16 %v1982
      %v2502 = vunpack.c.l.b16 %v1983
      %v2503 = vunpack.c.l.b16 %v1984
      %v2504 = vunpack.c.l.b16 %v1985
      %v2505 = vunpack.c.l.b16 %v1986
      %v2506 = vunpack.c.l.b16 %v1987
      %v2507 = vunpack.c.l.b16 %v1988
      %v2508 = vunpack.c.l.b16 %v1989
      %v2509 = vunpack.c.l.b16 %v1990
      %v2510 = vunpack.c.l.b16 %v1991
      %v2511 = vunpack.c.l.b16 %v1992
      %v2512 = vunpack.c.l.b16 %v1993
      %v2513 = vunpack.c.l.b16 %v1994
      %v2514 = vunpack.c.l.b16 %v1995
      %v2515 = vunpack.c.l.b16 %v1996
      %v2516 = vunpack.c.l.b16 %v1997
      %v2517 = vunpack.c.l.b16 %v1998
      %v2518 = vunpack.c.l.b16 %v1999
      %v2519 = vunpack.c.l.b16 %v2000
      %v2520 = vunpack.c.l.b16 %v2001
      %v2521 = vunpack.c.l.b16 %v2002
      %v2522 = vunpack.c.l.b16 %v2003
      %v2523 = vunpack.c.l.b16 %v2004
      %v2524 = vunpack.c.l.b16 %v2005
      %v2525 = vunpack.c.l.b16 %v2006
      %v2526 = vunpack.c.l.b16 %v2007
      %v2527 = vunpack.c.l.b16 %v2008
      %v2528 = vunpack.c.l.b16 %v2009
      %v2529 = vunpack.c.l.b16 %v2010
      %v2530 = vunpack.c.l.b16 %v2011
      %v2531 = vunpack.c.l.b16 %v2012
      %v2532 = vunpack.c.l.b16 %v2013
      %v2533 = vunpack.c.l.b16 %v2014
      %v2534 = vunpack.c.l.b16 %v2015
      %v2535 = vunpack.c.l.b16 %v2016
      %v2536 = vunpack.c.l.b16 %v2017
      %v2537 = vunpack.c.l.b16 %v2018
      %v2538 = vunpack.c.l.b16 %v2019
      %v2539 = vunpack.c.l.b16 %v2020
      %v2540 = vunpack.c.l.b16 %v2021
      %v2541 = vunpack.c.l.b16 %v2022
      %v2542 = vunpack.c.l.b16 %v2023
      %v2543 = vunpack.c.l.b16 %v2024
      %v2544 = vunpack.c.l.b16 %v2025
      %v2545 = vunpack.c.l.b16 %v2026
      %v2546 = vunpack.c.l.b16 %v2027
      %v2547 = vunpack.c.l.b16 %v2028
      %v2548 = vunpack.c.l.b16 %v2029
      %v2549 = vunpack.c.l.b16 %v2030
      %v2550 = vunpack.c.l.b16 %v2031
      %v2551 = vunpack.c.l.b16 %v2032
      %v2552 = vunpack.c.l.b16 %v2033
      %v2553 = vunpack.c.l.b16 %v2034
      %v2554 = vunpack.c.l.b16 %v2035
      %v2555 = vunpack.c.l.b16 %v2036
      %v2556 = vunpack.c.l.b16 %v2037
      %v2557 = vunpack.c.l.b16 %v2038
      %v2558 = vunpack.c.l.b16 %v2039
      %v2559 = vunpack.c.l.b16 %v2040
      %v2560 = vunpack.c.l.b16 %v2041
      %v2561 = vunpack.c.l.b16 %v2042
      %v2562 = vunpack.c.l.b16 %v2043
      %v2563 = vunpack.c.l.b16 %v2044
      %v2564 = vunpack.c.l.b16 %v2045
      %v2565 = vunpack.c.l.b16 %v2046
      %v2566 = vunpack.c.l.b16 %v2047
      %v2567 = vunpack.c.l.b16 %v2048
      %v2568 = vunpack.c.l.b16 %v2049
      %v2569 = vunpack.c.l.b16 %v2050
      %v2570 = vunpack.c.l.b16 %v2051
      %v2571 = vunpack.c.l.b16 %v2052
      %v2572 = vunpack.c.l.b16 %v2053
      %v2573 = vunpack.c.l.b16 %v2054
      %v2574 = vunpack.c.l.b16 %v2055
      %v2575 = vunpack.c.l.b16 %v2056
      %v2576 = vunpack.c.l.b16 %v2057
      %v2577 = vunpack.c.l.b16 %v2058
      %v2578 = vunpack.c.l.b16 %v2059
      %v2579 = vunpack.c.l.b16 %v2060
      %v2580 = vunpack.c.l.b16 %v2061
      %v2581 = vunpack.c.l.b16 %v2062
      %v2582 = vunpack.c.l.b16 %v2063
      %v2583 = vunpack.c.l.b16 %v2064
      %v2584 = vunpack.c.l.b16 %v2065
      %v2585 = vunpack.c.l.b16 %v2066
      %v2586 = vunpack.c.l.b16 %v2067
      %v2587 = vunpack.c.l.b16 %v2068
      %v2588 = vunpack.c.l.b16 %v2069
      %v2589 = vunpack.c.l.b16 %v2070
      %v2590 = vunpack.c.l.b16 %v2071
      %v2591 = vunpack.c.l.b16 %v2072
      %v2592 = vunpack.c.l.b16 %v2073
      %v2593 = vunpack.c.l.b16 %v2074
      %v2594 = vunpack.c.l.b16 %v2075
      %v2595 = vunpack.c.l.b16 %v2076
      %v2596 = vunpack.c.l.b16 %v2077
      %v2597 = vunpack.c.l.b16 %v2078
      %v2598 = vunpack.c.l.b16 %v2079
      %v2599 = vunpack.c.l.b16 %v2080
      %v2600 = vunpack.c.l.b16 %v2081
      %v2601 = vunpack.c.l.b16 %v2082
      %v2602 = vunpack.c.l.b16 %v2083
      %v2603 = vunpack.c.l.b16 %v2084
      %v2604 = vunpack.c.l.b16 %v2085
      %v2605 = vunpack.c.l.b16 %v2086
      %v2606 = vunpack.c.l.b16 %v2087
      %v2607 = vunpack.c.l.b16 %v2088
      %v2608 = vunpack.c.l.b16 %v2089
      %v2609 = vunpack.c.l.b16 %v2090
      %v2610 = vunpack.c.l.b16 %v2091
      %v2611 = vunpack.c.l.b16 %v2092
      %v2612 = vunpack.c.l.b16 %v2093
      %v2613 = vunpack.c.l.b16 %v2094
      %v2614 = vunpack.c.l.b16 %v2095
      %v2615 = vunpack.c.l.b16 %v2096
      %v2616 = vpack.c.b16 %v2361, %v2360
      %v2617 = vpack.c.b16 %v2363, %v2362
      %v2618 = vpack.c.b16 %v2365, %v2364
      %v2619 = vpack.c.b16 %v2367, %v2366
      %v2620 = vpack.c.b16 %v2369, %v2368
      %v2621 = vpack.c.b16 %v2371, %v2370
      %v2622 = vpack.c.b16 %v2373, %v2372
      %v2623 = vpack.c.b16 %v2375, %v2374
      %v2624 = vpack.c.b16 %v2377, %v2376
      %v2625 = vpack.c.b16 %v2379, %v2378
      %v2626 = vpack.c.b16 %v2381, %v2380
      %v2627 = vpack.c.b16 %v2383, %v2382
      %v2628 = vpack.c.b16 %v2385, %v2384
      %v2629 = vpack.c.b16 %v2387, %v2386
      %v2630 = vpack.c.b16 %v2389, %v2388
      %v2631 = vpack.c.b16 %v2391, %v2390
      %v2632 = vpack.c.b16 %v2393, %v2392
      %v2633 = vpack.c.b16 %v2395, %v2394
      %v2634 = vpack.c.b16 %v2397, %v2396
      %v2635 = vpack.c.b16 %v2399, %v2398
      %v2636 = vpack.c.b16 %v2401, %v2400
      %v2637 = vpack.c.b16 %v2403, %v2402
      %v2638 = vpack.c.b16 %v2405, %v2404
      %v2639 = vpack.c.b16 %v2407, %v2406
      %v2640 = vpack.c.b16 %v2409, %v2408
      %v2641 = vpack.c.b16 %v2411, %v2410
      %v2642 = vpack.c.b16 %v2413, %v2412
      %v2643 = vpack.c.b16 %v2415, %v2414
      %v2644 = vpack.c.b16 %v2417, %v2416
      %v2645 = vpack.c.b16 %v2419, %v2418
      %v2646 = vpack.c.b16 %v2421, %v2420
      %v2647 = vpack.c.b16 %v2423, %v2422
      %v2648 = vpack.c.b16 %v2425, %v2424
      %v2649 = vpack.c.b16 %v2427, %v2426
      %v2650 = vpack.c.b16 %v2429, %v2428
      %v2651 = vpack.c.b16 %v2431, %v2430
      %v2652 = vpack.c.b16 %v2433, %v2432
      %v2653 = vpack.c.b16 %v2435, %v2434
      %v2654 = vpack.c.b16 %v2437, %v2436
      %v2655 = vpack.c.b16 %v2439, %v2438
      %v2656 = vpack.c.b16 %v2441, %v2440
      %v2657 = vpack.c.b16 %v2443, %v2442
      %v2658 = vpack.c.b16 %v2445, %v2444
      %v2659 = vpack.c.b16 %v2447, %v2446
      %v2660 = vpack.c.b16 %v2449, %v2448
      %v2661 = vpack.c.b16 %v2451, %v2450
      %v2662 = vpack.c.b16 %v2453, %v2452
      %v2663 = vpack.c.b16 %v2455, %v2454
      %v2664 = vpack.c.b16 %v2457, %v2456
      %v2665 = vpack.c.b16 %v2459, %v2458
      %v2666 = vpack.c.b16 %v2461, %v2460
      %v2667 = vpack.c.b16 %v2463, %v2462
      %v2668 = vpack.c.b16 %v2465, %v2464
      %v2669 = vpack.c.b16 %v2467, %v2466
      %v2670 = vpack.c.b16 %v2469, %v2468
      %v2671 = vpack.c.b16 %v2471, %v2470
      %v2672 = vpack.c.b16 %v2473, %v2472
      %v2673 = vpack.c.b16 %v2475, %v2474
      %v2674 = vpack.c.b16 %v2477, %v2476
      %v2675 = vpack.c.b16 %v2479, %v2478
      %v2676 = vpack.c.b16 %v2481, %v2480
      %v2677 = vpack.c.b16 %v2483, %v2482
      %v2678 = vpack.c.b16 %v2485, %v2484
      %v2679 = vpack.c.b16 %v2487, %v2486
      %v2680 = vpack.c.b16 %v2489, %v2488
      %v2681 = vpack.c.b16 %v2491, %v2490
      %v2682 = vpack.c.b16 %v2493, %v2492
      %v2683 = vpack.c.b16 %v2495, %v2494
      %v2684 = vpack.c.b16 %v2497, %v2496
      %v2685 = vpack.c.b16 %v2499, %v2498
      %v2686 = vpack.c.b16 %v2501, %v2500
      %v2687 = vpack.c.b16 %v2503, %v2502
      %v2688 = vpack.c.b16 %v2505, %v2504
      %v2689 = vpack.c.b16 %v2507, %v2506
      %v2690 = vpack.c.b16 %v2509, %v2508
      %v2691 = vpack.c.b16 %v2511, %v2510
      %v2692 = vpack.c.b16 %v2513, %v2512
      %v2693 = vpack.c.b16 %v2515, %v2514
      %v2694 = vpack.c.b16 %v2517, %v2516
      %v2695 = vpack.c.b16 %v2519, %v2518
      %v2696 = vpack.c.b16 %v2521, %v2520
      %v2697 = vpack.c.b16 %v2523, %v2522
      %v2698 = vpack.c.b16 %v2525, %v2524
      %v2699 = vpack.c.b16 %v2527, %v2526
      %v2700 = vpack.c.b16 %v2529, %v2528
      %v2701 = vpack.c.b16 %v2531, %v2530
      %v2702 = vpack.c.b16 %v2533, %v2532
      %v2703 = vpack.c.b16 %v2535, %v2534
      %v2704 = vpack.c.b16 %v2537, %v2536
      %v2705 = vpack.c.b16 %v2539, %v2538
      %v2706 = vpack.c.b16 %v2541, %v2540
      %v2707 = vpack.c.b16 %v2543, %v2542
      %v2708 = vpack.c.b16 %v2545, %v2544
      %v2709 = vpack.c.b16 %v2547, %v2546
      %v2710 = vpack.c.b16 %v2549, %v2548
      %v2711 = vpack.c.b16 %v2551, %v2550
      %v2712 = vpack.c.b16 %v2553, %v2552
      %v2713 = vpack.c.b16 %v2555, %v2554
      %v2714 = vpack.c.b16 %v2557, %v2556
      %v2715 = vpack.c.b16 %v2559, %v2558
      %v2716 = vpack.c.b16 %v2561, %v2560
      %v2717 = vpack.c.b16 %v2563, %v2562
      %v2718 = vpack.c.b16 %v2565, %v2564
      %v2719 = vpack.c.b16 %v2567, %v2566
      %v2720 = vpack.c.b16 %v2569, %v2568
      %v2721 = vpack.c.b16 %v2571, %v2570
      %v2722 = vpack.c.b16 %v2573, %v2572
      %v2723 = vpack.c.b16 %v2575, %v2574
      %v2724 = vpack.c.b16 %v2577, %v2576
      %v2725 = vpack.c.b16 %v2579, %v2578
      %v2726 = vpack.c.b16 %v2581, %v2580
      %v2727 = vpack.c.b16 %v2583, %v2582
      %v2728 = vpack.c.b16 %v2585, %v2584
      %v2729 = vpack.c.b16 %v2587, %v2586
      %v2730 = vpack.c.b16 %v2589, %v2588
      %v2731 = vpack.c.b16 %v2591, %v2590
      %v2732 = vpack.c.b16 %v2593, %v2592
      %v2733 = vpack.c.b16 %v2595, %v2594
      %v2734 = vpack.c.b16 %v2597, %v2596
      %v2735 = vpack.c.b16 %v2599, %v2598
      %v2736 = vpack.c.b16 %v2601, %v2600
      %v2737 = vpack.c.b16 %v2603, %v2602
      %v2738 = vpack.c.b16 %v2605, %v2604
      %v2739 = vpack.c.b16 %v2607, %v2606
      %v2740 = vpack.c.b16 %v2609, %v2608
      %v2741 = vpack.c.b16 %v2611, %v2610
      %v2742 = vpack.c.b16 %v2613, %v2612
      %v2743 = vpack.c.b16 %v2615, %v2614
      %2872 = vmatprep.subr.bf16.mxu0 0
      %2873 = vmatpush1.bf16.msra.mxu0 %v2623
      %2874 = vmatprep.subr.bf16.mxu0 0
      %2875 = vmatpush1.bf16.msra.mxu0 %v2622
      %2876 = vmatprep.subr.bf16.mxu0 0
      %2877 = vmatpush1.bf16.msra.mxu0 %v2621
      %2878 = vmatprep.subr.bf16.mxu0 0
      %2879 = vmatpush1.bf16.msra.mxu0 %v2620
      %2880 = vmatprep.subr.bf16.mxu0 0
      %2881 = vmatpush1.bf16.msra.mxu0 %v2619
      %2882 = vmatprep.subr.bf16.mxu0 0
      %2883 = vmatpush1.bf16.msra.mxu0 %v2618
      %2884 = vmatprep.subr.bf16.mxu0 0
      %2885 = vmatpush1.bf16.msra.mxu0 %v2617
      %2886 = vmatprep.subr.bf16.mxu0 0
      %2887 = vmatpush1.bf16.msra.mxu0 %v2616
      %2888 = vmatprep.subr.bf16.mxu0 0
      %2889 = vmatpush2.bf16.msra.mxu0 %v2631
      %2890 = vmatprep.subr.bf16.mxu0 0
      %2891 = vmatpush2.bf16.msra.mxu0 %v2630
      %2892 = vmatprep.subr.bf16.mxu0 0
      %2893 = vmatpush2.bf16.msra.mxu0 %v2629
      %2894 = vmatprep.subr.bf16.mxu0 0
      %2895 = vmatpush2.bf16.msra.mxu0 %v2628
      %2896 = vmatprep.subr.bf16.mxu0 0
      %2897 = vmatpush2.bf16.msra.mxu0 %v2627
      %2898 = vmatprep.subr.bf16.mxu0 0
      %2899 = vmatpush2.bf16.msra.mxu0 %v2626
      %2900 = vmatprep.subr.bf16.mxu0 0
      %2901 = vmatpush2.bf16.msra.mxu0 %v2625
      %2902 = vmatprep.subr.bf16.mxu0 0
      %2903 = vmatpush2.bf16.msra.mxu0 %v2624
      %2904 = vmatprep.mubr.bf16.mxu0 %v1826
      %2905 = vmatmul.mubr.bf16.gmra.mxu0 %v1825
      %v2906 = vpop.f32.mrf.mxu0
      %v2907 = vadd.f32 %v2102, %v2906
      %v2908 = vpop.f32.mrf.mxu0
      %v2909 = vpop.f32.mrf.mxu0
      %v2910 = vpop.f32.mrf.mxu0
      %2911 = vdwg.mxu0
      %2912 = vmatprep.subr.bf16.mxu0 0
      %2913 = vmatpush1.bf16.msra.mxu0 %v2639
      %2914 = vmatprep.subr.bf16.mxu0 0
      %2915 = vmatpush1.bf16.msra.mxu0 %v2638
      %2916 = vmatprep.subr.bf16.mxu0 0
      %2917 = vmatpush1.bf16.msra.mxu0 %v2637
      %2918 = vmatprep.subr.bf16.mxu0 0
      %2919 = vmatpush1.bf16.msra.mxu0 %v2636
      %2920 = vmatprep.subr.bf16.mxu0 0
      %2921 = vmatpush1.bf16.msra.mxu0 %v2635
      %2922 = vmatprep.subr.bf16.mxu0 0
      %2923 = vmatpush1.bf16.msra.mxu0 %v2634
      %2924 = vmatprep.subr.bf16.mxu0 0
      %2925 = vmatpush1.bf16.msra.mxu0 %v2633
      %2926 = vmatprep.subr.bf16.mxu0 0
      %2927 = vmatpush1.bf16.msra.mxu0 %v2632
      %2928 = vmatprep.subr.bf16.mxu0 0
      %2929 = vmatpush2.bf16.msra.mxu0 %v2647
      %2930 = vmatprep.subr.bf16.mxu0 0
      %2931 = vmatpush2.bf16.msra.mxu0 %v2646
      %2932 = vmatprep.subr.bf16.mxu0 0
      %2933 = vmatpush2.bf16.msra.mxu0 %v2645
      %2934 = vmatprep.subr.bf16.mxu0 0
      %2935 = vmatpush2.bf16.msra.mxu0 %v2644
      %2936 = vmatprep.subr.bf16.mxu0 0
      %2937 = vmatpush2.bf16.msra.mxu0 %v2643
      %2938 = vmatprep.subr.bf16.mxu0 0
      %2939 = vmatpush2.bf16.msra.mxu0 %v2642
      %2940 = vmatprep.subr.bf16.mxu0 0
      %2941 = vmatpush2.bf16.msra.mxu0 %v2641
      %2942 = vmatprep.subr.bf16.mxu0 0
      %2943 = vmatpush2.bf16.msra.mxu0 %v2640
      %2944 = vmatprep.mubr.bf16.mxu0 %v1828
      %2945 = vmatmul.mubr.bf16.gmra.mxu0 %v1827
      %v2946 = vpop.f32.mrf.mxu0
      %v2947 = vadd.f32 %v2907, %v2946
      %v2948 = vpop.f32.mrf.mxu0
      %v2949 = vpop.f32.mrf.mxu0
      %v2950 = vpop.f32.mrf.mxu0
      %2951 = vdwg.mxu0
      %2952 = vmatprep.subr.bf16.mxu0 0
      %2953 = vmatpush1.bf16.msra.mxu0 %v2655
      %2954 = vmatprep.subr.bf16.mxu0 0
      %2955 = vmatpush1.bf16.msra.mxu0 %v2654
      %2956 = vmatprep.subr.bf16.mxu0 0
      %2957 = vmatpush1.bf16.msra.mxu0 %v2653
      %2958 = vmatprep.subr.bf16.mxu0 0
      %2959 = vmatpush1.bf16.msra.mxu0 %v2652
      %2960 = vmatprep.subr.bf16.mxu0 0
      %2961 = vmatpush1.bf16.msra.mxu0 %v2651
      %2962 = vmatprep.subr.bf16.mxu0 0
      %2963 = vmatpush1.bf16.msra.mxu0 %v2650
      %2964 = vmatprep.subr.bf16.mxu0 0
      %2965 = vmatpush1.bf16.msra.mxu0 %v2649
      %2966 = vmatprep.subr.bf16.mxu0 0
      %2967 = vmatpush1.bf16.msra.mxu0 %v2648
      %2968 = vmatprep.subr.bf16.mxu0 0
      %2969 = vmatpush2.bf16.msra.mxu0 %v2663
      %2970 = vmatprep.subr.bf16.mxu0 0
      %2971 = vmatpush2.bf16.msra.mxu0 %v2662
      %2972 = vmatprep.subr.bf16.mxu0 0
      %2973 = vmatpush2.bf16.msra.mxu0 %v2661
      %2974 = vmatprep.subr.bf16.mxu0 0
      %2975 = vmatpush2.bf16.msra.mxu0 %v2660
      %2976 = vmatprep.subr.bf16.mxu0 0
      %2977 = vmatpush2.bf16.msra.mxu0 %v2659
      %2978 = vmatprep.subr.bf16.mxu0 0
      %2979 = vmatpush2.bf16.msra.mxu0 %v2658
      %2980 = vmatprep.subr.bf16.mxu0 0
      %2981 = vmatpush2.bf16.msra.mxu0 %v2657
      %2982 = vmatprep.subr.bf16.mxu0 0
      %2983 = vmatpush2.bf16.msra.mxu0 %v2656
      %2984 = vmatprep.mubr.bf16.mxu0 %v1830
      %2985 = vmatmul.mubr.bf16.gmra.mxu0 %v1829
      %v2986 = vpop.f32.mrf.mxu0
      %v2987 = vadd.f32 %v2947, %v2986
      %v2988 = vpop.f32.mrf.mxu0
      %v2989 = vpop.f32.mrf.mxu0
      %v2990 = vpop.f32.mrf.mxu0
      %2991 = vdwg.mxu0
      %2992 = vmatprep.subr.bf16.mxu0 0
      %2993 = vmatpush1.bf16.msra.mxu0 %v2671
      %2994 = vmatprep.subr.bf16.mxu0 0
      %2995 = vmatpush1.bf16.msra.mxu0 %v2670
      %2996 = vmatprep.subr.bf16.mxu0 0
      %2997 = vmatpush1.bf16.msra.mxu0 %v2669
      %2998 = vmatprep.subr.bf16.mxu0 0
      %2999 = vmatpush1.bf16.msra.mxu0 %v2668
      %3000 = vmatprep.subr.bf16.mxu0 0
      %3001 = vmatpush1.bf16.msra.mxu0 %v2667
      %3002 = vmatprep.subr.bf16.mxu0 0
      %3003 = vmatpush1.bf16.msra.mxu0 %v2666
      %3004 = vmatprep.subr.bf16.mxu0 0
      %3005 = vmatpush1.bf16.msra.mxu0 %v2665
      %3006 = vmatprep.subr.bf16.mxu0 0
      %3007 = vmatpush1.bf16.msra.mxu0 %v2664
      %3008 = vmatprep.subr.bf16.mxu0 0
      %3009 = vmatpush2.bf16.msra.mxu0 %v2679
      %3010 = vmatprep.subr.bf16.mxu0 0
      %3011 = vmatpush2.bf16.msra.mxu0 %v2678
      %3012 = vmatprep.subr.bf16.mxu0 0
      %3013 = vmatpush2.bf16.msra.mxu0 %v2677
      %3014 = vmatprep.subr.bf16.mxu0 0
      %3015 = vmatpush2.bf16.msra.mxu0 %v2676
      %3016 = vmatprep.subr.bf16.mxu0 0
      %3017 = vmatpush2.bf16.msra.mxu0 %v2675
      %3018 = vmatprep.subr.bf16.mxu0 0
      %3019 = vmatpush2.bf16.msra.mxu0 %v2674
      %3020 = vmatprep.subr.bf16.mxu0 0
      %3021 = vmatpush2.bf16.msra.mxu0 %v2673
      %3022 = vmatprep.subr.bf16.mxu0 0
      %3023 = vmatpush2.bf16.msra.mxu0 %v2672
      %3024 = vmatprep.mubr.bf16.mxu0 %v1832
      %3025 = vmatmul.mubr.bf16.gmra.mxu0 %v1831
      %v3026 = vpop.f32.mrf.mxu0
      %v3027 = vadd.f32 %v2987, %v3026
      %v3028 = vpop.f32.mrf.mxu0
      %v3029 = vpop.f32.mrf.mxu0
      %v3030 = vpop.f32.mrf.mxu0
      %3031 = vdwg.mxu0
      %3032 = vmatprep.subr.bf16.mxu0 0
      %3033 = vmatpush1.bf16.msra.mxu0 %v2687
      %3034 = vmatprep.subr.bf16.mxu0 0
      %3035 = vmatpush1.bf16.msra.mxu0 %v2686
      %3036 = vmatprep.subr.bf16.mxu0 0
      %3037 = vmatpush1.bf16.msra.mxu0 %v2685
      %3038 = vmatprep.subr.bf16.mxu0 0
      %3039 = vmatpush1.bf16.msra.mxu0 %v2684
      %3040 = vmatprep.subr.bf16.mxu0 0
      %3041 = vmatpush1.bf16.msra.mxu0 %v2683
      %3042 = vmatprep.subr.bf16.mxu0 0
      %3043 = vmatpush1.bf16.msra.mxu0 %v2682
      %3044 = vmatprep.subr.bf16.mxu0 0
      %3045 = vmatpush1.bf16.msra.mxu0 %v2681
      %3046 = vmatprep.subr.bf16.mxu0 0
      %3047 = vmatpush1.bf16.msra.mxu0 %v2680
      %3048 = vmatprep.subr.bf16.mxu0 0
      %3049 = vmatpush2.bf16.msra.mxu0 %v2695
      %3050 = vmatprep.subr.bf16.mxu0 0
      %3051 = vmatpush2.bf16.msra.mxu0 %v2694
      %3052 = vmatprep.subr.bf16.mxu0 0
      %3053 = vmatpush2.bf16.msra.mxu0 %v2693
      %3054 = vmatprep.subr.bf16.mxu0 0
      %3055 = vmatpush2.bf16.msra.mxu0 %v2692
      %3056 = vmatprep.subr.bf16.mxu0 0
      %3057 = vmatpush2.bf16.msra.mxu0 %v2691
      %3058 = vmatprep.subr.bf16.mxu0 0
      %3059 = vmatpush2.bf16.msra.mxu0 %v2690
      %3060 = vmatprep.subr.bf16.mxu0 0
      %3061 = vmatpush2.bf16.msra.mxu0 %v2689
      %3062 = vmatprep.subr.bf16.mxu0 0
      %3063 = vmatpush2.bf16.msra.mxu0 %v2688
      %3064 = vmatprep.mubr.bf16.mxu0 %v1834
      %3065 = vmatmul.mubr.bf16.gmra.mxu0 %v1833
      %v3066 = vpop.f32.mrf.mxu0
      %v3067 = vadd.f32 %v3027, %v3066
      %v3068 = vpop.f32.mrf.mxu0
      %v3069 = vpop.f32.mrf.mxu0
      %v3070 = vpop.f32.mrf.mxu0
      %3071 = vdwg.mxu0
      %3072 = vmatprep.subr.bf16.mxu0 0
      %3073 = vmatpush1.bf16.msra.mxu0 %v2703
      %3074 = vmatprep.subr.bf16.mxu0 0
      %3075 = vmatpush1.bf16.msra.mxu0 %v2702
      %3076 = vmatprep.subr.bf16.mxu0 0
      %3077 = vmatpush1.bf16.msra.mxu0 %v2701
      %3078 = vmatprep.subr.bf16.mxu0 0
      %3079 = vmatpush1.bf16.msra.mxu0 %v2700
      %3080 = vmatprep.subr.bf16.mxu0 0
      %3081 = vmatpush1.bf16.msra.mxu0 %v2699
      %3082 = vmatprep.subr.bf16.mxu0 0
      %3083 = vmatpush1.bf16.msra.mxu0 %v2698
      %3084 = vmatprep.subr.bf16.mxu0 0
      %3085 = vmatpush1.bf16.msra.mxu0 %v2697
      %3086 = vmatprep.subr.bf16.mxu0 0
      %3087 = vmatpush1.bf16.msra.mxu0 %v2696
      %3088 = vmatprep.subr.bf16.mxu0 0
      %3089 = vmatpush2.bf16.msra.mxu0 %v2711
      %3090 = vmatprep.subr.bf16.mxu0 0
      %3091 = vmatpush2.bf16.msra.mxu0 %v2710
      %3092 = vmatprep.subr.bf16.mxu0 0
      %3093 = vmatpush2.bf16.msra.mxu0 %v2709
      %3094 = vmatprep.subr.bf16.mxu0 0
      %3095 = vmatpush2.bf16.msra.mxu0 %v2708
      %3096 = vmatprep.subr.bf16.mxu0 0
      %3097 = vmatpush2.bf16.msra.mxu0 %v2707
      %3098 = vmatprep.subr.bf16.mxu0 0
      %3099 = vmatpush2.bf16.msra.mxu0 %v2706
      %3100 = vmatprep.subr.bf16.mxu0 0
      %3101 = vmatpush2.bf16.msra.mxu0 %v2705
      %3102 = vmatprep.subr.bf16.mxu0 0
      %3103 = vmatpush2.bf16.msra.mxu0 %v2704
      %3104 = vmatprep.mubr.bf16.mxu0 %v1836
      %3105 = vmatmul.mubr.bf16.gmra.mxu0 %v1835
      %v3106 = vpop.f32.mrf.mxu0
      %v3107 = vadd.f32 %v3067, %v3106
      %v3108 = vpop.f32.mrf.mxu0
      %v3109 = vpop.f32.mrf.mxu0
      %v3110 = vpop.f32.mrf.mxu0
      %3111 = vdwg.mxu0
      %3112 = vmatprep.subr.bf16.mxu0 0
      %3113 = vmatpush1.bf16.msra.mxu0 %v2719
      %3114 = vmatprep.subr.bf16.mxu0 0
      %3115 = vmatpush1.bf16.msra.mxu0 %v2718
      %3116 = vmatprep.subr.bf16.mxu0 0
      %3117 = vmatpush1.bf16.msra.mxu0 %v2717
      %3118 = vmatprep.subr.bf16.mxu0 0
      %3119 = vmatpush1.bf16.msra.mxu0 %v2716
      %3120 = vmatprep.subr.bf16.mxu0 0
      %3121 = vmatpush1.bf16.msra.mxu0 %v2715
      %3122 = vmatprep.subr.bf16.mxu0 0
      %3123 = vmatpush1.bf16.msra.mxu0 %v2714
      %3124 = vmatprep.subr.bf16.mxu0 0
      %3125 = vmatpush1.bf16.msra.mxu0 %v2713
      %3126 = vmatprep.subr.bf16.mxu0 0
      %3127 = vmatpush1.bf16.msra.mxu0 %v2712
      %3128 = vmatprep.subr.bf16.mxu0 0
      %3129 = vmatpush2.bf16.msra.mxu0 %v2727
      %3130 = vmatprep.subr.bf16.mxu0 0
      %3131 = vmatpush2.bf16.msra.mxu0 %v2726
      %3132 = vmatprep.subr.bf16.mxu0 0
      %3133 = vmatpush2.bf16.msra.mxu0 %v2725
      %3134 = vmatprep.subr.bf16.mxu0 0
      %3135 = vmatpush2.bf16.msra.mxu0 %v2724
      %3136 = vmatprep.subr.bf16.mxu0 0
      %3137 = vmatpush2.bf16.msra.mxu0 %v2723
      %3138 = vmatprep.subr.bf16.mxu0 0
      %3139 = vmatpush2.bf16.msra.mxu0 %v2722
      %3140 = vmatprep.subr.bf16.mxu0 0
      %3141 = vmatpush2.bf16.msra.mxu0 %v2721
      %3142 = vmatprep.subr.bf16.mxu0 0
      %3143 = vmatpush2.bf16.msra.mxu0 %v2720
      %3144 = vmatprep.mubr.bf16.mxu0 %v1838
      %3145 = vmatmul.mubr.bf16.gmra.mxu0 %v1837
      %v3146 = vpop.f32.mrf.mxu0
      %v3147 = vadd.f32 %v3107, %v3146
      %v3148 = vpop.f32.mrf.mxu0
      %v3149 = vpop.f32.mrf.mxu0
      %v3150 = vpop.f32.mrf.mxu0
      %3151 = vdwg.mxu0
      %3152 = vmatprep.subr.bf16.mxu0 0
      %3153 = vmatpush1.bf16.msra.mxu0 %v2735
      %3154 = vmatprep.subr.bf16.mxu0 0
      %3155 = vmatpush1.bf16.msra.mxu0 %v2734
      %3156 = vmatprep.subr.bf16.mxu0 0
      %3157 = vmatpush1.bf16.msra.mxu0 %v2733
      %3158 = vmatprep.subr.bf16.mxu0 0
      %3159 = vmatpush1.bf16.msra.mxu0 %v2732
      %3160 = vmatprep.subr.bf16.mxu0 0
      %3161 = vmatpush1.bf16.msra.mxu0 %v2731
      %3162 = vmatprep.subr.bf16.mxu0 0
      %3163 = vmatpush1.bf16.msra.mxu0 %v2730
      %3164 = vmatprep.subr.bf16.mxu0 0
      %3165 = vmatpush1.bf16.msra.mxu0 %v2729
      %3166 = vmatprep.subr.bf16.mxu0 0
      %3167 = vmatpush1.bf16.msra.mxu0 %v2728
      %3168 = vmatprep.subr.bf16.mxu0 0
      %3169 = vmatpush2.bf16.msra.mxu0 %v2743
      %3170 = vmatprep.subr.bf16.mxu0 0
      %3171 = vmatpush2.bf16.msra.mxu0 %v2742
      %3172 = vmatprep.subr.bf16.mxu0 0
      %3173 = vmatpush2.bf16.msra.mxu0 %v2741
      %3174 = vmatprep.subr.bf16.mxu0 0
      %3175 = vmatpush2.bf16.msra.mxu0 %v2740
      %3176 = vmatprep.subr.bf16.mxu0 0
      %3177 = vmatpush2.bf16.msra.mxu0 %v2739
      %3178 = vmatprep.subr.bf16.mxu0 0
      %3179 = vmatpush2.bf16.msra.mxu0 %v2738
      %3180 = vmatprep.subr.bf16.mxu0 0
      %3181 = vmatpush2.bf16.msra.mxu0 %v2737
      %3182 = vmatprep.subr.bf16.mxu0 0
      %3183 = vmatpush2.bf16.msra.mxu0 %v2736
      %3184 = vmatprep.mubr.bf16.mxu0 %v1840
      %3185 = vmatmul.mubr.bf16.gmra.mxu0 %v1839
      %v3186 = vpop.f32.mrf.mxu0
      %v3187 = vadd.f32 %v3147, %v3186
      %v3188 = vpop.f32.mrf.mxu0
      %v3189 = vpop.f32.mrf.mxu0
      %v3190 = vpop.f32.mrf.mxu0
      %3191 = vdwg.mxu0
      %v3192 = vadd.f32 %v1200, %v3187
      %v3193 = vld [vmem:[%s10] sm:$0x1]
      %v3194 = vld [vmem:[%s11] sm:$0x1]
      %v3195 = vsel %vm506, %v3192, 0.0
      %3196 = vadd.xlane.f32.xlu0 %v3195
      %v3197 = vpop.xlane.xlu0 %3196
      %v3198 = vrcp.pop 32.0
      %v3199 = vmul.f32 %v3197, %v3198
      %v3200 = vsub.f32 %v3192, %v3199
      %v3201 = vmul.f32 %v3200, %v3200
      %v3202 = vsel %vm506, %v3201, 0.0
      %3203 = vadd.xlane.f32.xlu0 %v3202
      %v3204 = vpop.xlane.xlu0 %3203
      %v3205 = vmul.f32 %v3204, 0.032258064
      %v3206 = vrsqrt.pop %v3205
      %v3207 = vmul.f32 %v3205, %v3206
      %vm3208 = vcmp.eq.f32.partialorder %v3205, inf
      %v3209 = vsel %vm3208, %v3205, %v3207
      %vm3210 = vcmp.eq.f32.partialorder %v3205, 0.0
      %v3211 = vand.u32 %v3205, 2147483648
      %v3212 = vsel %vm3210, %v3211, %v3209
      %v3213 = vadd.f32 %v3212, 1e-06
      %v3214 = vrcp.pop %v3213
      %v3216 = vlaneseq
      %v3217 = vshrl.u32 %v3216, 7
      %v3218 = vsub.s32 0, %v3217
      %v3219 = vrot.slane %v3193, %v3218
      %v3221 = vmul.f32 %v3219, %v3200
      %v3222 = vmul.f32 %v3221, %v3214
      %v3224 = vlaneseq
      %v3225 = vshrl.u32 %v3224, 7
      %v3226 = vsub.s32 0, %v3225
      %v3227 = vrot.slane %v3194, %v3226
      %v3229 = vadd.f32 %v3222, %v3227
      %3230 = vst.msk [vmem:[%s479] sm:$0xff] %vm506, %v3229
      %p3231 = scmp.lt.s32.totalorder %s25, 1
      %s3232 = scalar_select %p3231, %s25, 1
      %s3233 = smul.addr %s3232, 8
      %s3234 = scalar_lea.vmem %s14, %s3233
      // Predicated region
      $region77: #{encoder_forward.2} parent=75 // pred_check
        %p3235 = pneg %p347
      $region78: #{encoder_forward.2} parent=75 // pred_check_branch
        %3237 = sbr.rel (%p3235) target = $region80
      $region79: #{encoder_forward.2} parent=75 // pred_region
        _
      $region80: #{encoder_forward.2} parent=75 // pred_fallthru
        _
    $region76: #{encoder_forward.2} parent=5 // pred_fallthru
      _
    %p3238 = scmp.le.s32.totalorder 2, %s20
    // Predicated region
    $region81: #{encoder_forward.2} parent=5 // pred_check
      %p3239 = pneg %p3238
    $region82: #{encoder_forward.2} parent=5 // pred_check_branch
      %3241 = sbr.rel (%p3239) target = $region84
    $region83: #{encoder_forward.2} parent=5 // pred_region
      %s3242 = ssub.s32 %s20, 2
      // Predicated region
      $region85: #{encoder_forward.2} parent=83 // pred_check
        %p3243 = pneg %p353
      $region86: #{encoder_forward.2} parent=83 // pred_check_branch
        %3245 = sbr.rel (%p3243) target = $region88
      $region87: #{encoder_forward.2} parent=83 // pred_region
        %p3246 = scmp.lt.s32.totalorder %s26, 1
        %s3247 = scalar_select %p3246, %s26, 1
        %s3248 = smul.addr %s3247, 8
        %s3249 = scalar_lea.vmem %s14, %s3248
      $region88: #{encoder_forward.2} parent=83 // pred_fallthru
        _
    $region84: #{encoder_forward.2} parent=5 // pred_fallthru
      _
  $region6: #{encoder_forward.2} parent=0 // loop_footer
    %s24 = sadd.s32 1, %s20
  $region7: #{encoder_forward.2} parent=0 // loop_footer_branch
    %19 = sbr.rel target = $region3
  $region8: #{encoder_forward.2} parent=0 // loop_exit
    _

</llo_original>
